<compile_context>
chip_gen: v7x
topology: tpu7x:2x2x1
jax: 0.10.0
libtpu: 0.0.40
codegen_flags: <defaults>
</compile_context>

<pallas_src>
import numpy as np
import jax
import jax.numpy as jnp
from jax.experimental import pallas as pl
from jax.experimental.pallas import tpu as pltpu

LEAKY_SLOPE = 0.01     # nn.LeakyReLU default negative_slope


def _round_up(x, m):
    return (x + m - 1) // m * m


# ----------------------- host-side constant construction ---------------------

def _bilinear_matrix(n_in, n_out):
    """(n_out, n_in) interpolation matrix of nn.UpsamplingBilinear2d (align_corners=True)."""
    o = np.arange(n_out, dtype=np.float64)
    src = o * (n_in - 1) / max(n_out - 1, 1)
    lo = np.clip(np.floor(src).astype(np.int64), 0, n_in - 1)
    hi = np.minimum(lo + 1, n_in - 1)
    frac = (src - lo).astype(np.float32)
    m = np.zeros((n_out, n_in), np.float32)
    m[np.arange(n_out), lo] += 1.0 - frac
    m[np.arange(n_out), hi] += frac
    return m


def _upsample2x_matrix(h, w):
    """(h*w, 4*h*w) matrix: row-major-flat bilinear 2x upsample as one matmul."""
    mh, mw = _bilinear_matrix(h, 2 * h), _bilinear_matrix(w, 2 * w)
    return np.kron(mh, mw).T.astype(np.float32)   # [i*w+j, p*2w+q] = mh[p,i]*mw[q,j]


def _pool_select_matrix(h, w):
    """(h*w, h*w//4) 0/1 matrix selecting flat position (2*ho, 2*wo) for output (ho, wo)."""
    ho, wo = h // 2, w // 2
    s = np.zeros((h * w, ho * wo), np.float32)
    for po in range(ho):
        for qo in range(wo):
            s[2 * po * w + 2 * qo, po * wo + qo] = 1.0
    return s


# ------------------------------- parameters -----------------------------------

def init_branch_params(key, in_channels=3, n_filters=4, depth=2, n_convs=1):
    """Branch parameters (batch_norm=False).  Each Conv2d uses PyTorch's default
    U(+-1/sqrt(9*cin)) init over the FULL concatenated Cin; weight layout is the
    PyTorch (cout, cin, 3, 3)."""
    # TODO(synk): batch_norm=True (nn.BatchNorm2d) and the hook branch are not implemented.
    kit = iter(jax.random.split(key, 64))

    def conv_param(cin, cout):
        bound = float(1.0 / np.sqrt(cin * 9))
        kw, kb = jax.random.split(next(kit))
        w = jax.random.uniform(kw, (cout, cin, 3, 3), jnp.float32, -bound, bound)
        b = jax.random.uniform(kb, (cout,), jnp.float32, -bound, bound)
        return {'w': w, 'b': b}

    enc, enc_out = [], []
    cin, nf = in_channels, n_filters
    for _d in range(depth):
        block, c = [], cin
        for _ in range(n_convs):
            block.append(conv_param(c, nf))
            c = nf
        enc.append(block)
        cin = cin + nf                        # residual: concat(block_out, block_in)
        enc_out.append(cin)
        nf *= 2

    mid_out = n_filters * 2 * (depth + 1)
    mid, c = [], cin
    for _ in range(n_convs):
        mid.append(conv_param(c, mid_out))
        c = mid_out

    dec_up, dec_conv = [None] * depth, [None] * depth
    cin, nf = mid_out, n_filters * 2 * depth
    for d in reversed(range(depth)):
        dec_up[d] = conv_param(cin, nf)
        block, c = [], nf + enc_out[d]
        for _ in range(n_convs):
            block.append(conv_param(c, nf))
            c = nf
        dec_conv[d] = block
        cin, nf = nf, nf // 2

    return {'enc': enc, 'mid': mid, 'dec': {'up': dec_up, 'conv': dec_conv}}


def pack_branch(params, H, W, depth):
    """Pack all conv weights/biases + pool-select + bilinear-upsample + wrap-mask
    constants into ONE lane-dense f32 slab (single prologue DMA) and return it plus
    the static row-offset layout used by the kernel."""
    chunks, row = [], 0

    def add(arr):
        nonlocal row
        arr = np.asarray(arr, np.float32)
        r = row
        chunks.append((r, arr))
        row = _round_up(r + arr.shape[0], 8)
        return r

    def add_conv(p):
        w = np.asarray(p['w'], np.float32)           # (cout, cin, 3, 3) PyTorch layout
        cout, cin = w.shape[0], w.shape[1]
        cpad = _round_up(cout, 8)                    # 8-aligned per-tap row pitch
        blk = np.zeros((9 * cpad, cin + 1), np.float32)
        for dh in range(3):
            for dw in range(3):
                t = dh * 3 + dw
                blk[t * cpad:t * cpad + cout, :cin] = w[:, :, dh, dw]
        blk[:cout, cin] = np.asarray(p['b'], np.float32)   # bias column at lane `cin`
        return {'row': add(blk), 'cout': cout, 'cin': cin, 'cpad': cpad}

    layout = {
        'enc': [[add_conv(c) for c in blk] for blk in params['enc']],
        'mid': [add_conv(c) for c in params['mid']],
        'dec': {'up': [add_conv(c) for c in params['dec']['up']],
                'conv': [[add_conv(c) for c in blk] for blk in params['dec']['conv']]},
        'pool': [add(_pool_select_matrix(H >> d, W >> d)) for d in range(depth)],
        'upm': [add(_upsample2x_matrix(H >> (d + 1), W >> (d + 1))) for d in range(depth)],
    }
    masks = []
    for lvl in range(depth + 1):                     # column-wrap masks per spatial level
        h, w = H >> lvl, W >> lvl
        col = np.arange(h * w) % w
        masks.append(add(np.stack([col != 0, col != w - 1]).astype(np.float32)))
    layout['mask'] = masks

    lanes = _round_up(max(c.shape[1] for _, c in chunks), 128)
    slab = np.zeros((_round_up(row, 8), lanes), np.float32)
    for r, c in chunks:
        slab[r:r + c.shape[0], :c.shape[1]] = c
    return jnp.asarray(slab), layout


# --------------------------------- kernel -------------------------------------

def _make_branch_kernel(layout, H, W, depth, data_off, trail):
    taps = [(dh, dw) for dh in range(3) for dw in range(3)]

    def kernel(x_ref, slab_ref, o_ref, buf):

        def stage(parts, hw):
            """Write the channel concat of `parts` into contiguous sublane rows of
            `buf` at lane offset data_off (the concat is never materialised) and
            zero only the 128-lane trailing halo chunk."""
            c0 = 0
            for p in parts:
                c = p.shape[0]
                buf[c0:c0 + c, data_off:data_off + hw] = p
                c0 += c
            buf[0:c0, data_off + hw:data_off + hw + trail] = jnp.zeros(
                (c0, trail), jnp.float32)
            return c0

        def conv3x3_leaky(parts, rec, lvl):
            """3x3 'same' conv + bias + LeakyReLU over concat(parts): one stage,
            9 (Cout, Cin_total) @ (Cin_total, h*w) MXU matmuls, f32 accumulation."""
            h, w = H >> lvl, W >> lvl
            hw = h * w
            r0, cout, cin, cpad = rec['row'], rec['cout'], rec['cin'], rec['cpad']
            c_total = stage(parts, hw)               # == cin
            mr = layout['mask'][lvl]
            nfc = slab_ref[mr:mr + 1, 0:hw]          # col != 0      (dw=-1 wrap mask)
            nlc = slab_ref[mr + 1:mr + 2, 0:hw]      # col != w-1    (dw=+1 wrap mask)
            acc = jnp.zeros((cout, hw), jnp.float32)
            for t, (dh, dw) in enumerate(taps):
                off = data_off + (dh - 1) * w + (dw - 1)
                xs = buf[0:c_total, off:off + hw]    # zero-padded in H via halos
                if dw == 0:
                    xs = xs * nfc
                elif dw == 2:
                    xs = xs * nlc
                wt = slab_ref[r0 + t * cpad:r0 + t * cpad + cout, 0:cin]
                acc = acc + jnp.dot(wt, xs, preferred_element_type=jnp.float32)
            acc = acc + slab_ref[r0:r0 + cout, cin:cin + 1]        # bias column
            return jnp.maximum(acc, LEAKY_SLOPE * acc)             # LeakyReLU

        def conv_block(parts, block, lvl):
            cur = parts
            for rec in block:
                cur = [conv3x3_leaky(cur, rec, lvl)]
            return cur[0]

        def maxpool2x2(parts, lvl):
            """2x2 / stride-2 max pool of the whole residual concat in one pass:
            one stage, 4-shift max chain, one 0/1 stride-2 lane-selection matmul."""
            h, w = H >> lvl, W >> lvl
            hw = h * w
            c_total = stage(parts, hw)
            m = jnp.maximum(buf[0:c_total, data_off:data_off + hw],
                            buf[0:c_total, data_off + 1:data_off + 1 + hw])
            m = jnp.maximum(m, buf[0:c_total, data_off + w:data_off + w + hw])
            m = jnp.maximum(m, buf[0:c_total, data_off + w + 1:data_off + w + 1 + hw])
            r = layout['pool'][lvl]
            sel = slab_ref[r:r + hw, 0:hw // 4]
            return jnp.dot(m, sel, preferred_element_type=jnp.float32)

        # Left zero halo (supplies the conv zero padding for dh/dw = -1 taps).
        # Written once per invocation; stages never store below lane data_off.
        buf[:, 0:data_off] = jnp.zeros((buf.shape[0], data_off), jnp.float32)

        x0 = x_ref[0]                                # (Cin, H*W), lane-dense
        # ------------------------------ encoder ------------------------------
        parts, residuals = [x0], []
        for d in range(depth):
            y = conv_block(parts, layout['enc'][d], d)
            res = [y] + parts                        # ConvBlock(residual=True): cat(out, in)
            residuals.append(res)
            parts = [maxpool2x2(res, d)]             # pooled concat == next level input
        # -------------------------------- mid --------------------------------
        out = conv_block(parts, layout['mid'], depth)
        # ------------------------------ decoder ------------------------------
        # TODO(synk): hook_in / hook_to_index concat and hook_from_index tap are not
        # implemented (the exercised config has no hook branch); hook_out == out.
        for d in reversed(range(depth)):
            r = layout['upm'][d]
            hw_in = (H >> (d + 1)) * (W >> (d + 1))
            hw_out = (H >> d) * (W >> d)
            up = jnp.dot(out, slab_ref[r:r + hw_in, 0:hw_out],   # bilinear 2x (align_corners)
                         preferred_element_type=jnp.float32)
            u = conv3x3_leaky([up], layout['dec']['up'][d], d)
            # concatenator(u, residuals[d]): spatial sizes match -> center_crop no-op;
            # the channel concat is staged in buf, never materialised.
            out = conv_block([u] + residuals[d], layout['dec']['conv'][d], d)

        o_ref[0] = out.astype(o_ref.dtype)           # one lane-dense (Cout, H*W) store

    return kernel


# -------------------------------- wrapper --------------------------------------

def build_branch_forward(layout, slab_shape, H, W, depth):
    """Returns a jitted fwd(slab, x_nchw) -> (out, hook_out) running the whole
    Branch forward as one pallas_call (all activations resident in VMEM)."""
    if H % (1 << depth) or W % (1 << depth):
        raise NotImplementedError("spatial dims must be divisible by 2**depth")
    data_off = _round_up(W + 1, 128)                 # left zero halo >= w+1 at every level
    trail = data_off                                 # trailing zero chunk >= w+1
    convs = ([c for blk in layout['enc'] for c in blk] + layout['mid']
             + layout['dec']['up']
             + [c for blk in layout['dec']['conv'] for c in blk])
    c_buf = _round_up(max(c['cin'] for c in convs), 8)   # max staged channel count
    c_out = layout['dec']['conv'][0][-1]['cout']
    buf_w = _round_up(data_off + H * W + trail, 128)
    kernel = _make_branch_kernel(layout, H, W, depth, data_off, trail)

    def fwd(slab, x_nchw, hook_in=None):
        if hook_in is not None:
            raise NotImplementedError("TODO(synk): hook_in path not implemented")
        N, Cin, _, _ = x_nchw.shape
        x_flat = x_nchw.reshape(N, Cin, H * W)       # layout-only glue reshape
        out_flat = pl.pallas_call(
            kernel,
            out_shape=jax.ShapeDtypeStruct((N, c_out, H * W), jnp.float32),
            grid=(N,),
            in_specs=[pl.BlockSpec((1, Cin, H * W), lambda n: (n, 0, 0)),
                      pl.BlockSpec(slab_shape, lambda n: (0, 0))],
            out_specs=pl.BlockSpec((1, c_out, H * W), lambda n: (n, 0, 0)),
            scratch_shapes=[pltpu.VMEM((c_buf, buf_w), jnp.float32)],
            compiler_params=pltpu.CompilerParams(
                dimension_semantics=("parallel",)),
        )(x_flat, slab)
        out = out_flat.reshape(N, c_out, H, W)
        return out, out      # hook_from_index=None -> hook_out is the decoder output

    return jax.jit(fwd)


# ---------------------------------- main ---------------------------------------

if __name__ == "__main__":
    key = jax.random.PRNGKey(0)
    pkey, xkey = jax.random.split(key)

    IN_CHANNELS, N_FILTERS, DEPTH, N_CONVS = 3, 4, 2, 1
    N, H, W = 2, 16, 16

    params = init_branch_params(pkey, IN_CHANNELS, N_FILTERS, DEPTH, N_CONVS)
    slab, layout = pack_branch(params, H, W, DEPTH)
    fwd = build_branch_forward(layout, slab.shape, H, W, DEPTH)

    x = jax.random.normal(xkey, (N, IN_CHANNELS, H, W), jnp.float32)   # NCHW, like PyTorch
    out, hook_out = fwd(slab, x)
    out, hook_out = jax.block_until_ready((out, hook_out))

    # depth=2, n_filters=4 -> final decoder channels = 8; spatial restored to 16x16.
    assert out.shape == (N, 8, H, W) and hook_out.shape == (N, 8, H, W)
    assert bool(jnp.all(jnp.isfinite(out))) and bool(jnp.all(jnp.isfinite(hook_out)))
    print("KERNEL_OK")
</pallas_src>

<mosaic_0001>
module attributes {stable_mosaic.version = 11 : i64} {
  func.func @kernel(%arg0: i32, %arg1: memref<1x3x256xf32, #tpu.memory_space<vmem>>, %arg2: memref<1216x256xf32, #tpu.memory_space<vmem>>, %arg3: memref<1x8x256xf32, #tpu.memory_space<vmem>>, %arg4: memref<32x512xf32, #tpu.memory_space<vmem>>) attributes {dimension_semantics = [#tpu.dimension_semantics<parallel>], iteration_bounds = array<i64: 2>, scalar_prefetch = 0 : i64, scratch_operands = 1 : i64, tpu.core_type = #tpu.core_type<tc>, window_params = [{transform_indices = @transform_0, window_bounds = array<i64: 1, 3, 256>}, {pipeline_mode = #tpu.pipeline_mode<synchronous>, transform_indices = @transform_1, window_bounds = array<i64: 1216, 256>}, {transform_indices = @transform_2, window_bounds = array<i64: 1, 8, 256>}]} {
    %cst = arith.constant 0.000000e+00 : f32
    %0 = vector.broadcast %cst : f32 to vector<32x128xf32>
    %c0 = arith.constant 0 : index
    %c0_0 = arith.constant 0 : index
    %1 = vector.load %arg4[%c0, %c0_0] : memref<32x512xf32, #tpu.memory_space<vmem>>, vector<32x128xf32>
    tpu.vector_store %arg4[%c0, %c0_0], %0 {strides = array<i32>} : memref<32x512xf32, #tpu.memory_space<vmem>>, vector<32x128xf32>,
    %c0_1 = arith.constant 0 : index
    %c0_2 = arith.constant 0 : index
    %c0_3 = arith.constant 0 : index
    %2 = vector.load %arg1[%c0_1, %c0_2, %c0_3] : memref<1x3x256xf32, #tpu.memory_space<vmem>>, vector<1x3x256xf32>
    %3 = vector.shape_cast %2 : vector<1x3x256xf32> to vector<3x256xf32>
    %c0_4 = arith.constant 0 : index
    %c128 = arith.constant 128 : index
    %4 = vector.load %arg4[%c0_4, %c128] : memref<32x512xf32, #tpu.memory_space<vmem>>, vector<3x256xf32>
    tpu.vector_store %arg4[%c0_4, %c128], %3 {strides = array<i32>} : memref<32x512xf32, #tpu.memory_space<vmem>>, vector<3x256xf32>,
    %cst_5 = arith.constant 0.000000e+00 : f32
    %5 = vector.broadcast %cst_5 : f32 to vector<3x128xf32>
    %c0_6 = arith.constant 0 : index
    %c384 = arith.constant 384 : index
    %6 = vector.load %arg4[%c0_6, %c384] : memref<32x512xf32, #tpu.memory_space<vmem>>, vector<3x128xf32>
    tpu.vector_store %arg4[%c0_6, %c384], %5 {strides = array<i32>} : memref<32x512xf32, #tpu.memory_space<vmem>>, vector<3x128xf32>,
    %c1192 = arith.constant 1192 : index
    %c0_7 = arith.constant 0 : index
    %7 = vector.load %arg2[%c1192, %c0_7] : memref<1216x256xf32, #tpu.memory_space<vmem>>, vector<1x256xf32>
    %c1193 = arith.constant 1193 : index
    %c0_8 = arith.constant 0 : index
    %8 = vector.load %arg2[%c1193, %c0_8] : memref<1216x256xf32, #tpu.memory_space<vmem>>, vector<1x256xf32>
    %cst_9 = arith.constant 0.000000e+00 : f32
    %9 = vector.broadcast %cst_9 : f32 to vector<4x256xf32>
    %c0_10 = arith.constant 0 : index
    %c111 = arith.constant 111 : index
    %10 = vector.load %arg4[%c0_10, %c111] : memref<32x512xf32, #tpu.memory_space<vmem>>, vector<3x256xf32>
    %11 = vector.broadcast %7 : vector<1x256xf32> to vector<3x256xf32>
    %12 = arith.mulf %10, %11 : vector<3x256xf32>
    %c0_11 = arith.constant 0 : index
    %c0_12 = arith.constant 0 : index
    %13 = vector.load %arg2[%c0_11, %c0_12] : memref<1216x256xf32, #tpu.memory_space<vmem>>, vector<4x3xf32>
    %cst_13 = arith.constant dense<0.000000e+00> : vector<4x256xf32>
    %14 = tpu.matmul %13, %12, %cst_13 {dimension_numbers = #tpu.dot_dimension_numbers<[1], [0], [0], [1], [0, 0, 1, 1], [], []>} : vector<4x3xf32>, vector<3x256xf32>, vector<4x256xf32> -> vector<4x256xf32>
    %15 = arith.addf %9, %14 : vector<4x256xf32>
    %c0_14 = arith.constant 0 : index
    %c112 = arith.constant 112 : index
    %16 = vector.load %arg4[%c0_14, %c112] : memref<32x512xf32, #tpu.memory_space<vmem>>, vector<3x256xf32>
    %c8 = arith.constant 8 : index
    %c0_15 = arith.constant 0 : index
    %17 = vector.load %arg2[%c8, %c0_15] : memref<1216x256xf32, #tpu.memory_space<vmem>>, vector<4x3xf32>
    %cst_16 = arith.constant dense<0.000000e+00> : vector<4x256xf32>
    %18 = tpu.matmul %17, %16, %cst_16 {dimension_numbers = #tpu.dot_dimension_numbers<[1], [0], [0], [1], [0, 0, 1, 1], [], []>} : vector<4x3xf32>, vector<3x256xf32>, vector<4x256xf32> -> vector<4x256xf32>
    %19 = arith.addf %15, %18 : vector<4x256xf32>
    %c0_17 = arith.constant 0 : index
    %c113 = arith.constant 113 : index
    %20 = vector.load %arg4[%c0_17, %c113] : memref<32x512xf32, #tpu.memory_space<vmem>>, vector<3x256xf32>
    %21 = vector.broadcast %8 : vector<1x256xf32> to vector<3x256xf32>
    %22 = arith.mulf %20, %21 : vector<3x256xf32>
    %c16 = arith.constant 16 : index
    %c0_18 = arith.constant 0 : index
    %23 = vector.load %arg2[%c16, %c0_18] : memref<1216x256xf32, #tpu.memory_space<vmem>>, vector<4x3xf32>
    %cst_19 = arith.constant dense<0.000000e+00> : vector<4x256xf32>
    %24 = tpu.matmul %23, %22, %cst_19 {dimension_numbers = #tpu.dot_dimension_numbers<[1], [0], [0], [1], [0, 0, 1, 1], [], []>} : vector<4x3xf32>, vector<3x256xf32>, vector<4x256xf32> -> vector<4x256xf32>
    %25 = arith.addf %19, %24 : vector<4x256xf32>
    %c0_20 = arith.constant 0 : index
    %c127 = arith.constant 127 : index
    %26 = vector.load %arg4[%c0_20, %c127] : memref<32x512xf32, #tpu.memory_space<vmem>>, vector<3x256xf32>
    %27 = vector.broadcast %7 : vector<1x256xf32> to vector<3x256xf32>
    %28 = arith.mulf %26, %27 : vector<3x256xf32>
    %c24 = arith.constant 24 : index
    %c0_21 = arith.constant 0 : index
    %29 = vector.load %arg2[%c24, %c0_21] : memref<1216x256xf32, #tpu.memory_space<vmem>>, vector<4x3xf32>
    %cst_22 = arith.constant dense<0.000000e+00> : vector<4x256xf32>
    %30 = tpu.matmul %29, %28, %cst_22 {dimension_numbers = #tpu.dot_dimension_numbers<[1], [0], [0], [1], [0, 0, 1, 1], [], []>} : vector<4x3xf32>, vector<3x256xf32>, vector<4x256xf32> -> vector<4x256xf32>
    %31 = arith.addf %25, %30 : vector<4x256xf32>
    %c0_23 = arith.constant 0 : index
    %c128_24 = arith.constant 128 : index
    %32 = vector.load %arg4[%c0_23, %c128_24] : memref<32x512xf32, #tpu.memory_space<vmem>>, vector<3x256xf32>
    %c32 = arith.constant 32 : index
    %c0_25 = arith.constant 0 : index
    %33 = vector.load %arg2[%c32, %c0_25] : memref<1216x256xf32, #tpu.memory_space<vmem>>, vector<4x3xf32>
    %cst_26 = arith.constant dense<0.000000e+00> : vector<4x256xf32>
    %34 = tpu.matmul %33, %32, %cst_26 {dimension_numbers = #tpu.dot_dimension_numbers<[1], [0], [0], [1], [0, 0, 1, 1], [], []>} : vector<4x3xf32>, vector<3x256xf32>, vector<4x256xf32> -> vector<4x256xf32>
    %35 = arith.addf %31, %34 : vector<4x256xf32>
    %c0_27 = arith.constant 0 : index
    %c129 = arith.constant 129 : index
    %36 = vector.load %arg4[%c0_27, %c129] : memref<32x512xf32, #tpu.memory_space<vmem>>, vector<3x256xf32>
    %37 = vector.broadcast %8 : vector<1x256xf32> to vector<3x256xf32>
    %38 = arith.mulf %36, %37 : vector<3x256xf32>
    %c40 = arith.constant 40 : index
    %c0_28 = arith.constant 0 : index
    %39 = vector.load %arg2[%c40, %c0_28] : memref<1216x256xf32, #tpu.memory_space<vmem>>, vector<4x3xf32>
    %cst_29 = arith.constant dense<0.000000e+00> : vector<4x256xf32>
    %40 = tpu.matmul %39, %38, %cst_29 {dimension_numbers = #tpu.dot_dimension_numbers<[1], [0], [0], [1], [0, 0, 1, 1], [], []>} : vector<4x3xf32>, vector<3x256xf32>, vector<4x256xf32> -> vector<4x256xf32>
    %41 = arith.addf %35, %40 : vector<4x256xf32>
    %c0_30 = arith.constant 0 : index
    %c143 = arith.constant 143 : index
    %42 = vector.load %arg4[%c0_30, %c143] : memref<32x512xf32, #tpu.memory_space<vmem>>, vector<3x256xf32>
    %43 = vector.broadcast %7 : vector<1x256xf32> to vector<3x256xf32>
    %44 = arith.mulf %42, %43 : vector<3x256xf32>
    %c48 = arith.constant 48 : index
    %c0_31 = arith.constant 0 : index
    %45 = vector.load %arg2[%c48, %c0_31] : memref<1216x256xf32, #tpu.memory_space<vmem>>, vector<4x3xf32>
    %cst_32 = arith.constant dense<0.000000e+00> : vector<4x256xf32>
    %46 = tpu.matmul %45, %44, %cst_32 {dimension_numbers = #tpu.dot_dimension_numbers<[1], [0], [0], [1], [0, 0, 1, 1], [], []>} : vector<4x3xf32>, vector<3x256xf32>, vector<4x256xf32> -> vector<4x256xf32>
    %47 = arith.addf %41, %46 : vector<4x256xf32>
    %c0_33 = arith.constant 0 : index
    %c144 = arith.constant 144 : index
    %48 = vector.load %arg4[%c0_33, %c144] : memref<32x512xf32, #tpu.memory_space<vmem>>, vector<3x256xf32>
    %c56 = arith.constant 56 : index
    %c0_34 = arith.constant 0 : index
    %49 = vector.load %arg2[%c56, %c0_34] : memref<1216x256xf32, #tpu.memory_space<vmem>>, vector<4x3xf32>
    %cst_35 = arith.constant dense<0.000000e+00> : vector<4x256xf32>
    %50 = tpu.matmul %49, %48, %cst_35 {dimension_numbers = #tpu.dot_dimension_numbers<[1], [0], [0], [1], [0, 0, 1, 1], [], []>} : vector<4x3xf32>, vector<3x256xf32>, vector<4x256xf32> -> vector<4x256xf32>
    %51 = arith.addf %47, %50 : vector<4x256xf32>
    %c0_36 = arith.constant 0 : index
    %c145 = arith.constant 145 : index
    %52 = vector.load %arg4[%c0_36, %c145] : memref<32x512xf32, #tpu.memory_space<vmem>>, vector<3x256xf32>
    %53 = vector.broadcast %8 : vector<1x256xf32> to vector<3x256xf32>
    %54 = arith.mulf %52, %53 : vector<3x256xf32>
    %c64 = arith.constant 64 : index
    %c0_37 = arith.constant 0 : index
    %55 = vector.load %arg2[%c64, %c0_37] : memref<1216x256xf32, #tpu.memory_space<vmem>>, vector<4x3xf32>
    %cst_38 = arith.constant dense<0.000000e+00> : vector<4x256xf32>
    %56 = tpu.matmul %55, %54, %cst_38 {dimension_numbers = #tpu.dot_dimension_numbers<[1], [0], [0], [1], [0, 0, 1, 1], [], []>} : vector<4x3xf32>, vector<3x256xf32>, vector<4x256xf32> -> vector<4x256xf32>
    %57 = arith.addf %51, %56 : vector<4x256xf32>
    %c0_39 = arith.constant 0 : index
    %c3 = arith.constant 3 : index
    %58 = vector.load %arg2[%c0_39, %c3] : memref<1216x256xf32, #tpu.memory_space<vmem>>, vector<4x1xf32>
    %59 = vector.broadcast %58 : vector<4x1xf32> to vector<4x256xf32>
    %60 = arith.addf %57, %59 : vector<4x256xf32>
    %cst_40 = arith.constant 0.00999999977 : f32
    %61 = vector.broadcast %cst_40 : f32 to vector<4x256xf32>
    %62 = arith.mulf %61, %60 : vector<4x256xf32>
    %63 = arith.maximumf %60, %62 : vector<4x256xf32>
    %c0_41 = arith.constant 0 : index
    %c128_42 = arith.constant 128 : index
    %64 = vector.load %arg4[%c0_41, %c128_42] : memref<32x512xf32, #tpu.memory_space<vmem>>, vector<4x256xf32>
    tpu.vector_store %arg4[%c0_41, %c128_42], %63 {strides = array<i32>} : memref<32x512xf32, #tpu.memory_space<vmem>>, vector<4x256xf32>,
    %c4 = arith.constant 4 : index
    %c128_43 = arith.constant 128 : index
    %65 = vector.load %arg4[%c4, %c128_43] : memref<32x512xf32, #tpu.memory_space<vmem>>, vector<3x256xf32>
    tpu.vector_store %arg4[%c4, %c128_43], %3 {strides = array<i32>} : memref<32x512xf32, #tpu.memory_space<vmem>>, vector<3x256xf32>,
    %cst_44 = arith.constant 0.000000e+00 : f32
    %66 = vector.broadcast %cst_44 : f32 to vector<7x128xf32>
    %c0_45 = arith.constant 0 : index
    %c384_46 = arith.constant 384 : index
    %67 = vector.load %arg4[%c0_45, %c384_46] : memref<32x512xf32, #tpu.memory_space<vmem>>, vector<7x128xf32>
    tpu.vector_store %arg4[%c0_45, %c384_46], %66 {strides = array<i32>} : memref<32x512xf32, #tpu.memory_space<vmem>>, vector<7x128xf32>,
    %c0_47 = arith.constant 0 : index
    %c128_48 = arith.constant 128 : index
    %68 = vector.load %arg4[%c0_47, %c128_48] : memref<32x512xf32, #tpu.memory_space<vmem>>, vector<7x256xf32>
    %c0_49 = arith.constant 0 : index
    %c129_50 = arith.constant 129 : index
    %69 = vector.load %arg4[%c0_49, %c129_50] : memref<32x512xf32, #tpu.memory_space<vmem>>, vector<7x256xf32>
    %70 = arith.maximumf %68, %69 : vector<7x256xf32>
    %c0_51 = arith.constant 0 : index
    %c144_52 = arith.constant 144 : index
    %71 = vector.load %arg4[%c0_51, %c144_52] : memref<32x512xf32, #tpu.memory_space<vmem>>, vector<7x256xf32>
    %72 = arith.maximumf %70, %71 : vector<7x256xf32>
    %c0_53 = arith.constant 0 : index
    %c145_54 = arith.constant 145 : index
    %73 = vector.load %arg4[%c0_53, %c145_54] : memref<32x512xf32, #tpu.memory_space<vmem>>, vector<7x256xf32>
    %74 = arith.maximumf %72, %73 : vector<7x256xf32>
    %c792 = arith.constant 792 : index
    %c0_55 = arith.constant 0 : index
    %75 = vector.load %arg2[%c792, %c0_55] : memref<1216x256xf32, #tpu.memory_space<vmem>>, vector<256x64xf32>
    %cst_56 = arith.constant dense<0.000000e+00> : vector<7x64xf32>
    %76 = tpu.matmul %74, %75, %cst_56 {dimension_numbers = #tpu.dot_dimension_numbers<[1], [0], [0], [1], [0, 0, 1, 1], [], []>} : vector<7x256xf32>, vector<256x64xf32>, vector<7x64xf32> -> vector<7x64xf32>
    %c0_57 = arith.constant 0 : index
    %c128_58 = arith.constant 128 : index
    %77 = vector.load %arg4[%c0_57, %c128_58] : memref<32x512xf32, #tpu.memory_space<vmem>>, vector<7x64xf32>
    tpu.vector_store %arg4[%c0_57, %c128_58], %76 {strides = array<i32>} : memref<32x512xf32, #tpu.memory_space<vmem>>, vector<7x64xf32>,
    %cst_59 = arith.constant 0.000000e+00 : f32
    %78 = vector.broadcast %cst_59 : f32 to vector<7x128xf32>
    %c0_60 = arith.constant 0 : index
    %c192 = arith.constant 192 : index
    %79 = vector.load %arg4[%c0_60, %c192] : memref<32x512xf32, #tpu.memory_space<vmem>>, vector<7x128xf32>
    tpu.vector_store %arg4[%c0_60, %c192], %78 {strides = array<i32>} : memref<32x512xf32, #tpu.memory_space<vmem>>, vector<7x128xf32>,
    %c1200 = arith.constant 1200 : index
    %c0_61 = arith.constant 0 : index
    %80 = vector.load %arg2[%c1200, %c0_61] : memref<1216x256xf32, #tpu.memory_space<vmem>>, vector<1x64xf32>
    %c1201 = arith.constant 1201 : index
    %c0_62 = arith.constant 0 : index
    %81 = vector.load %arg2[%c1201, %c0_62] : memref<1216x256xf32, #tpu.memory_space<vmem>>, vector<1x64xf32>
    %cst_63 = arith.constant 0.000000e+00 : f32
    %82 = vector.broadcast %cst_63 : f32 to vector<8x64xf32>
    %c0_64 = arith.constant 0 : index
    %c119 = arith.constant 119 : index
    %83 = vector.load %arg4[%c0_64, %c119] : memref<32x512xf32, #tpu.memory_space<vmem>>, vector<7x64xf32>
    %84 = vector.broadcast %80 : vector<1x64xf32> to vector<7x64xf32>
    %85 = arith.mulf %83, %84 : vector<7x64xf32>
    %c72 = arith.constant 72 : index
    %c0_65 = arith.constant 0 : index
    %86 = vector.load %arg2[%c72, %c0_65] : memref<1216x256xf32, #tpu.memory_space<vmem>>, vector<8x7xf32>
    %cst_66 = arith.constant dense<0.000000e+00> : vector<8x64xf32>
    %87 = tpu.matmul %86, %85, %cst_66 {dimension_numbers = #tpu.dot_dimension_numbers<[1], [0], [0], [1], [0, 0, 1, 1], [], []>} : vector<8x7xf32>, vector<7x64xf32>, vector<8x64xf32> -> vector<8x64xf32>
    %88 = arith.addf %82, %87 : vector<8x64xf32>
    %c0_67 = arith.constant 0 : index
    %c120 = arith.constant 120 : index
    %89 = vector.load %arg4[%c0_67, %c120] : memref<32x512xf32, #tpu.memory_space<vmem>>, vector<7x64xf32>
    %c80 = arith.constant 80 : index
    %c0_68 = arith.constant 0 : index
    %90 = vector.load %arg2[%c80, %c0_68] : memref<1216x256xf32, #tpu.memory_space<vmem>>, vector<8x7xf32>
    %cst_69 = arith.constant dense<0.000000e+00> : vector<8x64xf32>
    %91 = tpu.matmul %90, %89, %cst_69 {dimension_numbers = #tpu.dot_dimension_numbers<[1], [0], [0], [1], [0, 0, 1, 1], [], []>} : vector<8x7xf32>, vector<7x64xf32>, vector<8x64xf32> -> vector<8x64xf32>
    %92 = arith.addf %88, %91 : vector<8x64xf32>
    %c0_70 = arith.constant 0 : index
    %c121 = arith.constant 121 : index
    %93 = vector.load %arg4[%c0_70, %c121] : memref<32x512xf32, #tpu.memory_space<vmem>>, vector<7x64xf32>
    %94 = vector.broadcast %81 : vector<1x64xf32> to vector<7x64xf32>
    %95 = arith.mulf %93, %94 : vector<7x64xf32>
    %c88 = arith.constant 88 : index
    %c0_71 = arith.constant 0 : index
    %96 = vector.load %arg2[%c88, %c0_71] : memref<1216x256xf32, #tpu.memory_space<vmem>>, vector<8x7xf32>
    %cst_72 = arith.constant dense<0.000000e+00> : vector<8x64xf32>
    %97 = tpu.matmul %96, %95, %cst_72 {dimension_numbers = #tpu.dot_dimension_numbers<[1], [0], [0], [1], [0, 0, 1, 1], [], []>} : vector<8x7xf32>, vector<7x64xf32>, vector<8x64xf32> -> vector<8x64xf32>
    %98 = arith.addf %92, %97 : vector<8x64xf32>
    %c0_73 = arith.constant 0 : index
    %c127_74 = arith.constant 127 : index
    %99 = vector.load %arg4[%c0_73, %c127_74] : memref<32x512xf32, #tpu.memory_space<vmem>>, vector<7x64xf32>
    %100 = vector.broadcast %80 : vector<1x64xf32> to vector<7x64xf32>
    %101 = arith.mulf %99, %100 : vector<7x64xf32>
    %c96 = arith.constant 96 : index
    %c0_75 = arith.constant 0 : index
    %102 = vector.load %arg2[%c96, %c0_75] : memref<1216x256xf32, #tpu.memory_space<vmem>>, vector<8x7xf32>
    %cst_76 = arith.constant dense<0.000000e+00> : vector<8x64xf32>
    %103 = tpu.matmul %102, %101, %cst_76 {dimension_numbers = #tpu.dot_dimension_numbers<[1], [0], [0], [1], [0, 0, 1, 1], [], []>} : vector<8x7xf32>, vector<7x64xf32>, vector<8x64xf32> -> vector<8x64xf32>
    %104 = arith.addf %98, %103 : vector<8x64xf32>
    %c0_77 = arith.constant 0 : index
    %c128_78 = arith.constant 128 : index
    %105 = vector.load %arg4[%c0_77, %c128_78] : memref<32x512xf32, #tpu.memory_space<vmem>>, vector<7x64xf32>
    %c104 = arith.constant 104 : index
    %c0_79 = arith.constant 0 : index
    %106 = vector.load %arg2[%c104, %c0_79] : memref<1216x256xf32, #tpu.memory_space<vmem>>, vector<8x7xf32>
    %cst_80 = arith.constant dense<0.000000e+00> : vector<8x64xf32>
    %107 = tpu.matmul %106, %105, %cst_80 {dimension_numbers = #tpu.dot_dimension_numbers<[1], [0], [0], [1], [0, 0, 1, 1], [], []>} : vector<8x7xf32>, vector<7x64xf32>, vector<8x64xf32> -> vector<8x64xf32>
    %108 = arith.addf %104, %107 : vector<8x64xf32>
    %c0_81 = arith.constant 0 : index
    %c129_82 = arith.constant 129 : index
    %109 = vector.load %arg4[%c0_81, %c129_82] : memref<32x512xf32, #tpu.memory_space<vmem>>, vector<7x64xf32>
    %110 = vector.broadcast %81 : vector<1x64xf32> to vector<7x64xf32>
    %111 = arith.mulf %109, %110 : vector<7x64xf32>
    %c112_83 = arith.constant 112 : index
    %c0_84 = arith.constant 0 : index
    %112 = vector.load %arg2[%c112_83, %c0_84] : memref<1216x256xf32, #tpu.memory_space<vmem>>, vector<8x7xf32>
    %cst_85 = arith.constant dense<0.000000e+00> : vector<8x64xf32>
    %113 = tpu.matmul %112, %111, %cst_85 {dimension_numbers = #tpu.dot_dimension_numbers<[1], [0], [0], [1], [0, 0, 1, 1], [], []>} : vector<8x7xf32>, vector<7x64xf32>, vector<8x64xf32> -> vector<8x64xf32>
    %114 = arith.addf %108, %113 : vector<8x64xf32>
    %c0_86 = arith.constant 0 : index
    %c135 = arith.constant 135 : index
    %115 = vector.load %arg4[%c0_86, %c135] : memref<32x512xf32, #tpu.memory_space<vmem>>, vector<7x64xf32>
    %116 = vector.broadcast %80 : vector<1x64xf32> to vector<7x64xf32>
    %117 = arith.mulf %115, %116 : vector<7x64xf32>
    %c120_87 = arith.constant 120 : index
    %c0_88 = arith.constant 0 : index
    %118 = vector.load %arg2[%c120_87, %c0_88] : memref<1216x256xf32, #tpu.memory_space<vmem>>, vector<8x7xf32>
    %cst_89 = arith.constant dense<0.000000e+00> : vector<8x64xf32>
    %119 = tpu.matmul %118, %117, %cst_89 {dimension_numbers = #tpu.dot_dimension_numbers<[1], [0], [0], [1], [0, 0, 1, 1], [], []>} : vector<8x7xf32>, vector<7x64xf32>, vector<8x64xf32> -> vector<8x64xf32>
    %120 = arith.addf %114, %119 : vector<8x64xf32>
    %c0_90 = arith.constant 0 : index
    %c136 = arith.constant 136 : index
    %121 = vector.load %arg4[%c0_90, %c136] : memref<32x512xf32, #tpu.memory_space<vmem>>, vector<7x64xf32>
    %c128_91 = arith.constant 128 : index
    %c0_92 = arith.constant 0 : index
    %122 = vector.load %arg2[%c128_91, %c0_92] : memref<1216x256xf32, #tpu.memory_space<vmem>>, vector<8x7xf32>
    %cst_93 = arith.constant dense<0.000000e+00> : vector<8x64xf32>
    %123 = tpu.matmul %122, %121, %cst_93 {dimension_numbers = #tpu.dot_dimension_numbers<[1], [0], [0], [1], [0, 0, 1, 1], [], []>} : vector<8x7xf32>, vector<7x64xf32>, vector<8x64xf32> -> vector<8x64xf32>
    %124 = arith.addf %120, %123 : vector<8x64xf32>
    %c0_94 = arith.constant 0 : index
    %c137 = arith.constant 137 : index
    %125 = vector.load %arg4[%c0_94, %c137] : memref<32x512xf32, #tpu.memory_space<vmem>>, vector<7x64xf32>
    %126 = vector.broadcast %81 : vector<1x64xf32> to vector<7x64xf32>
    %127 = arith.mulf %125, %126 : vector<7x64xf32>
    %c136_95 = arith.constant 136 : index
    %c0_96 = arith.constant 0 : index
    %128 = vector.load %arg2[%c136_95, %c0_96] : memref<1216x256xf32, #tpu.memory_space<vmem>>, vector<8x7xf32>
    %cst_97 = arith.constant dense<0.000000e+00> : vector<8x64xf32>
    %129 = tpu.matmul %128, %127, %cst_97 {dimension_numbers = #tpu.dot_dimension_numbers<[1], [0], [0], [1], [0, 0, 1, 1], [], []>} : vector<8x7xf32>, vector<7x64xf32>, vector<8x64xf32> -> vector<8x64xf32>
    %130 = arith.addf %124, %129 : vector<8x64xf32>
    %c72_98 = arith.constant 72 : index
    %c7 = arith.constant 7 : index
    %131 = vector.load %arg2[%c72_98, %c7] : memref<1216x256xf32, #tpu.memory_space<vmem>>, vector<8x1xf32>
    %132 = vector.broadcast %131 : vector<8x1xf32> to vector<8x64xf32>
    %133 = arith.addf %130, %132 : vector<8x64xf32>
    %cst_99 = arith.constant 0.00999999977 : f32
    %134 = vector.broadcast %cst_99 : f32 to vector<8x64xf32>
    %135 = arith.mulf %134, %133 : vector<8x64xf32>
    %136 = arith.maximumf %133, %135 : vector<8x64xf32>
    %c0_100 = arith.constant 0 : index
    %c128_101 = arith.constant 128 : index
    %137 = vector.load %arg4[%c0_100, %c128_101] : memref<32x512xf32, #tpu.memory_space<vmem>>, vector<8x64xf32>
    tpu.vector_store %arg4[%c0_100, %c128_101], %136 {strides = array<i32>} : memref<32x512xf32, #tpu.memory_space<vmem>>, vector<8x64xf32>,
    %c8_102 = arith.constant 8 : index
    %c128_103 = arith.constant 128 : index
    %138 = vector.load %arg4[%c8_102, %c128_103] : memref<32x512xf32, #tpu.memory_space<vmem>>, vector<7x64xf32>
    tpu.vector_store %arg4[%c8_102, %c128_103], %76 {strides = array<i32>} : memref<32x512xf32, #tpu.memory_space<vmem>>, vector<7x64xf32>,
    %cst_104 = arith.constant 0.000000e+00 : f32
    %139 = vector.broadcast %cst_104 : f32 to vector<15x128xf32>
    %c0_105 = arith.constant 0 : index
    %c192_106 = arith.constant 192 : index
    %140 = vector.load %arg4[%c0_105, %c192_106] : memref<32x512xf32, #tpu.memory_space<vmem>>, vector<15x128xf32>
    tpu.vector_store %arg4[%c0_105, %c192_106], %139 {strides = array<i32>} : memref<32x512xf32, #tpu.memory_space<vmem>>, vector<15x128xf32>,
    %c0_107 = arith.constant 0 : index
    %c128_108 = arith.constant 128 : index
    %141 = vector.load %arg4[%c0_107, %c128_108] : memref<32x512xf32, #tpu.memory_space<vmem>>, vector<15x64xf32>
    %c0_109 = arith.constant 0 : index
    %c129_110 = arith.constant 129 : index
    %142 = vector.load %arg4[%c0_109, %c129_110] : memref<32x512xf32, #tpu.memory_space<vmem>>, vector<15x64xf32>
    %143 = arith.maximumf %141, %142 : vector<15x64xf32>
    %c0_111 = arith.constant 0 : index
    %c136_112 = arith.constant 136 : index
    %144 = vector.load %arg4[%c0_111, %c136_112] : memref<32x512xf32, #tpu.memory_space<vmem>>, vector<15x64xf32>
    %145 = arith.maximumf %143, %144 : vector<15x64xf32>
    %c0_113 = arith.constant 0 : index
    %c137_114 = arith.constant 137 : index
    %146 = vector.load %arg4[%c0_113, %c137_114] : memref<32x512xf32, #tpu.memory_space<vmem>>, vector<15x64xf32>
    %147 = arith.maximumf %145, %146 : vector<15x64xf32>
    %c1048 = arith.constant 1048 : index
    %c0_115 = arith.constant 0 : index
    %148 = vector.load %arg2[%c1048, %c0_115] : memref<1216x256xf32, #tpu.memory_space<vmem>>, vector<64x16xf32>
    %cst_116 = arith.constant dense<0.000000e+00> : vector<15x16xf32>
    %149 = tpu.matmul %147, %148, %cst_116 {dimension_numbers = #tpu.dot_dimension_numbers<[1], [0], [0], [1], [0, 0, 1, 1], [], []>} : vector<15x64xf32>, vector<64x16xf32>, vector<15x16xf32> -> vector<15x16xf32>
    %c0_117 = arith.constant 0 : index
    %c128_118 = arith.constant 128 : index
    %150 = vector.load %arg4[%c0_117, %c128_118] : memref<32x512xf32, #tpu.memory_space<vmem>>, vector<15x16xf32>
    tpu.vector_store %arg4[%c0_117, %c128_118], %149 {strides = array<i32>} : memref<32x512xf32, #tpu.memory_space<vmem>>, vector<15x16xf32>,
    %cst_119 = arith.constant 0.000000e+00 : f32
    %151 = vector.broadcast %cst_119 : f32 to vector<15x128xf32>
    %c0_120 = arith.constant 0 : index
    %c144_121 = arith.constant 144 : index
    %152 = vector.load %arg4[%c0_120, %c144_121] : memref<32x512xf32, #tpu.memory_space<vmem>>, vector<15x128xf32>
    tpu.vector_store %arg4[%c0_120, %c144_121], %151 {strides = array<i32>} : memref<32x512xf32, #tpu.memory_space<vmem>>, vector<15x128xf32>,
    %c1208 = arith.constant 1208 : index
    %c0_122 = arith.constant 0 : index
    %153 = vector.load %arg2[%c1208, %c0_122] : memref<1216x256xf32, #tpu.memory_space<vmem>>, vector<1x16xf32>
    %c1209 = arith.constant 1209 : index
    %c0_123 = arith.constant 0 : index
    %154 = vector.load %arg2[%c1209, %c0_123] : memref<1216x256xf32, #tpu.memory_space<vmem>>, vector<1x16xf32>
    %cst_124 = arith.constant 0.000000e+00 : f32
    %155 = vector.broadcast %cst_124 : f32 to vector<24x16xf32>
    %c0_125 = arith.constant 0 : index
    %c123 = arith.constant 123 : index
    %156 = vector.load %arg4[%c0_125, %c123] : memref<32x512xf32, #tpu.memory_space<vmem>>, vector<15x16xf32>
    %157 = vector.broadcast %153 : vector<1x16xf32> to vector<15x16xf32>
    %158 = arith.mulf %156, %157 : vector<15x16xf32>
    %c144_126 = arith.constant 144 : index
    %c0_127 = arith.constant 0 : index
    %159 = vector.load %arg2[%c144_126, %c0_127] : memref<1216x256xf32, #tpu.memory_space<vmem>>, vector<24x15xf32>
    %cst_128 = arith.constant dense<0.000000e+00> : vector<24x16xf32>
    %160 = tpu.matmul %159, %158, %cst_128 {dimension_numbers = #tpu.dot_dimension_numbers<[1], [0], [0], [1], [0, 0, 1, 1], [], []>} : vector<24x15xf32>, vector<15x16xf32>, vector<24x16xf32> -> vector<24x16xf32>
    %161 = arith.addf %155, %160 : vector<24x16xf32>
    %c0_129 = arith.constant 0 : index
    %c124 = arith.constant 124 : index
    %162 = vector.load %arg4[%c0_129, %c124] : memref<32x512xf32, #tpu.memory_space<vmem>>, vector<15x16xf32>
    %c168 = arith.constant 168 : index
    %c0_130 = arith.constant 0 : index
    %163 = vector.load %arg2[%c168, %c0_130] : memref<1216x256xf32, #tpu.memory_space<vmem>>, vector<24x15xf32>
    %cst_131 = arith.constant dense<0.000000e+00> : vector<24x16xf32>
    %164 = tpu.matmul %163, %162, %cst_131 {dimension_numbers = #tpu.dot_dimension_numbers<[1], [0], [0], [1], [0, 0, 1, 1], [], []>} : vector<24x15xf32>, vector<15x16xf32>, vector<24x16xf32> -> vector<24x16xf32>
    %165 = arith.addf %161, %164 : vector<24x16xf32>
    %c0_132 = arith.constant 0 : index
    %c125 = arith.constant 125 : index
    %166 = vector.load %arg4[%c0_132, %c125] : memref<32x512xf32, #tpu.memory_space<vmem>>, vector<15x16xf32>
    %167 = vector.broadcast %154 : vector<1x16xf32> to vector<15x16xf32>
    %168 = arith.mulf %166, %167 : vector<15x16xf32>
    %c192_133 = arith.constant 192 : index
    %c0_134 = arith.constant 0 : index
    %169 = vector.load %arg2[%c192_133, %c0_134] : memref<1216x256xf32, #tpu.memory_space<vmem>>, vector<24x15xf32>
    %cst_135 = arith.constant dense<0.000000e+00> : vector<24x16xf32>
    %170 = tpu.matmul %169, %168, %cst_135 {dimension_numbers = #tpu.dot_dimension_numbers<[1], [0], [0], [1], [0, 0, 1, 1], [], []>} : vector<24x15xf32>, vector<15x16xf32>, vector<24x16xf32> -> vector<24x16xf32>
    %171 = arith.addf %165, %170 : vector<24x16xf32>
    %c0_136 = arith.constant 0 : index
    %c127_137 = arith.constant 127 : index
    %172 = vector.load %arg4[%c0_136, %c127_137] : memref<32x512xf32, #tpu.memory_space<vmem>>, vector<15x16xf32>
    %173 = vector.broadcast %153 : vector<1x16xf32> to vector<15x16xf32>
    %174 = arith.mulf %172, %173 : vector<15x16xf32>
    %c216 = arith.constant 216 : index
    %c0_138 = arith.constant 0 : index
    %175 = vector.load %arg2[%c216, %c0_138] : memref<1216x256xf32, #tpu.memory_space<vmem>>, vector<24x15xf32>
    %cst_139 = arith.constant dense<0.000000e+00> : vector<24x16xf32>
    %176 = tpu.matmul %175, %174, %cst_139 {dimension_numbers = #tpu.dot_dimension_numbers<[1], [0], [0], [1], [0, 0, 1, 1], [], []>} : vector<24x15xf32>, vector<15x16xf32>, vector<24x16xf32> -> vector<24x16xf32>
    %177 = arith.addf %171, %176 : vector<24x16xf32>
    %c0_140 = arith.constant 0 : index
    %c128_141 = arith.constant 128 : index
    %178 = vector.load %arg4[%c0_140, %c128_141] : memref<32x512xf32, #tpu.memory_space<vmem>>, vector<15x16xf32>
    %c240 = arith.constant 240 : index
    %c0_142 = arith.constant 0 : index
    %179 = vector.load %arg2[%c240, %c0_142] : memref<1216x256xf32, #tpu.memory_space<vmem>>, vector<24x15xf32>
    %cst_143 = arith.constant dense<0.000000e+00> : vector<24x16xf32>
    %180 = tpu.matmul %179, %178, %cst_143 {dimension_numbers = #tpu.dot_dimension_numbers<[1], [0], [0], [1], [0, 0, 1, 1], [], []>} : vector<24x15xf32>, vector<15x16xf32>, vector<24x16xf32> -> vector<24x16xf32>
    %181 = arith.addf %177, %180 : vector<24x16xf32>
    %c0_144 = arith.constant 0 : index
    %c129_145 = arith.constant 129 : index
    %182 = vector.load %arg4[%c0_144, %c129_145] : memref<32x512xf32, #tpu.memory_space<vmem>>, vector<15x16xf32>
    %183 = vector.broadcast %154 : vector<1x16xf32> to vector<15x16xf32>
    %184 = arith.mulf %182, %183 : vector<15x16xf32>
    %c264 = arith.constant 264 : index
    %c0_146 = arith.constant 0 : index
    %185 = vector.load %arg2[%c264, %c0_146] : memref<1216x256xf32, #tpu.memory_space<vmem>>, vector<24x15xf32>
    %cst_147 = arith.constant dense<0.000000e+00> : vector<24x16xf32>
    %186 = tpu.matmul %185, %184, %cst_147 {dimension_numbers = #tpu.dot_dimension_numbers<[1], [0], [0], [1], [0, 0, 1, 1], [], []>} : vector<24x15xf32>, vector<15x16xf32>, vector<24x16xf32> -> vector<24x16xf32>
    %187 = arith.addf %181, %186 : vector<24x16xf32>
    %c0_148 = arith.constant 0 : index
    %c131 = arith.constant 131 : index
    %188 = vector.load %arg4[%c0_148, %c131] : memref<32x512xf32, #tpu.memory_space<vmem>>, vector<15x16xf32>
    %189 = vector.broadcast %153 : vector<1x16xf32> to vector<15x16xf32>
    %190 = arith.mulf %188, %189 : vector<15x16xf32>
    %c288 = arith.constant 288 : index
    %c0_149 = arith.constant 0 : index
    %191 = vector.load %arg2[%c288, %c0_149] : memref<1216x256xf32, #tpu.memory_space<vmem>>, vector<24x15xf32>
    %cst_150 = arith.constant dense<0.000000e+00> : vector<24x16xf32>
    %192 = tpu.matmul %191, %190, %cst_150 {dimension_numbers = #tpu.dot_dimension_numbers<[1], [0], [0], [1], [0, 0, 1, 1], [], []>} : vector<24x15xf32>, vector<15x16xf32>, vector<24x16xf32> -> vector<24x16xf32>
    %193 = arith.addf %187, %192 : vector<24x16xf32>
    %c0_151 = arith.constant 0 : index
    %c132 = arith.constant 132 : index
    %194 = vector.load %arg4[%c0_151, %c132] : memref<32x512xf32, #tpu.memory_space<vmem>>, vector<15x16xf32>
    %c312 = arith.constant 312 : index
    %c0_152 = arith.constant 0 : index
    %195 = vector.load %arg2[%c312, %c0_152] : memref<1216x256xf32, #tpu.memory_space<vmem>>, vector<24x15xf32>
    %cst_153 = arith.constant dense<0.000000e+00> : vector<24x16xf32>
    %196 = tpu.matmul %195, %194, %cst_153 {dimension_numbers = #tpu.dot_dimension_numbers<[1], [0], [0], [1], [0, 0, 1, 1], [], []>} : vector<24x15xf32>, vector<15x16xf32>, vector<24x16xf32> -> vector<24x16xf32>
    %197 = arith.addf %193, %196 : vector<24x16xf32>
    %c0_154 = arith.constant 0 : index
    %c133 = arith.constant 133 : index
    %198 = vector.load %arg4[%c0_154, %c133] : memref<32x512xf32, #tpu.memory_space<vmem>>, vector<15x16xf32>
    %199 = vector.broadcast %154 : vector<1x16xf32> to vector<15x16xf32>
    %200 = arith.mulf %198, %199 : vector<15x16xf32>
    %c336 = arith.constant 336 : index
    %c0_155 = arith.constant 0 : index
    %201 = vector.load %arg2[%c336, %c0_155] : memref<1216x256xf32, #tpu.memory_space<vmem>>, vector<24x15xf32>
    %cst_156 = arith.constant dense<0.000000e+00> : vector<24x16xf32>
    %202 = tpu.matmul %201, %200, %cst_156 {dimension_numbers = #tpu.dot_dimension_numbers<[1], [0], [0], [1], [0, 0, 1, 1], [], []>} : vector<24x15xf32>, vector<15x16xf32>, vector<24x16xf32> -> vector<24x16xf32>
    %203 = arith.addf %197, %202 : vector<24x16xf32>
    %c144_157 = arith.constant 144 : index
    %c15 = arith.constant 15 : index
    %204 = vector.load %arg2[%c144_157, %c15] : memref<1216x256xf32, #tpu.memory_space<vmem>>, vector<24x1xf32>
    %205 = vector.broadcast %204 : vector<24x1xf32> to vector<24x16xf32>
    %206 = arith.addf %203, %205 : vector<24x16xf32>
    %cst_158 = arith.constant 0.00999999977 : f32
    %207 = vector.broadcast %cst_158 : f32 to vector<24x16xf32>
    %208 = arith.mulf %207, %206 : vector<24x16xf32>
    %209 = arith.maximumf %206, %208 : vector<24x16xf32>
    %c1176 = arith.constant 1176 : index
    %c0_159 = arith.constant 0 : index
    %210 = vector.load %arg2[%c1176, %c0_159] : memref<1216x256xf32, #tpu.memory_space<vmem>>, vector<16x64xf32>
    %cst_160 = arith.constant dense<0.000000e+00> : vector<24x64xf32>
    %211 = tpu.matmul %209, %210, %cst_160 {dimension_numbers = #tpu.dot_dimension_numbers<[1], [0], [0], [1], [0, 0, 1, 1], [], []>} : vector<24x16xf32>, vector<16x64xf32>, vector<24x64xf32> -> vector<24x64xf32>
    %c0_161 = arith.constant 0 : index
    %c128_162 = arith.constant 128 : index
    %212 = vector.load %arg4[%c0_161, %c128_162] : memref<32x512xf32, #tpu.memory_space<vmem>>, vector<24x64xf32>
    tpu.vector_store %arg4[%c0_161, %c128_162], %211 {strides = array<i32>} : memref<32x512xf32, #tpu.memory_space<vmem>>, vector<24x64xf32>,
    %cst_163 = arith.constant 0.000000e+00 : f32
    %213 = vector.broadcast %cst_163 : f32 to vector<24x128xf32>
    %c0_164 = arith.constant 0 : index
    %c192_165 = arith.constant 192 : index
    %214 = vector.load %arg4[%c0_164, %c192_165] : memref<32x512xf32, #tpu.memory_space<vmem>>, vector<24x128xf32>
    tpu.vector_store %arg4[%c0_164, %c192_165], %213 {strides = array<i32>} : memref<32x512xf32, #tpu.memory_space<vmem>>, vector<24x128xf32>,
    %c1200_166 = arith.constant 1200 : index
    %c0_167 = arith.constant 0 : index
    %215 = vector.load %arg2[%c1200_166, %c0_167] : memref<1216x256xf32, #tpu.memory_space<vmem>>, vector<1x64xf32>
    %c1201_168 = arith.constant 1201 : index
    %c0_169 = arith.constant 0 : index
    %216 = vector.load %arg2[%c1201_168, %c0_169] : memref<1216x256xf32, #tpu.memory_space<vmem>>, vector<1x64xf32>
    %cst_170 = arith.constant 0.000000e+00 : f32
    %217 = vector.broadcast %cst_170 : f32 to vector<16x64xf32>
    %c0_171 = arith.constant 0 : index
    %c119_172 = arith.constant 119 : index
    %218 = vector.load %arg4[%c0_171, %c119_172] : memref<32x512xf32, #tpu.memory_space<vmem>>, vector<24x64xf32>
    %219 = vector.broadcast %215 : vector<1x64xf32> to vector<24x64xf32>
    %220 = arith.mulf %218, %219 : vector<24x64xf32>
    %c432 = arith.constant 432 : index
    %c0_173 = arith.constant 0 : index
    %221 = vector.load %arg2[%c432, %c0_173] : memref<1216x256xf32, #tpu.memory_space<vmem>>, vector<16x24xf32>
    %cst_174 = arith.constant dense<0.000000e+00> : vector<16x64xf32>
    %222 = tpu.matmul %221, %220, %cst_174 {dimension_numbers = #tpu.dot_dimension_numbers<[1], [0], [0], [1], [0, 0, 1, 1], [], []>} : vector<16x24xf32>, vector<24x64xf32>, vector<16x64xf32> -> vector<16x64xf32>
    %223 = arith.addf %217, %222 : vector<16x64xf32>
    %c0_175 = arith.constant 0 : index
    %c120_176 = arith.constant 120 : index
    %224 = vector.load %arg4[%c0_175, %c120_176] : memref<32x512xf32, #tpu.memory_space<vmem>>, vector<24x64xf32>
    %c448 = arith.constant 448 : index
    %c0_177 = arith.constant 0 : index
    %225 = vector.load %arg2[%c448, %c0_177] : memref<1216x256xf32, #tpu.memory_space<vmem>>, vector<16x24xf32>
    %cst_178 = arith.constant dense<0.000000e+00> : vector<16x64xf32>
    %226 = tpu.matmul %225, %224, %cst_178 {dimension_numbers = #tpu.dot_dimension_numbers<[1], [0], [0], [1], [0, 0, 1, 1], [], []>} : vector<16x24xf32>, vector<24x64xf32>, vector<16x64xf32> -> vector<16x64xf32>
    %227 = arith.addf %223, %226 : vector<16x64xf32>
    %c0_179 = arith.constant 0 : index
    %c121_180 = arith.constant 121 : index
    %228 = vector.load %arg4[%c0_179, %c121_180] : memref<32x512xf32, #tpu.memory_space<vmem>>, vector<24x64xf32>
    %229 = vector.broadcast %216 : vector<1x64xf32> to vector<24x64xf32>
    %230 = arith.mulf %228, %229 : vector<24x64xf32>
    %c464 = arith.constant 464 : index
    %c0_181 = arith.constant 0 : index
    %231 = vector.load %arg2[%c464, %c0_181] : memref<1216x256xf32, #tpu.memory_space<vmem>>, vector<16x24xf32>
    %cst_182 = arith.constant dense<0.000000e+00> : vector<16x64xf32>
    %232 = tpu.matmul %231, %230, %cst_182 {dimension_numbers = #tpu.dot_dimension_numbers<[1], [0], [0], [1], [0, 0, 1, 1], [], []>} : vector<16x24xf32>, vector<24x64xf32>, vector<16x64xf32> -> vector<16x64xf32>
    %233 = arith.addf %227, %232 : vector<16x64xf32>
    %c0_183 = arith.constant 0 : index
    %c127_184 = arith.constant 127 : index
    %234 = vector.load %arg4[%c0_183, %c127_184] : memref<32x512xf32, #tpu.memory_space<vmem>>, vector<24x64xf32>
    %235 = vector.broadcast %215 : vector<1x64xf32> to vector<24x64xf32>
    %236 = arith.mulf %234, %235 : vector<24x64xf32>
    %c480 = arith.constant 480 : index
    %c0_185 = arith.constant 0 : index
    %237 = vector.load %arg2[%c480, %c0_185] : memref<1216x256xf32, #tpu.memory_space<vmem>>, vector<16x24xf32>
    %cst_186 = arith.constant dense<0.000000e+00> : vector<16x64xf32>
    %238 = tpu.matmul %237, %236, %cst_186 {dimension_numbers = #tpu.dot_dimension_numbers<[1], [0], [0], [1], [0, 0, 1, 1], [], []>} : vector<16x24xf32>, vector<24x64xf32>, vector<16x64xf32> -> vector<16x64xf32>
    %239 = arith.addf %233, %238 : vector<16x64xf32>
    %c0_187 = arith.constant 0 : index
    %c128_188 = arith.constant 128 : index
    %240 = vector.load %arg4[%c0_187, %c128_188] : memref<32x512xf32, #tpu.memory_space<vmem>>, vector<24x64xf32>
    %c496 = arith.constant 496 : index
    %c0_189 = arith.constant 0 : index
    %241 = vector.load %arg2[%c496, %c0_189] : memref<1216x256xf32, #tpu.memory_space<vmem>>, vector<16x24xf32>
    %cst_190 = arith.constant dense<0.000000e+00> : vector<16x64xf32>
    %242 = tpu.matmul %241, %240, %cst_190 {dimension_numbers = #tpu.dot_dimension_numbers<[1], [0], [0], [1], [0, 0, 1, 1], [], []>} : vector<16x24xf32>, vector<24x64xf32>, vector<16x64xf32> -> vector<16x64xf32>
    %243 = arith.addf %239, %242 : vector<16x64xf32>
    %c0_191 = arith.constant 0 : index
    %c129_192 = arith.constant 129 : index
    %244 = vector.load %arg4[%c0_191, %c129_192] : memref<32x512xf32, #tpu.memory_space<vmem>>, vector<24x64xf32>
    %245 = vector.broadcast %216 : vector<1x64xf32> to vector<24x64xf32>
    %246 = arith.mulf %244, %245 : vector<24x64xf32>
    %c512 = arith.constant 512 : index
    %c0_193 = arith.constant 0 : index
    %247 = vector.load %arg2[%c512, %c0_193] : memref<1216x256xf32, #tpu.memory_space<vmem>>, vector<16x24xf32>
    %cst_194 = arith.constant dense<0.000000e+00> : vector<16x64xf32>
    %248 = tpu.matmul %247, %246, %cst_194 {dimension_numbers = #tpu.dot_dimension_numbers<[1], [0], [0], [1], [0, 0, 1, 1], [], []>} : vector<16x24xf32>, vector<24x64xf32>, vector<16x64xf32> -> vector<16x64xf32>
    %249 = arith.addf %243, %248 : vector<16x64xf32>
    %c0_195 = arith.constant 0 : index
    %c135_196 = arith.constant 135 : index
    %250 = vector.load %arg4[%c0_195, %c135_196] : memref<32x512xf32, #tpu.memory_space<vmem>>, vector<24x64xf32>
    %251 = vector.broadcast %215 : vector<1x64xf32> to vector<24x64xf32>
    %252 = arith.mulf %250, %251 : vector<24x64xf32>
    %c528 = arith.constant 528 : index
    %c0_197 = arith.constant 0 : index
    %253 = vector.load %arg2[%c528, %c0_197] : memref<1216x256xf32, #tpu.memory_space<vmem>>, vector<16x24xf32>
    %cst_198 = arith.constant dense<0.000000e+00> : vector<16x64xf32>
    %254 = tpu.matmul %253, %252, %cst_198 {dimension_numbers = #tpu.dot_dimension_numbers<[1], [0], [0], [1], [0, 0, 1, 1], [], []>} : vector<16x24xf32>, vector<24x64xf32>, vector<16x64xf32> -> vector<16x64xf32>
    %255 = arith.addf %249, %254 : vector<16x64xf32>
    %c0_199 = arith.constant 0 : index
    %c136_200 = arith.constant 136 : index
    %256 = vector.load %arg4[%c0_199, %c136_200] : memref<32x512xf32, #tpu.memory_space<vmem>>, vector<24x64xf32>
    %c544 = arith.constant 544 : index
    %c0_201 = arith.constant 0 : index
    %257 = vector.load %arg2[%c544, %c0_201] : memref<1216x256xf32, #tpu.memory_space<vmem>>, vector<16x24xf32>
    %cst_202 = arith.constant dense<0.000000e+00> : vector<16x64xf32>
    %258 = tpu.matmul %257, %256, %cst_202 {dimension_numbers = #tpu.dot_dimension_numbers<[1], [0], [0], [1], [0, 0, 1, 1], [], []>} : vector<16x24xf32>, vector<24x64xf32>, vector<16x64xf32> -> vector<16x64xf32>
    %259 = arith.addf %255, %258 : vector<16x64xf32>
    %c0_203 = arith.constant 0 : index
    %c137_204 = arith.constant 137 : index
    %260 = vector.load %arg4[%c0_203, %c137_204] : memref<32x512xf32, #tpu.memory_space<vmem>>, vector<24x64xf32>
    %261 = vector.broadcast %216 : vector<1x64xf32> to vector<24x64xf32>
    %262 = arith.mulf %260, %261 : vector<24x64xf32>
    %c560 = arith.constant 560 : index
    %c0_205 = arith.constant 0 : index
    %263 = vector.load %arg2[%c560, %c0_205] : memref<1216x256xf32, #tpu.memory_space<vmem>>, vector<16x24xf32>
    %cst_206 = arith.constant dense<0.000000e+00> : vector<16x64xf32>
    %264 = tpu.matmul %263, %262, %cst_206 {dimension_numbers = #tpu.dot_dimension_numbers<[1], [0], [0], [1], [0, 0, 1, 1], [], []>} : vector<16x24xf32>, vector<24x64xf32>, vector<16x64xf32> -> vector<16x64xf32>
    %265 = arith.addf %259, %264 : vector<16x64xf32>
    %c432_207 = arith.constant 432 : index
    %c24_208 = arith.constant 24 : index
    %266 = vector.load %arg2[%c432_207, %c24_208] : memref<1216x256xf32, #tpu.memory_space<vmem>>, vector<16x1xf32>
    %267 = vector.broadcast %266 : vector<16x1xf32> to vector<16x64xf32>
    %268 = arith.addf %265, %267 : vector<16x64xf32>
    %cst_209 = arith.constant 0.00999999977 : f32
    %269 = vector.broadcast %cst_209 : f32 to vector<16x64xf32>
    %270 = arith.mulf %269, %268 : vector<16x64xf32>
    %271 = arith.maximumf %268, %270 : vector<16x64xf32>
    %c0_210 = arith.constant 0 : index
    %c128_211 = arith.constant 128 : index
    %272 = vector.load %arg4[%c0_210, %c128_211] : memref<32x512xf32, #tpu.memory_space<vmem>>, vector<16x64xf32>
    tpu.vector_store %arg4[%c0_210, %c128_211], %271 {strides = array<i32>} : memref<32x512xf32, #tpu.memory_space<vmem>>, vector<16x64xf32>,
    %c16_212 = arith.constant 16 : index
    %c128_213 = arith.constant 128 : index
    %273 = vector.load %arg4[%c16_212, %c128_213] : memref<32x512xf32, #tpu.memory_space<vmem>>, vector<8x64xf32>
    tpu.vector_store %arg4[%c16_212, %c128_213], %136 {strides = array<i32>} : memref<32x512xf32, #tpu.memory_space<vmem>>, vector<8x64xf32>,
    %c24_214 = arith.constant 24 : index
    %c128_215 = arith.constant 128 : index
    %274 = vector.load %arg4[%c24_214, %c128_215] : memref<32x512xf32, #tpu.memory_space<vmem>>, vector<7x64xf32>
    tpu.vector_store %arg4[%c24_214, %c128_215], %76 {strides = array<i32>} : memref<32x512xf32, #tpu.memory_space<vmem>>, vector<7x64xf32>,
    %cst_216 = arith.constant 0.000000e+00 : f32
    %275 = vector.broadcast %cst_216 : f32 to vector<31x128xf32>
    %c0_217 = arith.constant 0 : index
    %c192_218 = arith.constant 192 : index
    %276 = vector.load %arg4[%c0_217, %c192_218] : memref<32x512xf32, #tpu.memory_space<vmem>>, vector<31x128xf32>
    tpu.vector_store %arg4[%c0_217, %c192_218], %275 {strides = array<i32>} : memref<32x512xf32, #tpu.memory_space<vmem>>, vector<31x128xf32>,
    %c1200_219 = arith.constant 1200 : index
    %c0_220 = arith.constant 0 : index
    %277 = vector.load %arg2[%c1200_219, %c0_220] : memref<1216x256xf32, #tpu.memory_space<vmem>>, vector<1x64xf32>
    %c1201_221 = arith.constant 1201 : index
    %c0_222 = arith.constant 0 : index
    %278 = vector.load %arg2[%c1201_221, %c0_222] : memref<1216x256xf32, #tpu.memory_space<vmem>>, vector<1x64xf32>
    %cst_223 = arith.constant 0.000000e+00 : f32
    %279 = vector.broadcast %cst_223 : f32 to vector<16x64xf32>
    %c0_224 = arith.constant 0 : index
    %c119_225 = arith.constant 119 : index
    %280 = vector.load %arg4[%c0_224, %c119_225] : memref<32x512xf32, #tpu.memory_space<vmem>>, vector<31x64xf32>
    %281 = vector.broadcast %277 : vector<1x64xf32> to vector<31x64xf32>
    %282 = arith.mulf %280, %281 : vector<31x64xf32>
    %c648 = arith.constant 648 : index
    %c0_226 = arith.constant 0 : index
    %283 = vector.load %arg2[%c648, %c0_226] : memref<1216x256xf32, #tpu.memory_space<vmem>>, vector<16x31xf32>
    %cst_227 = arith.constant dense<0.000000e+00> : vector<16x64xf32>
    %284 = tpu.matmul %283, %282, %cst_227 {dimension_numbers = #tpu.dot_dimension_numbers<[1], [0], [0], [1], [0, 0, 1, 1], [], []>} : vector<16x31xf32>, vector<31x64xf32>, vector<16x64xf32> -> vector<16x64xf32>
    %285 = arith.addf %279, %284 : vector<16x64xf32>
    %c0_228 = arith.constant 0 : index
    %c120_229 = arith.constant 120 : index
    %286 = vector.load %arg4[%c0_228, %c120_229] : memref<32x512xf32, #tpu.memory_space<vmem>>, vector<31x64xf32>
    %c664 = arith.constant 664 : index
    %c0_230 = arith.constant 0 : index
    %287 = vector.load %arg2[%c664, %c0_230] : memref<1216x256xf32, #tpu.memory_space<vmem>>, vector<16x31xf32>
    %cst_231 = arith.constant dense<0.000000e+00> : vector<16x64xf32>
    %288 = tpu.matmul %287, %286, %cst_231 {dimension_numbers = #tpu.dot_dimension_numbers<[1], [0], [0], [1], [0, 0, 1, 1], [], []>} : vector<16x31xf32>, vector<31x64xf32>, vector<16x64xf32> -> vector<16x64xf32>
    %289 = arith.addf %285, %288 : vector<16x64xf32>
    %c0_232 = arith.constant 0 : index
    %c121_233 = arith.constant 121 : index
    %290 = vector.load %arg4[%c0_232, %c121_233] : memref<32x512xf32, #tpu.memory_space<vmem>>, vector<31x64xf32>
    %291 = vector.broadcast %278 : vector<1x64xf32> to vector<31x64xf32>
    %292 = arith.mulf %290, %291 : vector<31x64xf32>
    %c680 = arith.constant 680 : index
    %c0_234 = arith.constant 0 : index
    %293 = vector.load %arg2[%c680, %c0_234] : memref<1216x256xf32, #tpu.memory_space<vmem>>, vector<16x31xf32>
    %cst_235 = arith.constant dense<0.000000e+00> : vector<16x64xf32>
    %294 = tpu.matmul %293, %292, %cst_235 {dimension_numbers = #tpu.dot_dimension_numbers<[1], [0], [0], [1], [0, 0, 1, 1], [], []>} : vector<16x31xf32>, vector<31x64xf32>, vector<16x64xf32> -> vector<16x64xf32>
    %295 = arith.addf %289, %294 : vector<16x64xf32>
    %c0_236 = arith.constant 0 : index
    %c127_237 = arith.constant 127 : index
    %296 = vector.load %arg4[%c0_236, %c127_237] : memref<32x512xf32, #tpu.memory_space<vmem>>, vector<31x64xf32>
    %297 = vector.broadcast %277 : vector<1x64xf32> to vector<31x64xf32>
    %298 = arith.mulf %296, %297 : vector<31x64xf32>
    %c696 = arith.constant 696 : index
    %c0_238 = arith.constant 0 : index
    %299 = vector.load %arg2[%c696, %c0_238] : memref<1216x256xf32, #tpu.memory_space<vmem>>, vector<16x31xf32>
    %cst_239 = arith.constant dense<0.000000e+00> : vector<16x64xf32>
    %300 = tpu.matmul %299, %298, %cst_239 {dimension_numbers = #tpu.dot_dimension_numbers<[1], [0], [0], [1], [0, 0, 1, 1], [], []>} : vector<16x31xf32>, vector<31x64xf32>, vector<16x64xf32> -> vector<16x64xf32>
    %301 = arith.addf %295, %300 : vector<16x64xf32>
    %c0_240 = arith.constant 0 : index
    %c128_241 = arith.constant 128 : index
    %302 = vector.load %arg4[%c0_240, %c128_241] : memref<32x512xf32, #tpu.memory_space<vmem>>, vector<31x64xf32>
    %c712 = arith.constant 712 : index
    %c0_242 = arith.constant 0 : index
    %303 = vector.load %arg2[%c712, %c0_242] : memref<1216x256xf32, #tpu.memory_space<vmem>>, vector<16x31xf32>
    %cst_243 = arith.constant dense<0.000000e+00> : vector<16x64xf32>
    %304 = tpu.matmul %303, %302, %cst_243 {dimension_numbers = #tpu.dot_dimension_numbers<[1], [0], [0], [1], [0, 0, 1, 1], [], []>} : vector<16x31xf32>, vector<31x64xf32>, vector<16x64xf32> -> vector<16x64xf32>
    %305 = arith.addf %301, %304 : vector<16x64xf32>
    %c0_244 = arith.constant 0 : index
    %c129_245 = arith.constant 129 : index
    %306 = vector.load %arg4[%c0_244, %c129_245] : memref<32x512xf32, #tpu.memory_space<vmem>>, vector<31x64xf32>
    %307 = vector.broadcast %278 : vector<1x64xf32> to vector<31x64xf32>
    %308 = arith.mulf %306, %307 : vector<31x64xf32>
    %c728 = arith.constant 728 : index
    %c0_246 = arith.constant 0 : index
    %309 = vector.load %arg2[%c728, %c0_246] : memref<1216x256xf32, #tpu.memory_space<vmem>>, vector<16x31xf32>
    %cst_247 = arith.constant dense<0.000000e+00> : vector<16x64xf32>
    %310 = tpu.matmul %309, %308, %cst_247 {dimension_numbers = #tpu.dot_dimension_numbers<[1], [0], [0], [1], [0, 0, 1, 1], [], []>} : vector<16x31xf32>, vector<31x64xf32>, vector<16x64xf32> -> vector<16x64xf32>
    %311 = arith.addf %305, %310 : vector<16x64xf32>
    %c0_248 = arith.constant 0 : index
    %c135_249 = arith.constant 135 : index
    %312 = vector.load %arg4[%c0_248, %c135_249] : memref<32x512xf32, #tpu.memory_space<vmem>>, vector<31x64xf32>
    %313 = vector.broadcast %277 : vector<1x64xf32> to vector<31x64xf32>
    %314 = arith.mulf %312, %313 : vector<31x64xf32>
    %c744 = arith.constant 744 : index
    %c0_250 = arith.constant 0 : index
    %315 = vector.load %arg2[%c744, %c0_250] : memref<1216x256xf32, #tpu.memory_space<vmem>>, vector<16x31xf32>
    %cst_251 = arith.constant dense<0.000000e+00> : vector<16x64xf32>
    %316 = tpu.matmul %315, %314, %cst_251 {dimension_numbers = #tpu.dot_dimension_numbers<[1], [0], [0], [1], [0, 0, 1, 1], [], []>} : vector<16x31xf32>, vector<31x64xf32>, vector<16x64xf32> -> vector<16x64xf32>
    %317 = arith.addf %311, %316 : vector<16x64xf32>
    %c0_252 = arith.constant 0 : index
    %c136_253 = arith.constant 136 : index
    %318 = vector.load %arg4[%c0_252, %c136_253] : memref<32x512xf32, #tpu.memory_space<vmem>>, vector<31x64xf32>
    %c760 = arith.constant 760 : index
    %c0_254 = arith.constant 0 : index
    %319 = vector.load %arg2[%c760, %c0_254] : memref<1216x256xf32, #tpu.memory_space<vmem>>, vector<16x31xf32>
    %cst_255 = arith.constant dense<0.000000e+00> : vector<16x64xf32>
    %320 = tpu.matmul %319, %318, %cst_255 {dimension_numbers = #tpu.dot_dimension_numbers<[1], [0], [0], [1], [0, 0, 1, 1], [], []>} : vector<16x31xf32>, vector<31x64xf32>, vector<16x64xf32> -> vector<16x64xf32>
    %321 = arith.addf %317, %320 : vector<16x64xf32>
    %c0_256 = arith.constant 0 : index
    %c137_257 = arith.constant 137 : index
    %322 = vector.load %arg4[%c0_256, %c137_257] : memref<32x512xf32, #tpu.memory_space<vmem>>, vector<31x64xf32>
    %323 = vector.broadcast %278 : vector<1x64xf32> to vector<31x64xf32>
    %324 = arith.mulf %322, %323 : vector<31x64xf32>
    %c776 = arith.constant 776 : index
    %c0_258 = arith.constant 0 : index
    %325 = vector.load %arg2[%c776, %c0_258] : memref<1216x256xf32, #tpu.memory_space<vmem>>, vector<16x31xf32>
    %cst_259 = arith.constant dense<0.000000e+00> : vector<16x64xf32>
    %326 = tpu.matmul %325, %324, %cst_259 {dimension_numbers = #tpu.dot_dimension_numbers<[1], [0], [0], [1], [0, 0, 1, 1], [], []>} : vector<16x31xf32>, vector<31x64xf32>, vector<16x64xf32> -> vector<16x64xf32>
    %327 = arith.addf %321, %326 : vector<16x64xf32>
    %c648_260 = arith.constant 648 : index
    %c31 = arith.constant 31 : index
    %328 = vector.load %arg2[%c648_260, %c31] : memref<1216x256xf32, #tpu.memory_space<vmem>>, vector<16x1xf32>
    %329 = vector.broadcast %328 : vector<16x1xf32> to vector<16x64xf32>
    %330 = arith.addf %327, %329 : vector<16x64xf32>
    %cst_261 = arith.constant 0.00999999977 : f32
    %331 = vector.broadcast %cst_261 : f32 to vector<16x64xf32>
    %332 = arith.mulf %331, %330 : vector<16x64xf32>
    %333 = arith.maximumf %330, %332 : vector<16x64xf32>
    %c1112 = arith.constant 1112 : index
    %c0_262 = arith.constant 0 : index
    %334 = vector.load %arg2[%c1112, %c0_262] : memref<1216x256xf32, #tpu.memory_space<vmem>>, vector<64x256xf32>
    %cst_263 = arith.constant dense<0.000000e+00> : vector<16x256xf32>
    %335 = tpu.matmul %333, %334, %cst_263 {dimension_numbers = #tpu.dot_dimension_numbers<[1], [0], [0], [1], [0, 0, 1, 1], [], []>} : vector<16x64xf32>, vector<64x256xf32>, vector<16x256xf32> -> vector<16x256xf32>
    %c0_264 = arith.constant 0 : index
    %c128_265 = arith.constant 128 : index
    %336 = vector.load %arg4[%c0_264, %c128_265] : memref<32x512xf32, #tpu.memory_space<vmem>>, vector<16x256xf32>
    tpu.vector_store %arg4[%c0_264, %c128_265], %335 {strides = array<i32>} : memref<32x512xf32, #tpu.memory_space<vmem>>, vector<16x256xf32>,
    %cst_266 = arith.constant 0.000000e+00 : f32
    %337 = vector.broadcast %cst_266 : f32 to vector<16x128xf32>
    %c0_267 = arith.constant 0 : index
    %c384_268 = arith.constant 384 : index
    %338 = vector.load %arg4[%c0_267, %c384_268] : memref<32x512xf32, #tpu.memory_space<vmem>>, vector<16x128xf32>
    tpu.vector_store %arg4[%c0_267, %c384_268], %337 {strides = array<i32>} : memref<32x512xf32, #tpu.memory_space<vmem>>, vector<16x128xf32>,
    %c1192_269 = arith.constant 1192 : index
    %c0_270 = arith.constant 0 : index
    %339 = vector.load %arg2[%c1192_269, %c0_270] : memref<1216x256xf32, #tpu.memory_space<vmem>>, vector<1x256xf32>
    %c1193_271 = arith.constant 1193 : index
    %c0_272 = arith.constant 0 : index
    %340 = vector.load %arg2[%c1193_271, %c0_272] : memref<1216x256xf32, #tpu.memory_space<vmem>>, vector<1x256xf32>
    %cst_273 = arith.constant 0.000000e+00 : f32
    %341 = vector.broadcast %cst_273 : f32 to vector<8x256xf32>
    %c0_274 = arith.constant 0 : index
    %c111_275 = arith.constant 111 : index
    %342 = vector.load %arg4[%c0_274, %c111_275] : memref<32x512xf32, #tpu.memory_space<vmem>>, vector<16x256xf32>
    %343 = vector.broadcast %339 : vector<1x256xf32> to vector<16x256xf32>
    %344 = arith.mulf %342, %343 : vector<16x256xf32>
    %c360 = arith.constant 360 : index
    %c0_276 = arith.constant 0 : index
    %345 = vector.load %arg2[%c360, %c0_276] : memref<1216x256xf32, #tpu.memory_space<vmem>>, vector<8x16xf32>
    %cst_277 = arith.constant dense<0.000000e+00> : vector<8x256xf32>
    %346 = tpu.matmul %345, %344, %cst_277 {dimension_numbers = #tpu.dot_dimension_numbers<[1], [0], [0], [1], [0, 0, 1, 1], [], []>} : vector<8x16xf32>, vector<16x256xf32>, vector<8x256xf32> -> vector<8x256xf32>
    %347 = arith.addf %341, %346 : vector<8x256xf32>
    %c0_278 = arith.constant 0 : index
    %c112_279 = arith.constant 112 : index
    %348 = vector.load %arg4[%c0_278, %c112_279] : memref<32x512xf32, #tpu.memory_space<vmem>>, vector<16x256xf32>
    %c368 = arith.constant 368 : index
    %c0_280 = arith.constant 0 : index
    %349 = vector.load %arg2[%c368, %c0_280] : memref<1216x256xf32, #tpu.memory_space<vmem>>, vector<8x16xf32>
    %cst_281 = arith.constant dense<0.000000e+00> : vector<8x256xf32>
    %350 = tpu.matmul %349, %348, %cst_281 {dimension_numbers = #tpu.dot_dimension_numbers<[1], [0], [0], [1], [0, 0, 1, 1], [], []>} : vector<8x16xf32>, vector<16x256xf32>, vector<8x256xf32> -> vector<8x256xf32>
    %351 = arith.addf %347, %350 : vector<8x256xf32>
    %c0_282 = arith.constant 0 : index
    %c113_283 = arith.constant 113 : index
    %352 = vector.load %arg4[%c0_282, %c113_283] : memref<32x512xf32, #tpu.memory_space<vmem>>, vector<16x256xf32>
    %353 = vector.broadcast %340 : vector<1x256xf32> to vector<16x256xf32>
    %354 = arith.mulf %352, %353 : vector<16x256xf32>
    %c376 = arith.constant 376 : index
    %c0_284 = arith.constant 0 : index
    %355 = vector.load %arg2[%c376, %c0_284] : memref<1216x256xf32, #tpu.memory_space<vmem>>, vector<8x16xf32>
    %cst_285 = arith.constant dense<0.000000e+00> : vector<8x256xf32>
    %356 = tpu.matmul %355, %354, %cst_285 {dimension_numbers = #tpu.dot_dimension_numbers<[1], [0], [0], [1], [0, 0, 1, 1], [], []>} : vector<8x16xf32>, vector<16x256xf32>, vector<8x256xf32> -> vector<8x256xf32>
    %357 = arith.addf %351, %356 : vector<8x256xf32>
    %c0_286 = arith.constant 0 : index
    %c127_287 = arith.constant 127 : index
    %358 = vector.load %arg4[%c0_286, %c127_287] : memref<32x512xf32, #tpu.memory_space<vmem>>, vector<16x256xf32>
    %359 = vector.broadcast %339 : vector<1x256xf32> to vector<16x256xf32>
    %360 = arith.mulf %358, %359 : vector<16x256xf32>
    %c384_288 = arith.constant 384 : index
    %c0_289 = arith.constant 0 : index
    %361 = vector.load %arg2[%c384_288, %c0_289] : memref<1216x256xf32, #tpu.memory_space<vmem>>, vector<8x16xf32>
    %cst_290 = arith.constant dense<0.000000e+00> : vector<8x256xf32>
    %362 = tpu.matmul %361, %360, %cst_290 {dimension_numbers = #tpu.dot_dimension_numbers<[1], [0], [0], [1], [0, 0, 1, 1], [], []>} : vector<8x16xf32>, vector<16x256xf32>, vector<8x256xf32> -> vector<8x256xf32>
    %363 = arith.addf %357, %362 : vector<8x256xf32>
    %c0_291 = arith.constant 0 : index
    %c128_292 = arith.constant 128 : index
    %364 = vector.load %arg4[%c0_291, %c128_292] : memref<32x512xf32, #tpu.memory_space<vmem>>, vector<16x256xf32>
    %c392 = arith.constant 392 : index
    %c0_293 = arith.constant 0 : index
    %365 = vector.load %arg2[%c392, %c0_293] : memref<1216x256xf32, #tpu.memory_space<vmem>>, vector<8x16xf32>
    %cst_294 = arith.constant dense<0.000000e+00> : vector<8x256xf32>
    %366 = tpu.matmul %365, %364, %cst_294 {dimension_numbers = #tpu.dot_dimension_numbers<[1], [0], [0], [1], [0, 0, 1, 1], [], []>} : vector<8x16xf32>, vector<16x256xf32>, vector<8x256xf32> -> vector<8x256xf32>
    %367 = arith.addf %363, %366 : vector<8x256xf32>
    %c0_295 = arith.constant 0 : index
    %c129_296 = arith.constant 129 : index
    %368 = vector.load %arg4[%c0_295, %c129_296] : memref<32x512xf32, #tpu.memory_space<vmem>>, vector<16x256xf32>
    %369 = vector.broadcast %340 : vector<1x256xf32> to vector<16x256xf32>
    %370 = arith.mulf %368, %369 : vector<16x256xf32>
    %c400 = arith.constant 400 : index
    %c0_297 = arith.constant 0 : index
    %371 = vector.load %arg2[%c400, %c0_297] : memref<1216x256xf32, #tpu.memory_space<vmem>>, vector<8x16xf32>
    %cst_298 = arith.constant dense<0.000000e+00> : vector<8x256xf32>
    %372 = tpu.matmul %371, %370, %cst_298 {dimension_numbers = #tpu.dot_dimension_numbers<[1], [0], [0], [1], [0, 0, 1, 1], [], []>} : vector<8x16xf32>, vector<16x256xf32>, vector<8x256xf32> -> vector<8x256xf32>
    %373 = arith.addf %367, %372 : vector<8x256xf32>
    %c0_299 = arith.constant 0 : index
    %c143_300 = arith.constant 143 : index
    %374 = vector.load %arg4[%c0_299, %c143_300] : memref<32x512xf32, #tpu.memory_space<vmem>>, vector<16x256xf32>
    %375 = vector.broadcast %339 : vector<1x256xf32> to vector<16x256xf32>
    %376 = arith.mulf %374, %375 : vector<16x256xf32>
    %c408 = arith.constant 408 : index
    %c0_301 = arith.constant 0 : index
    %377 = vector.load %arg2[%c408, %c0_301] : memref<1216x256xf32, #tpu.memory_space<vmem>>, vector<8x16xf32>
    %cst_302 = arith.constant dense<0.000000e+00> : vector<8x256xf32>
    %378 = tpu.matmul %377, %376, %cst_302 {dimension_numbers = #tpu.dot_dimension_numbers<[1], [0], [0], [1], [0, 0, 1, 1], [], []>} : vector<8x16xf32>, vector<16x256xf32>, vector<8x256xf32> -> vector<8x256xf32>
    %379 = arith.addf %373, %378 : vector<8x256xf32>
    %c0_303 = arith.constant 0 : index
    %c144_304 = arith.constant 144 : index
    %380 = vector.load %arg4[%c0_303, %c144_304] : memref<32x512xf32, #tpu.memory_space<vmem>>, vector<16x256xf32>
    %c416 = arith.constant 416 : index
    %c0_305 = arith.constant 0 : index
    %381 = vector.load %arg2[%c416, %c0_305] : memref<1216x256xf32, #tpu.memory_space<vmem>>, vector<8x16xf32>
    %cst_306 = arith.constant dense<0.000000e+00> : vector<8x256xf32>
    %382 = tpu.matmul %381, %380, %cst_306 {dimension_numbers = #tpu.dot_dimension_numbers<[1], [0], [0], [1], [0, 0, 1, 1], [], []>} : vector<8x16xf32>, vector<16x256xf32>, vector<8x256xf32> -> vector<8x256xf32>
    %383 = arith.addf %379, %382 : vector<8x256xf32>
    %c0_307 = arith.constant 0 : index
    %c145_308 = arith.constant 145 : index
    %384 = vector.load %arg4[%c0_307, %c145_308] : memref<32x512xf32, #tpu.memory_space<vmem>>, vector<16x256xf32>
    %385 = vector.broadcast %340 : vector<1x256xf32> to vector<16x256xf32>
    %386 = arith.mulf %384, %385 : vector<16x256xf32>
    %c424 = arith.constant 424 : index
    %c0_309 = arith.constant 0 : index
    %387 = vector.load %arg2[%c424, %c0_309] : memref<1216x256xf32, #tpu.memory_space<vmem>>, vector<8x16xf32>
    %cst_310 = arith.constant dense<0.000000e+00> : vector<8x256xf32>
    %388 = tpu.matmul %387, %386, %cst_310 {dimension_numbers = #tpu.dot_dimension_numbers<[1], [0], [0], [1], [0, 0, 1, 1], [], []>} : vector<8x16xf32>, vector<16x256xf32>, vector<8x256xf32> -> vector<8x256xf32>
    %389 = arith.addf %383, %388 : vector<8x256xf32>
    %c360_311 = arith.constant 360 : index
    %c16_312 = arith.constant 16 : index
    %390 = vector.load %arg2[%c360_311, %c16_312] : memref<1216x256xf32, #tpu.memory_space<vmem>>, vector<8x1xf32>
    %391 = vector.broadcast %390 : vector<8x1xf32> to vector<8x256xf32>
    %392 = arith.addf %389, %391 : vector<8x256xf32>
    %cst_313 = arith.constant 0.00999999977 : f32
    %393 = vector.broadcast %cst_313 : f32 to vector<8x256xf32>
    %394 = arith.mulf %393, %392 : vector<8x256xf32>
    %395 = arith.maximumf %392, %394 : vector<8x256xf32>
    %c0_314 = arith.constant 0 : index
    %c128_315 = arith.constant 128 : index
    %396 = vector.load %arg4[%c0_314, %c128_315] : memref<32x512xf32, #tpu.memory_space<vmem>>, vector<8x256xf32>
    tpu.vector_store %arg4[%c0_314, %c128_315], %395 {strides = array<i32>} : memref<32x512xf32, #tpu.memory_space<vmem>>, vector<8x256xf32>,
    %c8_316 = arith.constant 8 : index
    %c128_317 = arith.constant 128 : index
    %397 = vector.load %arg4[%c8_316, %c128_317] : memref<32x512xf32, #tpu.memory_space<vmem>>, vector<4x256xf32>
    tpu.vector_store %arg4[%c8_316, %c128_317], %63 {strides = array<i32>} : memref<32x512xf32, #tpu.memory_space<vmem>>, vector<4x256xf32>,
    %c12 = arith.constant 12 : index
    %c128_318 = arith.constant 128 : index
    %398 = vector.load %arg4[%c12, %c128_318] : memref<32x512xf32, #tpu.memory_space<vmem>>, vector<3x256xf32>
    tpu.vector_store %arg4[%c12, %c128_318], %3 {strides = array<i32>} : memref<32x512xf32, #tpu.memory_space<vmem>>, vector<3x256xf32>,
    %cst_319 = arith.constant 0.000000e+00 : f32
    %399 = vector.broadcast %cst_319 : f32 to vector<15x128xf32>
    %c0_320 = arith.constant 0 : index
    %c384_321 = arith.constant 384 : index
    %400 = vector.load %arg4[%c0_320, %c384_321] : memref<32x512xf32, #tpu.memory_space<vmem>>, vector<15x128xf32>
    tpu.vector_store %arg4[%c0_320, %c384_321], %399 {strides = array<i32>} : memref<32x512xf32, #tpu.memory_space<vmem>>, vector<15x128xf32>,
    %c1192_322 = arith.constant 1192 : index
    %c0_323 = arith.constant 0 : index
    %401 = vector.load %arg2[%c1192_322, %c0_323] : memref<1216x256xf32, #tpu.memory_space<vmem>>, vector<1x256xf32>
    %c1193_324 = arith.constant 1193 : index
    %c0_325 = arith.constant 0 : index
    %402 = vector.load %arg2[%c1193_324, %c0_325] : memref<1216x256xf32, #tpu.memory_space<vmem>>, vector<1x256xf32>
    %cst_326 = arith.constant 0.000000e+00 : f32
    %403 = vector.broadcast %cst_326 : f32 to vector<8x256xf32>
    %c0_327 = arith.constant 0 : index
    %c111_328 = arith.constant 111 : index
    %404 = vector.load %arg4[%c0_327, %c111_328] : memref<32x512xf32, #tpu.memory_space<vmem>>, vector<15x256xf32>
    %405 = vector.broadcast %401 : vector<1x256xf32> to vector<15x256xf32>
    %406 = arith.mulf %404, %405 : vector<15x256xf32>
    %c576 = arith.constant 576 : index
    %c0_329 = arith.constant 0 : index
    %407 = vector.load %arg2[%c576, %c0_329] : memref<1216x256xf32, #tpu.memory_space<vmem>>, vector<8x15xf32>
    %cst_330 = arith.constant dense<0.000000e+00> : vector<8x256xf32>
    %408 = tpu.matmul %407, %406, %cst_330 {dimension_numbers = #tpu.dot_dimension_numbers<[1], [0], [0], [1], [0, 0, 1, 1], [], []>} : vector<8x15xf32>, vector<15x256xf32>, vector<8x256xf32> -> vector<8x256xf32>
    %409 = arith.addf %403, %408 : vector<8x256xf32>
    %c0_331 = arith.constant 0 : index
    %c112_332 = arith.constant 112 : index
    %410 = vector.load %arg4[%c0_331, %c112_332] : memref<32x512xf32, #tpu.memory_space<vmem>>, vector<15x256xf32>
    %c584 = arith.constant 584 : index
    %c0_333 = arith.constant 0 : index
    %411 = vector.load %arg2[%c584, %c0_333] : memref<1216x256xf32, #tpu.memory_space<vmem>>, vector<8x15xf32>
    %cst_334 = arith.constant dense<0.000000e+00> : vector<8x256xf32>
    %412 = tpu.matmul %411, %410, %cst_334 {dimension_numbers = #tpu.dot_dimension_numbers<[1], [0], [0], [1], [0, 0, 1, 1], [], []>} : vector<8x15xf32>, vector<15x256xf32>, vector<8x256xf32> -> vector<8x256xf32>
    %413 = arith.addf %409, %412 : vector<8x256xf32>
    %c0_335 = arith.constant 0 : index
    %c113_336 = arith.constant 113 : index
    %414 = vector.load %arg4[%c0_335, %c113_336] : memref<32x512xf32, #tpu.memory_space<vmem>>, vector<15x256xf32>
    %415 = vector.broadcast %402 : vector<1x256xf32> to vector<15x256xf32>
    %416 = arith.mulf %414, %415 : vector<15x256xf32>
    %c592 = arith.constant 592 : index
    %c0_337 = arith.constant 0 : index
    %417 = vector.load %arg2[%c592, %c0_337] : memref<1216x256xf32, #tpu.memory_space<vmem>>, vector<8x15xf32>
    %cst_338 = arith.constant dense<0.000000e+00> : vector<8x256xf32>
    %418 = tpu.matmul %417, %416, %cst_338 {dimension_numbers = #tpu.dot_dimension_numbers<[1], [0], [0], [1], [0, 0, 1, 1], [], []>} : vector<8x15xf32>, vector<15x256xf32>, vector<8x256xf32> -> vector<8x256xf32>
    %419 = arith.addf %413, %418 : vector<8x256xf32>
    %c0_339 = arith.constant 0 : index
    %c127_340 = arith.constant 127 : index
    %420 = vector.load %arg4[%c0_339, %c127_340] : memref<32x512xf32, #tpu.memory_space<vmem>>, vector<15x256xf32>
    %421 = vector.broadcast %401 : vector<1x256xf32> to vector<15x256xf32>
    %422 = arith.mulf %420, %421 : vector<15x256xf32>
    %c600 = arith.constant 600 : index
    %c0_341 = arith.constant 0 : index
    %423 = vector.load %arg2[%c600, %c0_341] : memref<1216x256xf32, #tpu.memory_space<vmem>>, vector<8x15xf32>
    %cst_342 = arith.constant dense<0.000000e+00> : vector<8x256xf32>
    %424 = tpu.matmul %423, %422, %cst_342 {dimension_numbers = #tpu.dot_dimension_numbers<[1], [0], [0], [1], [0, 0, 1, 1], [], []>} : vector<8x15xf32>, vector<15x256xf32>, vector<8x256xf32> -> vector<8x256xf32>
    %425 = arith.addf %419, %424 : vector<8x256xf32>
    %c0_343 = arith.constant 0 : index
    %c128_344 = arith.constant 128 : index
    %426 = vector.load %arg4[%c0_343, %c128_344] : memref<32x512xf32, #tpu.memory_space<vmem>>, vector<15x256xf32>
    %c608 = arith.constant 608 : index
    %c0_345 = arith.constant 0 : index
    %427 = vector.load %arg2[%c608, %c0_345] : memref<1216x256xf32, #tpu.memory_space<vmem>>, vector<8x15xf32>
    %cst_346 = arith.constant dense<0.000000e+00> : vector<8x256xf32>
    %428 = tpu.matmul %427, %426, %cst_346 {dimension_numbers = #tpu.dot_dimension_numbers<[1], [0], [0], [1], [0, 0, 1, 1], [], []>} : vector<8x15xf32>, vector<15x256xf32>, vector<8x256xf32> -> vector<8x256xf32>
    %429 = arith.addf %425, %428 : vector<8x256xf32>
    %c0_347 = arith.constant 0 : index
    %c129_348 = arith.constant 129 : index
    %430 = vector.load %arg4[%c0_347, %c129_348] : memref<32x512xf32, #tpu.memory_space<vmem>>, vector<15x256xf32>
    %431 = vector.broadcast %402 : vector<1x256xf32> to vector<15x256xf32>
    %432 = arith.mulf %430, %431 : vector<15x256xf32>
    %c616 = arith.constant 616 : index
    %c0_349 = arith.constant 0 : index
    %433 = vector.load %arg2[%c616, %c0_349] : memref<1216x256xf32, #tpu.memory_space<vmem>>, vector<8x15xf32>
    %cst_350 = arith.constant dense<0.000000e+00> : vector<8x256xf32>
    %434 = tpu.matmul %433, %432, %cst_350 {dimension_numbers = #tpu.dot_dimension_numbers<[1], [0], [0], [1], [0, 0, 1, 1], [], []>} : vector<8x15xf32>, vector<15x256xf32>, vector<8x256xf32> -> vector<8x256xf32>
    %435 = arith.addf %429, %434 : vector<8x256xf32>
    %c0_351 = arith.constant 0 : index
    %c143_352 = arith.constant 143 : index
    %436 = vector.load %arg4[%c0_351, %c143_352] : memref<32x512xf32, #tpu.memory_space<vmem>>, vector<15x256xf32>
    %437 = vector.broadcast %401 : vector<1x256xf32> to vector<15x256xf32>
    %438 = arith.mulf %436, %437 : vector<15x256xf32>
    %c624 = arith.constant 624 : index
    %c0_353 = arith.constant 0 : index
    %439 = vector.load %arg2[%c624, %c0_353] : memref<1216x256xf32, #tpu.memory_space<vmem>>, vector<8x15xf32>
    %cst_354 = arith.constant dense<0.000000e+00> : vector<8x256xf32>
    %440 = tpu.matmul %439, %438, %cst_354 {dimension_numbers = #tpu.dot_dimension_numbers<[1], [0], [0], [1], [0, 0, 1, 1], [], []>} : vector<8x15xf32>, vector<15x256xf32>, vector<8x256xf32> -> vector<8x256xf32>
    %441 = arith.addf %435, %440 : vector<8x256xf32>
    %c0_355 = arith.constant 0 : index
    %c144_356 = arith.constant 144 : index
    %442 = vector.load %arg4[%c0_355, %c144_356] : memref<32x512xf32, #tpu.memory_space<vmem>>, vector<15x256xf32>
    %c632 = arith.constant 632 : index
    %c0_357 = arith.constant 0 : index
    %443 = vector.load %arg2[%c632, %c0_357] : memref<1216x256xf32, #tpu.memory_space<vmem>>, vector<8x15xf32>
    %cst_358 = arith.constant dense<0.000000e+00> : vector<8x256xf32>
    %444 = tpu.matmul %443, %442, %cst_358 {dimension_numbers = #tpu.dot_dimension_numbers<[1], [0], [0], [1], [0, 0, 1, 1], [], []>} : vector<8x15xf32>, vector<15x256xf32>, vector<8x256xf32> -> vector<8x256xf32>
    %445 = arith.addf %441, %444 : vector<8x256xf32>
    %c0_359 = arith.constant 0 : index
    %c145_360 = arith.constant 145 : index
    %446 = vector.load %arg4[%c0_359, %c145_360] : memref<32x512xf32, #tpu.memory_space<vmem>>, vector<15x256xf32>
    %447 = vector.broadcast %402 : vector<1x256xf32> to vector<15x256xf32>
    %448 = arith.mulf %446, %447 : vector<15x256xf32>
    %c640 = arith.constant 640 : index
    %c0_361 = arith.constant 0 : index
    %449 = vector.load %arg2[%c640, %c0_361] : memref<1216x256xf32, #tpu.memory_space<vmem>>, vector<8x15xf32>
    %cst_362 = arith.constant dense<0.000000e+00> : vector<8x256xf32>
    %450 = tpu.matmul %449, %448, %cst_362 {dimension_numbers = #tpu.dot_dimension_numbers<[1], [0], [0], [1], [0, 0, 1, 1], [], []>} : vector<8x15xf32>, vector<15x256xf32>, vector<8x256xf32> -> vector<8x256xf32>
    %451 = arith.addf %445, %450 : vector<8x256xf32>
    %c576_363 = arith.constant 576 : index
    %c15_364 = arith.constant 15 : index
    %452 = vector.load %arg2[%c576_363, %c15_364] : memref<1216x256xf32, #tpu.memory_space<vmem>>, vector<8x1xf32>
    %453 = vector.broadcast %452 : vector<8x1xf32> to vector<8x256xf32>
    %454 = arith.addf %451, %453 : vector<8x256xf32>
    %cst_365 = arith.constant 0.00999999977 : f32
    %455 = vector.broadcast %cst_365 : f32 to vector<8x256xf32>
    %456 = arith.mulf %455, %454 : vector<8x256xf32>
    %457 = arith.maximumf %454, %456 : vector<8x256xf32>
    %c0_366 = arith.constant 0 : index
    %c0_367 = arith.constant 0 : index
    %c0_368 = arith.constant 0 : index
    %458 = vector.load %arg3[%c0_366, %c0_367, %c0_368] : memref<1x8x256xf32, #tpu.memory_space<vmem>>, vector<1x8x256xf32>
    %459 = vector.shape_cast %458 : vector<1x8x256xf32> to vector<8x256xf32>
    %460 = vector.shape_cast %457 : vector<8x256xf32> to vector<1x8x256xf32>
    tpu.vector_store %arg3[%c0_366, %c0_367, %c0_368], %460 {strides = array<i32>} : memref<1x8x256xf32, #tpu.memory_space<vmem>>, vector<1x8x256xf32>,
    return
  }
  func.func @transform_0(%arg0: i32) -> (i32, i32, i32) {
    %c0_i32 = arith.constant 0 : i32
    %c0_i32_0 = arith.constant 0 : i32
    %c0_i32_1 = arith.constant 0 : i32
    return %arg0, %c0_i32, %c0_i32_0 : i32, i32, i32
  }
  func.func @transform_1(%arg0: i32) -> (i32, i32) {
    %c0_i32 = arith.constant 0 : i32
    %c0_i32_0 = arith.constant 0 : i32
    %c0_i32_1 = arith.constant 0 : i32
    return %c0_i32, %c0_i32_0 : i32, i32
  }
  func.func @transform_2(%arg0: i32) -> (i32, i32, i32) {
    %c0_i32 = arith.constant 0 : i32
    %c0_i32_0 = arith.constant 0 : i32
    %c0_i32_1 = arith.constant 0 : i32
    return %arg0, %c0_i32, %c0_i32_0 : i32, i32, i32
  }
}

</mosaic_0001>

<llo_original>
// kernel: fwd.1
$region0: #{fwd.1}
  #allocation0 [shape = 'u32[]', space=smem, size = 0x4, offset = 0x4, fixed_abs, tag = 'smem constant byte address 0x4 - core index']
  #allocation1 [shape = 'u32[144,128]{1,0:T(1,128)}', space=vmem, size = 0x12000, scoped, tag = 'internal scratch']
  #allocation2 [shape = 'f32[32,512]{1,0:T(8,128)}', space=vmem, size = 0x10000, scoped, tag = 'scratch operand']
  %s0 = inlined_call_operand.vmem [shape: f32[2,3,256], index: 0, kind: input, shape index: {}]
  %s1 = inlined_call_operand.hbm [shape: f32[1216,256], index: 1, kind: input, shape index: {}]
  %s2 = inlined_call_operand.vmem [shape: f32[2,8,256], index: 2, kind: output, shape index: {}]
  %s3 = sld [smem:[#allocation0]]
  $region45: #{fwd.1} parent=0
    _
  %s5 = ssub.s32 1, %s3
  %s6 = scalar_select 0, %s5, %s3
  $region1: #{fwd.1} parent=0
    #allocation3 [shape = 'u8[1245184]{0}', space=vmem, size = 0x130000, scoped, tag = 'input window, operand 1, single buffered']
    #allocation4 [shape = 's32[2]{0}', space=sflag, size = 0x8, scoped, tag = 'scoped memory for fwd.1']
    %7 = vsyncpa [#allocation4], 0
    loop: start=0, step=1, limit=4
    $region2: #{fwd.1} parent=1 // loop_pre_header
      _
    $region3: #{fwd.1} parent=1 // loop_header
      %s9 = sphi 0, %s13
      %p10 = scmp.ge.s32.totalorder %s9, 4
      %s19 = sphi 0, %s21
      %s22 = sphi 0, %s19
      %s23 = sphi 0, %s22
      %s39 = sphi 0, %s23
      %s43 = sphi 0, %s43
      %s45 = sphi 0, %s43
      %s46 = sphi 0, %s45
      %s60 = sphi 0, %s46
      %s66 = sphi 0, %s68
      %s69 = sphi 0, %s66
      %s70 = sphi 0, %s69
      %s86 = sphi 0, %s70
    $region4: #{fwd.1} parent=1 // loop_header_branch
      %12 = sbr.rel (%p10) target = $region8
    $region5: #{fwd.1} parent=1 // loop_body
      %s14 = ssub.s32 %s9, 1
      %s15 = ssub.s32 %s9, 2
      %s16 = sadd.s32 %s9, 1
      %s17 = ssub.s32 %s9, %s16
      %p18 = scmp.eq.s32.totalorder %s17, 0
      %s20 = sadd.s32 %s19, 1
      %s21 = scalar_select %p18, %s19, %s20
      %p24 = pneg %p18
      %p25 = scmp.eq.s32.totalorder %s9, 1
      %p26 = por %p24, %p25
      %p27 = scmp.ne.s32.totalorder %s19, %s22
      %p28 = scmp.eq.s32.totalorder %s9, 0
      %p29 = por %p27, %p28
      %p30 = scmp.ne.s32.totalorder %s19, %s22
      %p31 = scmp.eq.s32.totalorder %s14, 1
      %p32 = por %p30, %p31
      %p33 = scmp.ne.s32.totalorder %s22, %s23
      %p34 = scmp.eq.s32.totalorder %s14, 0
      %p35 = por %p33, %p34
      %p36 = scmp.ne.s32.totalorder %s22, %s23
      %p37 = scmp.eq.s32.totalorder %s15, 1
      %p38 = por %p36, %p37
      %p40 = scmp.ne.s32.totalorder %s23, %s39
      %p41 = scmp.eq.s32.totalorder %s15, 0
      %p42 = por %p40, %p41
      %s44 = sadd.s32 %s43, 1
      %p47 = scmp.eq.s32.totalorder %s9, 1
      %p48 = scmp.ne.s32.totalorder %s43, %s45
      %p49 = scmp.eq.s32.totalorder %s9, 0
      %p50 = por %p48, %p49
      %p51 = scmp.ne.s32.totalorder %s43, %s45
      %p52 = scmp.eq.s32.totalorder %s14, 1
      %p53 = por %p51, %p52
      %p54 = scmp.ne.s32.totalorder %s45, %s46
      %p55 = scmp.eq.s32.totalorder %s14, 0
      %p56 = por %p54, %p55
      %p57 = scmp.ne.s32.totalorder %s45, %s46
      %p58 = scmp.eq.s32.totalorder %s15, 1
      %p59 = por %p57, %p58
      %p61 = scmp.ne.s32.totalorder %s46, %s60
      %p62 = scmp.eq.s32.totalorder %s15, 0
      %p63 = por %p61, %p62
      %s64 = ssub.s32 %s9, %s16
      %p65 = scmp.eq.s32.totalorder %s64, 0
      %s67 = sadd.s32 %s66, 1
      %s68 = scalar_select %p65, %s66, %s67
      %p71 = pneg %p65
      %p72 = scmp.eq.s32.totalorder %s9, 1
      %p73 = por %p71, %p72
      %p74 = scmp.ne.s32.totalorder %s66, %s69
      %p75 = scmp.eq.s32.totalorder %s9, 0
      %p76 = por %p74, %p75
      %p77 = scmp.ne.s32.totalorder %s66, %s69
      %p78 = scmp.eq.s32.totalorder %s14, 1
      %p79 = por %p77, %p78
      %p80 = scmp.ne.s32.totalorder %s69, %s70
      %p81 = scmp.eq.s32.totalorder %s14, 0
      %p82 = por %p80, %p81
      %p83 = scmp.ne.s32.totalorder %s69, %s70
      %p84 = scmp.eq.s32.totalorder %s15, 1
      %p85 = por %p83, %p84
      %p87 = scmp.ne.s32.totalorder %s70, %s86
      %p88 = scmp.eq.s32.totalorder %s15, 0
      %p89 = por %p87, %p88
      %p90 = scmp.le.s32.totalorder 1, %s9
      %p91 = scmp.lt.s32.totalorder %s9, 3
      %p92 = pnand %p90, %p91
      %p93 = pneg %p92
      // Predicated region
      $region9: #{fwd.1} parent=5 // pred_check
        _
      $region10: #{fwd.1} parent=5 // pred_check_branch
        %95 = sbr.rel (%p92) target = $region12
      $region11: #{fwd.1} parent=5 // pred_region
        %s96 = ssub.s32 %s9, 1
        // Predicated region
        $region13: #{fwd.1} parent=11 // pred_check
          %p97 = pneg %p56
        $region14: #{fwd.1} parent=11 // pred_check_branch
          %99 = sbr.rel (%p97) target = $region16
        $region15: #{fwd.1} parent=11 // pred_region
          %s101 = ssub.s32 38912, 38912
          %102 = vsyncadd [#allocation4], %s101
          %s103 = sshll.u32 [#allocation3], 4
          %s104 = int_to_ptr.vmem [resolvable:$true] %s103
          %109 = dma.hbm_to_vmem [thread:$0]  %s1, 38912, %s104, [#allocation4], 256, 256, 16
        $region16: #{fwd.1} parent=11 // pred_fallthru
          _
      $region12: #{fwd.1} parent=5 // pred_fallthru
        _
      %p110 = scmp.lt.s32.totalorder %s9, 2
      // Predicated region
      $region17: #{fwd.1} parent=5 // pred_check
        %p111 = pneg %p110
      $region18: #{fwd.1} parent=5 // pred_check_branch
        %113 = sbr.rel (%p111) target = $region20
      $region19: #{fwd.1} parent=5 // pred_region
        // Predicated region
        $region21: #{fwd.1} parent=19 // pred_check
          %p114 = pneg %p29
        $region22: #{fwd.1} parent=19 // pred_check_branch
          %116 = sbr.rel (%p114) target = $region24
        $region23: #{fwd.1} parent=19 // pred_region
          %p117 = scmp.lt.s32.totalorder %s9, 1
          %s118 = scalar_select %p117, %s9, 1
          %s119 = smul.addr %s118, 2
          %s120 = smul.addr %s119, 4
          %s121 = scalar_lea.vmem %s0, %s120
        $region24: #{fwd.1} parent=19 // pred_fallthru
          _
      $region20: #{fwd.1} parent=5 // pred_fallthru
        _
      %p122 = scmp.le.s32.totalorder 1, %s9
      %p123 = scmp.lt.s32.totalorder %s9, 3
      %p124 = pnand %p122, %p123
      %p125 = pneg %p124
      // Predicated region
      $region25: #{fwd.1} parent=5 // pred_check
        _
      $region26: #{fwd.1} parent=5 // pred_check_branch
        %127 = sbr.rel (%p124) target = $region28
      $region27: #{fwd.1} parent=5 // pred_region
        %s128 = ssub.s32 %s9, 1
        // Predicated region
        $region29: #{fwd.1} parent=27 // pred_check
          %p129 = pneg %p56
        $region30: #{fwd.1} parent=27 // pred_check_branch
          %131 = sbr.rel (%p129) target = $region32
        $region31: #{fwd.1} parent=27 // pred_region
          %132 = dma.done [#allocation4], 38912
        $region32: #{fwd.1} parent=27 // pred_fallthru
          _
        %p133 = scmp.lt.s32.totalorder %s14, 1
        %s134 = scalar_select %p133, %s14, 1
        %s135 = smul.addr %s134, 2
        %s136 = smul.addr %s135, 4
        %s137 = scalar_lea.vmem %s0, %s136
        %p138 = pneg %p35
        %p139 = pneg %p32
        %p140 = pneg %p56
        %p141 = pneg %p53
        %p142 = pneg %p82
        %p143 = pneg %p79
        %p144 = scmp.lt.s32.totalorder %s14, 1
        %s145 = scalar_select %p144, %s14, 1
        %s146 = smul.addr %s145, 2
        %s147 = smul.addr %s146, 8
        %s148 = scalar_lea.vmem %s2, %s147
        %p149 = scmp.lt.s32.totalorder %s14, 1
        %s150 = scalar_select %p149, %s14, 1
        %s151 = smul.addr %s150, 2
        %s152 = smul.addr %s151, 4
        %s153 = scalar_lea.vmem %s0, %s152
        %p154 = scmp.lt.s32.totalorder %s14, 1
        %s155 = scalar_select %p154, %s14, 1
        %s156 = smul.addr %s155, 2
        %s157 = smul.addr %s156, 8
        %s158 = scalar_lea.vmem %s2, %s157
        %159 = vst [vmem:[#allocation2] sm:$0xff] 0.0
        %160 = vst [vmem:[#allocation2 + $0x20] sm:$0xff] 0.0
        %161 = vst [vmem:[#allocation2 + $0x40] sm:$0xff] 0.0
        %162 = vst [vmem:[#allocation2 + $0x60] sm:$0xff] 0.0
        %v163 = vld [vmem:[%s153] sm:$0x77]
        %v165 = vcombine.high %v163, %v163
        %167 = vst [vmem:[#allocation2 + $0x8] sm:$0x7] %v163
        %168 = vst [vmem:[#allocation2 + $0x10] sm:$0x7] %v165
        %169 = vst [vmem:[#allocation2 + $0x18] sm:$0x7] 0.0
        %s170 = scalar_lea.vmem [#allocation3], 2384
        %v171 = vld [vmem:[%s170] ss:$8 sm:$0x3]
        %s172 = scalar_lea.vmem [#allocation3], 2385
        %v173 = vld [vmem:[%s172] ss:$8 sm:$0x3]
        %v174 = vld [vmem:[#allocation2] sm:$0x7]
        %v175 = vld [vmem:[#allocation2 + $0x8] sm:$0x7]
        %v176 = vld [vmem:[#allocation2 + $0x10] sm:$0x7]
        %v178 = vlaneseq
        %v179 = vshrl.u32 %v178, 7
        %v180 = vsub.s32 0, %v179
        %v181 = vrot.slane %v171, %v180
        %v182 = vlaneseq
        %v183 = vshrl.u32 %v182, 7
        %v184 = vsub.s32 1, %v183
        %v185 = vrot.slane %v171, %v184
        %186 = vrot.lane.b32.xlu0 %v181, 111
        %v187 = vpop.permute.xlu0 %186
        %188 = vrot.lane.b32.xlu0 %v185, 111
        %v189 = vpop.permute.xlu0 %188
        %vm190 = vcmask 908288
        %v191 = vsel %vm190, %v187, %v189
        %v195 = vmul.f32 %v174, %v187
        %v196 = vmul.f32 %v175, %v191
        %v197 = vmul.f32 %v176, %v189
        %v198 = vld [vmem:[#allocation3] sm:$0xf]
        %v199 = vld [vmem:[#allocation3 + $0x10] sm:$0xf]
        %203 = vrot.lane.b32.xlu0 %v174, 16
        %v204 = vpop.permute.xlu0 %203
        %205 = vrot.lane.b32.xlu0 %v175, 16
        %v206 = vpop.permute.xlu0 %205
        %207 = vrot.lane.b32.xlu0 %v176, 16
        %v208 = vpop.permute.xlu0 %207
        %vm209 = vcmask 130048
        %v210 = vsel %vm209, %v204, %v206
        %v211 = vsel %vm209, %v206, %v208
        %vm212 = vcmask 23552
        %v214 = vsel %vm212, %v199, 0
        %vm216 = vcmask 1042432
        %v217 = vsel %vm216, %v210, 0
        %v219 = vsel %vm216, %v211, 0
        %221 = vmatprep.subr.mxu0 %v219
        %222 = vmatpush1.msra.mxu0 %v217
        %223 = vmatprep.subr.mxu0 0.0
        %224 = vmatpush1.msra.mxu0 0.0
        %225 = vmatprep.subr.mxu0 0.0
        %226 = vmatpush1.msra.mxu0 0.0
        %227 = vmatprep.subr.mxu0 0.0
        %228 = vmatpush1.msra.mxu0 0.0
        %229 = vmatprep.subr.mxu0 0.0
        %230 = vmatpush1.msra.mxu0 0.0
        %231 = vmatprep.subr.mxu0 0.0
        %232 = vmatpush1.msra.mxu0 0.0
        %233 = vmatprep.subr.mxu0 0.0
        %234 = vmatpush1.msra.mxu0 0.0
        %235 = vmatprep.subr.mxu0 0.0
        %236 = vmatpush1.msra.mxu0 0.0
        %237 = vmatprep.subr.mxu0 0.0
        %238 = vmatpush1.msra.mxu0 0.0
        %239 = vmatprep.subr.mxu0 0.0
        %240 = vmatpush1.msra.mxu0 0.0
        %241 = vmatprep.subr.mxu0 0.0
        %242 = vmatpush1.msra.mxu0 0.0
        %243 = vmatprep.subr.mxu0 0.0
        %244 = vmatpush1.msra.mxu0 0.0
        %245 = vmatprep.subr.mxu0 0.0
        %246 = vmatpush1.msra.mxu0 0.0
        %247 = vmatprep.subr.mxu0 0.0
        %248 = vmatpush1.msra.mxu0 0.0
        %249 = vmatprep.subr.mxu0 0.0
        %250 = vmatpush1.msra.mxu0 0.0
        %251 = vmatprep.subr.mxu0 0.0
        %252 = vmatpush1.msra.mxu0 0.0
        %253 = vmatprep.subr.mxu0 0.0
        %254 = vmatpush1.msra.mxu0 0.0
        %255 = vmatprep.subr.mxu0 0.0
        %256 = vmatpush1.msra.mxu0 0.0
        %257 = vmatprep.subr.mxu0 0.0
        %258 = vmatpush1.msra.mxu0 0.0
        %259 = vmatprep.subr.mxu0 0.0
        %260 = vmatpush1.msra.mxu0 0.0
        %261 = vmatprep.subr.mxu0 0.0
        %262 = vmatpush1.msra.mxu0 0.0
        %263 = vmatprep.subr.mxu0 0.0
        %264 = vmatpush1.msra.mxu0 0.0
        %265 = vmatprep.subr.mxu0 0.0
        %266 = vmatpush1.msra.mxu0 0.0
        %267 = vmatprep.subr.mxu0 0.0
        %268 = vmatpush1.msra.mxu0 0.0
        %269 = vmatprep.subr.mxu0 0.0
        %270 = vmatpush1.msra.mxu0 0.0
        %271 = vmatprep.subr.mxu0 0.0
        %272 = vmatpush1.msra.mxu0 0.0
        %273 = vmatprep.subr.mxu0 0.0
        %274 = vmatpush1.msra.mxu0 0.0
        %275 = vmatprep.subr.mxu0 0.0
        %276 = vmatpush1.msra.mxu0 0.0
        %277 = vmatprep.subr.mxu0 0.0
        %278 = vmatpush1.msra.mxu0 0.0
        %279 = vmatprep.subr.mxu0 0.0
        %280 = vmatpush1.msra.mxu0 0.0
        %281 = vmatprep.subr.mxu0 0.0
        %282 = vmatpush1.msra.mxu0 0.0
        %283 = vmatprep.subr.mxu0 0.0
        %284 = vmatpush1.msra.mxu0 0.0
        %285 = vmatprep.mubr.f32.mxu0 0.0
        %286 = vmatmul.mubr.f32.gmra.mrb[0].mxu0 %v214
        %v287 = vpop.f32.mrb[0].mxu0
        %v288 = vadd.f32 0.0, %v287
        %v289 = vpop.f32.mrb[0].mxu0
        %v290 = vadd.f32 0.0, %v289
        %291 = vdwg.mxu0
        %295 = vrot.lane.b32.xlu0 %v195, 17
        %v296 = vpop.permute.xlu0 %295
        %297 = vrot.lane.b32.xlu0 %v196, 17
        %v298 = vpop.permute.xlu0 %297
        %299 = vrot.lane.b32.xlu0 %v197, 17
        %v300 = vpop.permute.xlu0 %299
        %vm301 = vcmask 138240
        %v302 = vsel %vm301, %v296, %v298
        %v303 = vsel %vm301, %v298, %v300
        %v305 = vsel %vm212, %v198, 0
        %v307 = vsel %vm216, %v302, 0
        %v309 = vsel %vm216, %v303, 0
        %311 = vmatprep.subr.mxu0 %v309
        %312 = vmatpush1.msra.mxu0 %v307
        %313 = vmatprep.subr.mxu0 0.0
        %314 = vmatpush1.msra.mxu0 0.0
        %315 = vmatprep.subr.mxu0 0.0
        %316 = vmatpush1.msra.mxu0 0.0
        %317 = vmatprep.subr.mxu0 0.0
        %318 = vmatpush1.msra.mxu0 0.0
        %319 = vmatprep.subr.mxu0 0.0
        %320 = vmatpush1.msra.mxu0 0.0
        %321 = vmatprep.subr.mxu0 0.0
        %322 = vmatpush1.msra.mxu0 0.0
        %323 = vmatprep.subr.mxu0 0.0
        %324 = vmatpush1.msra.mxu0 0.0
        %325 = vmatprep.subr.mxu0 0.0
        %326 = vmatpush1.msra.mxu0 0.0
        %327 = vmatprep.subr.mxu0 0.0
        %328 = vmatpush1.msra.mxu0 0.0
        %329 = vmatprep.subr.mxu0 0.0
        %330 = vmatpush1.msra.mxu0 0.0
        %331 = vmatprep.subr.mxu0 0.0
        %332 = vmatpush1.msra.mxu0 0.0
        %333 = vmatprep.subr.mxu0 0.0
        %334 = vmatpush1.msra.mxu0 0.0
        %335 = vmatprep.subr.mxu0 0.0
        %336 = vmatpush1.msra.mxu0 0.0
        %337 = vmatprep.subr.mxu0 0.0
        %338 = vmatpush1.msra.mxu0 0.0
        %339 = vmatprep.subr.mxu0 0.0
        %340 = vmatpush1.msra.mxu0 0.0
        %341 = vmatprep.subr.mxu0 0.0
        %342 = vmatpush1.msra.mxu0 0.0
        %343 = vmatprep.subr.mxu0 0.0
        %344 = vmatpush1.msra.mxu0 0.0
        %345 = vmatprep.subr.mxu0 0.0
        %346 = vmatpush1.msra.mxu0 0.0
        %347 = vmatprep.subr.mxu0 0.0
        %348 = vmatpush1.msra.mxu0 0.0
        %349 = vmatprep.subr.mxu0 0.0
        %350 = vmatpush1.msra.mxu0 0.0
        %351 = vmatprep.subr.mxu0 0.0
        %352 = vmatpush1.msra.mxu0 0.0
        %353 = vmatprep.subr.mxu0 0.0
        %354 = vmatpush1.msra.mxu0 0.0
        %355 = vmatprep.subr.mxu0 0.0
        %356 = vmatpush1.msra.mxu0 0.0
        %357 = vmatprep.subr.mxu0 0.0
        %358 = vmatpush1.msra.mxu0 0.0
        %359 = vmatprep.subr.mxu0 0.0
        %360 = vmatpush1.msra.mxu0 0.0
        %361 = vmatprep.subr.mxu0 0.0
        %362 = vmatpush1.msra.mxu0 0.0
        %363 = vmatprep.subr.mxu0 0.0
        %364 = vmatpush1.msra.mxu0 0.0
        %365 = vmatprep.subr.mxu0 0.0
        %366 = vmatpush1.msra.mxu0 0.0
        %367 = vmatprep.subr.mxu0 0.0
        %368 = vmatpush1.msra.mxu0 0.0
        %369 = vmatprep.subr.mxu0 0.0
        %370 = vmatpush1.msra.mxu0 0.0
        %371 = vmatprep.subr.mxu0 0.0
        %372 = vmatpush1.msra.mxu0 0.0
        %373 = vmatprep.subr.mxu0 0.0
        %374 = vmatpush1.msra.mxu0 0.0
        %375 = vmatprep.mubr.f32.mxu0 0.0
        %376 = vmatmul.mubr.f32.gmra.mrb[0].mxu0 %v305
        %v377 = vpop.f32.mrb[0].mxu0
        %v378 = vadd.f32 %v288, %v377
        %v379 = vpop.f32.mrb[0].mxu0
        %v380 = vadd.f32 %v290, %v379
        %381 = vdwg.mxu0
        %v383 = vlaneseq
        %v384 = vshrl.u32 %v383, 7
        %v385 = vsub.s32 0, %v384
        %v386 = vrot.slane %v173, %v385
        %v387 = vlaneseq
        %v388 = vshrl.u32 %v387, 7
        %v389 = vsub.s32 1, %v388
        %v390 = vrot.slane %v173, %v389
        %391 = vrot.lane.b32.xlu0 %v386, 113
        %v392 = vpop.permute.xlu0 %391
        %393 = vrot.lane.b32.xlu0 %v390, 113
        %v394 = vpop.permute.xlu0 %393
        %vm395 = vcmask 924672
        %v396 = vsel %vm395, %v392, %v394
        %v400 = vmul.f32 %v174, %v392
        %v401 = vmul.f32 %v175, %v396
        %v402 = vmul.f32 %v176, %v394
        %v403 = vld [vmem:[#allocation3 + $0x20] sm:$0xf]
        %407 = vrot.lane.b32.xlu0 %v400, 15
        %v408 = vpop.permute.xlu0 %407
        %409 = vrot.lane.b32.xlu0 %v401, 15
        %v410 = vpop.permute.xlu0 %409
        %411 = vrot.lane.b32.xlu0 %v402, 15
        %v412 = vpop.permute.xlu0 %411
        %vm413 = vcmask 121856
        %v414 = vsel %vm413, %v408, %v410
        %v415 = vsel %vm413, %v410, %v412
        %v417 = vsel %vm212, %v403, 0
        %v419 = vsel %vm216, %v414, 0
        %v421 = vsel %vm216, %v415, 0
        %423 = vmatprep.subr.mxu0 %v421
        %424 = vmatpush1.msra.mxu0 %v419
        %425 = vmatprep.subr.mxu0 0.0
        %426 = vmatpush1.msra.mxu0 0.0
        %427 = vmatprep.subr.mxu0 0.0
        %428 = vmatpush1.msra.mxu0 0.0
        %429 = vmatprep.subr.mxu0 0.0
        %430 = vmatpush1.msra.mxu0 0.0
        %431 = vmatprep.subr.mxu0 0.0
        %432 = vmatpush1.msra.mxu0 0.0
        %433 = vmatprep.subr.mxu0 0.0
        %434 = vmatpush1.msra.mxu0 0.0
        %435 = vmatprep.subr.mxu0 0.0
        %436 = vmatpush1.msra.mxu0 0.0
        %437 = vmatprep.subr.mxu0 0.0
        %438 = vmatpush1.msra.mxu0 0.0
        %439 = vmatprep.subr.mxu0 0.0
        %440 = vmatpush1.msra.mxu0 0.0
        %441 = vmatprep.subr.mxu0 0.0
        %442 = vmatpush1.msra.mxu0 0.0
        %443 = vmatprep.subr.mxu0 0.0
        %444 = vmatpush1.msra.mxu0 0.0
        %445 = vmatprep.subr.mxu0 0.0
        %446 = vmatpush1.msra.mxu0 0.0
        %447 = vmatprep.subr.mxu0 0.0
        %448 = vmatpush1.msra.mxu0 0.0
        %449 = vmatprep.subr.mxu0 0.0
        %450 = vmatpush1.msra.mxu0 0.0
        %451 = vmatprep.subr.mxu0 0.0
        %452 = vmatpush1.msra.mxu0 0.0
        %453 = vmatprep.subr.mxu0 0.0
        %454 = vmatpush1.msra.mxu0 0.0
        %455 = vmatprep.subr.mxu0 0.0
        %456 = vmatpush1.msra.mxu0 0.0
        %457 = vmatprep.subr.mxu0 0.0
        %458 = vmatpush1.msra.mxu0 0.0
        %459 = vmatprep.subr.mxu0 0.0
        %460 = vmatpush1.msra.mxu0 0.0
        %461 = vmatprep.subr.mxu0 0.0
        %462 = vmatpush1.msra.mxu0 0.0
        %463 = vmatprep.subr.mxu0 0.0
        %464 = vmatpush1.msra.mxu0 0.0
        %465 = vmatprep.subr.mxu0 0.0
        %466 = vmatpush1.msra.mxu0 0.0
        %467 = vmatprep.subr.mxu0 0.0
        %468 = vmatpush1.msra.mxu0 0.0
        %469 = vmatprep.subr.mxu0 0.0
        %470 = vmatpush1.msra.mxu0 0.0
        %471 = vmatprep.subr.mxu0 0.0
        %472 = vmatpush1.msra.mxu0 0.0
        %473 = vmatprep.subr.mxu0 0.0
        %474 = vmatpush1.msra.mxu0 0.0
        %475 = vmatprep.subr.mxu0 0.0
        %476 = vmatpush1.msra.mxu0 0.0
        %477 = vmatprep.subr.mxu0 0.0
        %478 = vmatpush1.msra.mxu0 0.0
        %479 = vmatprep.subr.mxu0 0.0
        %480 = vmatpush1.msra.mxu0 0.0
        %481 = vmatprep.subr.mxu0 0.0
        %482 = vmatpush1.msra.mxu0 0.0
        %483 = vmatprep.subr.mxu0 0.0
        %484 = vmatpush1.msra.mxu0 0.0
        %485 = vmatprep.subr.mxu0 0.0
        %486 = vmatpush1.msra.mxu0 0.0
        %487 = vmatprep.mubr.f32.mxu0 0.0
        %488 = vmatmul.mubr.f32.gmra.mrb[0].mxu0 %v417
        %v489 = vpop.f32.mrb[0].mxu0
        %v490 = vadd.f32 0.0, %v489
        %v491 = vpop.f32.mrb[0].mxu0
        %v492 = vadd.f32 0.0, %v491
        %493 = vdwg.mxu0
        %v494 = vadd.f32 %v378, %v490
        %v495 = vadd.f32 %v380, %v492
        %496 = vrot.lane.b32.xlu0 %v181, 127
        %v497 = vpop.permute.xlu0 %496
        %498 = vrot.lane.b32.xlu0 %v185, 127
        %v499 = vpop.permute.xlu0 %498
        %vm500 = vcmask 1039360
        %v501 = vsel %vm500, %v497, %v499
        %v505 = vmul.f32 %v174, %v497
        %v506 = vmul.f32 %v175, %v501
        %v507 = vmul.f32 %v176, %v499
        %v508 = vld [vmem:[#allocation3 + $0x30] sm:$0xf]
        %512 = vrot.lane.b32.xlu0 %v505, 1
        %v513 = vpop.permute.xlu0 %512
        %514 = vrot.lane.b32.xlu0 %v506, 1
        %v515 = vpop.permute.xlu0 %514
        %516 = vrot.lane.b32.xlu0 %v507, 1
        %v517 = vpop.permute.xlu0 %516
        %vm518 = vcmask 7168
        %v519 = vsel %vm518, %v513, %v515
        %v520 = vsel %vm518, %v515, %v517
        %v522 = vsel %vm212, %v508, 0
        %v524 = vsel %vm216, %v519, 0
        %v526 = vsel %vm216, %v520, 0
        %528 = vmatprep.subr.mxu0 %v526
        %529 = vmatpush1.msra.mxu0 %v524
        %530 = vmatprep.subr.mxu0 0.0
        %531 = vmatpush1.msra.mxu0 0.0
        %532 = vmatprep.subr.mxu0 0.0
        %533 = vmatpush1.msra.mxu0 0.0
        %534 = vmatprep.subr.mxu0 0.0
        %535 = vmatpush1.msra.mxu0 0.0
        %536 = vmatprep.subr.mxu0 0.0
        %537 = vmatpush1.msra.mxu0 0.0
        %538 = vmatprep.subr.mxu0 0.0
        %539 = vmatpush1.msra.mxu0 0.0
        %540 = vmatprep.subr.mxu0 0.0
        %541 = vmatpush1.msra.mxu0 0.0
        %542 = vmatprep.subr.mxu0 0.0
        %543 = vmatpush1.msra.mxu0 0.0
        %544 = vmatprep.subr.mxu0 0.0
        %545 = vmatpush1.msra.mxu0 0.0
        %546 = vmatprep.subr.mxu0 0.0
        %547 = vmatpush1.msra.mxu0 0.0
        %548 = vmatprep.subr.mxu0 0.0
        %549 = vmatpush1.msra.mxu0 0.0
        %550 = vmatprep.subr.mxu0 0.0
        %551 = vmatpush1.msra.mxu0 0.0
        %552 = vmatprep.subr.mxu0 0.0
        %553 = vmatpush1.msra.mxu0 0.0
        %554 = vmatprep.subr.mxu0 0.0
        %555 = vmatpush1.msra.mxu0 0.0
        %556 = vmatprep.subr.mxu0 0.0
        %557 = vmatpush1.msra.mxu0 0.0
        %558 = vmatprep.subr.mxu0 0.0
        %559 = vmatpush1.msra.mxu0 0.0
        %560 = vmatprep.subr.mxu0 0.0
        %561 = vmatpush1.msra.mxu0 0.0
        %562 = vmatprep.subr.mxu0 0.0
        %563 = vmatpush1.msra.mxu0 0.0
        %564 = vmatprep.subr.mxu0 0.0
        %565 = vmatpush1.msra.mxu0 0.0
        %566 = vmatprep.subr.mxu0 0.0
        %567 = vmatpush1.msra.mxu0 0.0
        %568 = vmatprep.subr.mxu0 0.0
        %569 = vmatpush1.msra.mxu0 0.0
        %570 = vmatprep.subr.mxu0 0.0
        %571 = vmatpush1.msra.mxu0 0.0
        %572 = vmatprep.subr.mxu0 0.0
        %573 = vmatpush1.msra.mxu0 0.0
        %574 = vmatprep.subr.mxu0 0.0
        %575 = vmatpush1.msra.mxu0 0.0
        %576 = vmatprep.subr.mxu0 0.0
        %577 = vmatpush1.msra.mxu0 0.0
        %578 = vmatprep.subr.mxu0 0.0
        %579 = vmatpush1.msra.mxu0 0.0
        %580 = vmatprep.subr.mxu0 0.0
        %581 = vmatpush1.msra.mxu0 0.0
        %582 = vmatprep.subr.mxu0 0.0
        %583 = vmatpush1.msra.mxu0 0.0
        %584 = vmatprep.subr.mxu0 0.0
        %585 = vmatpush1.msra.mxu0 0.0
        %586 = vmatprep.subr.mxu0 0.0
        %587 = vmatpush1.msra.mxu0 0.0
        %588 = vmatprep.subr.mxu0 0.0
        %589 = vmatpush1.msra.mxu0 0.0
        %590 = vmatprep.subr.mxu0 0.0
        %591 = vmatpush1.msra.mxu0 0.0
        %592 = vmatprep.mubr.f32.mxu0 0.0
        %593 = vmatmul.mubr.f32.gmra.mrb[0].mxu0 %v522
        %v594 = vpop.f32.mrb[0].mxu0
        %v595 = vadd.f32 0.0, %v594
        %v596 = vpop.f32.mrb[0].mxu0
        %v597 = vadd.f32 0.0, %v596
        %598 = vdwg.mxu0
        %v599 = vadd.f32 %v494, %v595
        %v600 = vadd.f32 %v495, %v597
        %v601 = vld [vmem:[#allocation3 + $0x40] sm:$0xf]
        %v603 = vsel %vm212, %v601, 0
        %v605 = vsel %vm216, %v175, 0
        %v607 = vsel %vm216, %v176, 0
        %609 = vmatprep.subr.mxu0 %v607
        %610 = vmatpush1.msra.mxu0 %v605
        %611 = vmatprep.subr.mxu0 0.0
        %612 = vmatpush1.msra.mxu0 0.0
        %613 = vmatprep.subr.mxu0 0.0
        %614 = vmatpush1.msra.mxu0 0.0
        %615 = vmatprep.subr.mxu0 0.0
        %616 = vmatpush1.msra.mxu0 0.0
        %617 = vmatprep.subr.mxu0 0.0
        %618 = vmatpush1.msra.mxu0 0.0
        %619 = vmatprep.subr.mxu0 0.0
        %620 = vmatpush1.msra.mxu0 0.0
        %621 = vmatprep.subr.mxu0 0.0
        %622 = vmatpush1.msra.mxu0 0.0
        %623 = vmatprep.subr.mxu0 0.0
        %624 = vmatpush1.msra.mxu0 0.0
        %625 = vmatprep.subr.mxu0 0.0
        %626 = vmatpush1.msra.mxu0 0.0
        %627 = vmatprep.subr.mxu0 0.0
        %628 = vmatpush1.msra.mxu0 0.0
        %629 = vmatprep.subr.mxu0 0.0
        %630 = vmatpush1.msra.mxu0 0.0
        %631 = vmatprep.subr.mxu0 0.0
        %632 = vmatpush1.msra.mxu0 0.0
        %633 = vmatprep.subr.mxu0 0.0
        %634 = vmatpush1.msra.mxu0 0.0
        %635 = vmatprep.subr.mxu0 0.0
        %636 = vmatpush1.msra.mxu0 0.0
        %637 = vmatprep.subr.mxu0 0.0
        %638 = vmatpush1.msra.mxu0 0.0
        %639 = vmatprep.subr.mxu0 0.0
        %640 = vmatpush1.msra.mxu0 0.0
        %641 = vmatprep.subr.mxu0 0.0
        %642 = vmatpush1.msra.mxu0 0.0
        %643 = vmatprep.subr.mxu0 0.0
        %644 = vmatpush1.msra.mxu0 0.0
        %645 = vmatprep.subr.mxu0 0.0
        %646 = vmatpush1.msra.mxu0 0.0
        %647 = vmatprep.subr.mxu0 0.0
        %648 = vmatpush1.msra.mxu0 0.0
        %649 = vmatprep.subr.mxu0 0.0
        %650 = vmatpush1.msra.mxu0 0.0
        %651 = vmatprep.subr.mxu0 0.0
        %652 = vmatpush1.msra.mxu0 0.0
        %653 = vmatprep.subr.mxu0 0.0
        %654 = vmatpush1.msra.mxu0 0.0
        %655 = vmatprep.subr.mxu0 0.0
        %656 = vmatpush1.msra.mxu0 0.0
        %657 = vmatprep.subr.mxu0 0.0
        %658 = vmatpush1.msra.mxu0 0.0
        %659 = vmatprep.subr.mxu0 0.0
        %660 = vmatpush1.msra.mxu0 0.0
        %661 = vmatprep.subr.mxu0 0.0
        %662 = vmatpush1.msra.mxu0 0.0
        %663 = vmatprep.subr.mxu0 0.0
        %664 = vmatpush1.msra.mxu0 0.0
        %665 = vmatprep.subr.mxu0 0.0
        %666 = vmatpush1.msra.mxu0 0.0
        %667 = vmatprep.subr.mxu0 0.0
        %668 = vmatpush1.msra.mxu0 0.0
        %669 = vmatprep.subr.mxu0 0.0
        %670 = vmatpush1.msra.mxu0 0.0
        %671 = vmatprep.subr.mxu0 0.0
        %672 = vmatpush1.msra.mxu0 0.0
        %673 = vmatprep.mubr.f32.mxu0 0.0
        %674 = vmatmul.mubr.f32.gmra.mrb[0].mxu0 %v603
        %v675 = vpop.f32.mrb[0].mxu0
        %v676 = vadd.f32 0.0, %v675
        %v677 = vpop.f32.mrb[0].mxu0
        %v678 = vadd.f32 0.0, %v677
        %679 = vdwg.mxu0
        %v680 = vadd.f32 %v599, %v676
        %v681 = vadd.f32 %v600, %v678
        %v682 = vld [vmem:[#allocation2 + $0x8] sm:$0x7]
        %v683 = vld [vmem:[#allocation2 + $0x10] sm:$0x7]
        %v684 = vld [vmem:[#allocation2 + $0x18] sm:$0x7]
        %685 = vrot.lane.b32.xlu0 %v386, 1
        %v686 = vpop.permute.xlu0 %685
        %687 = vrot.lane.b32.xlu0 %v390, 1
        %v688 = vpop.permute.xlu0 %687
        %v689 = vsel %vm518, %v686, %v688
        %v693 = vmul.f32 %v682, %v686
        %v694 = vmul.f32 %v683, %v689
        %v695 = vmul.f32 %v684, %v688
        %v696 = vld [vmem:[#allocation3 + $0x50] sm:$0xf]
        %700 = vrot.lane.b32.xlu0 %v693, 127
        %v701 = vpop.permute.xlu0 %700
        %702 = vrot.lane.b32.xlu0 %v694, 127
        %v703 = vpop.permute.xlu0 %702
        %704 = vrot.lane.b32.xlu0 %v695, 127
        %v705 = vpop.permute.xlu0 %704
        %v706 = vsel %vm500, %v701, %v703
        %v707 = vsel %vm500, %v703, %v705
        %v709 = vsel %vm212, %v696, 0
        %v711 = vsel %vm216, %v706, 0
        %v713 = vsel %vm216, %v707, 0
        %715 = vmatprep.subr.mxu0 %v713
        %716 = vmatpush1.msra.mxu0 %v711
        %717 = vmatprep.subr.mxu0 0.0
        %718 = vmatpush1.msra.mxu0 0.0
        %719 = vmatprep.subr.mxu0 0.0
        %720 = vmatpush1.msra.mxu0 0.0
        %721 = vmatprep.subr.mxu0 0.0
        %722 = vmatpush1.msra.mxu0 0.0
        %723 = vmatprep.subr.mxu0 0.0
        %724 = vmatpush1.msra.mxu0 0.0
        %725 = vmatprep.subr.mxu0 0.0
        %726 = vmatpush1.msra.mxu0 0.0
        %727 = vmatprep.subr.mxu0 0.0
        %728 = vmatpush1.msra.mxu0 0.0
        %729 = vmatprep.subr.mxu0 0.0
        %730 = vmatpush1.msra.mxu0 0.0
        %731 = vmatprep.subr.mxu0 0.0
        %732 = vmatpush1.msra.mxu0 0.0
        %733 = vmatprep.subr.mxu0 0.0
        %734 = vmatpush1.msra.mxu0 0.0
        %735 = vmatprep.subr.mxu0 0.0
        %736 = vmatpush1.msra.mxu0 0.0
        %737 = vmatprep.subr.mxu0 0.0
        %738 = vmatpush1.msra.mxu0 0.0
        %739 = vmatprep.subr.mxu0 0.0
        %740 = vmatpush1.msra.mxu0 0.0
        %741 = vmatprep.subr.mxu0 0.0
        %742 = vmatpush1.msra.mxu0 0.0
        %743 = vmatprep.subr.mxu0 0.0
        %744 = vmatpush1.msra.mxu0 0.0
        %745 = vmatprep.subr.mxu0 0.0
        %746 = vmatpush1.msra.mxu0 0.0
        %747 = vmatprep.subr.mxu0 0.0
        %748 = vmatpush1.msra.mxu0 0.0
        %749 = vmatprep.subr.mxu0 0.0
        %750 = vmatpush1.msra.mxu0 0.0
        %751 = vmatprep.subr.mxu0 0.0
        %752 = vmatpush1.msra.mxu0 0.0
        %753 = vmatprep.subr.mxu0 0.0
        %754 = vmatpush1.msra.mxu0 0.0
        %755 = vmatprep.subr.mxu0 0.0
        %756 = vmatpush1.msra.mxu0 0.0
        %757 = vmatprep.subr.mxu0 0.0
        %758 = vmatpush1.msra.mxu0 0.0
        %759 = vmatprep.subr.mxu0 0.0
        %760 = vmatpush1.msra.mxu0 0.0
        %761 = vmatprep.subr.mxu0 0.0
        %762 = vmatpush1.msra.mxu0 0.0
        %763 = vmatprep.subr.mxu0 0.0
        %764 = vmatpush1.msra.mxu0 0.0
        %765 = vmatprep.subr.mxu0 0.0
        %766 = vmatpush1.msra.mxu0 0.0
        %767 = vmatprep.subr.mxu0 0.0
        %768 = vmatpush1.msra.mxu0 0.0
        %769 = vmatprep.subr.mxu0 0.0
        %770 = vmatpush1.msra.mxu0 0.0
        %771 = vmatprep.subr.mxu0 0.0
        %772 = vmatpush1.msra.mxu0 0.0
        %773 = vmatprep.subr.mxu0 0.0
        %774 = vmatpush1.msra.mxu0 0.0
        %775 = vmatprep.subr.mxu0 0.0
        %776 = vmatpush1.msra.mxu0 0.0
        %777 = vmatprep.subr.mxu0 0.0
        %778 = vmatpush1.msra.mxu0 0.0
        %779 = vmatprep.mubr.f32.mxu0 0.0
        %780 = vmatmul.mubr.f32.gmra.mrb[0].mxu0 %v709
        %v781 = vpop.f32.mrb[0].mxu0
        %v782 = vadd.f32 0.0, %v781
        %v783 = vpop.f32.mrb[0].mxu0
        %v784 = vadd.f32 0.0, %v783
        %785 = vdwg.mxu0
        %v786 = vadd.f32 %v680, %v782
        %v787 = vadd.f32 %v681, %v784
        %788 = vrot.lane.b32.xlu0 %v181, 15
        %v789 = vpop.permute.xlu0 %788
        %790 = vrot.lane.b32.xlu0 %v185, 15
        %v791 = vpop.permute.xlu0 %790
        %v792 = vsel %vm413, %v789, %v791
        %v796 = vmul.f32 %v682, %v789
        %v797 = vmul.f32 %v683, %v792
        %v798 = vmul.f32 %v684, %v791
        %v799 = vld [vmem:[#allocation3 + $0x60] sm:$0xf]
        %803 = vrot.lane.b32.xlu0 %v796, 113
        %v804 = vpop.permute.xlu0 %803
        %805 = vrot.lane.b32.xlu0 %v797, 113
        %v806 = vpop.permute.xlu0 %805
        %807 = vrot.lane.b32.xlu0 %v798, 113
        %v808 = vpop.permute.xlu0 %807
        %v809 = vsel %vm395, %v804, %v806
        %v810 = vsel %vm395, %v806, %v808
        %v812 = vsel %vm212, %v799, 0
        %v814 = vsel %vm216, %v809, 0
        %v816 = vsel %vm216, %v810, 0
        %818 = vmatprep.subr.mxu0 %v816
        %819 = vmatpush1.msra.mxu0 %v814
        %820 = vmatprep.subr.mxu0 0.0
        %821 = vmatpush1.msra.mxu0 0.0
        %822 = vmatprep.subr.mxu0 0.0
        %823 = vmatpush1.msra.mxu0 0.0
        %824 = vmatprep.subr.mxu0 0.0
        %825 = vmatpush1.msra.mxu0 0.0
        %826 = vmatprep.subr.mxu0 0.0
        %827 = vmatpush1.msra.mxu0 0.0
        %828 = vmatprep.subr.mxu0 0.0
        %829 = vmatpush1.msra.mxu0 0.0
        %830 = vmatprep.subr.mxu0 0.0
        %831 = vmatpush1.msra.mxu0 0.0
        %832 = vmatprep.subr.mxu0 0.0
        %833 = vmatpush1.msra.mxu0 0.0
        %834 = vmatprep.subr.mxu0 0.0
        %835 = vmatpush1.msra.mxu0 0.0
        %836 = vmatprep.subr.mxu0 0.0
        %837 = vmatpush1.msra.mxu0 0.0
        %838 = vmatprep.subr.mxu0 0.0
        %839 = vmatpush1.msra.mxu0 0.0
        %840 = vmatprep.subr.mxu0 0.0
        %841 = vmatpush1.msra.mxu0 0.0
        %842 = vmatprep.subr.mxu0 0.0
        %843 = vmatpush1.msra.mxu0 0.0
        %844 = vmatprep.subr.mxu0 0.0
        %845 = vmatpush1.msra.mxu0 0.0
        %846 = vmatprep.subr.mxu0 0.0
        %847 = vmatpush1.msra.mxu0 0.0
        %848 = vmatprep.subr.mxu0 0.0
        %849 = vmatpush1.msra.mxu0 0.0
        %850 = vmatprep.subr.mxu0 0.0
        %851 = vmatpush1.msra.mxu0 0.0
        %852 = vmatprep.subr.mxu0 0.0
        %853 = vmatpush1.msra.mxu0 0.0
        %854 = vmatprep.subr.mxu0 0.0
        %855 = vmatpush1.msra.mxu0 0.0
        %856 = vmatprep.subr.mxu0 0.0
        %857 = vmatpush1.msra.mxu0 0.0
        %858 = vmatprep.subr.mxu0 0.0
        %859 = vmatpush1.msra.mxu0 0.0
        %860 = vmatprep.subr.mxu0 0.0
        %861 = vmatpush1.msra.mxu0 0.0
        %862 = vmatprep.subr.mxu0 0.0
        %863 = vmatpush1.msra.mxu0 0.0
        %864 = vmatprep.subr.mxu0 0.0
        %865 = vmatpush1.msra.mxu0 0.0
        %866 = vmatprep.subr.mxu0 0.0
        %867 = vmatpush1.msra.mxu0 0.0
        %868 = vmatprep.subr.mxu0 0.0
        %869 = vmatpush1.msra.mxu0 0.0
        %870 = vmatprep.subr.mxu0 0.0
        %871 = vmatpush1.msra.mxu0 0.0
        %872 = vmatprep.subr.mxu0 0.0
        %873 = vmatpush1.msra.mxu0 0.0
        %874 = vmatprep.subr.mxu0 0.0
        %875 = vmatpush1.msra.mxu0 0.0
        %876 = vmatprep.subr.mxu0 0.0
        %877 = vmatpush1.msra.mxu0 0.0
        %878 = vmatprep.subr.mxu0 0.0
        %879 = vmatpush1.msra.mxu0 0.0
        %880 = vmatprep.subr.mxu0 0.0
        %881 = vmatpush1.msra.mxu0 0.0
        %882 = vmatprep.mubr.f32.mxu0 0.0
        %883 = vmatmul.mubr.f32.gmra.mrb[0].mxu0 %v812
        %v884 = vpop.f32.mrb[0].mxu0
        %v885 = vadd.f32 0.0, %v884
        %v886 = vpop.f32.mrb[0].mxu0
        %v887 = vadd.f32 0.0, %v886
        %888 = vdwg.mxu0
        %v889 = vadd.f32 %v786, %v885
        %v890 = vadd.f32 %v787, %v887
        %v891 = vld [vmem:[#allocation3 + $0x70] sm:$0xf]
        %895 = vrot.lane.b32.xlu0 %v682, 112
        %v896 = vpop.permute.xlu0 %895
        %897 = vrot.lane.b32.xlu0 %v683, 112
        %v898 = vpop.permute.xlu0 %897
        %899 = vrot.lane.b32.xlu0 %v684, 112
        %v900 = vpop.permute.xlu0 %899
        %vm901 = vcmask 916480
        %v902 = vsel %vm901, %v896, %v898
        %v903 = vsel %vm901, %v898, %v900
        %v905 = vsel %vm212, %v891, 0
        %v907 = vsel %vm216, %v902, 0
        %v909 = vsel %vm216, %v903, 0
        %911 = vmatprep.subr.mxu0 %v909
        %912 = vmatpush1.msra.mxu0 %v907
        %913 = vmatprep.subr.mxu0 0.0
        %914 = vmatpush1.msra.mxu0 0.0
        %915 = vmatprep.subr.mxu0 0.0
        %916 = vmatpush1.msra.mxu0 0.0
        %917 = vmatprep.subr.mxu0 0.0
        %918 = vmatpush1.msra.mxu0 0.0
        %919 = vmatprep.subr.mxu0 0.0
        %920 = vmatpush1.msra.mxu0 0.0
        %921 = vmatprep.subr.mxu0 0.0
        %922 = vmatpush1.msra.mxu0 0.0
        %923 = vmatprep.subr.mxu0 0.0
        %924 = vmatpush1.msra.mxu0 0.0
        %925 = vmatprep.subr.mxu0 0.0
        %926 = vmatpush1.msra.mxu0 0.0
        %927 = vmatprep.subr.mxu0 0.0
        %928 = vmatpush1.msra.mxu0 0.0
        %929 = vmatprep.subr.mxu0 0.0
        %930 = vmatpush1.msra.mxu0 0.0
        %931 = vmatprep.subr.mxu0 0.0
        %932 = vmatpush1.msra.mxu0 0.0
        %933 = vmatprep.subr.mxu0 0.0
        %934 = vmatpush1.msra.mxu0 0.0
        %935 = vmatprep.subr.mxu0 0.0
        %936 = vmatpush1.msra.mxu0 0.0
        %937 = vmatprep.subr.mxu0 0.0
        %938 = vmatpush1.msra.mxu0 0.0
        %939 = vmatprep.subr.mxu0 0.0
        %940 = vmatpush1.msra.mxu0 0.0
        %941 = vmatprep.subr.mxu0 0.0
        %942 = vmatpush1.msra.mxu0 0.0
        %943 = vmatprep.subr.mxu0 0.0
        %944 = vmatpush1.msra.mxu0 0.0
        %945 = vmatprep.subr.mxu0 0.0
        %946 = vmatpush1.msra.mxu0 0.0
        %947 = vmatprep.subr.mxu0 0.0
        %948 = vmatpush1.msra.mxu0 0.0
        %949 = vmatprep.subr.mxu0 0.0
        %950 = vmatpush1.msra.mxu0 0.0
        %951 = vmatprep.subr.mxu0 0.0
        %952 = vmatpush1.msra.mxu0 0.0
        %953 = vmatprep.subr.mxu0 0.0
        %954 = vmatpush1.msra.mxu0 0.0
        %955 = vmatprep.subr.mxu0 0.0
        %956 = vmatpush1.msra.mxu0 0.0
        %957 = vmatprep.subr.mxu0 0.0
        %958 = vmatpush1.msra.mxu0 0.0
        %959 = vmatprep.subr.mxu0 0.0
        %960 = vmatpush1.msra.mxu0 0.0
        %961 = vmatprep.subr.mxu0 0.0
        %962 = vmatpush1.msra.mxu0 0.0
        %963 = vmatprep.subr.mxu0 0.0
        %964 = vmatpush1.msra.mxu0 0.0
        %965 = vmatprep.subr.mxu0 0.0
        %966 = vmatpush1.msra.mxu0 0.0
        %967 = vmatprep.subr.mxu0 0.0
        %968 = vmatpush1.msra.mxu0 0.0
        %969 = vmatprep.subr.mxu0 0.0
        %970 = vmatpush1.msra.mxu0 0.0
        %971 = vmatprep.subr.mxu0 0.0
        %972 = vmatpush1.msra.mxu0 0.0
        %973 = vmatprep.subr.mxu0 0.0
        %974 = vmatpush1.msra.mxu0 0.0
        %975 = vmatprep.mubr.f32.mxu0 0.0
        %976 = vmatmul.mubr.f32.gmra.mrb[0].mxu0 %v905
        %v977 = vpop.f32.mrb[0].mxu0
        %v978 = vadd.f32 0.0, %v977
        %v979 = vpop.f32.mrb[0].mxu0
        %v980 = vadd.f32 0.0, %v979
        %981 = vdwg.mxu0
        %v982 = vadd.f32 %v889, %v978
        %v983 = vadd.f32 %v890, %v980
        %984 = vrot.lane.b32.xlu0 %v386, 17
        %v985 = vpop.permute.xlu0 %984
        %986 = vrot.lane.b32.xlu0 %v390, 17
        %v987 = vpop.permute.xlu0 %986
        %v988 = vsel %vm301, %v985, %v987
        %v992 = vmul.f32 %v682, %v985
        %v993 = vmul.f32 %v683, %v988
        %v994 = vmul.f32 %v684, %v987
        %v995 = vld [vmem:[#allocation3 + $0x80] sm:$0xf]
        %999 = vrot.lane.b32.xlu0 %v992, 111
        %v1000 = vpop.permute.xlu0 %999
        %1001 = vrot.lane.b32.xlu0 %v993, 111
        %v1002 = vpop.permute.xlu0 %1001
        %1003 = vrot.lane.b32.xlu0 %v994, 111
        %v1004 = vpop.permute.xlu0 %1003
        %v1005 = vsel %vm190, %v1000, %v1002
        %v1006 = vsel %vm190, %v1002, %v1004
        %v1008 = vsel %vm212, %v995, 0
        %v1010 = vsel %vm216, %v1005, 0
        %v1012 = vsel %vm216, %v1006, 0
        %1014 = vmatprep.subr.mxu0 %v1012
        %1015 = vmatpush1.msra.mxu0 %v1010
        %1016 = vmatprep.subr.mxu0 0.0
        %1017 = vmatpush1.msra.mxu0 0.0
        %1018 = vmatprep.subr.mxu0 0.0
        %1019 = vmatpush1.msra.mxu0 0.0
        %1020 = vmatprep.subr.mxu0 0.0
        %1021 = vmatpush1.msra.mxu0 0.0
        %1022 = vmatprep.subr.mxu0 0.0
        %1023 = vmatpush1.msra.mxu0 0.0
        %1024 = vmatprep.subr.mxu0 0.0
        %1025 = vmatpush1.msra.mxu0 0.0
        %1026 = vmatprep.subr.mxu0 0.0
        %1027 = vmatpush1.msra.mxu0 0.0
        %1028 = vmatprep.subr.mxu0 0.0
        %1029 = vmatpush1.msra.mxu0 0.0
        %1030 = vmatprep.subr.mxu0 0.0
        %1031 = vmatpush1.msra.mxu0 0.0
        %1032 = vmatprep.subr.mxu0 0.0
        %1033 = vmatpush1.msra.mxu0 0.0
        %1034 = vmatprep.subr.mxu0 0.0
        %1035 = vmatpush1.msra.mxu0 0.0
        %1036 = vmatprep.subr.mxu0 0.0
        %1037 = vmatpush1.msra.mxu0 0.0
        %1038 = vmatprep.subr.mxu0 0.0
        %1039 = vmatpush1.msra.mxu0 0.0
        %1040 = vmatprep.subr.mxu0 0.0
        %1041 = vmatpush1.msra.mxu0 0.0
        %1042 = vmatprep.subr.mxu0 0.0
        %1043 = vmatpush1.msra.mxu0 0.0
        %1044 = vmatprep.subr.mxu0 0.0
        %1045 = vmatpush1.msra.mxu0 0.0
        %1046 = vmatprep.subr.mxu0 0.0
        %1047 = vmatpush1.msra.mxu0 0.0
        %1048 = vmatprep.subr.mxu0 0.0
        %1049 = vmatpush1.msra.mxu0 0.0
        %1050 = vmatprep.subr.mxu0 0.0
        %1051 = vmatpush1.msra.mxu0 0.0
        %1052 = vmatprep.subr.mxu0 0.0
        %1053 = vmatpush1.msra.mxu0 0.0
        %1054 = vmatprep.subr.mxu0 0.0
        %1055 = vmatpush1.msra.mxu0 0.0
        %1056 = vmatprep.subr.mxu0 0.0
        %1057 = vmatpush1.msra.mxu0 0.0
        %1058 = vmatprep.subr.mxu0 0.0
        %1059 = vmatpush1.msra.mxu0 0.0
        %1060 = vmatprep.subr.mxu0 0.0
        %1061 = vmatpush1.msra.mxu0 0.0
        %1062 = vmatprep.subr.mxu0 0.0
        %1063 = vmatpush1.msra.mxu0 0.0
        %1064 = vmatprep.subr.mxu0 0.0
        %1065 = vmatpush1.msra.mxu0 0.0
        %1066 = vmatprep.subr.mxu0 0.0
        %1067 = vmatpush1.msra.mxu0 0.0
        %1068 = vmatprep.subr.mxu0 0.0
        %1069 = vmatpush1.msra.mxu0 0.0
        %1070 = vmatprep.subr.mxu0 0.0
        %1071 = vmatpush1.msra.mxu0 0.0
        %1072 = vmatprep.subr.mxu0 0.0
        %1073 = vmatpush1.msra.mxu0 0.0
        %1074 = vmatprep.subr.mxu0 0.0
        %1075 = vmatpush1.msra.mxu0 0.0
        %1076 = vmatprep.subr.mxu0 0.0
        %1077 = vmatpush1.msra.mxu0 0.0
        %1078 = vmatprep.mubr.f32.mxu0 0.0
        %1079 = vmatmul.mubr.f32.gmra.mrb[0].mxu0 %v1008
        %v1080 = vpop.f32.mrb[0].mxu0
        %v1081 = vadd.f32 0.0, %v1080
        %v1082 = vpop.f32.mrb[0].mxu0
        %v1083 = vadd.f32 0.0, %v1082
        %1084 = vdwg.mxu0
        %v1085 = vadd.f32 %v982, %v1081
        %v1086 = vadd.f32 %v983, %v1083
        %1087 = vset.pattern.permute.xlu0 3
        %1088 = vperm.xlu0 %1087, %v198
        %v1089 = vpop.permute.xlu0 %1088
        %v1091 = vadd.f32 %v1085, %v1089
        %v1092 = vadd.f32 %v1086, %v1089
        %v1093 = vmul.f32 %v1091, 0.01
        %v1094 = vmul.f32 %v1092, 0.01
        %v1095 = vmax.f32 %v1091, %v1093
        %v1096 = vmax.f32 %v1092, %v1094
        %1097 = vst [vmem:[#allocation2 + $0x8] sm:$0xf] %v1095
        %1098 = vst [vmem:[#allocation2 + $0x10] sm:$0xf] %v1096
        %v1099 = vcombine.low %v163, %v163
        %1101 = vst [vmem:[#allocation2 + $0x8] sm:$0x70] %v1099
        %1102 = vst [vmem:[#allocation2 + $0x10] sm:$0x70] %v163
        %1103 = vst [vmem:[#allocation2 + $0x18] sm:$0x7f] 0.0
        %v1104 = vld [vmem:[#allocation2 + $0x8] sm:$0x7f]
        %v1105 = vld [vmem:[#allocation2 + $0x10] sm:$0x7f]
        %v1106 = vld [vmem:[#allocation2 + $0x18] sm:$0x7f]
        %1110 = vrot.lane.b32.xlu0 %v1104, 127
        %v1111 = vpop.permute.xlu0 %1110
        %1112 = vrot.lane.b32.xlu0 %v1105, 127
        %v1113 = vpop.permute.xlu0 %1112
        %1114 = vrot.lane.b32.xlu0 %v1106, 127
        %v1115 = vpop.permute.xlu0 %1114
        %v1116 = vsel %vm500, %v1111, %v1113
        %v1117 = vsel %vm500, %v1113, %v1115
        %v1120 = vmax.f32 %v1104, %v1116
        %v1121 = vmax.f32 %v1105, %v1117
        %1122 = vrot.lane.b32.xlu0 %v1104, 112
        %v1123 = vpop.permute.xlu0 %1122
        %1124 = vrot.lane.b32.xlu0 %v1105, 112
        %v1125 = vpop.permute.xlu0 %1124
        %1126 = vrot.lane.b32.xlu0 %v1106, 112
        %v1127 = vpop.permute.xlu0 %1126
        %v1128 = vsel %vm901, %v1123, %v1125
        %v1129 = vsel %vm901, %v1125, %v1127
        %v1132 = vmax.f32 %v1120, %v1128
        %v1133 = vmax.f32 %v1121, %v1129
        %1134 = vrot.lane.b32.xlu0 %v1104, 111
        %v1135 = vpop.permute.xlu0 %1134
        %1136 = vrot.lane.b32.xlu0 %v1105, 111
        %v1137 = vpop.permute.xlu0 %1136
        %1138 = vrot.lane.b32.xlu0 %v1106, 111
        %v1139 = vpop.permute.xlu0 %1138
        %v1140 = vsel %vm190, %v1135, %v1137
        %v1141 = vsel %vm190, %v1137, %v1139
        %v1144 = vmax.f32 %v1132, %v1140
        %v1145 = vmax.f32 %v1133, %v1141
        %v1146 = vld [vmem:[#allocation3 + $0x630] sm:$0xff]
        %v1147 = vld [vmem:[#allocation3 + $0x640] sm:$0xff]
        %v1148 = vld [vmem:[#allocation3 + $0x650] sm:$0xff]
        %v1149 = vld [vmem:[#allocation3 + $0x660] sm:$0xff]
        %v1150 = vld [vmem:[#allocation3 + $0x670] sm:$0xff]
        %v1151 = vld [vmem:[#allocation3 + $0x680] sm:$0xff]
        %v1152 = vld [vmem:[#allocation3 + $0x690] sm:$0xff]
        %v1153 = vld [vmem:[#allocation3 + $0x6a0] sm:$0xff]
        %v1154 = vld [vmem:[#allocation3 + $0x6b0] sm:$0xff]
        %v1155 = vld [vmem:[#allocation3 + $0x6c0] sm:$0xff]
        %v1156 = vld [vmem:[#allocation3 + $0x6d0] sm:$0xff]
        %v1157 = vld [vmem:[#allocation3 + $0x6e0] sm:$0xff]
        %v1158 = vld [vmem:[#allocation3 + $0x6f0] sm:$0xff]
        %v1159 = vld [vmem:[#allocation3 + $0x700] sm:$0xff]
        %v1160 = vld [vmem:[#allocation3 + $0x710] sm:$0xff]
        %v1161 = vld [vmem:[#allocation3 + $0x720] sm:$0xff]
        %v1162 = vld [vmem:[#allocation3 + $0x730] sm:$0xff]
        %v1163 = vld [vmem:[#allocation3 + $0x740] sm:$0xff]
        %v1164 = vld [vmem:[#allocation3 + $0x750] sm:$0xff]
        %v1165 = vld [vmem:[#allocation3 + $0x760] sm:$0xff]
        %v1166 = vld [vmem:[#allocation3 + $0x770] sm:$0xff]
        %v1167 = vld [vmem:[#allocation3 + $0x780] sm:$0xff]
        %v1168 = vld [vmem:[#allocation3 + $0x790] sm:$0xff]
        %v1169 = vld [vmem:[#allocation3 + $0x7a0] sm:$0xff]
        %v1170 = vld [vmem:[#allocation3 + $0x7b0] sm:$0xff]
        %v1171 = vld [vmem:[#allocation3 + $0x7c0] sm:$0xff]
        %v1172 = vld [vmem:[#allocation3 + $0x7d0] sm:$0xff]
        %v1173 = vld [vmem:[#allocation3 + $0x7e0] sm:$0xff]
        %v1174 = vld [vmem:[#allocation3 + $0x7f0] sm:$0xff]
        %v1175 = vld [vmem:[#allocation3 + $0x800] sm:$0xff]
        %v1176 = vld [vmem:[#allocation3 + $0x810] sm:$0xff]
        %v1177 = vld [vmem:[#allocation3 + $0x820] sm:$0xff]
        %1178 = vmatprep.subr.mxu0 0.0
        %1179 = vmatpush1.msra.mxu0 %v1146
        %1180 = vmatprep.subr.mxu0 0.0
        %1181 = vmatpush1.msra.mxu0 %v1147
        %1182 = vmatprep.subr.mxu0 0.0
        %1183 = vmatpush1.msra.mxu0 %v1148
        %1184 = vmatprep.subr.mxu0 0.0
        %1185 = vmatpush1.msra.mxu0 %v1149
        %1186 = vmatprep.subr.mxu0 0.0
        %1187 = vmatpush1.msra.mxu0 %v1150
        %1188 = vmatprep.subr.mxu0 0.0
        %1189 = vmatpush1.msra.mxu0 %v1151
        %1190 = vmatprep.subr.mxu0 0.0
        %1191 = vmatpush1.msra.mxu0 %v1152
        %1192 = vmatprep.subr.mxu0 0.0
        %1193 = vmatpush1.msra.mxu0 %v1153
        %1194 = vmatprep.subr.mxu0 0.0
        %1195 = vmatpush1.msra.mxu0 %v1154
        %1196 = vmatprep.subr.mxu0 0.0
        %1197 = vmatpush1.msra.mxu0 %v1155
        %1198 = vmatprep.subr.mxu0 0.0
        %1199 = vmatpush1.msra.mxu0 %v1156
        %1200 = vmatprep.subr.mxu0 0.0
        %1201 = vmatpush1.msra.mxu0 %v1157
        %1202 = vmatprep.subr.mxu0 0.0
        %1203 = vmatpush1.msra.mxu0 %v1158
        %1204 = vmatprep.subr.mxu0 0.0
        %1205 = vmatpush1.msra.mxu0 %v1159
        %1206 = vmatprep.subr.mxu0 0.0
        %1207 = vmatpush1.msra.mxu0 %v1160
        %1208 = vmatprep.subr.mxu0 0.0
        %1209 = vmatpush1.msra.mxu0 %v1161
        %1210 = vmatprep.subr.mxu0 0.0
        %1211 = vmatpush1.msra.mxu0 %v1162
        %1212 = vmatprep.subr.mxu0 0.0
        %1213 = vmatpush1.msra.mxu0 %v1163
        %1214 = vmatprep.subr.mxu0 0.0
        %1215 = vmatpush1.msra.mxu0 %v1164
        %1216 = vmatprep.subr.mxu0 0.0
        %1217 = vmatpush1.msra.mxu0 %v1165
        %1218 = vmatprep.subr.mxu0 0.0
        %1219 = vmatpush1.msra.mxu0 %v1166
        %1220 = vmatprep.subr.mxu0 0.0
        %1221 = vmatpush1.msra.mxu0 %v1167
        %1222 = vmatprep.subr.mxu0 0.0
        %1223 = vmatpush1.msra.mxu0 %v1168
        %1224 = vmatprep.subr.mxu0 0.0
        %1225 = vmatpush1.msra.mxu0 %v1169
        %1226 = vmatprep.subr.mxu0 0.0
        %1227 = vmatpush1.msra.mxu0 %v1170
        %1228 = vmatprep.subr.mxu0 0.0
        %1229 = vmatpush1.msra.mxu0 %v1171
        %1230 = vmatprep.subr.mxu0 0.0
        %1231 = vmatpush1.msra.mxu0 %v1172
        %1232 = vmatprep.subr.mxu0 0.0
        %1233 = vmatpush1.msra.mxu0 %v1173
        %1234 = vmatprep.subr.mxu0 0.0
        %1235 = vmatpush1.msra.mxu0 %v1174
        %1236 = vmatprep.subr.mxu0 0.0
        %1237 = vmatpush1.msra.mxu0 %v1175
        %1238 = vmatprep.subr.mxu0 0.0
        %1239 = vmatpush1.msra.mxu0 %v1176
        %1240 = vmatprep.subr.mxu0 0.0
        %1241 = vmatpush1.msra.mxu0 %v1177
        %1242 = vmatprep.mubr.f32.mxu0 %v1145
        %1243 = vmatmul.mubr.f32.gmra.mrb[0].mxu0 %v1144
        %v1244 = vpop.f32.mrb[0].mxu0
        %v1245 = vadd.f32 0.0, %v1244
        %v1246 = vpop.f32.mrb[0].mxu0
        %1247 = vdwg.mxu0
        %vm1248 = vcmask 522240
        %1249 = vst.msk [vmem:[#allocation2 + $0x8] sm:$0x7f] %vm1248, %v1245
        %vm1250 = vcmask 1047040
        %1251 = vst.msk [vmem:[#allocation2 + $0x8] sm:$0x7f] %vm1250, 0.0
        %1252 = vst.msk [vmem:[#allocation2 + $0x10] sm:$0x7f] %vm1248, 0.0
        %v1253 = vld [vmem:[#allocation3 + $0x960] ss:$0 sm:$0xff]
        %v1254 = vld [vmem:[#allocation3 + $0x961] ss:$0 sm:$0xff]
        %v1255 = vld [vmem:[#allocation2] sm:$0x7f]
        %v1256 = vld [vmem:[#allocation2 + $0x8] sm:$0x7f]
        %1258 = vrot.lane.b32.xlu0 %v1253, 119
        %v1259 = vpop.permute.xlu0 %1258
        %v1261 = vmul.f32 %v1255, %v1259
        %v1262 = vmul.f32 %v1256, %v1259
        %v1263 = vld [vmem:[#allocation3 + $0x90] sm:$0xff]
        %v1264 = vld [vmem:[#allocation3 + $0xa0] sm:$0xff]
        %1267 = vrot.lane.b32.xlu0 %v1255, 8
        %v1268 = vpop.permute.xlu0 %1267
        %1269 = vrot.lane.b32.xlu0 %v1256, 8
        %v1270 = vpop.permute.xlu0 %1269
        %vm1271 = vcmask 64512
        %v1272 = vsel %vm1271, %v1268, %v1270
        %vm1273 = vcmask 56320
        %v1275 = vsel %vm1273, %v1264, 0
        %vm1277 = vcmask 1046528
        %v1278 = vsel %vm1277, %v1272, 0
        %1280 = vmatprep.subr.mxu0 0.0
        %1281 = vmatpush1.msra.mxu0 %v1278
        %1282 = vmatprep.subr.mxu0 0.0
        %1283 = vmatpush1.msra.mxu0 0.0
        %1284 = vmatprep.subr.mxu0 0.0
        %1285 = vmatpush1.msra.mxu0 0.0
        %1286 = vmatprep.subr.mxu0 0.0
        %1287 = vmatpush1.msra.mxu0 0.0
        %1288 = vmatprep.subr.mxu0 0.0
        %1289 = vmatpush1.msra.mxu0 0.0
        %1290 = vmatprep.subr.mxu0 0.0
        %1291 = vmatpush1.msra.mxu0 0.0
        %1292 = vmatprep.subr.mxu0 0.0
        %1293 = vmatpush1.msra.mxu0 0.0
        %1294 = vmatprep.subr.mxu0 0.0
        %1295 = vmatpush1.msra.mxu0 0.0
        %1296 = vmatprep.subr.mxu0 0.0
        %1297 = vmatpush1.msra.mxu0 0.0
        %1298 = vmatprep.subr.mxu0 0.0
        %1299 = vmatpush1.msra.mxu0 0.0
        %1300 = vmatprep.subr.mxu0 0.0
        %1301 = vmatpush1.msra.mxu0 0.0
        %1302 = vmatprep.subr.mxu0 0.0
        %1303 = vmatpush1.msra.mxu0 0.0
        %1304 = vmatprep.subr.mxu0 0.0
        %1305 = vmatpush1.msra.mxu0 0.0
        %1306 = vmatprep.subr.mxu0 0.0
        %1307 = vmatpush1.msra.mxu0 0.0
        %1308 = vmatprep.subr.mxu0 0.0
        %1309 = vmatpush1.msra.mxu0 0.0
        %1310 = vmatprep.subr.mxu0 0.0
        %1311 = vmatpush1.msra.mxu0 0.0
        %1312 = vmatprep.subr.mxu0 0.0
        %1313 = vmatpush1.msra.mxu0 0.0
        %1314 = vmatprep.subr.mxu0 0.0
        %1315 = vmatpush1.msra.mxu0 0.0
        %1316 = vmatprep.subr.mxu0 0.0
        %1317 = vmatpush1.msra.mxu0 0.0
        %1318 = vmatprep.subr.mxu0 0.0
        %1319 = vmatpush1.msra.mxu0 0.0
        %1320 = vmatprep.subr.mxu0 0.0
        %1321 = vmatpush1.msra.mxu0 0.0
        %1322 = vmatprep.subr.mxu0 0.0
        %1323 = vmatpush1.msra.mxu0 0.0
        %1324 = vmatprep.subr.mxu0 0.0
        %1325 = vmatpush1.msra.mxu0 0.0
        %1326 = vmatprep.subr.mxu0 0.0
        %1327 = vmatpush1.msra.mxu0 0.0
        %1328 = vmatprep.subr.mxu0 0.0
        %1329 = vmatpush1.msra.mxu0 0.0
        %1330 = vmatprep.subr.mxu0 0.0
        %1331 = vmatpush1.msra.mxu0 0.0
        %1332 = vmatprep.subr.mxu0 0.0
        %1333 = vmatpush1.msra.mxu0 0.0
        %1334 = vmatprep.subr.mxu0 0.0
        %1335 = vmatpush1.msra.mxu0 0.0
        %1336 = vmatprep.subr.mxu0 0.0
        %1337 = vmatpush1.msra.mxu0 0.0
        %1338 = vmatprep.subr.mxu0 0.0
        %1339 = vmatpush1.msra.mxu0 0.0
        %1340 = vmatprep.subr.mxu0 0.0
        %1341 = vmatpush1.msra.mxu0 0.0
        %1342 = vmatprep.subr.mxu0 0.0
        %1343 = vmatpush1.msra.mxu0 0.0
        %1344 = vmatprep.mubr.f32.mxu0 0.0
        %1345 = vmatmul.mubr.f32.gmra.mrb[0].mxu0 %v1275
        %v1346 = vpop.f32.mrb[0].mxu0
        %v1347 = vadd.f32 0.0, %v1346
        %v1348 = vpop.f32.mrb[0].mxu0
        %1349 = vdwg.mxu0
        %1352 = vrot.lane.b32.xlu0 %v1261, 9
        %v1353 = vpop.permute.xlu0 %1352
        %1354 = vrot.lane.b32.xlu0 %v1262, 9
        %v1355 = vpop.permute.xlu0 %1354
        %vm1356 = vcmask 72704
        %v1357 = vsel %vm1356, %v1353, %v1355
        %v1359 = vsel %vm1273, %v1263, 0
        %v1361 = vsel %vm1277, %v1357, 0
        %1363 = vmatprep.subr.mxu0 0.0
        %1364 = vmatpush1.msra.mxu0 %v1361
        %1365 = vmatprep.subr.mxu0 0.0
        %1366 = vmatpush1.msra.mxu0 0.0
        %1367 = vmatprep.subr.mxu0 0.0
        %1368 = vmatpush1.msra.mxu0 0.0
        %1369 = vmatprep.subr.mxu0 0.0
        %1370 = vmatpush1.msra.mxu0 0.0
        %1371 = vmatprep.subr.mxu0 0.0
        %1372 = vmatpush1.msra.mxu0 0.0
        %1373 = vmatprep.subr.mxu0 0.0
        %1374 = vmatpush1.msra.mxu0 0.0
        %1375 = vmatprep.subr.mxu0 0.0
        %1376 = vmatpush1.msra.mxu0 0.0
        %1377 = vmatprep.subr.mxu0 0.0
        %1378 = vmatpush1.msra.mxu0 0.0
        %1379 = vmatprep.subr.mxu0 0.0
        %1380 = vmatpush1.msra.mxu0 0.0
        %1381 = vmatprep.subr.mxu0 0.0
        %1382 = vmatpush1.msra.mxu0 0.0
        %1383 = vmatprep.subr.mxu0 0.0
        %1384 = vmatpush1.msra.mxu0 0.0
        %1385 = vmatprep.subr.mxu0 0.0
        %1386 = vmatpush1.msra.mxu0 0.0
        %1387 = vmatprep.subr.mxu0 0.0
        %1388 = vmatpush1.msra.mxu0 0.0
        %1389 = vmatprep.subr.mxu0 0.0
        %1390 = vmatpush1.msra.mxu0 0.0
        %1391 = vmatprep.subr.mxu0 0.0
        %1392 = vmatpush1.msra.mxu0 0.0
        %1393 = vmatprep.subr.mxu0 0.0
        %1394 = vmatpush1.msra.mxu0 0.0
        %1395 = vmatprep.subr.mxu0 0.0
        %1396 = vmatpush1.msra.mxu0 0.0
        %1397 = vmatprep.subr.mxu0 0.0
        %1398 = vmatpush1.msra.mxu0 0.0
        %1399 = vmatprep.subr.mxu0 0.0
        %1400 = vmatpush1.msra.mxu0 0.0
        %1401 = vmatprep.subr.mxu0 0.0
        %1402 = vmatpush1.msra.mxu0 0.0
        %1403 = vmatprep.subr.mxu0 0.0
        %1404 = vmatpush1.msra.mxu0 0.0
        %1405 = vmatprep.subr.mxu0 0.0
        %1406 = vmatpush1.msra.mxu0 0.0
        %1407 = vmatprep.subr.mxu0 0.0
        %1408 = vmatpush1.msra.mxu0 0.0
        %1409 = vmatprep.subr.mxu0 0.0
        %1410 = vmatpush1.msra.mxu0 0.0
        %1411 = vmatprep.subr.mxu0 0.0
        %1412 = vmatpush1.msra.mxu0 0.0
        %1413 = vmatprep.subr.mxu0 0.0
        %1414 = vmatpush1.msra.mxu0 0.0
        %1415 = vmatprep.subr.mxu0 0.0
        %1416 = vmatpush1.msra.mxu0 0.0
        %1417 = vmatprep.subr.mxu0 0.0
        %1418 = vmatpush1.msra.mxu0 0.0
        %1419 = vmatprep.subr.mxu0 0.0
        %1420 = vmatpush1.msra.mxu0 0.0
        %1421 = vmatprep.subr.mxu0 0.0
        %1422 = vmatpush1.msra.mxu0 0.0
        %1423 = vmatprep.subr.mxu0 0.0
        %1424 = vmatpush1.msra.mxu0 0.0
        %1425 = vmatprep.subr.mxu0 0.0
        %1426 = vmatpush1.msra.mxu0 0.0
        %1427 = vmatprep.mubr.f32.mxu0 0.0
        %1428 = vmatmul.mubr.f32.gmra.mrb[0].mxu0 %v1359
        %v1429 = vpop.f32.mrb[0].mxu0
        %v1430 = vadd.f32 %v1347, %v1429
        %v1431 = vpop.f32.mrb[0].mxu0
        %1432 = vdwg.mxu0
        %1434 = vrot.lane.b32.xlu0 %v1254, 121
        %v1435 = vpop.permute.xlu0 %1434
        %v1437 = vmul.f32 %v1255, %v1435
        %v1438 = vmul.f32 %v1256, %v1435
        %v1439 = vld [vmem:[#allocation3 + $0xb0] sm:$0xff]
        %1442 = vrot.lane.b32.xlu0 %v1437, 7
        %v1443 = vpop.permute.xlu0 %1442
        %1444 = vrot.lane.b32.xlu0 %v1438, 7
        %v1445 = vpop.permute.xlu0 %1444
        %v1446 = vsel %vm1273, %v1443, %v1445
        %v1448 = vsel %vm1273, %v1439, 0
        %v1450 = vsel %vm1277, %v1446, 0
        %1452 = vmatprep.subr.mxu0 0.0
        %1453 = vmatpush1.msra.mxu0 %v1450
        %1454 = vmatprep.subr.mxu0 0.0
        %1455 = vmatpush1.msra.mxu0 0.0
        %1456 = vmatprep.subr.mxu0 0.0
        %1457 = vmatpush1.msra.mxu0 0.0
        %1458 = vmatprep.subr.mxu0 0.0
        %1459 = vmatpush1.msra.mxu0 0.0
        %1460 = vmatprep.subr.mxu0 0.0
        %1461 = vmatpush1.msra.mxu0 0.0
        %1462 = vmatprep.subr.mxu0 0.0
        %1463 = vmatpush1.msra.mxu0 0.0
        %1464 = vmatprep.subr.mxu0 0.0
        %1465 = vmatpush1.msra.mxu0 0.0
        %1466 = vmatprep.subr.mxu0 0.0
        %1467 = vmatpush1.msra.mxu0 0.0
        %1468 = vmatprep.subr.mxu0 0.0
        %1469 = vmatpush1.msra.mxu0 0.0
        %1470 = vmatprep.subr.mxu0 0.0
        %1471 = vmatpush1.msra.mxu0 0.0
        %1472 = vmatprep.subr.mxu0 0.0
        %1473 = vmatpush1.msra.mxu0 0.0
        %1474 = vmatprep.subr.mxu0 0.0
        %1475 = vmatpush1.msra.mxu0 0.0
        %1476 = vmatprep.subr.mxu0 0.0
        %1477 = vmatpush1.msra.mxu0 0.0
        %1478 = vmatprep.subr.mxu0 0.0
        %1479 = vmatpush1.msra.mxu0 0.0
        %1480 = vmatprep.subr.mxu0 0.0
        %1481 = vmatpush1.msra.mxu0 0.0
        %1482 = vmatprep.subr.mxu0 0.0
        %1483 = vmatpush1.msra.mxu0 0.0
        %1484 = vmatprep.subr.mxu0 0.0
        %1485 = vmatpush1.msra.mxu0 0.0
        %1486 = vmatprep.subr.mxu0 0.0
        %1487 = vmatpush1.msra.mxu0 0.0
        %1488 = vmatprep.subr.mxu0 0.0
        %1489 = vmatpush1.msra.mxu0 0.0
        %1490 = vmatprep.subr.mxu0 0.0
        %1491 = vmatpush1.msra.mxu0 0.0
        %1492 = vmatprep.subr.mxu0 0.0
        %1493 = vmatpush1.msra.mxu0 0.0
        %1494 = vmatprep.subr.mxu0 0.0
        %1495 = vmatpush1.msra.mxu0 0.0
        %1496 = vmatprep.subr.mxu0 0.0
        %1497 = vmatpush1.msra.mxu0 0.0
        %1498 = vmatprep.subr.mxu0 0.0
        %1499 = vmatpush1.msra.mxu0 0.0
        %1500 = vmatprep.subr.mxu0 0.0
        %1501 = vmatpush1.msra.mxu0 0.0
        %1502 = vmatprep.subr.mxu0 0.0
        %1503 = vmatpush1.msra.mxu0 0.0
        %1504 = vmatprep.subr.mxu0 0.0
        %1505 = vmatpush1.msra.mxu0 0.0
        %1506 = vmatprep.subr.mxu0 0.0
        %1507 = vmatpush1.msra.mxu0 0.0
        %1508 = vmatprep.subr.mxu0 0.0
        %1509 = vmatpush1.msra.mxu0 0.0
        %1510 = vmatprep.subr.mxu0 0.0
        %1511 = vmatpush1.msra.mxu0 0.0
        %1512 = vmatprep.subr.mxu0 0.0
        %1513 = vmatpush1.msra.mxu0 0.0
        %1514 = vmatprep.subr.mxu0 0.0
        %1515 = vmatpush1.msra.mxu0 0.0
        %1516 = vmatprep.mubr.f32.mxu0 0.0
        %1517 = vmatmul.mubr.f32.gmra.mrb[0].mxu0 %v1448
        %v1518 = vpop.f32.mrb[0].mxu0
        %v1519 = vadd.f32 0.0, %v1518
        %v1520 = vpop.f32.mrb[0].mxu0
        %1521 = vdwg.mxu0
        %v1522 = vadd.f32 %v1430, %v1519
        %1523 = vrot.lane.b32.xlu0 %v1253, 127
        %v1524 = vpop.permute.xlu0 %1523
        %v1526 = vmul.f32 %v1255, %v1524
        %v1527 = vmul.f32 %v1256, %v1524
        %v1528 = vld [vmem:[#allocation3 + $0xc0] sm:$0xff]
        %1531 = vrot.lane.b32.xlu0 %v1526, 1
        %v1532 = vpop.permute.xlu0 %1531
        %1533 = vrot.lane.b32.xlu0 %v1527, 1
        %v1534 = vpop.permute.xlu0 %1533
        %v1535 = vsel %vm518, %v1532, %v1534
        %v1537 = vsel %vm1273, %v1528, 0
        %v1539 = vsel %vm1277, %v1535, 0
        %1541 = vmatprep.subr.mxu0 0.0
        %1542 = vmatpush1.msra.mxu0 %v1539
        %1543 = vmatprep.subr.mxu0 0.0
        %1544 = vmatpush1.msra.mxu0 0.0
        %1545 = vmatprep.subr.mxu0 0.0
        %1546 = vmatpush1.msra.mxu0 0.0
        %1547 = vmatprep.subr.mxu0 0.0
        %1548 = vmatpush1.msra.mxu0 0.0
        %1549 = vmatprep.subr.mxu0 0.0
        %1550 = vmatpush1.msra.mxu0 0.0
        %1551 = vmatprep.subr.mxu0 0.0
        %1552 = vmatpush1.msra.mxu0 0.0
        %1553 = vmatprep.subr.mxu0 0.0
        %1554 = vmatpush1.msra.mxu0 0.0
        %1555 = vmatprep.subr.mxu0 0.0
        %1556 = vmatpush1.msra.mxu0 0.0
        %1557 = vmatprep.subr.mxu0 0.0
        %1558 = vmatpush1.msra.mxu0 0.0
        %1559 = vmatprep.subr.mxu0 0.0
        %1560 = vmatpush1.msra.mxu0 0.0
        %1561 = vmatprep.subr.mxu0 0.0
        %1562 = vmatpush1.msra.mxu0 0.0
        %1563 = vmatprep.subr.mxu0 0.0
        %1564 = vmatpush1.msra.mxu0 0.0
        %1565 = vmatprep.subr.mxu0 0.0
        %1566 = vmatpush1.msra.mxu0 0.0
        %1567 = vmatprep.subr.mxu0 0.0
        %1568 = vmatpush1.msra.mxu0 0.0
        %1569 = vmatprep.subr.mxu0 0.0
        %1570 = vmatpush1.msra.mxu0 0.0
        %1571 = vmatprep.subr.mxu0 0.0
        %1572 = vmatpush1.msra.mxu0 0.0
        %1573 = vmatprep.subr.mxu0 0.0
        %1574 = vmatpush1.msra.mxu0 0.0
        %1575 = vmatprep.subr.mxu0 0.0
        %1576 = vmatpush1.msra.mxu0 0.0
        %1577 = vmatprep.subr.mxu0 0.0
        %1578 = vmatpush1.msra.mxu0 0.0
        %1579 = vmatprep.subr.mxu0 0.0
        %1580 = vmatpush1.msra.mxu0 0.0
        %1581 = vmatprep.subr.mxu0 0.0
        %1582 = vmatpush1.msra.mxu0 0.0
        %1583 = vmatprep.subr.mxu0 0.0
        %1584 = vmatpush1.msra.mxu0 0.0
        %1585 = vmatprep.subr.mxu0 0.0
        %1586 = vmatpush1.msra.mxu0 0.0
        %1587 = vmatprep.subr.mxu0 0.0
        %1588 = vmatpush1.msra.mxu0 0.0
        %1589 = vmatprep.subr.mxu0 0.0
        %1590 = vmatpush1.msra.mxu0 0.0
        %1591 = vmatprep.subr.mxu0 0.0
        %1592 = vmatpush1.msra.mxu0 0.0
        %1593 = vmatprep.subr.mxu0 0.0
        %1594 = vmatpush1.msra.mxu0 0.0
        %1595 = vmatprep.subr.mxu0 0.0
        %1596 = vmatpush1.msra.mxu0 0.0
        %1597 = vmatprep.subr.mxu0 0.0
        %1598 = vmatpush1.msra.mxu0 0.0
        %1599 = vmatprep.subr.mxu0 0.0
        %1600 = vmatpush1.msra.mxu0 0.0
        %1601 = vmatprep.subr.mxu0 0.0
        %1602 = vmatpush1.msra.mxu0 0.0
        %1603 = vmatprep.subr.mxu0 0.0
        %1604 = vmatpush1.msra.mxu0 0.0
        %1605 = vmatprep.mubr.f32.mxu0 0.0
        %1606 = vmatmul.mubr.f32.gmra.mrb[0].mxu0 %v1537
        %v1607 = vpop.f32.mrb[0].mxu0
        %v1608 = vadd.f32 0.0, %v1607
        %v1609 = vpop.f32.mrb[0].mxu0
        %1610 = vdwg.mxu0
        %v1611 = vadd.f32 %v1522, %v1608
        %v1612 = vld [vmem:[#allocation3 + $0xd0] sm:$0xff]
        %v1614 = vsel %vm1273, %v1612, 0
        %v1616 = vsel %vm1277, %v1256, 0
        %1618 = vmatprep.subr.mxu0 0.0
        %1619 = vmatpush1.msra.mxu0 %v1616
        %1620 = vmatprep.subr.mxu0 0.0
        %1621 = vmatpush1.msra.mxu0 0.0
        %1622 = vmatprep.subr.mxu0 0.0
        %1623 = vmatpush1.msra.mxu0 0.0
        %1624 = vmatprep.subr.mxu0 0.0
        %1625 = vmatpush1.msra.mxu0 0.0
        %1626 = vmatprep.subr.mxu0 0.0
        %1627 = vmatpush1.msra.mxu0 0.0
        %1628 = vmatprep.subr.mxu0 0.0
        %1629 = vmatpush1.msra.mxu0 0.0
        %1630 = vmatprep.subr.mxu0 0.0
        %1631 = vmatpush1.msra.mxu0 0.0
        %1632 = vmatprep.subr.mxu0 0.0
        %1633 = vmatpush1.msra.mxu0 0.0
        %1634 = vmatprep.subr.mxu0 0.0
        %1635 = vmatpush1.msra.mxu0 0.0
        %1636 = vmatprep.subr.mxu0 0.0
        %1637 = vmatpush1.msra.mxu0 0.0
        %1638 = vmatprep.subr.mxu0 0.0
        %1639 = vmatpush1.msra.mxu0 0.0
        %1640 = vmatprep.subr.mxu0 0.0
        %1641 = vmatpush1.msra.mxu0 0.0
        %1642 = vmatprep.subr.mxu0 0.0
        %1643 = vmatpush1.msra.mxu0 0.0
        %1644 = vmatprep.subr.mxu0 0.0
        %1645 = vmatpush1.msra.mxu0 0.0
        %1646 = vmatprep.subr.mxu0 0.0
        %1647 = vmatpush1.msra.mxu0 0.0
        %1648 = vmatprep.subr.mxu0 0.0
        %1649 = vmatpush1.msra.mxu0 0.0
        %1650 = vmatprep.subr.mxu0 0.0
        %1651 = vmatpush1.msra.mxu0 0.0
        %1652 = vmatprep.subr.mxu0 0.0
        %1653 = vmatpush1.msra.mxu0 0.0
        %1654 = vmatprep.subr.mxu0 0.0
        %1655 = vmatpush1.msra.mxu0 0.0
        %1656 = vmatprep.subr.mxu0 0.0
        %1657 = vmatpush1.msra.mxu0 0.0
        %1658 = vmatprep.subr.mxu0 0.0
        %1659 = vmatpush1.msra.mxu0 0.0
        %1660 = vmatprep.subr.mxu0 0.0
        %1661 = vmatpush1.msra.mxu0 0.0
        %1662 = vmatprep.subr.mxu0 0.0
        %1663 = vmatpush1.msra.mxu0 0.0
        %1664 = vmatprep.subr.mxu0 0.0
        %1665 = vmatpush1.msra.mxu0 0.0
        %1666 = vmatprep.subr.mxu0 0.0
        %1667 = vmatpush1.msra.mxu0 0.0
        %1668 = vmatprep.subr.mxu0 0.0
        %1669 = vmatpush1.msra.mxu0 0.0
        %1670 = vmatprep.subr.mxu0 0.0
        %1671 = vmatpush1.msra.mxu0 0.0
        %1672 = vmatprep.subr.mxu0 0.0
        %1673 = vmatpush1.msra.mxu0 0.0
        %1674 = vmatprep.subr.mxu0 0.0
        %1675 = vmatpush1.msra.mxu0 0.0
        %1676 = vmatprep.subr.mxu0 0.0
        %1677 = vmatpush1.msra.mxu0 0.0
        %1678 = vmatprep.subr.mxu0 0.0
        %1679 = vmatpush1.msra.mxu0 0.0
        %1680 = vmatprep.subr.mxu0 0.0
        %1681 = vmatpush1.msra.mxu0 0.0
        %1682 = vmatprep.mubr.f32.mxu0 0.0
        %1683 = vmatmul.mubr.f32.gmra.mrb[0].mxu0 %v1614
        %v1684 = vpop.f32.mrb[0].mxu0
        %v1685 = vadd.f32 0.0, %v1684
        %v1686 = vpop.f32.mrb[0].mxu0
        %1687 = vdwg.mxu0
        %v1688 = vadd.f32 %v1611, %v1685
        %1689 = vrot.lane.b32.xlu0 %v1254, 1
        %v1690 = vpop.permute.xlu0 %1689
        %v1692 = vmul.f32 %v1256, %v1690
        %v1693 = vld [vmem:[#allocation3 + $0xe0] sm:$0xff]
        %1695 = vrot.lane.b32.xlu0 %v1692, 127
        %v1696 = vpop.permute.xlu0 %1695
        %v1698 = vsel %vm1273, %v1693, 0
        %v1700 = vsel %vm1277, %v1696, 0
        %1702 = vmatprep.subr.mxu0 0.0
        %1703 = vmatpush1.msra.mxu0 %v1700
        %1704 = vmatprep.subr.mxu0 0.0
        %1705 = vmatpush1.msra.mxu0 0.0
        %1706 = vmatprep.subr.mxu0 0.0
        %1707 = vmatpush1.msra.mxu0 0.0
        %1708 = vmatprep.subr.mxu0 0.0
        %1709 = vmatpush1.msra.mxu0 0.0
        %1710 = vmatprep.subr.mxu0 0.0
        %1711 = vmatpush1.msra.mxu0 0.0
        %1712 = vmatprep.subr.mxu0 0.0
        %1713 = vmatpush1.msra.mxu0 0.0
        %1714 = vmatprep.subr.mxu0 0.0
        %1715 = vmatpush1.msra.mxu0 0.0
        %1716 = vmatprep.subr.mxu0 0.0
        %1717 = vmatpush1.msra.mxu0 0.0
        %1718 = vmatprep.subr.mxu0 0.0
        %1719 = vmatpush1.msra.mxu0 0.0
        %1720 = vmatprep.subr.mxu0 0.0
        %1721 = vmatpush1.msra.mxu0 0.0
        %1722 = vmatprep.subr.mxu0 0.0
        %1723 = vmatpush1.msra.mxu0 0.0
        %1724 = vmatprep.subr.mxu0 0.0
        %1725 = vmatpush1.msra.mxu0 0.0
        %1726 = vmatprep.subr.mxu0 0.0
        %1727 = vmatpush1.msra.mxu0 0.0
        %1728 = vmatprep.subr.mxu0 0.0
        %1729 = vmatpush1.msra.mxu0 0.0
        %1730 = vmatprep.subr.mxu0 0.0
        %1731 = vmatpush1.msra.mxu0 0.0
        %1732 = vmatprep.subr.mxu0 0.0
        %1733 = vmatpush1.msra.mxu0 0.0
        %1734 = vmatprep.subr.mxu0 0.0
        %1735 = vmatpush1.msra.mxu0 0.0
        %1736 = vmatprep.subr.mxu0 0.0
        %1737 = vmatpush1.msra.mxu0 0.0
        %1738 = vmatprep.subr.mxu0 0.0
        %1739 = vmatpush1.msra.mxu0 0.0
        %1740 = vmatprep.subr.mxu0 0.0
        %1741 = vmatpush1.msra.mxu0 0.0
        %1742 = vmatprep.subr.mxu0 0.0
        %1743 = vmatpush1.msra.mxu0 0.0
        %1744 = vmatprep.subr.mxu0 0.0
        %1745 = vmatpush1.msra.mxu0 0.0
        %1746 = vmatprep.subr.mxu0 0.0
        %1747 = vmatpush1.msra.mxu0 0.0
        %1748 = vmatprep.subr.mxu0 0.0
        %1749 = vmatpush1.msra.mxu0 0.0
        %1750 = vmatprep.subr.mxu0 0.0
        %1751 = vmatpush1.msra.mxu0 0.0
        %1752 = vmatprep.subr.mxu0 0.0
        %1753 = vmatpush1.msra.mxu0 0.0
        %1754 = vmatprep.subr.mxu0 0.0
        %1755 = vmatpush1.msra.mxu0 0.0
        %1756 = vmatprep.subr.mxu0 0.0
        %1757 = vmatpush1.msra.mxu0 0.0
        %1758 = vmatprep.subr.mxu0 0.0
        %1759 = vmatpush1.msra.mxu0 0.0
        %1760 = vmatprep.subr.mxu0 0.0
        %1761 = vmatpush1.msra.mxu0 0.0
        %1762 = vmatprep.subr.mxu0 0.0
        %1763 = vmatpush1.msra.mxu0 0.0
        %1764 = vmatprep.subr.mxu0 0.0
        %1765 = vmatpush1.msra.mxu0 0.0
        %1766 = vmatprep.mubr.f32.mxu0 0.0
        %1767 = vmatmul.mubr.f32.gmra.mrb[0].mxu0 %v1698
        %v1768 = vpop.f32.mrb[0].mxu0
        %v1769 = vadd.f32 0.0, %v1768
        %v1770 = vpop.f32.mrb[0].mxu0
        %1771 = vdwg.mxu0
        %v1772 = vadd.f32 %v1688, %v1769
        %1773 = vrot.lane.b32.xlu0 %v1253, 7
        %v1774 = vpop.permute.xlu0 %1773
        %v1776 = vmul.f32 %v1256, %v1774
        %v1777 = vld [vmem:[#allocation3 + $0xf0] sm:$0xff]
        %1779 = vrot.lane.b32.xlu0 %v1776, 121
        %v1780 = vpop.permute.xlu0 %1779
        %v1782 = vsel %vm1273, %v1777, 0
        %v1784 = vsel %vm1277, %v1780, 0
        %1786 = vmatprep.subr.mxu0 0.0
        %1787 = vmatpush1.msra.mxu0 %v1784
        %1788 = vmatprep.subr.mxu0 0.0
        %1789 = vmatpush1.msra.mxu0 0.0
        %1790 = vmatprep.subr.mxu0 0.0
        %1791 = vmatpush1.msra.mxu0 0.0
        %1792 = vmatprep.subr.mxu0 0.0
        %1793 = vmatpush1.msra.mxu0 0.0
        %1794 = vmatprep.subr.mxu0 0.0
        %1795 = vmatpush1.msra.mxu0 0.0
        %1796 = vmatprep.subr.mxu0 0.0
        %1797 = vmatpush1.msra.mxu0 0.0
        %1798 = vmatprep.subr.mxu0 0.0
        %1799 = vmatpush1.msra.mxu0 0.0
        %1800 = vmatprep.subr.mxu0 0.0
        %1801 = vmatpush1.msra.mxu0 0.0
        %1802 = vmatprep.subr.mxu0 0.0
        %1803 = vmatpush1.msra.mxu0 0.0
        %1804 = vmatprep.subr.mxu0 0.0
        %1805 = vmatpush1.msra.mxu0 0.0
        %1806 = vmatprep.subr.mxu0 0.0
        %1807 = vmatpush1.msra.mxu0 0.0
        %1808 = vmatprep.subr.mxu0 0.0
        %1809 = vmatpush1.msra.mxu0 0.0
        %1810 = vmatprep.subr.mxu0 0.0
        %1811 = vmatpush1.msra.mxu0 0.0
        %1812 = vmatprep.subr.mxu0 0.0
        %1813 = vmatpush1.msra.mxu0 0.0
        %1814 = vmatprep.subr.mxu0 0.0
        %1815 = vmatpush1.msra.mxu0 0.0
        %1816 = vmatprep.subr.mxu0 0.0
        %1817 = vmatpush1.msra.mxu0 0.0
        %1818 = vmatprep.subr.mxu0 0.0
        %1819 = vmatpush1.msra.mxu0 0.0
        %1820 = vmatprep.subr.mxu0 0.0
        %1821 = vmatpush1.msra.mxu0 0.0
        %1822 = vmatprep.subr.mxu0 0.0
        %1823 = vmatpush1.msra.mxu0 0.0
        %1824 = vmatprep.subr.mxu0 0.0
        %1825 = vmatpush1.msra.mxu0 0.0
        %1826 = vmatprep.subr.mxu0 0.0
        %1827 = vmatpush1.msra.mxu0 0.0
        %1828 = vmatprep.subr.mxu0 0.0
        %1829 = vmatpush1.msra.mxu0 0.0
        %1830 = vmatprep.subr.mxu0 0.0
        %1831 = vmatpush1.msra.mxu0 0.0
        %1832 = vmatprep.subr.mxu0 0.0
        %1833 = vmatpush1.msra.mxu0 0.0
        %1834 = vmatprep.subr.mxu0 0.0
        %1835 = vmatpush1.msra.mxu0 0.0
        %1836 = vmatprep.subr.mxu0 0.0
        %1837 = vmatpush1.msra.mxu0 0.0
        %1838 = vmatprep.subr.mxu0 0.0
        %1839 = vmatpush1.msra.mxu0 0.0
        %1840 = vmatprep.subr.mxu0 0.0
        %1841 = vmatpush1.msra.mxu0 0.0
        %1842 = vmatprep.subr.mxu0 0.0
        %1843 = vmatpush1.msra.mxu0 0.0
        %1844 = vmatprep.subr.mxu0 0.0
        %1845 = vmatpush1.msra.mxu0 0.0
        %1846 = vmatprep.subr.mxu0 0.0
        %1847 = vmatpush1.msra.mxu0 0.0
        %1848 = vmatprep.subr.mxu0 0.0
        %1849 = vmatpush1.msra.mxu0 0.0
        %1850 = vmatprep.mubr.f32.mxu0 0.0
        %1851 = vmatmul.mubr.f32.gmra.mrb[0].mxu0 %v1782
        %v1852 = vpop.f32.mrb[0].mxu0
        %v1853 = vadd.f32 0.0, %v1852
        %v1854 = vpop.f32.mrb[0].mxu0
        %1855 = vdwg.mxu0
        %v1856 = vadd.f32 %v1772, %v1853
        %v1857 = vld [vmem:[#allocation3 + $0x100] sm:$0xff]
        %1858 = vrot.lane.b32.xlu0 %v1256, 120
        %v1859 = vpop.permute.xlu0 %1858
        %v1861 = vsel %vm1273, %v1857, 0
        %v1863 = vsel %vm1277, %v1859, 0
        %1865 = vmatprep.subr.mxu0 0.0
        %1866 = vmatpush1.msra.mxu0 %v1863
        %1867 = vmatprep.subr.mxu0 0.0
        %1868 = vmatpush1.msra.mxu0 0.0
        %1869 = vmatprep.subr.mxu0 0.0
        %1870 = vmatpush1.msra.mxu0 0.0
        %1871 = vmatprep.subr.mxu0 0.0
        %1872 = vmatpush1.msra.mxu0 0.0
        %1873 = vmatprep.subr.mxu0 0.0
        %1874 = vmatpush1.msra.mxu0 0.0
        %1875 = vmatprep.subr.mxu0 0.0
        %1876 = vmatpush1.msra.mxu0 0.0
        %1877 = vmatprep.subr.mxu0 0.0
        %1878 = vmatpush1.msra.mxu0 0.0
        %1879 = vmatprep.subr.mxu0 0.0
        %1880 = vmatpush1.msra.mxu0 0.0
        %1881 = vmatprep.subr.mxu0 0.0
        %1882 = vmatpush1.msra.mxu0 0.0
        %1883 = vmatprep.subr.mxu0 0.0
        %1884 = vmatpush1.msra.mxu0 0.0
        %1885 = vmatprep.subr.mxu0 0.0
        %1886 = vmatpush1.msra.mxu0 0.0
        %1887 = vmatprep.subr.mxu0 0.0
        %1888 = vmatpush1.msra.mxu0 0.0
        %1889 = vmatprep.subr.mxu0 0.0
        %1890 = vmatpush1.msra.mxu0 0.0
        %1891 = vmatprep.subr.mxu0 0.0
        %1892 = vmatpush1.msra.mxu0 0.0
        %1893 = vmatprep.subr.mxu0 0.0
        %1894 = vmatpush1.msra.mxu0 0.0
        %1895 = vmatprep.subr.mxu0 0.0
        %1896 = vmatpush1.msra.mxu0 0.0
        %1897 = vmatprep.subr.mxu0 0.0
        %1898 = vmatpush1.msra.mxu0 0.0
        %1899 = vmatprep.subr.mxu0 0.0
        %1900 = vmatpush1.msra.mxu0 0.0
        %1901 = vmatprep.subr.mxu0 0.0
        %1902 = vmatpush1.msra.mxu0 0.0
        %1903 = vmatprep.subr.mxu0 0.0
        %1904 = vmatpush1.msra.mxu0 0.0
        %1905 = vmatprep.subr.mxu0 0.0
        %1906 = vmatpush1.msra.mxu0 0.0
        %1907 = vmatprep.subr.mxu0 0.0
        %1908 = vmatpush1.msra.mxu0 0.0
        %1909 = vmatprep.subr.mxu0 0.0
        %1910 = vmatpush1.msra.mxu0 0.0
        %1911 = vmatprep.subr.mxu0 0.0
        %1912 = vmatpush1.msra.mxu0 0.0
        %1913 = vmatprep.subr.mxu0 0.0
        %1914 = vmatpush1.msra.mxu0 0.0
        %1915 = vmatprep.subr.mxu0 0.0
        %1916 = vmatpush1.msra.mxu0 0.0
        %1917 = vmatprep.subr.mxu0 0.0
        %1918 = vmatpush1.msra.mxu0 0.0
        %1919 = vmatprep.subr.mxu0 0.0
        %1920 = vmatpush1.msra.mxu0 0.0
        %1921 = vmatprep.subr.mxu0 0.0
        %1922 = vmatpush1.msra.mxu0 0.0
        %1923 = vmatprep.subr.mxu0 0.0
        %1924 = vmatpush1.msra.mxu0 0.0
        %1925 = vmatprep.subr.mxu0 0.0
        %1926 = vmatpush1.msra.mxu0 0.0
        %1927 = vmatprep.subr.mxu0 0.0
        %1928 = vmatpush1.msra.mxu0 0.0
        %1929 = vmatprep.mubr.f32.mxu0 0.0
        %1930 = vmatmul.mubr.f32.gmra.mrb[0].mxu0 %v1861
        %v1931 = vpop.f32.mrb[0].mxu0
        %v1932 = vadd.f32 0.0, %v1931
        %v1933 = vpop.f32.mrb[0].mxu0
        %1934 = vdwg.mxu0
        %v1935 = vadd.f32 %v1856, %v1932
        %1936 = vrot.lane.b32.xlu0 %v1254, 9
        %v1937 = vpop.permute.xlu0 %1936
        %v1939 = vmul.f32 %v1256, %v1937
        %v1940 = vld [vmem:[#allocation3 + $0x110] sm:$0xff]
        %1942 = vrot.lane.b32.xlu0 %v1939, 119
        %v1943 = vpop.permute.xlu0 %1942
        %v1945 = vsel %vm1273, %v1940, 0
        %v1947 = vsel %vm1277, %v1943, 0
        %1949 = vmatprep.subr.mxu0 0.0
        %1950 = vmatpush1.msra.mxu0 %v1947
        %1951 = vmatprep.subr.mxu0 0.0
        %1952 = vmatpush1.msra.mxu0 0.0
        %1953 = vmatprep.subr.mxu0 0.0
        %1954 = vmatpush1.msra.mxu0 0.0
        %1955 = vmatprep.subr.mxu0 0.0
        %1956 = vmatpush1.msra.mxu0 0.0
        %1957 = vmatprep.subr.mxu0 0.0
        %1958 = vmatpush1.msra.mxu0 0.0
        %1959 = vmatprep.subr.mxu0 0.0
        %1960 = vmatpush1.msra.mxu0 0.0
        %1961 = vmatprep.subr.mxu0 0.0
        %1962 = vmatpush1.msra.mxu0 0.0
        %1963 = vmatprep.subr.mxu0 0.0
        %1964 = vmatpush1.msra.mxu0 0.0
        %1965 = vmatprep.subr.mxu0 0.0
        %1966 = vmatpush1.msra.mxu0 0.0
        %1967 = vmatprep.subr.mxu0 0.0
        %1968 = vmatpush1.msra.mxu0 0.0
        %1969 = vmatprep.subr.mxu0 0.0
        %1970 = vmatpush1.msra.mxu0 0.0
        %1971 = vmatprep.subr.mxu0 0.0
        %1972 = vmatpush1.msra.mxu0 0.0
        %1973 = vmatprep.subr.mxu0 0.0
        %1974 = vmatpush1.msra.mxu0 0.0
        %1975 = vmatprep.subr.mxu0 0.0
        %1976 = vmatpush1.msra.mxu0 0.0
        %1977 = vmatprep.subr.mxu0 0.0
        %1978 = vmatpush1.msra.mxu0 0.0
        %1979 = vmatprep.subr.mxu0 0.0
        %1980 = vmatpush1.msra.mxu0 0.0
        %1981 = vmatprep.subr.mxu0 0.0
        %1982 = vmatpush1.msra.mxu0 0.0
        %1983 = vmatprep.subr.mxu0 0.0
        %1984 = vmatpush1.msra.mxu0 0.0
        %1985 = vmatprep.subr.mxu0 0.0
        %1986 = vmatpush1.msra.mxu0 0.0
        %1987 = vmatprep.subr.mxu0 0.0
        %1988 = vmatpush1.msra.mxu0 0.0
        %1989 = vmatprep.subr.mxu0 0.0
        %1990 = vmatpush1.msra.mxu0 0.0
        %1991 = vmatprep.subr.mxu0 0.0
        %1992 = vmatpush1.msra.mxu0 0.0
        %1993 = vmatprep.subr.mxu0 0.0
        %1994 = vmatpush1.msra.mxu0 0.0
        %1995 = vmatprep.subr.mxu0 0.0
        %1996 = vmatpush1.msra.mxu0 0.0
        %1997 = vmatprep.subr.mxu0 0.0
        %1998 = vmatpush1.msra.mxu0 0.0
        %1999 = vmatprep.subr.mxu0 0.0
        %2000 = vmatpush1.msra.mxu0 0.0
        %2001 = vmatprep.subr.mxu0 0.0
        %2002 = vmatpush1.msra.mxu0 0.0
        %2003 = vmatprep.subr.mxu0 0.0
        %2004 = vmatpush1.msra.mxu0 0.0
        %2005 = vmatprep.subr.mxu0 0.0
        %2006 = vmatpush1.msra.mxu0 0.0
        %2007 = vmatprep.subr.mxu0 0.0
        %2008 = vmatpush1.msra.mxu0 0.0
        %2009 = vmatprep.subr.mxu0 0.0
        %2010 = vmatpush1.msra.mxu0 0.0
        %2011 = vmatprep.subr.mxu0 0.0
        %2012 = vmatpush1.msra.mxu0 0.0
        %2013 = vmatprep.mubr.f32.mxu0 0.0
        %2014 = vmatmul.mubr.f32.gmra.mrb[0].mxu0 %v1945
        %v2015 = vpop.f32.mrb[0].mxu0
        %v2016 = vadd.f32 0.0, %v2015
        %v2017 = vpop.f32.mrb[0].mxu0
        %2018 = vdwg.mxu0
        %v2019 = vadd.f32 %v1935, %v2016
        %2020 = vset.pattern.permute.xlu0 7
        %2021 = vperm.xlu0 %2020, %v1263
        %v2022 = vpop.permute.xlu0 %2021
        %v2024 = vadd.f32 %v2019, %v2022
        %v2025 = vmul.f32 %v2024, 0.01
        %v2026 = vmax.f32 %v2024, %v2025
        %vm2027 = vcmask 523264
        %2028 = vst.msk [vmem:[#allocation2 + $0x8] sm:$0xff] %vm2027, %v2026
        %2029 = vst.msk [vmem:[#allocation2 + $0x28] sm:$0x7f] %vm1248, %v1245
        %vm2030 = vcmask 1048064
        %2031 = vst.msk [vmem:[#allocation2 + $0x8] sm:$0xff] %vm2030, 0.0
        %2032 = vst.msk [vmem:[#allocation2 + $0x10] sm:$0xff] %vm2027, 0.0
        %2033 = vst.msk [vmem:[#allocation2 + $0x28] sm:$0x7f] %vm1250, 0.0
        %2034 = vst.msk [vmem:[#allocation2 + $0x30] sm:$0x7f] %vm1248, 0.0
        %v2035 = vld [vmem:[#allocation2 + $0x8] sm:$0xff]
        %v2036 = vld [vmem:[#allocation2 + $0x28] sm:$0x7f]
        %2039 = vrot.lane.b32.xlu0 %v2035, 127
        %v2040 = vpop.permute.xlu0 %2039
        %2041 = vrot.lane.b32.xlu0 %v2036, 127
        %v2042 = vpop.permute.xlu0 %2041
        %v2045 = vmax.f32 %v2035, %v2040
        %v2046 = vmax.f32 %v2036, %v2042
        %2047 = vrot.lane.b32.xlu0 %v2035, 120
        %v2048 = vpop.permute.xlu0 %2047
        %2049 = vrot.lane.b32.xlu0 %v2036, 120
        %v2050 = vpop.permute.xlu0 %2049
        %v2053 = vmax.f32 %v2045, %v2048
        %v2054 = vmax.f32 %v2046, %v2050
        %2055 = vrot.lane.b32.xlu0 %v2035, 119
        %v2056 = vpop.permute.xlu0 %2055
        %2057 = vrot.lane.b32.xlu0 %v2036, 119
        %v2058 = vpop.permute.xlu0 %2057
        %v2061 = vmax.f32 %v2053, %v2056
        %v2062 = vmax.f32 %v2054, %v2058
        %v2063 = vld [vmem:[#allocation3 + $0x830] sm:$0xff]
        %v2064 = vld [vmem:[#allocation3 + $0x840] sm:$0xff]
        %v2065 = vld [vmem:[#allocation3 + $0x850] sm:$0xff]
        %v2066 = vld [vmem:[#allocation3 + $0x860] sm:$0xff]
        %v2067 = vld [vmem:[#allocation3 + $0x870] sm:$0xff]
        %v2068 = vld [vmem:[#allocation3 + $0x880] sm:$0xff]
        %v2069 = vld [vmem:[#allocation3 + $0x890] sm:$0xff]
        %v2070 = vld [vmem:[#allocation3 + $0x8a0] sm:$0xff]
        %v2072 = vsel %vm2027, %v2061, 0
        %v2075 = vsel %vm2027, %v2062, 0
        %2077 = vmatprep.subr.mxu0 0.0
        %2078 = vmatpush1.msra.mxu0 %v2063
        %2079 = vmatprep.subr.mxu0 0.0
        %2080 = vmatpush1.msra.mxu0 %v2064
        %2081 = vmatprep.subr.mxu0 0.0
        %2082 = vmatpush1.msra.mxu0 %v2065
        %2083 = vmatprep.subr.mxu0 0.0
        %2084 = vmatpush1.msra.mxu0 %v2066
        %2085 = vmatprep.subr.mxu0 0.0
        %2086 = vmatpush1.msra.mxu0 %v2067
        %2087 = vmatprep.subr.mxu0 0.0
        %2088 = vmatpush1.msra.mxu0 %v2068
        %2089 = vmatprep.subr.mxu0 0.0
        %2090 = vmatpush1.msra.mxu0 %v2069
        %2091 = vmatprep.subr.mxu0 0.0
        %2092 = vmatpush1.msra.mxu0 %v2070
        %2093 = vmatprep.subr.mxu0 0.0
        %2094 = vmatpush1.msra.mxu0 0.0
        %2095 = vmatprep.subr.mxu0 0.0
        %2096 = vmatpush1.msra.mxu0 0.0
        %2097 = vmatprep.subr.mxu0 0.0
        %2098 = vmatpush1.msra.mxu0 0.0
        %2099 = vmatprep.subr.mxu0 0.0
        %2100 = vmatpush1.msra.mxu0 0.0
        %2101 = vmatprep.subr.mxu0 0.0
        %2102 = vmatpush1.msra.mxu0 0.0
        %2103 = vmatprep.subr.mxu0 0.0
        %2104 = vmatpush1.msra.mxu0 0.0
        %2105 = vmatprep.subr.mxu0 0.0
        %2106 = vmatpush1.msra.mxu0 0.0
        %2107 = vmatprep.subr.mxu0 0.0
        %2108 = vmatpush1.msra.mxu0 0.0
        %2109 = vmatprep.subr.mxu0 0.0
        %2110 = vmatpush1.msra.mxu0 0.0
        %2111 = vmatprep.subr.mxu0 0.0
        %2112 = vmatpush1.msra.mxu0 0.0
        %2113 = vmatprep.subr.mxu0 0.0
        %2114 = vmatpush1.msra.mxu0 0.0
        %2115 = vmatprep.subr.mxu0 0.0
        %2116 = vmatpush1.msra.mxu0 0.0
        %2117 = vmatprep.subr.mxu0 0.0
        %2118 = vmatpush1.msra.mxu0 0.0
        %2119 = vmatprep.subr.mxu0 0.0
        %2120 = vmatpush1.msra.mxu0 0.0
        %2121 = vmatprep.subr.mxu0 0.0
        %2122 = vmatpush1.msra.mxu0 0.0
        %2123 = vmatprep.subr.mxu0 0.0
        %2124 = vmatpush1.msra.mxu0 0.0
        %2125 = vmatprep.subr.mxu0 0.0
        %2126 = vmatpush1.msra.mxu0 0.0
        %2127 = vmatprep.subr.mxu0 0.0
        %2128 = vmatpush1.msra.mxu0 0.0
        %2129 = vmatprep.subr.mxu0 0.0
        %2130 = vmatpush1.msra.mxu0 0.0
        %2131 = vmatprep.subr.mxu0 0.0
        %2132 = vmatpush1.msra.mxu0 0.0
        %2133 = vmatprep.subr.mxu0 0.0
        %2134 = vmatpush1.msra.mxu0 0.0
        %2135 = vmatprep.subr.mxu0 0.0
        %2136 = vmatpush1.msra.mxu0 0.0
        %2137 = vmatprep.subr.mxu0 0.0
        %2138 = vmatpush1.msra.mxu0 0.0
        %2139 = vmatprep.subr.mxu0 0.0
        %2140 = vmatpush1.msra.mxu0 0.0
        %2141 = vmatprep.mubr.f32.mxu0 0.0
        %2142 = vmatmul.mubr.f32.gmra.mrb[0].mxu0 %v2072
        %v2143 = vpop.f32.mrb[0].mxu0
        %v2144 = vadd.f32 0.0, %v2143
        %v2145 = vpop.f32.mrb[0].mxu0
        %2146 = vmatprep.mubr.f32.mxu0 0.0
        %2147 = vmatmul.mubr.f32.gmra.mrb[0].mxu0 %v2075
        %v2148 = vpop.f32.mrb[0].mxu0
        %v2149 = vadd.f32 0.0, %v2148
        %v2150 = vpop.f32.mrb[0].mxu0
        %2151 = vdwg.mxu0
        %2152 = vst.msk [vmem:[#allocation2 + $0x8] sm:$0xff] %vm209, %v2144
        %vm2153 = vcmask 129024
        %2154 = vst.msk [vmem:[#allocation2 + $0x28] sm:$0x7f] %vm2153, %v2149
        %vm2155 = vcmask 1047680
        %2156 = vst.msk [vmem:[#allocation2 + $0x8] sm:$0xff] %vm2155, 0.0
        %2157 = vst.msk [vmem:[#allocation2 + $0x10] sm:$0xff] %vm209, 0.0
        %vm2158 = vcmask 1046656
        %2159 = vst.msk [vmem:[#allocation2 + $0x28] sm:$0x7f] %vm2158, 0.0
        %2160 = vst.msk [vmem:[#allocation2 + $0x30] sm:$0x7f] %vm2153, 0.0
        %v2161 = vld [vmem:[#allocation3 + $0x970] ss:$0 sm:$0xff]
        %v2162 = vld [vmem:[#allocation3 + $0x971] ss:$0 sm:$0xff]
        %v2163 = vld [vmem:[#allocation2] sm:$0xff]
        %v2164 = vld [vmem:[#allocation2 + $0x8] sm:$0xff]
        %v2165 = vld [vmem:[#allocation2 + $0x20] sm:$0x7f]
        %v2166 = vld [vmem:[#allocation2 + $0x28] sm:$0x7f]
        %2168 = vrot.lane.b32.xlu0 %v2161, 123
        %v2169 = vpop.permute.xlu0 %2168
        %v2171 = vmul.f32 %v2163, %v2169
        %v2172 = vmul.f32 %v2164, %v2169
        %v2173 = vmul.f32 %v2165, %v2169
        %v2174 = vmul.f32 %v2166, %v2169
        %v2175 = vld [vmem:[#allocation3 + $0x120] sm:$0xff]
        %v2176 = vld [vmem:[#allocation3 + $0x130] sm:$0xff]
        %v2177 = vld [vmem:[#allocation3 + $0x140] sm:$0xff]
        %v2178 = vld [vmem:[#allocation3 + $0x150] sm:$0xff]
        %v2179 = vld [vmem:[#allocation3 + $0x160] sm:$0xff]
        %v2180 = vld [vmem:[#allocation3 + $0x170] sm:$0xff]
        %2185 = vrot.lane.b32.xlu0 %v2163, 4
        %v2186 = vpop.permute.xlu0 %2185
        %2187 = vrot.lane.b32.xlu0 %v2164, 4
        %v2188 = vpop.permute.xlu0 %2187
        %2189 = vrot.lane.b32.xlu0 %v2165, 4
        %v2190 = vpop.permute.xlu0 %2189
        %2191 = vrot.lane.b32.xlu0 %v2166, 4
        %v2192 = vpop.permute.xlu0 %2191
        %vm2193 = vcmask 31744
        %v2194 = vsel %vm2193, %v2186, %v2188
        %v2195 = vsel %vm2193, %v2190, %v2192
        %v2198 = vsel %vm413, %v2178, 0
        %v2201 = vsel %vm413, %v2179, 0
        %v2204 = vsel %vm413, %v2180, 0
        %v2206 = vsel %vm1277, %v2195, 0
        %2208 = vmatprep.subr.mxu0 0.0
        %2209 = vmatpush1.msra.mxu0 %v2194
        %2210 = vmatprep.subr.mxu0 0.0
        %2211 = vmatpush1.msra.mxu0 %v2206
        %2212 = vmatprep.subr.mxu0 0.0
        %2213 = vmatpush1.msra.mxu0 0.0
        %2214 = vmatprep.subr.mxu0 0.0
        %2215 = vmatpush1.msra.mxu0 0.0
        %2216 = vmatprep.subr.mxu0 0.0
        %2217 = vmatpush1.msra.mxu0 0.0
        %2218 = vmatprep.subr.mxu0 0.0
        %2219 = vmatpush1.msra.mxu0 0.0
        %2220 = vmatprep.subr.mxu0 0.0
        %2221 = vmatpush1.msra.mxu0 0.0
        %2222 = vmatprep.subr.mxu0 0.0
        %2223 = vmatpush1.msra.mxu0 0.0
        %2224 = vmatprep.subr.mxu0 0.0
        %2225 = vmatpush1.msra.mxu0 0.0
        %2226 = vmatprep.subr.mxu0 0.0
        %2227 = vmatpush1.msra.mxu0 0.0
        %2228 = vmatprep.subr.mxu0 0.0
        %2229 = vmatpush1.msra.mxu0 0.0
        %2230 = vmatprep.subr.mxu0 0.0
        %2231 = vmatpush1.msra.mxu0 0.0
        %2232 = vmatprep.subr.mxu0 0.0
        %2233 = vmatpush1.msra.mxu0 0.0
        %2234 = vmatprep.subr.mxu0 0.0
        %2235 = vmatpush1.msra.mxu0 0.0
        %2236 = vmatprep.subr.mxu0 0.0
        %2237 = vmatpush1.msra.mxu0 0.0
        %2238 = vmatprep.subr.mxu0 0.0
        %2239 = vmatpush1.msra.mxu0 0.0
        %2240 = vmatprep.subr.mxu0 0.0
        %2241 = vmatpush1.msra.mxu0 0.0
        %2242 = vmatprep.subr.mxu0 0.0
        %2243 = vmatpush1.msra.mxu0 0.0
        %2244 = vmatprep.subr.mxu0 0.0
        %2245 = vmatpush1.msra.mxu0 0.0
        %2246 = vmatprep.subr.mxu0 0.0
        %2247 = vmatpush1.msra.mxu0 0.0
        %2248 = vmatprep.subr.mxu0 0.0
        %2249 = vmatpush1.msra.mxu0 0.0
        %2250 = vmatprep.subr.mxu0 0.0
        %2251 = vmatpush1.msra.mxu0 0.0
        %2252 = vmatprep.subr.mxu0 0.0
        %2253 = vmatpush1.msra.mxu0 0.0
        %2254 = vmatprep.subr.mxu0 0.0
        %2255 = vmatpush1.msra.mxu0 0.0
        %2256 = vmatprep.subr.mxu0 0.0
        %2257 = vmatpush1.msra.mxu0 0.0
        %2258 = vmatprep.subr.mxu0 0.0
        %2259 = vmatpush1.msra.mxu0 0.0
        %2260 = vmatprep.subr.mxu0 0.0
        %2261 = vmatpush1.msra.mxu0 0.0
        %2262 = vmatprep.subr.mxu0 0.0
        %2263 = vmatpush1.msra.mxu0 0.0
        %2264 = vmatprep.subr.mxu0 0.0
        %2265 = vmatpush1.msra.mxu0 0.0
        %2266 = vmatprep.subr.mxu0 0.0
        %2267 = vmatpush1.msra.mxu0 0.0
        %2268 = vmatprep.subr.mxu0 0.0
        %2269 = vmatpush1.msra.mxu0 0.0
        %2270 = vmatprep.subr.mxu0 0.0
        %2271 = vmatpush1.msra.mxu0 0.0
        %2272 = vmatprep.mubr.f32.mxu0 0.0
        %2273 = vmatmul.mubr.f32.gmra.mrb[0].mxu0 %v2198
        %v2274 = vpop.f32.mrb[0].mxu0
        %v2275 = vadd.f32 0.0, %v2274
        %v2276 = vpop.f32.mrb[0].mxu0
        %2277 = vmatprep.mubr.f32.mxu0 0.0
        %2278 = vmatmul.mubr.f32.gmra.mrb[0].mxu0 %v2201
        %v2279 = vpop.f32.mrb[0].mxu0
        %v2280 = vadd.f32 0.0, %v2279
        %v2281 = vpop.f32.mrb[0].mxu0
        %2282 = vmatprep.mubr.f32.mxu0 0.0
        %2283 = vmatmul.mubr.f32.gmra.mrb[0].mxu0 %v2204
        %v2284 = vpop.f32.mrb[0].mxu0
        %v2285 = vadd.f32 0.0, %v2284
        %v2286 = vpop.f32.mrb[0].mxu0
        %2287 = vdwg.mxu0
        %2292 = vrot.lane.b32.xlu0 %v2171, 5
        %v2293 = vpop.permute.xlu0 %2292
        %2294 = vrot.lane.b32.xlu0 %v2172, 5
        %v2295 = vpop.permute.xlu0 %2294
        %2296 = vrot.lane.b32.xlu0 %v2173, 5
        %v2297 = vpop.permute.xlu0 %2296
        %2298 = vrot.lane.b32.xlu0 %v2174, 5
        %v2299 = vpop.permute.xlu0 %2298
        %vm2300 = vcmask 39936
        %v2301 = vsel %vm2300, %v2293, %v2295
        %v2302 = vsel %vm2300, %v2297, %v2299
        %v2305 = vsel %vm413, %v2175, 0
        %v2308 = vsel %vm413, %v2176, 0
        %v2311 = vsel %vm413, %v2177, 0
        %v2313 = vsel %vm1277, %v2302, 0
        %2315 = vmatprep.subr.mxu0 0.0
        %2316 = vmatpush1.msra.mxu0 %v2301
        %2317 = vmatprep.subr.mxu0 0.0
        %2318 = vmatpush1.msra.mxu0 %v2313
        %2319 = vmatprep.subr.mxu0 0.0
        %2320 = vmatpush1.msra.mxu0 0.0
        %2321 = vmatprep.subr.mxu0 0.0
        %2322 = vmatpush1.msra.mxu0 0.0
        %2323 = vmatprep.subr.mxu0 0.0
        %2324 = vmatpush1.msra.mxu0 0.0
        %2325 = vmatprep.subr.mxu0 0.0
        %2326 = vmatpush1.msra.mxu0 0.0
        %2327 = vmatprep.subr.mxu0 0.0
        %2328 = vmatpush1.msra.mxu0 0.0
        %2329 = vmatprep.subr.mxu0 0.0
        %2330 = vmatpush1.msra.mxu0 0.0
        %2331 = vmatprep.subr.mxu0 0.0
        %2332 = vmatpush1.msra.mxu0 0.0
        %2333 = vmatprep.subr.mxu0 0.0
        %2334 = vmatpush1.msra.mxu0 0.0
        %2335 = vmatprep.subr.mxu0 0.0
        %2336 = vmatpush1.msra.mxu0 0.0
        %2337 = vmatprep.subr.mxu0 0.0
        %2338 = vmatpush1.msra.mxu0 0.0
        %2339 = vmatprep.subr.mxu0 0.0
        %2340 = vmatpush1.msra.mxu0 0.0
        %2341 = vmatprep.subr.mxu0 0.0
        %2342 = vmatpush1.msra.mxu0 0.0
        %2343 = vmatprep.subr.mxu0 0.0
        %2344 = vmatpush1.msra.mxu0 0.0
        %2345 = vmatprep.subr.mxu0 0.0
        %2346 = vmatpush1.msra.mxu0 0.0
        %2347 = vmatprep.subr.mxu0 0.0
        %2348 = vmatpush1.msra.mxu0 0.0
        %2349 = vmatprep.subr.mxu0 0.0
        %2350 = vmatpush1.msra.mxu0 0.0
        %2351 = vmatprep.subr.mxu0 0.0
        %2352 = vmatpush1.msra.mxu0 0.0
        %2353 = vmatprep.subr.mxu0 0.0
        %2354 = vmatpush1.msra.mxu0 0.0
        %2355 = vmatprep.subr.mxu0 0.0
        %2356 = vmatpush1.msra.mxu0 0.0
        %2357 = vmatprep.subr.mxu0 0.0
        %2358 = vmatpush1.msra.mxu0 0.0
        %2359 = vmatprep.subr.mxu0 0.0
        %2360 = vmatpush1.msra.mxu0 0.0
        %2361 = vmatprep.subr.mxu0 0.0
        %2362 = vmatpush1.msra.mxu0 0.0
        %2363 = vmatprep.subr.mxu0 0.0
        %2364 = vmatpush1.msra.mxu0 0.0
        %2365 = vmatprep.subr.mxu0 0.0
        %2366 = vmatpush1.msra.mxu0 0.0
        %2367 = vmatprep.subr.mxu0 0.0
        %2368 = vmatpush1.msra.mxu0 0.0
        %2369 = vmatprep.subr.mxu0 0.0
        %2370 = vmatpush1.msra.mxu0 0.0
        %2371 = vmatprep.subr.mxu0 0.0
        %2372 = vmatpush1.msra.mxu0 0.0
        %2373 = vmatprep.subr.mxu0 0.0
        %2374 = vmatpush1.msra.mxu0 0.0
        %2375 = vmatprep.subr.mxu0 0.0
        %2376 = vmatpush1.msra.mxu0 0.0
        %2377 = vmatprep.subr.mxu0 0.0
        %2378 = vmatpush1.msra.mxu0 0.0
        %2379 = vmatprep.mubr.f32.mxu0 0.0
        %2380 = vmatmul.mubr.f32.gmra.mrb[0].mxu0 %v2305
        %v2381 = vpop.f32.mrb[0].mxu0
        %v2382 = vadd.f32 %v2275, %v2381
        %v2383 = vpop.f32.mrb[0].mxu0
        %2384 = vmatprep.mubr.f32.mxu0 0.0
        %2385 = vmatmul.mubr.f32.gmra.mrb[0].mxu0 %v2308
        %v2386 = vpop.f32.mrb[0].mxu0
        %v2387 = vadd.f32 %v2280, %v2386
        %v2388 = vpop.f32.mrb[0].mxu0
        %2389 = vmatprep.mubr.f32.mxu0 0.0
        %2390 = vmatmul.mubr.f32.gmra.mrb[0].mxu0 %v2311
        %v2391 = vpop.f32.mrb[0].mxu0
        %v2392 = vadd.f32 %v2285, %v2391
        %v2393 = vpop.f32.mrb[0].mxu0
        %2394 = vdwg.mxu0
        %2396 = vrot.lane.b32.xlu0 %v2162, 125
        %v2397 = vpop.permute.xlu0 %2396
        %v2399 = vmul.f32 %v2163, %v2397
        %v2400 = vmul.f32 %v2164, %v2397
        %v2401 = vmul.f32 %v2165, %v2397
        %v2402 = vmul.f32 %v2166, %v2397
        %v2403 = vld [vmem:[#allocation3 + $0x180] sm:$0xff]
        %v2404 = vld [vmem:[#allocation3 + $0x190] sm:$0xff]
        %v2405 = vld [vmem:[#allocation3 + $0x1a0] sm:$0xff]
        %2410 = vrot.lane.b32.xlu0 %v2399, 3
        %v2411 = vpop.permute.xlu0 %2410
        %2412 = vrot.lane.b32.xlu0 %v2400, 3
        %v2413 = vpop.permute.xlu0 %2412
        %2414 = vrot.lane.b32.xlu0 %v2401, 3
        %v2415 = vpop.permute.xlu0 %2414
        %2416 = vrot.lane.b32.xlu0 %v2402, 3
        %v2417 = vpop.permute.xlu0 %2416
        %v2418 = vsel %vm212, %v2411, %v2413
        %v2419 = vsel %vm212, %v2415, %v2417
        %v2422 = vsel %vm413, %v2403, 0
        %v2425 = vsel %vm413, %v2404, 0
        %v2428 = vsel %vm413, %v2405, 0
        %v2430 = vsel %vm1277, %v2419, 0
        %2432 = vmatprep.subr.mxu0 0.0
        %2433 = vmatpush1.msra.mxu0 %v2418
        %2434 = vmatprep.subr.mxu0 0.0
        %2435 = vmatpush1.msra.mxu0 %v2430
        %2436 = vmatprep.subr.mxu0 0.0
        %2437 = vmatpush1.msra.mxu0 0.0
        %2438 = vmatprep.subr.mxu0 0.0
        %2439 = vmatpush1.msra.mxu0 0.0
        %2440 = vmatprep.subr.mxu0 0.0
        %2441 = vmatpush1.msra.mxu0 0.0
        %2442 = vmatprep.subr.mxu0 0.0
        %2443 = vmatpush1.msra.mxu0 0.0
        %2444 = vmatprep.subr.mxu0 0.0
        %2445 = vmatpush1.msra.mxu0 0.0
        %2446 = vmatprep.subr.mxu0 0.0
        %2447 = vmatpush1.msra.mxu0 0.0
        %2448 = vmatprep.subr.mxu0 0.0
        %2449 = vmatpush1.msra.mxu0 0.0
        %2450 = vmatprep.subr.mxu0 0.0
        %2451 = vmatpush1.msra.mxu0 0.0
        %2452 = vmatprep.subr.mxu0 0.0
        %2453 = vmatpush1.msra.mxu0 0.0
        %2454 = vmatprep.subr.mxu0 0.0
        %2455 = vmatpush1.msra.mxu0 0.0
        %2456 = vmatprep.subr.mxu0 0.0
        %2457 = vmatpush1.msra.mxu0 0.0
        %2458 = vmatprep.subr.mxu0 0.0
        %2459 = vmatpush1.msra.mxu0 0.0
        %2460 = vmatprep.subr.mxu0 0.0
        %2461 = vmatpush1.msra.mxu0 0.0
        %2462 = vmatprep.subr.mxu0 0.0
        %2463 = vmatpush1.msra.mxu0 0.0
        %2464 = vmatprep.subr.mxu0 0.0
        %2465 = vmatpush1.msra.mxu0 0.0
        %2466 = vmatprep.subr.mxu0 0.0
        %2467 = vmatpush1.msra.mxu0 0.0
        %2468 = vmatprep.subr.mxu0 0.0
        %2469 = vmatpush1.msra.mxu0 0.0
        %2470 = vmatprep.subr.mxu0 0.0
        %2471 = vmatpush1.msra.mxu0 0.0
        %2472 = vmatprep.subr.mxu0 0.0
        %2473 = vmatpush1.msra.mxu0 0.0
        %2474 = vmatprep.subr.mxu0 0.0
        %2475 = vmatpush1.msra.mxu0 0.0
        %2476 = vmatprep.subr.mxu0 0.0
        %2477 = vmatpush1.msra.mxu0 0.0
        %2478 = vmatprep.subr.mxu0 0.0
        %2479 = vmatpush1.msra.mxu0 0.0
        %2480 = vmatprep.subr.mxu0 0.0
        %2481 = vmatpush1.msra.mxu0 0.0
        %2482 = vmatprep.subr.mxu0 0.0
        %2483 = vmatpush1.msra.mxu0 0.0
        %2484 = vmatprep.subr.mxu0 0.0
        %2485 = vmatpush1.msra.mxu0 0.0
        %2486 = vmatprep.subr.mxu0 0.0
        %2487 = vmatpush1.msra.mxu0 0.0
        %2488 = vmatprep.subr.mxu0 0.0
        %2489 = vmatpush1.msra.mxu0 0.0
        %2490 = vmatprep.subr.mxu0 0.0
        %2491 = vmatpush1.msra.mxu0 0.0
        %2492 = vmatprep.subr.mxu0 0.0
        %2493 = vmatpush1.msra.mxu0 0.0
        %2494 = vmatprep.subr.mxu0 0.0
        %2495 = vmatpush1.msra.mxu0 0.0
        %2496 = vmatprep.mubr.f32.mxu0 0.0
        %2497 = vmatmul.mubr.f32.gmra.mrb[0].mxu0 %v2422
        %v2498 = vpop.f32.mrb[0].mxu0
        %v2499 = vadd.f32 0.0, %v2498
        %v2500 = vpop.f32.mrb[0].mxu0
        %2501 = vmatprep.mubr.f32.mxu0 0.0
        %2502 = vmatmul.mubr.f32.gmra.mrb[0].mxu0 %v2425
        %v2503 = vpop.f32.mrb[0].mxu0
        %v2504 = vadd.f32 0.0, %v2503
        %v2505 = vpop.f32.mrb[0].mxu0
        %2506 = vmatprep.mubr.f32.mxu0 0.0
        %2507 = vmatmul.mubr.f32.gmra.mrb[0].mxu0 %v2428
        %v2508 = vpop.f32.mrb[0].mxu0
        %v2509 = vadd.f32 0.0, %v2508
        %v2510 = vpop.f32.mrb[0].mxu0
        %2511 = vdwg.mxu0
        %v2512 = vadd.f32 %v2382, %v2499
        %v2513 = vadd.f32 %v2387, %v2504
        %v2514 = vadd.f32 %v2392, %v2509
        %2515 = vrot.lane.b32.xlu0 %v2161, 127
        %v2516 = vpop.permute.xlu0 %2515
        %v2518 = vmul.f32 %v2163, %v2516
        %v2519 = vmul.f32 %v2164, %v2516
        %v2520 = vmul.f32 %v2165, %v2516
        %v2521 = vmul.f32 %v2166, %v2516
        %v2522 = vld [vmem:[#allocation3 + $0x1b0] sm:$0xff]
        %v2523 = vld [vmem:[#allocation3 + $0x1c0] sm:$0xff]
        %v2524 = vld [vmem:[#allocation3 + $0x1d0] sm:$0xff]
        %2529 = vrot.lane.b32.xlu0 %v2518, 1
        %v2530 = vpop.permute.xlu0 %2529
        %2531 = vrot.lane.b32.xlu0 %v2519, 1
        %v2532 = vpop.permute.xlu0 %2531
        %2533 = vrot.lane.b32.xlu0 %v2520, 1
        %v2534 = vpop.permute.xlu0 %2533
        %2535 = vrot.lane.b32.xlu0 %v2521, 1
        %v2536 = vpop.permute.xlu0 %2535
        %v2537 = vsel %vm518, %v2530, %v2532
        %v2538 = vsel %vm518, %v2534, %v2536
        %v2541 = vsel %vm413, %v2522, 0
        %v2544 = vsel %vm413, %v2523, 0
        %v2547 = vsel %vm413, %v2524, 0
        %v2549 = vsel %vm1277, %v2538, 0
        %2551 = vmatprep.subr.mxu0 0.0
        %2552 = vmatpush1.msra.mxu0 %v2537
        %2553 = vmatprep.subr.mxu0 0.0
        %2554 = vmatpush1.msra.mxu0 %v2549
        %2555 = vmatprep.subr.mxu0 0.0
        %2556 = vmatpush1.msra.mxu0 0.0
        %2557 = vmatprep.subr.mxu0 0.0
        %2558 = vmatpush1.msra.mxu0 0.0
        %2559 = vmatprep.subr.mxu0 0.0
        %2560 = vmatpush1.msra.mxu0 0.0
        %2561 = vmatprep.subr.mxu0 0.0
        %2562 = vmatpush1.msra.mxu0 0.0
        %2563 = vmatprep.subr.mxu0 0.0
        %2564 = vmatpush1.msra.mxu0 0.0
        %2565 = vmatprep.subr.mxu0 0.0
        %2566 = vmatpush1.msra.mxu0 0.0
        %2567 = vmatprep.subr.mxu0 0.0
        %2568 = vmatpush1.msra.mxu0 0.0
        %2569 = vmatprep.subr.mxu0 0.0
        %2570 = vmatpush1.msra.mxu0 0.0
        %2571 = vmatprep.subr.mxu0 0.0
        %2572 = vmatpush1.msra.mxu0 0.0
        %2573 = vmatprep.subr.mxu0 0.0
        %2574 = vmatpush1.msra.mxu0 0.0
        %2575 = vmatprep.subr.mxu0 0.0
        %2576 = vmatpush1.msra.mxu0 0.0
        %2577 = vmatprep.subr.mxu0 0.0
        %2578 = vmatpush1.msra.mxu0 0.0
        %2579 = vmatprep.subr.mxu0 0.0
        %2580 = vmatpush1.msra.mxu0 0.0
        %2581 = vmatprep.subr.mxu0 0.0
        %2582 = vmatpush1.msra.mxu0 0.0
        %2583 = vmatprep.subr.mxu0 0.0
        %2584 = vmatpush1.msra.mxu0 0.0
        %2585 = vmatprep.subr.mxu0 0.0
        %2586 = vmatpush1.msra.mxu0 0.0
        %2587 = vmatprep.subr.mxu0 0.0
        %2588 = vmatpush1.msra.mxu0 0.0
        %2589 = vmatprep.subr.mxu0 0.0
        %2590 = vmatpush1.msra.mxu0 0.0
        %2591 = vmatprep.subr.mxu0 0.0
        %2592 = vmatpush1.msra.mxu0 0.0
        %2593 = vmatprep.subr.mxu0 0.0
        %2594 = vmatpush1.msra.mxu0 0.0
        %2595 = vmatprep.subr.mxu0 0.0
        %2596 = vmatpush1.msra.mxu0 0.0
        %2597 = vmatprep.subr.mxu0 0.0
        %2598 = vmatpush1.msra.mxu0 0.0
        %2599 = vmatprep.subr.mxu0 0.0
        %2600 = vmatpush1.msra.mxu0 0.0
        %2601 = vmatprep.subr.mxu0 0.0
        %2602 = vmatpush1.msra.mxu0 0.0
        %2603 = vmatprep.subr.mxu0 0.0
        %2604 = vmatpush1.msra.mxu0 0.0
        %2605 = vmatprep.subr.mxu0 0.0
        %2606 = vmatpush1.msra.mxu0 0.0
        %2607 = vmatprep.subr.mxu0 0.0
        %2608 = vmatpush1.msra.mxu0 0.0
        %2609 = vmatprep.subr.mxu0 0.0
        %2610 = vmatpush1.msra.mxu0 0.0
        %2611 = vmatprep.subr.mxu0 0.0
        %2612 = vmatpush1.msra.mxu0 0.0
        %2613 = vmatprep.subr.mxu0 0.0
        %2614 = vmatpush1.msra.mxu0 0.0
        %2615 = vmatprep.mubr.f32.mxu0 0.0
        %2616 = vmatmul.mubr.f32.gmra.mrb[0].mxu0 %v2541
        %v2617 = vpop.f32.mrb[0].mxu0
        %v2618 = vadd.f32 0.0, %v2617
        %v2619 = vpop.f32.mrb[0].mxu0
        %2620 = vmatprep.mubr.f32.mxu0 0.0
        %2621 = vmatmul.mubr.f32.gmra.mrb[0].mxu0 %v2544
        %v2622 = vpop.f32.mrb[0].mxu0
        %v2623 = vadd.f32 0.0, %v2622
        %v2624 = vpop.f32.mrb[0].mxu0
        %2625 = vmatprep.mubr.f32.mxu0 0.0
        %2626 = vmatmul.mubr.f32.gmra.mrb[0].mxu0 %v2547
        %v2627 = vpop.f32.mrb[0].mxu0
        %v2628 = vadd.f32 0.0, %v2627
        %v2629 = vpop.f32.mrb[0].mxu0
        %2630 = vdwg.mxu0
        %v2631 = vadd.f32 %v2512, %v2618
        %v2632 = vadd.f32 %v2513, %v2623
        %v2633 = vadd.f32 %v2514, %v2628
        %v2634 = vld [vmem:[#allocation3 + $0x1e0] sm:$0xff]
        %v2635 = vld [vmem:[#allocation3 + $0x1f0] sm:$0xff]
        %v2636 = vld [vmem:[#allocation3 + $0x200] sm:$0xff]
        %v2638 = vsel %vm413, %v2634, 0
        %v2641 = vsel %vm413, %v2635, 0
        %v2644 = vsel %vm413, %v2636, 0
        %v2646 = vsel %vm1277, %v2166, 0
        %2648 = vmatprep.subr.mxu0 0.0
        %2649 = vmatpush1.msra.mxu0 %v2164
        %2650 = vmatprep.subr.mxu0 0.0
        %2651 = vmatpush1.msra.mxu0 %v2646
        %2652 = vmatprep.subr.mxu0 0.0
        %2653 = vmatpush1.msra.mxu0 0.0
        %2654 = vmatprep.subr.mxu0 0.0
        %2655 = vmatpush1.msra.mxu0 0.0
        %2656 = vmatprep.subr.mxu0 0.0
        %2657 = vmatpush1.msra.mxu0 0.0
        %2658 = vmatprep.subr.mxu0 0.0
        %2659 = vmatpush1.msra.mxu0 0.0
        %2660 = vmatprep.subr.mxu0 0.0
        %2661 = vmatpush1.msra.mxu0 0.0
        %2662 = vmatprep.subr.mxu0 0.0
        %2663 = vmatpush1.msra.mxu0 0.0
        %2664 = vmatprep.subr.mxu0 0.0
        %2665 = vmatpush1.msra.mxu0 0.0
        %2666 = vmatprep.subr.mxu0 0.0
        %2667 = vmatpush1.msra.mxu0 0.0
        %2668 = vmatprep.subr.mxu0 0.0
        %2669 = vmatpush1.msra.mxu0 0.0
        %2670 = vmatprep.subr.mxu0 0.0
        %2671 = vmatpush1.msra.mxu0 0.0
        %2672 = vmatprep.subr.mxu0 0.0
        %2673 = vmatpush1.msra.mxu0 0.0
        %2674 = vmatprep.subr.mxu0 0.0
        %2675 = vmatpush1.msra.mxu0 0.0
        %2676 = vmatprep.subr.mxu0 0.0
        %2677 = vmatpush1.msra.mxu0 0.0
        %2678 = vmatprep.subr.mxu0 0.0
        %2679 = vmatpush1.msra.mxu0 0.0
        %2680 = vmatprep.subr.mxu0 0.0
        %2681 = vmatpush1.msra.mxu0 0.0
        %2682 = vmatprep.subr.mxu0 0.0
        %2683 = vmatpush1.msra.mxu0 0.0
        %2684 = vmatprep.subr.mxu0 0.0
        %2685 = vmatpush1.msra.mxu0 0.0
        %2686 = vmatprep.subr.mxu0 0.0
        %2687 = vmatpush1.msra.mxu0 0.0
        %2688 = vmatprep.subr.mxu0 0.0
        %2689 = vmatpush1.msra.mxu0 0.0
        %2690 = vmatprep.subr.mxu0 0.0
        %2691 = vmatpush1.msra.mxu0 0.0
        %2692 = vmatprep.subr.mxu0 0.0
        %2693 = vmatpush1.msra.mxu0 0.0
        %2694 = vmatprep.subr.mxu0 0.0
        %2695 = vmatpush1.msra.mxu0 0.0
        %2696 = vmatprep.subr.mxu0 0.0
        %2697 = vmatpush1.msra.mxu0 0.0
        %2698 = vmatprep.subr.mxu0 0.0
        %2699 = vmatpush1.msra.mxu0 0.0
        %2700 = vmatprep.subr.mxu0 0.0
        %2701 = vmatpush1.msra.mxu0 0.0
        %2702 = vmatprep.subr.mxu0 0.0
        %2703 = vmatpush1.msra.mxu0 0.0
        %2704 = vmatprep.subr.mxu0 0.0
        %2705 = vmatpush1.msra.mxu0 0.0
        %2706 = vmatprep.subr.mxu0 0.0
        %2707 = vmatpush1.msra.mxu0 0.0
        %2708 = vmatprep.subr.mxu0 0.0
        %2709 = vmatpush1.msra.mxu0 0.0
        %2710 = vmatprep.subr.mxu0 0.0
        %2711 = vmatpush1.msra.mxu0 0.0
        %2712 = vmatprep.mubr.f32.mxu0 0.0
        %2713 = vmatmul.mubr.f32.gmra.mrb[0].mxu0 %v2638
        %v2714 = vpop.f32.mrb[0].mxu0
        %v2715 = vadd.f32 0.0, %v2714
        %v2716 = vpop.f32.mrb[0].mxu0
        %2717 = vmatprep.mubr.f32.mxu0 0.0
        %2718 = vmatmul.mubr.f32.gmra.mrb[0].mxu0 %v2641
        %v2719 = vpop.f32.mrb[0].mxu0
        %v2720 = vadd.f32 0.0, %v2719
        %v2721 = vpop.f32.mrb[0].mxu0
        %2722 = vmatprep.mubr.f32.mxu0 0.0
        %2723 = vmatmul.mubr.f32.gmra.mrb[0].mxu0 %v2644
        %v2724 = vpop.f32.mrb[0].mxu0
        %v2725 = vadd.f32 0.0, %v2724
        %v2726 = vpop.f32.mrb[0].mxu0
        %2727 = vdwg.mxu0
        %v2728 = vadd.f32 %v2631, %v2715
        %v2729 = vadd.f32 %v2632, %v2720
        %v2730 = vadd.f32 %v2633, %v2725
        %2731 = vrot.lane.b32.xlu0 %v2162, 1
        %v2732 = vpop.permute.xlu0 %2731
        %v2734 = vmul.f32 %v2164, %v2732
        %v2735 = vmul.f32 %v2166, %v2732
        %v2736 = vld [vmem:[#allocation3 + $0x210] sm:$0xff]
        %v2737 = vld [vmem:[#allocation3 + $0x220] sm:$0xff]
        %v2738 = vld [vmem:[#allocation3 + $0x230] sm:$0xff]
        %2741 = vrot.lane.b32.xlu0 %v2734, 127
        %v2742 = vpop.permute.xlu0 %2741
        %2743 = vrot.lane.b32.xlu0 %v2735, 127
        %v2744 = vpop.permute.xlu0 %2743
        %v2747 = vsel %vm413, %v2736, 0
        %v2750 = vsel %vm413, %v2737, 0
        %v2753 = vsel %vm413, %v2738, 0
        %v2755 = vsel %vm1277, %v2744, 0
        %2757 = vmatprep.subr.mxu0 0.0
        %2758 = vmatpush1.msra.mxu0 %v2742
        %2759 = vmatprep.subr.mxu0 0.0
        %2760 = vmatpush1.msra.mxu0 %v2755
        %2761 = vmatprep.subr.mxu0 0.0
        %2762 = vmatpush1.msra.mxu0 0.0
        %2763 = vmatprep.subr.mxu0 0.0
        %2764 = vmatpush1.msra.mxu0 0.0
        %2765 = vmatprep.subr.mxu0 0.0
        %2766 = vmatpush1.msra.mxu0 0.0
        %2767 = vmatprep.subr.mxu0 0.0
        %2768 = vmatpush1.msra.mxu0 0.0
        %2769 = vmatprep.subr.mxu0 0.0
        %2770 = vmatpush1.msra.mxu0 0.0
        %2771 = vmatprep.subr.mxu0 0.0
        %2772 = vmatpush1.msra.mxu0 0.0
        %2773 = vmatprep.subr.mxu0 0.0
        %2774 = vmatpush1.msra.mxu0 0.0
        %2775 = vmatprep.subr.mxu0 0.0
        %2776 = vmatpush1.msra.mxu0 0.0
        %2777 = vmatprep.subr.mxu0 0.0
        %2778 = vmatpush1.msra.mxu0 0.0
        %2779 = vmatprep.subr.mxu0 0.0
        %2780 = vmatpush1.msra.mxu0 0.0
        %2781 = vmatprep.subr.mxu0 0.0
        %2782 = vmatpush1.msra.mxu0 0.0
        %2783 = vmatprep.subr.mxu0 0.0
        %2784 = vmatpush1.msra.mxu0 0.0
        %2785 = vmatprep.subr.mxu0 0.0
        %2786 = vmatpush1.msra.mxu0 0.0
        %2787 = vmatprep.subr.mxu0 0.0
        %2788 = vmatpush1.msra.mxu0 0.0
        %2789 = vmatprep.subr.mxu0 0.0
        %2790 = vmatpush1.msra.mxu0 0.0
        %2791 = vmatprep.subr.mxu0 0.0
        %2792 = vmatpush1.msra.mxu0 0.0
        %2793 = vmatprep.subr.mxu0 0.0
        %2794 = vmatpush1.msra.mxu0 0.0
        %2795 = vmatprep.subr.mxu0 0.0
        %2796 = vmatpush1.msra.mxu0 0.0
        %2797 = vmatprep.subr.mxu0 0.0
        %2798 = vmatpush1.msra.mxu0 0.0
        %2799 = vmatprep.subr.mxu0 0.0
        %2800 = vmatpush1.msra.mxu0 0.0
        %2801 = vmatprep.subr.mxu0 0.0
        %2802 = vmatpush1.msra.mxu0 0.0
        %2803 = vmatprep.subr.mxu0 0.0
        %2804 = vmatpush1.msra.mxu0 0.0
        %2805 = vmatprep.subr.mxu0 0.0
        %2806 = vmatpush1.msra.mxu0 0.0
        %2807 = vmatprep.subr.mxu0 0.0
        %2808 = vmatpush1.msra.mxu0 0.0
        %2809 = vmatprep.subr.mxu0 0.0
        %2810 = vmatpush1.msra.mxu0 0.0
        %2811 = vmatprep.subr.mxu0 0.0
        %2812 = vmatpush1.msra.mxu0 0.0
        %2813 = vmatprep.subr.mxu0 0.0
        %2814 = vmatpush1.msra.mxu0 0.0
        %2815 = vmatprep.subr.mxu0 0.0
        %2816 = vmatpush1.msra.mxu0 0.0
        %2817 = vmatprep.subr.mxu0 0.0
        %2818 = vmatpush1.msra.mxu0 0.0
        %2819 = vmatprep.subr.mxu0 0.0
        %2820 = vmatpush1.msra.mxu0 0.0
        %2821 = vmatprep.mubr.f32.mxu0 0.0
        %2822 = vmatmul.mubr.f32.gmra.mrb[0].mxu0 %v2747
        %v2823 = vpop.f32.mrb[0].mxu0
        %v2824 = vadd.f32 0.0, %v2823
        %v2825 = vpop.f32.mrb[0].mxu0
        %2826 = vmatprep.mubr.f32.mxu0 0.0
        %2827 = vmatmul.mubr.f32.gmra.mrb[0].mxu0 %v2750
        %v2828 = vpop.f32.mrb[0].mxu0
        %v2829 = vadd.f32 0.0, %v2828
        %v2830 = vpop.f32.mrb[0].mxu0
        %2831 = vmatprep.mubr.f32.mxu0 0.0
        %2832 = vmatmul.mubr.f32.gmra.mrb[0].mxu0 %v2753
        %v2833 = vpop.f32.mrb[0].mxu0
        %v2834 = vadd.f32 0.0, %v2833
        %v2835 = vpop.f32.mrb[0].mxu0
        %2836 = vdwg.mxu0
        %v2837 = vadd.f32 %v2728, %v2824
        %v2838 = vadd.f32 %v2729, %v2829
        %v2839 = vadd.f32 %v2730, %v2834
        %2840 = vrot.lane.b32.xlu0 %v2161, 3
        %v2841 = vpop.permute.xlu0 %2840
        %v2843 = vmul.f32 %v2164, %v2841
        %v2844 = vmul.f32 %v2166, %v2841
        %v2845 = vld [vmem:[#allocation3 + $0x240] sm:$0xff]
        %v2846 = vld [vmem:[#allocation3 + $0x250] sm:$0xff]
        %v2847 = vld [vmem:[#allocation3 + $0x260] sm:$0xff]
        %2850 = vrot.lane.b32.xlu0 %v2843, 125
        %v2851 = vpop.permute.xlu0 %2850
        %2852 = vrot.lane.b32.xlu0 %v2844, 125
        %v2853 = vpop.permute.xlu0 %2852
        %v2856 = vsel %vm413, %v2845, 0
        %v2859 = vsel %vm413, %v2846, 0
        %v2862 = vsel %vm413, %v2847, 0
        %v2864 = vsel %vm1277, %v2853, 0
        %2866 = vmatprep.subr.mxu0 0.0
        %2867 = vmatpush1.msra.mxu0 %v2851
        %2868 = vmatprep.subr.mxu0 0.0
        %2869 = vmatpush1.msra.mxu0 %v2864
        %2870 = vmatprep.subr.mxu0 0.0
        %2871 = vmatpush1.msra.mxu0 0.0
        %2872 = vmatprep.subr.mxu0 0.0
        %2873 = vmatpush1.msra.mxu0 0.0
        %2874 = vmatprep.subr.mxu0 0.0
        %2875 = vmatpush1.msra.mxu0 0.0
        %2876 = vmatprep.subr.mxu0 0.0
        %2877 = vmatpush1.msra.mxu0 0.0
        %2878 = vmatprep.subr.mxu0 0.0
        %2879 = vmatpush1.msra.mxu0 0.0
        %2880 = vmatprep.subr.mxu0 0.0
        %2881 = vmatpush1.msra.mxu0 0.0
        %2882 = vmatprep.subr.mxu0 0.0
        %2883 = vmatpush1.msra.mxu0 0.0
        %2884 = vmatprep.subr.mxu0 0.0
        %2885 = vmatpush1.msra.mxu0 0.0
        %2886 = vmatprep.subr.mxu0 0.0
        %2887 = vmatpush1.msra.mxu0 0.0
        %2888 = vmatprep.subr.mxu0 0.0
        %2889 = vmatpush1.msra.mxu0 0.0
        %2890 = vmatprep.subr.mxu0 0.0
        %2891 = vmatpush1.msra.mxu0 0.0
        %2892 = vmatprep.subr.mxu0 0.0
        %2893 = vmatpush1.msra.mxu0 0.0
        %2894 = vmatprep.subr.mxu0 0.0
        %2895 = vmatpush1.msra.mxu0 0.0
        %2896 = vmatprep.subr.mxu0 0.0
        %2897 = vmatpush1.msra.mxu0 0.0
        %2898 = vmatprep.subr.mxu0 0.0
        %2899 = vmatpush1.msra.mxu0 0.0
        %2900 = vmatprep.subr.mxu0 0.0
        %2901 = vmatpush1.msra.mxu0 0.0
        %2902 = vmatprep.subr.mxu0 0.0
        %2903 = vmatpush1.msra.mxu0 0.0
        %2904 = vmatprep.subr.mxu0 0.0
        %2905 = vmatpush1.msra.mxu0 0.0
        %2906 = vmatprep.subr.mxu0 0.0
        %2907 = vmatpush1.msra.mxu0 0.0
        %2908 = vmatprep.subr.mxu0 0.0
        %2909 = vmatpush1.msra.mxu0 0.0
        %2910 = vmatprep.subr.mxu0 0.0
        %2911 = vmatpush1.msra.mxu0 0.0
        %2912 = vmatprep.subr.mxu0 0.0
        %2913 = vmatpush1.msra.mxu0 0.0
        %2914 = vmatprep.subr.mxu0 0.0
        %2915 = vmatpush1.msra.mxu0 0.0
        %2916 = vmatprep.subr.mxu0 0.0
        %2917 = vmatpush1.msra.mxu0 0.0
        %2918 = vmatprep.subr.mxu0 0.0
        %2919 = vmatpush1.msra.mxu0 0.0
        %2920 = vmatprep.subr.mxu0 0.0
        %2921 = vmatpush1.msra.mxu0 0.0
        %2922 = vmatprep.subr.mxu0 0.0
        %2923 = vmatpush1.msra.mxu0 0.0
        %2924 = vmatprep.subr.mxu0 0.0
        %2925 = vmatpush1.msra.mxu0 0.0
        %2926 = vmatprep.subr.mxu0 0.0
        %2927 = vmatpush1.msra.mxu0 0.0
        %2928 = vmatprep.subr.mxu0 0.0
        %2929 = vmatpush1.msra.mxu0 0.0
        %2930 = vmatprep.mubr.f32.mxu0 0.0
        %2931 = vmatmul.mubr.f32.gmra.mrb[0].mxu0 %v2856
        %v2932 = vpop.f32.mrb[0].mxu0
        %v2933 = vadd.f32 0.0, %v2932
        %v2934 = vpop.f32.mrb[0].mxu0
        %2935 = vmatprep.mubr.f32.mxu0 0.0
        %2936 = vmatmul.mubr.f32.gmra.mrb[0].mxu0 %v2859
        %v2937 = vpop.f32.mrb[0].mxu0
        %v2938 = vadd.f32 0.0, %v2937
        %v2939 = vpop.f32.mrb[0].mxu0
        %2940 = vmatprep.mubr.f32.mxu0 0.0
        %2941 = vmatmul.mubr.f32.gmra.mrb[0].mxu0 %v2862
        %v2942 = vpop.f32.mrb[0].mxu0
        %v2943 = vadd.f32 0.0, %v2942
        %v2944 = vpop.f32.mrb[0].mxu0
        %2945 = vdwg.mxu0
        %v2946 = vadd.f32 %v2837, %v2933
        %v2947 = vadd.f32 %v2838, %v2938
        %v2948 = vadd.f32 %v2839, %v2943
        %v2949 = vld [vmem:[#allocation3 + $0x270] sm:$0xff]
        %v2950 = vld [vmem:[#allocation3 + $0x280] sm:$0xff]
        %v2951 = vld [vmem:[#allocation3 + $0x290] sm:$0xff]
        %2952 = vrot.lane.b32.xlu0 %v2164, 124
        %v2953 = vpop.permute.xlu0 %2952
        %2954 = vrot.lane.b32.xlu0 %v2166, 124
        %v2955 = vpop.permute.xlu0 %2954
        %v2958 = vsel %vm413, %v2949, 0
        %v2961 = vsel %vm413, %v2950, 0
        %v2964 = vsel %vm413, %v2951, 0
        %v2966 = vsel %vm1277, %v2955, 0
        %2968 = vmatprep.subr.mxu0 0.0
        %2969 = vmatpush1.msra.mxu0 %v2953
        %2970 = vmatprep.subr.mxu0 0.0
        %2971 = vmatpush1.msra.mxu0 %v2966
        %2972 = vmatprep.subr.mxu0 0.0
        %2973 = vmatpush1.msra.mxu0 0.0
        %2974 = vmatprep.subr.mxu0 0.0
        %2975 = vmatpush1.msra.mxu0 0.0
        %2976 = vmatprep.subr.mxu0 0.0
        %2977 = vmatpush1.msra.mxu0 0.0
        %2978 = vmatprep.subr.mxu0 0.0
        %2979 = vmatpush1.msra.mxu0 0.0
        %2980 = vmatprep.subr.mxu0 0.0
        %2981 = vmatpush1.msra.mxu0 0.0
        %2982 = vmatprep.subr.mxu0 0.0
        %2983 = vmatpush1.msra.mxu0 0.0
        %2984 = vmatprep.subr.mxu0 0.0
        %2985 = vmatpush1.msra.mxu0 0.0
        %2986 = vmatprep.subr.mxu0 0.0
        %2987 = vmatpush1.msra.mxu0 0.0
        %2988 = vmatprep.subr.mxu0 0.0
        %2989 = vmatpush1.msra.mxu0 0.0
        %2990 = vmatprep.subr.mxu0 0.0
        %2991 = vmatpush1.msra.mxu0 0.0
        %2992 = vmatprep.subr.mxu0 0.0
        %2993 = vmatpush1.msra.mxu0 0.0
        %2994 = vmatprep.subr.mxu0 0.0
        %2995 = vmatpush1.msra.mxu0 0.0
        %2996 = vmatprep.subr.mxu0 0.0
        %2997 = vmatpush1.msra.mxu0 0.0
        %2998 = vmatprep.subr.mxu0 0.0
        %2999 = vmatpush1.msra.mxu0 0.0
        %3000 = vmatprep.subr.mxu0 0.0
        %3001 = vmatpush1.msra.mxu0 0.0
        %3002 = vmatprep.subr.mxu0 0.0
        %3003 = vmatpush1.msra.mxu0 0.0
        %3004 = vmatprep.subr.mxu0 0.0
        %3005 = vmatpush1.msra.mxu0 0.0
        %3006 = vmatprep.subr.mxu0 0.0
        %3007 = vmatpush1.msra.mxu0 0.0
        %3008 = vmatprep.subr.mxu0 0.0
        %3009 = vmatpush1.msra.mxu0 0.0
        %3010 = vmatprep.subr.mxu0 0.0
        %3011 = vmatpush1.msra.mxu0 0.0
        %3012 = vmatprep.subr.mxu0 0.0
        %3013 = vmatpush1.msra.mxu0 0.0
        %3014 = vmatprep.subr.mxu0 0.0
        %3015 = vmatpush1.msra.mxu0 0.0
        %3016 = vmatprep.subr.mxu0 0.0
        %3017 = vmatpush1.msra.mxu0 0.0
        %3018 = vmatprep.subr.mxu0 0.0
        %3019 = vmatpush1.msra.mxu0 0.0
        %3020 = vmatprep.subr.mxu0 0.0
        %3021 = vmatpush1.msra.mxu0 0.0
        %3022 = vmatprep.subr.mxu0 0.0
        %3023 = vmatpush1.msra.mxu0 0.0
        %3024 = vmatprep.subr.mxu0 0.0
        %3025 = vmatpush1.msra.mxu0 0.0
        %3026 = vmatprep.subr.mxu0 0.0
        %3027 = vmatpush1.msra.mxu0 0.0
        %3028 = vmatprep.subr.mxu0 0.0
        %3029 = vmatpush1.msra.mxu0 0.0
        %3030 = vmatprep.subr.mxu0 0.0
        %3031 = vmatpush1.msra.mxu0 0.0
        %3032 = vmatprep.mubr.f32.mxu0 0.0
        %3033 = vmatmul.mubr.f32.gmra.mrb[0].mxu0 %v2958
        %v3034 = vpop.f32.mrb[0].mxu0
        %v3035 = vadd.f32 0.0, %v3034
        %v3036 = vpop.f32.mrb[0].mxu0
        %3037 = vmatprep.mubr.f32.mxu0 0.0
        %3038 = vmatmul.mubr.f32.gmra.mrb[0].mxu0 %v2961
        %v3039 = vpop.f32.mrb[0].mxu0
        %v3040 = vadd.f32 0.0, %v3039
        %v3041 = vpop.f32.mrb[0].mxu0
        %3042 = vmatprep.mubr.f32.mxu0 0.0
        %3043 = vmatmul.mubr.f32.gmra.mrb[0].mxu0 %v2964
        %v3044 = vpop.f32.mrb[0].mxu0
        %v3045 = vadd.f32 0.0, %v3044
        %v3046 = vpop.f32.mrb[0].mxu0
        %3047 = vdwg.mxu0
        %v3048 = vadd.f32 %v2946, %v3035
        %v3049 = vadd.f32 %v2947, %v3040
        %v3050 = vadd.f32 %v2948, %v3045
        %3051 = vrot.lane.b32.xlu0 %v2162, 5
        %v3052 = vpop.permute.xlu0 %3051
        %v3054 = vmul.f32 %v2164, %v3052
        %v3055 = vmul.f32 %v2166, %v3052
        %v3056 = vld [vmem:[#allocation3 + $0x2a0] sm:$0xff]
        %v3057 = vld [vmem:[#allocation3 + $0x2b0] sm:$0xff]
        %v3058 = vld [vmem:[#allocation3 + $0x2c0] sm:$0xff]
        %3061 = vrot.lane.b32.xlu0 %v3054, 123
        %v3062 = vpop.permute.xlu0 %3061
        %3063 = vrot.lane.b32.xlu0 %v3055, 123
        %v3064 = vpop.permute.xlu0 %3063
        %v3067 = vsel %vm413, %v3056, 0
        %v3070 = vsel %vm413, %v3057, 0
        %v3073 = vsel %vm413, %v3058, 0
        %v3075 = vsel %vm1277, %v3064, 0
        %3077 = vmatprep.subr.mxu0 0.0
        %3078 = vmatpush1.msra.mxu0 %v3062
        %3079 = vmatprep.subr.mxu0 0.0
        %3080 = vmatpush1.msra.mxu0 %v3075
        %3081 = vmatprep.subr.mxu0 0.0
        %3082 = vmatpush1.msra.mxu0 0.0
        %3083 = vmatprep.subr.mxu0 0.0
        %3084 = vmatpush1.msra.mxu0 0.0
        %3085 = vmatprep.subr.mxu0 0.0
        %3086 = vmatpush1.msra.mxu0 0.0
        %3087 = vmatprep.subr.mxu0 0.0
        %3088 = vmatpush1.msra.mxu0 0.0
        %3089 = vmatprep.subr.mxu0 0.0
        %3090 = vmatpush1.msra.mxu0 0.0
        %3091 = vmatprep.subr.mxu0 0.0
        %3092 = vmatpush1.msra.mxu0 0.0
        %3093 = vmatprep.subr.mxu0 0.0
        %3094 = vmatpush1.msra.mxu0 0.0
        %3095 = vmatprep.subr.mxu0 0.0
        %3096 = vmatpush1.msra.mxu0 0.0
        %3097 = vmatprep.subr.mxu0 0.0
        %3098 = vmatpush1.msra.mxu0 0.0
        %3099 = vmatprep.subr.mxu0 0.0
        %3100 = vmatpush1.msra.mxu0 0.0
        %3101 = vmatprep.subr.mxu0 0.0
        %3102 = vmatpush1.msra.mxu0 0.0
        %3103 = vmatprep.subr.mxu0 0.0
        %3104 = vmatpush1.msra.mxu0 0.0
        %3105 = vmatprep.subr.mxu0 0.0
        %3106 = vmatpush1.msra.mxu0 0.0
        %3107 = vmatprep.subr.mxu0 0.0
        %3108 = vmatpush1.msra.mxu0 0.0
        %3109 = vmatprep.subr.mxu0 0.0
        %3110 = vmatpush1.msra.mxu0 0.0
        %3111 = vmatprep.subr.mxu0 0.0
        %3112 = vmatpush1.msra.mxu0 0.0
        %3113 = vmatprep.subr.mxu0 0.0
        %3114 = vmatpush1.msra.mxu0 0.0
        %3115 = vmatprep.subr.mxu0 0.0
        %3116 = vmatpush1.msra.mxu0 0.0
        %3117 = vmatprep.subr.mxu0 0.0
        %3118 = vmatpush1.msra.mxu0 0.0
        %3119 = vmatprep.subr.mxu0 0.0
        %3120 = vmatpush1.msra.mxu0 0.0
        %3121 = vmatprep.subr.mxu0 0.0
        %3122 = vmatpush1.msra.mxu0 0.0
        %3123 = vmatprep.subr.mxu0 0.0
        %3124 = vmatpush1.msra.mxu0 0.0
        %3125 = vmatprep.subr.mxu0 0.0
        %3126 = vmatpush1.msra.mxu0 0.0
        %3127 = vmatprep.subr.mxu0 0.0
        %3128 = vmatpush1.msra.mxu0 0.0
        %3129 = vmatprep.subr.mxu0 0.0
        %3130 = vmatpush1.msra.mxu0 0.0
        %3131 = vmatprep.subr.mxu0 0.0
        %3132 = vmatpush1.msra.mxu0 0.0
        %3133 = vmatprep.subr.mxu0 0.0
        %3134 = vmatpush1.msra.mxu0 0.0
        %3135 = vmatprep.subr.mxu0 0.0
        %3136 = vmatpush1.msra.mxu0 0.0
        %3137 = vmatprep.subr.mxu0 0.0
        %3138 = vmatpush1.msra.mxu0 0.0
        %3139 = vmatprep.subr.mxu0 0.0
        %3140 = vmatpush1.msra.mxu0 0.0
        %3141 = vmatprep.mubr.f32.mxu0 0.0
        %3142 = vmatmul.mubr.f32.gmra.mrb[0].mxu0 %v3067
        %v3143 = vpop.f32.mrb[0].mxu0
        %v3144 = vadd.f32 0.0, %v3143
        %v3145 = vpop.f32.mrb[0].mxu0
        %3146 = vmatprep.mubr.f32.mxu0 0.0
        %3147 = vmatmul.mubr.f32.gmra.mrb[0].mxu0 %v3070
        %v3148 = vpop.f32.mrb[0].mxu0
        %v3149 = vadd.f32 0.0, %v3148
        %v3150 = vpop.f32.mrb[0].mxu0
        %3151 = vmatprep.mubr.f32.mxu0 0.0
        %3152 = vmatmul.mubr.f32.gmra.mrb[0].mxu0 %v3073
        %v3153 = vpop.f32.mrb[0].mxu0
        %v3154 = vadd.f32 0.0, %v3153
        %v3155 = vpop.f32.mrb[0].mxu0
        %3156 = vdwg.mxu0
        %v3157 = vadd.f32 %v3048, %v3144
        %v3158 = vadd.f32 %v3049, %v3149
        %v3159 = vadd.f32 %v3050, %v3154
        %3160 = vset.pattern.permute.xlu0 15
        %3161 = vperm.xlu0 %3160, %v2175
        %v3162 = vpop.permute.xlu0 %3161
        %3164 = vset.pattern.permute.xlu0 15
        %3165 = vperm.xlu0 %3164, %v2176
        %v3166 = vpop.permute.xlu0 %3165
        %3168 = vset.pattern.permute.xlu0 15
        %3169 = vperm.xlu0 %3168, %v2177
        %v3170 = vpop.permute.xlu0 %3169
        %v3172 = vadd.f32 %v3157, %v3162
        %v3173 = vadd.f32 %v3158, %v3166
        %v3174 = vadd.f32 %v3159, %v3170
        %v3175 = vmul.f32 %v3172, 0.01
        %v3176 = vmul.f32 %v3173, 0.01
        %v3177 = vmul.f32 %v3174, 0.01
        %v3178 = vmax.f32 %v3172, %v3175
        %v3179 = vmax.f32 %v3173, %v3176
        %v3180 = vmax.f32 %v3174, %v3177
        %v3181 = vld [vmem:[#allocation3 + $0x930] sm:$0xff]
        %v3182 = vld [vmem:[#allocation3 + $0x940] sm:$0xff]
        %v3184 = vsel %vm209, %v3178, 0
        %v3187 = vsel %vm209, %v3179, 0
        %v3190 = vsel %vm209, %v3180, 0
        %3192 = vmatprep.subr.mxu0 0.0
        %3193 = vmatpush1.msra.mxu0 %v3181
        %3194 = vmatprep.subr.mxu0 0.0
        %3195 = vmatpush1.msra.mxu0 %v3182
        %3196 = vmatprep.subr.mxu0 0.0
        %3197 = vmatpush1.msra.mxu0 0.0
        %3198 = vmatprep.subr.mxu0 0.0
        %3199 = vmatpush1.msra.mxu0 0.0
        %3200 = vmatprep.subr.mxu0 0.0
        %3201 = vmatpush1.msra.mxu0 0.0
        %3202 = vmatprep.subr.mxu0 0.0
        %3203 = vmatpush1.msra.mxu0 0.0
        %3204 = vmatprep.subr.mxu0 0.0
        %3205 = vmatpush1.msra.mxu0 0.0
        %3206 = vmatprep.subr.mxu0 0.0
        %3207 = vmatpush1.msra.mxu0 0.0
        %3208 = vmatprep.subr.mxu0 0.0
        %3209 = vmatpush1.msra.mxu0 0.0
        %3210 = vmatprep.subr.mxu0 0.0
        %3211 = vmatpush1.msra.mxu0 0.0
        %3212 = vmatprep.subr.mxu0 0.0
        %3213 = vmatpush1.msra.mxu0 0.0
        %3214 = vmatprep.subr.mxu0 0.0
        %3215 = vmatpush1.msra.mxu0 0.0
        %3216 = vmatprep.subr.mxu0 0.0
        %3217 = vmatpush1.msra.mxu0 0.0
        %3218 = vmatprep.subr.mxu0 0.0
        %3219 = vmatpush1.msra.mxu0 0.0
        %3220 = vmatprep.subr.mxu0 0.0
        %3221 = vmatpush1.msra.mxu0 0.0
        %3222 = vmatprep.subr.mxu0 0.0
        %3223 = vmatpush1.msra.mxu0 0.0
        %3224 = vmatprep.subr.mxu0 0.0
        %3225 = vmatpush1.msra.mxu0 0.0
        %3226 = vmatprep.subr.mxu0 0.0
        %3227 = vmatpush1.msra.mxu0 0.0
        %3228 = vmatprep.subr.mxu0 0.0
        %3229 = vmatpush1.msra.mxu0 0.0
        %3230 = vmatprep.subr.mxu0 0.0
        %3231 = vmatpush1.msra.mxu0 0.0
        %3232 = vmatprep.subr.mxu0 0.0
        %3233 = vmatpush1.msra.mxu0 0.0
        %3234 = vmatprep.subr.mxu0 0.0
        %3235 = vmatpush1.msra.mxu0 0.0
        %3236 = vmatprep.subr.mxu0 0.0
        %3237 = vmatpush1.msra.mxu0 0.0
        %3238 = vmatprep.subr.mxu0 0.0
        %3239 = vmatpush1.msra.mxu0 0.0
        %3240 = vmatprep.subr.mxu0 0.0
        %3241 = vmatpush1.msra.mxu0 0.0
        %3242 = vmatprep.subr.mxu0 0.0
        %3243 = vmatpush1.msra.mxu0 0.0
        %3244 = vmatprep.subr.mxu0 0.0
        %3245 = vmatpush1.msra.mxu0 0.0
        %3246 = vmatprep.subr.mxu0 0.0
        %3247 = vmatpush1.msra.mxu0 0.0
        %3248 = vmatprep.subr.mxu0 0.0
        %3249 = vmatpush1.msra.mxu0 0.0
        %3250 = vmatprep.subr.mxu0 0.0
        %3251 = vmatpush1.msra.mxu0 0.0
        %3252 = vmatprep.subr.mxu0 0.0
        %3253 = vmatpush1.msra.mxu0 0.0
        %3254 = vmatprep.subr.mxu0 0.0
        %3255 = vmatpush1.msra.mxu0 0.0
        %3256 = vmatprep.mubr.f32.mxu0 0.0
        %3257 = vmatmul.mubr.f32.gmra.mrb[0].mxu0 %v3184
        %v3258 = vpop.f32.mrb[0].mxu0
        %v3259 = vadd.f32 0.0, %v3258
        %v3260 = vpop.f32.mrb[0].mxu0
        %3261 = vmatprep.mubr.f32.mxu0 0.0
        %3262 = vmatmul.mubr.f32.gmra.mrb[0].mxu0 %v3187
        %v3263 = vpop.f32.mrb[0].mxu0
        %v3264 = vadd.f32 0.0, %v3263
        %v3265 = vpop.f32.mrb[0].mxu0
        %3266 = vmatprep.mubr.f32.mxu0 0.0
        %3267 = vmatmul.mubr.f32.gmra.mrb[0].mxu0 %v3190
        %v3268 = vpop.f32.mrb[0].mxu0
        %v3269 = vadd.f32 0.0, %v3268
        %v3270 = vpop.f32.mrb[0].mxu0
        %3271 = vdwg.mxu0
        %3272 = vst.msk [vmem:[#allocation2 + $0x8] sm:$0xff] %vm2027, %v3259
        %3273 = vst.msk [vmem:[#allocation2 + $0x28] sm:$0xff] %vm2027, %v3264
        %3274 = vst.msk [vmem:[#allocation2 + $0x48] sm:$0xff] %vm2027, %v3269
        %3275 = vst.msk [vmem:[#allocation2 + $0x8] sm:$0xff] %vm2030, 0.0
        %3276 = vst.msk [vmem:[#allocation2 + $0x10] sm:$0xff] %vm2027, 0.0
        %3277 = vst.msk [vmem:[#allocation2 + $0x28] sm:$0xff] %vm2030, 0.0
        %3278 = vst.msk [vmem:[#allocation2 + $0x30] sm:$0xff] %vm2027, 0.0
        %3279 = vst.msk [vmem:[#allocation2 + $0x48] sm:$0xff] %vm2030, 0.0
        %3280 = vst.msk [vmem:[#allocation2 + $0x50] sm:$0xff] %vm2027, 0.0
        %v3281 = vld [vmem:[#allocation3 + $0x960] ss:$0 sm:$0xff]
        %v3282 = vld [vmem:[#allocation3 + $0x961] ss:$0 sm:$0xff]
        %v3283 = vld [vmem:[#allocation2] sm:$0xff]
        %v3284 = vld [vmem:[#allocation2 + $0x8] sm:$0xff]
        %v3285 = vld [vmem:[#allocation2 + $0x20] sm:$0xff]
        %v3286 = vld [vmem:[#allocation2 + $0x28] sm:$0xff]
        %v3287 = vld [vmem:[#allocation2 + $0x40] sm:$0xff]
        %v3288 = vld [vmem:[#allocation2 + $0x48] sm:$0xff]
        %3290 = vrot.lane.b32.xlu0 %v3281, 119
        %v3291 = vpop.permute.xlu0 %3290
        %v3293 = vmul.f32 %v3283, %v3291
        %v3294 = vmul.f32 %v3284, %v3291
        %v3295 = vmul.f32 %v3285, %v3291
        %v3296 = vmul.f32 %v3286, %v3291
        %v3297 = vmul.f32 %v3287, %v3291
        %v3298 = vmul.f32 %v3288, %v3291
        %v3299 = vld [vmem:[#allocation3 + $0x360] sm:$0xff]
        %v3300 = vld [vmem:[#allocation3 + $0x370] sm:$0xff]
        %v3301 = vld [vmem:[#allocation3 + $0x380] sm:$0xff]
        %v3302 = vld [vmem:[#allocation3 + $0x390] sm:$0xff]
        %3309 = vrot.lane.b32.xlu0 %v3283, 8
        %v3310 = vpop.permute.xlu0 %3309
        %3311 = vrot.lane.b32.xlu0 %v3284, 8
        %v3312 = vpop.permute.xlu0 %3311
        %3313 = vrot.lane.b32.xlu0 %v3285, 8
        %v3314 = vpop.permute.xlu0 %3313
        %3315 = vrot.lane.b32.xlu0 %v3286, 8
        %v3316 = vpop.permute.xlu0 %3315
        %3317 = vrot.lane.b32.xlu0 %v3287, 8
        %v3318 = vpop.permute.xlu0 %3317
        %3319 = vrot.lane.b32.xlu0 %v3288, 8
        %v3320 = vpop.permute.xlu0 %3319
        %v3321 = vsel %vm1271, %v3310, %v3312
        %v3322 = vsel %vm1271, %v3314, %v3316
        %v3323 = vsel %vm1271, %v3318, %v3320
        %vm3327 = vcmask 195584
        %v3329 = vsel %vm3327, %v3301, 0
        %v3332 = vsel %vm3327, %v3302, 0
        %3334 = vmatprep.subr.mxu0 0.0
        %3335 = vmatpush1.msra.mxu0 %v3321
        %3336 = vmatprep.subr.mxu0 0.0
        %3337 = vmatpush1.msra.mxu0 %v3322
        %3338 = vmatprep.subr.mxu0 0.0
        %3339 = vmatpush1.msra.mxu0 %v3323
        %3340 = vmatprep.subr.mxu0 0.0
        %3341 = vmatpush1.msra.mxu0 0.0
        %3342 = vmatprep.subr.mxu0 0.0
        %3343 = vmatpush1.msra.mxu0 0.0
        %3344 = vmatprep.subr.mxu0 0.0
        %3345 = vmatpush1.msra.mxu0 0.0
        %3346 = vmatprep.subr.mxu0 0.0
        %3347 = vmatpush1.msra.mxu0 0.0
        %3348 = vmatprep.subr.mxu0 0.0
        %3349 = vmatpush1.msra.mxu0 0.0
        %3350 = vmatprep.subr.mxu0 0.0
        %3351 = vmatpush1.msra.mxu0 0.0
        %3352 = vmatprep.subr.mxu0 0.0
        %3353 = vmatpush1.msra.mxu0 0.0
        %3354 = vmatprep.subr.mxu0 0.0
        %3355 = vmatpush1.msra.mxu0 0.0
        %3356 = vmatprep.subr.mxu0 0.0
        %3357 = vmatpush1.msra.mxu0 0.0
        %3358 = vmatprep.subr.mxu0 0.0
        %3359 = vmatpush1.msra.mxu0 0.0
        %3360 = vmatprep.subr.mxu0 0.0
        %3361 = vmatpush1.msra.mxu0 0.0
        %3362 = vmatprep.subr.mxu0 0.0
        %3363 = vmatpush1.msra.mxu0 0.0
        %3364 = vmatprep.subr.mxu0 0.0
        %3365 = vmatpush1.msra.mxu0 0.0
        %3366 = vmatprep.subr.mxu0 0.0
        %3367 = vmatpush1.msra.mxu0 0.0
        %3368 = vmatprep.subr.mxu0 0.0
        %3369 = vmatpush1.msra.mxu0 0.0
        %3370 = vmatprep.subr.mxu0 0.0
        %3371 = vmatpush1.msra.mxu0 0.0
        %3372 = vmatprep.subr.mxu0 0.0
        %3373 = vmatpush1.msra.mxu0 0.0
        %3374 = vmatprep.subr.mxu0 0.0
        %3375 = vmatpush1.msra.mxu0 0.0
        %3376 = vmatprep.subr.mxu0 0.0
        %3377 = vmatpush1.msra.mxu0 0.0
        %3378 = vmatprep.subr.mxu0 0.0
        %3379 = vmatpush1.msra.mxu0 0.0
        %3380 = vmatprep.subr.mxu0 0.0
        %3381 = vmatpush1.msra.mxu0 0.0
        %3382 = vmatprep.subr.mxu0 0.0
        %3383 = vmatpush1.msra.mxu0 0.0
        %3384 = vmatprep.subr.mxu0 0.0
        %3385 = vmatpush1.msra.mxu0 0.0
        %3386 = vmatprep.subr.mxu0 0.0
        %3387 = vmatpush1.msra.mxu0 0.0
        %3388 = vmatprep.subr.mxu0 0.0
        %3389 = vmatpush1.msra.mxu0 0.0
        %3390 = vmatprep.subr.mxu0 0.0
        %3391 = vmatpush1.msra.mxu0 0.0
        %3392 = vmatprep.subr.mxu0 0.0
        %3393 = vmatpush1.msra.mxu0 0.0
        %3394 = vmatprep.subr.mxu0 0.0
        %3395 = vmatpush1.msra.mxu0 0.0
        %3396 = vmatprep.subr.mxu0 0.0
        %3397 = vmatpush1.msra.mxu0 0.0
        %3398 = vmatprep.mubr.f32.mxu0 0.0
        %3399 = vmatmul.mubr.f32.gmra.mrb[0].mxu0 %v3329
        %v3400 = vpop.f32.mrb[0].mxu0
        %v3401 = vadd.f32 0.0, %v3400
        %v3402 = vpop.f32.mrb[0].mxu0
        %3403 = vmatprep.mubr.f32.mxu0 0.0
        %3404 = vmatmul.mubr.f32.gmra.mrb[0].mxu0 %v3332
        %v3405 = vpop.f32.mrb[0].mxu0
        %v3406 = vadd.f32 0.0, %v3405
        %v3407 = vpop.f32.mrb[0].mxu0
        %3408 = vdwg.mxu0
        %3415 = vrot.lane.b32.xlu0 %v3293, 9
        %v3416 = vpop.permute.xlu0 %3415
        %3417 = vrot.lane.b32.xlu0 %v3294, 9
        %v3418 = vpop.permute.xlu0 %3417
        %3419 = vrot.lane.b32.xlu0 %v3295, 9
        %v3420 = vpop.permute.xlu0 %3419
        %3421 = vrot.lane.b32.xlu0 %v3296, 9
        %v3422 = vpop.permute.xlu0 %3421
        %3423 = vrot.lane.b32.xlu0 %v3297, 9
        %v3424 = vpop.permute.xlu0 %3423
        %3425 = vrot.lane.b32.xlu0 %v3298, 9
        %v3426 = vpop.permute.xlu0 %3425
        %v3427 = vsel %vm1356, %v3416, %v3418
        %v3428 = vsel %vm1356, %v3420, %v3422
        %v3429 = vsel %vm1356, %v3424, %v3426
        %v3434 = vsel %vm3327, %v3299, 0
        %v3437 = vsel %vm3327, %v3300, 0
        %3439 = vmatprep.subr.mxu0 0.0
        %3440 = vmatpush1.msra.mxu0 %v3427
        %3441 = vmatprep.subr.mxu0 0.0
        %3442 = vmatpush1.msra.mxu0 %v3428
        %3443 = vmatprep.subr.mxu0 0.0
        %3444 = vmatpush1.msra.mxu0 %v3429
        %3445 = vmatprep.subr.mxu0 0.0
        %3446 = vmatpush1.msra.mxu0 0.0
        %3447 = vmatprep.subr.mxu0 0.0
        %3448 = vmatpush1.msra.mxu0 0.0
        %3449 = vmatprep.subr.mxu0 0.0
        %3450 = vmatpush1.msra.mxu0 0.0
        %3451 = vmatprep.subr.mxu0 0.0
        %3452 = vmatpush1.msra.mxu0 0.0
        %3453 = vmatprep.subr.mxu0 0.0
        %3454 = vmatpush1.msra.mxu0 0.0
        %3455 = vmatprep.subr.mxu0 0.0
        %3456 = vmatpush1.msra.mxu0 0.0
        %3457 = vmatprep.subr.mxu0 0.0
        %3458 = vmatpush1.msra.mxu0 0.0
        %3459 = vmatprep.subr.mxu0 0.0
        %3460 = vmatpush1.msra.mxu0 0.0
        %3461 = vmatprep.subr.mxu0 0.0
        %3462 = vmatpush1.msra.mxu0 0.0
        %3463 = vmatprep.subr.mxu0 0.0
        %3464 = vmatpush1.msra.mxu0 0.0
        %3465 = vmatprep.subr.mxu0 0.0
        %3466 = vmatpush1.msra.mxu0 0.0
        %3467 = vmatprep.subr.mxu0 0.0
        %3468 = vmatpush1.msra.mxu0 0.0
        %3469 = vmatprep.subr.mxu0 0.0
        %3470 = vmatpush1.msra.mxu0 0.0
        %3471 = vmatprep.subr.mxu0 0.0
        %3472 = vmatpush1.msra.mxu0 0.0
        %3473 = vmatprep.subr.mxu0 0.0
        %3474 = vmatpush1.msra.mxu0 0.0
        %3475 = vmatprep.subr.mxu0 0.0
        %3476 = vmatpush1.msra.mxu0 0.0
        %3477 = vmatprep.subr.mxu0 0.0
        %3478 = vmatpush1.msra.mxu0 0.0
        %3479 = vmatprep.subr.mxu0 0.0
        %3480 = vmatpush1.msra.mxu0 0.0
        %3481 = vmatprep.subr.mxu0 0.0
        %3482 = vmatpush1.msra.mxu0 0.0
        %3483 = vmatprep.subr.mxu0 0.0
        %3484 = vmatpush1.msra.mxu0 0.0
        %3485 = vmatprep.subr.mxu0 0.0
        %3486 = vmatpush1.msra.mxu0 0.0
        %3487 = vmatprep.subr.mxu0 0.0
        %3488 = vmatpush1.msra.mxu0 0.0
        %3489 = vmatprep.subr.mxu0 0.0
        %3490 = vmatpush1.msra.mxu0 0.0
        %3491 = vmatprep.subr.mxu0 0.0
        %3492 = vmatpush1.msra.mxu0 0.0
        %3493 = vmatprep.subr.mxu0 0.0
        %3494 = vmatpush1.msra.mxu0 0.0
        %3495 = vmatprep.subr.mxu0 0.0
        %3496 = vmatpush1.msra.mxu0 0.0
        %3497 = vmatprep.subr.mxu0 0.0
        %3498 = vmatpush1.msra.mxu0 0.0
        %3499 = vmatprep.subr.mxu0 0.0
        %3500 = vmatpush1.msra.mxu0 0.0
        %3501 = vmatprep.subr.mxu0 0.0
        %3502 = vmatpush1.msra.mxu0 0.0
        %3503 = vmatprep.mubr.f32.mxu0 0.0
        %3504 = vmatmul.mubr.f32.gmra.mrb[0].mxu0 %v3434
        %v3505 = vpop.f32.mrb[0].mxu0
        %v3506 = vadd.f32 %v3401, %v3505
        %v3507 = vpop.f32.mrb[0].mxu0
        %3508 = vmatprep.mubr.f32.mxu0 0.0
        %3509 = vmatmul.mubr.f32.gmra.mrb[0].mxu0 %v3437
        %v3510 = vpop.f32.mrb[0].mxu0
        %v3511 = vadd.f32 %v3406, %v3510
        %v3512 = vpop.f32.mrb[0].mxu0
        %3513 = vdwg.mxu0
        %3515 = vrot.lane.b32.xlu0 %v3282, 121
        %v3516 = vpop.permute.xlu0 %3515
        %v3518 = vmul.f32 %v3283, %v3516
        %v3519 = vmul.f32 %v3284, %v3516
        %v3520 = vmul.f32 %v3285, %v3516
        %v3521 = vmul.f32 %v3286, %v3516
        %v3522 = vmul.f32 %v3287, %v3516
        %v3523 = vmul.f32 %v3288, %v3516
        %v3524 = vld [vmem:[#allocation3 + $0x3a0] sm:$0xff]
        %v3525 = vld [vmem:[#allocation3 + $0x3b0] sm:$0xff]
        %3532 = vrot.lane.b32.xlu0 %v3518, 7
        %v3533 = vpop.permute.xlu0 %3532
        %3534 = vrot.lane.b32.xlu0 %v3519, 7
        %v3535 = vpop.permute.xlu0 %3534
        %3536 = vrot.lane.b32.xlu0 %v3520, 7
        %v3537 = vpop.permute.xlu0 %3536
        %3538 = vrot.lane.b32.xlu0 %v3521, 7
        %v3539 = vpop.permute.xlu0 %3538
        %3540 = vrot.lane.b32.xlu0 %v3522, 7
        %v3541 = vpop.permute.xlu0 %3540
        %3542 = vrot.lane.b32.xlu0 %v3523, 7
        %v3543 = vpop.permute.xlu0 %3542
        %v3544 = vsel %vm1273, %v3533, %v3535
        %v3545 = vsel %vm1273, %v3537, %v3539
        %v3546 = vsel %vm1273, %v3541, %v3543
        %v3551 = vsel %vm3327, %v3524, 0
        %v3554 = vsel %vm3327, %v3525, 0
        %3556 = vmatprep.subr.mxu0 0.0
        %3557 = vmatpush1.msra.mxu0 %v3544
        %3558 = vmatprep.subr.mxu0 0.0
        %3559 = vmatpush1.msra.mxu0 %v3545
        %3560 = vmatprep.subr.mxu0 0.0
        %3561 = vmatpush1.msra.mxu0 %v3546
        %3562 = vmatprep.subr.mxu0 0.0
        %3563 = vmatpush1.msra.mxu0 0.0
        %3564 = vmatprep.subr.mxu0 0.0
        %3565 = vmatpush1.msra.mxu0 0.0
        %3566 = vmatprep.subr.mxu0 0.0
        %3567 = vmatpush1.msra.mxu0 0.0
        %3568 = vmatprep.subr.mxu0 0.0
        %3569 = vmatpush1.msra.mxu0 0.0
        %3570 = vmatprep.subr.mxu0 0.0
        %3571 = vmatpush1.msra.mxu0 0.0
        %3572 = vmatprep.subr.mxu0 0.0
        %3573 = vmatpush1.msra.mxu0 0.0
        %3574 = vmatprep.subr.mxu0 0.0
        %3575 = vmatpush1.msra.mxu0 0.0
        %3576 = vmatprep.subr.mxu0 0.0
        %3577 = vmatpush1.msra.mxu0 0.0
        %3578 = vmatprep.subr.mxu0 0.0
        %3579 = vmatpush1.msra.mxu0 0.0
        %3580 = vmatprep.subr.mxu0 0.0
        %3581 = vmatpush1.msra.mxu0 0.0
        %3582 = vmatprep.subr.mxu0 0.0
        %3583 = vmatpush1.msra.mxu0 0.0
        %3584 = vmatprep.subr.mxu0 0.0
        %3585 = vmatpush1.msra.mxu0 0.0
        %3586 = vmatprep.subr.mxu0 0.0
        %3587 = vmatpush1.msra.mxu0 0.0
        %3588 = vmatprep.subr.mxu0 0.0
        %3589 = vmatpush1.msra.mxu0 0.0
        %3590 = vmatprep.subr.mxu0 0.0
        %3591 = vmatpush1.msra.mxu0 0.0
        %3592 = vmatprep.subr.mxu0 0.0
        %3593 = vmatpush1.msra.mxu0 0.0
        %3594 = vmatprep.subr.mxu0 0.0
        %3595 = vmatpush1.msra.mxu0 0.0
        %3596 = vmatprep.subr.mxu0 0.0
        %3597 = vmatpush1.msra.mxu0 0.0
        %3598 = vmatprep.subr.mxu0 0.0
        %3599 = vmatpush1.msra.mxu0 0.0
        %3600 = vmatprep.subr.mxu0 0.0
        %3601 = vmatpush1.msra.mxu0 0.0
        %3602 = vmatprep.subr.mxu0 0.0
        %3603 = vmatpush1.msra.mxu0 0.0
        %3604 = vmatprep.subr.mxu0 0.0
        %3605 = vmatpush1.msra.mxu0 0.0
        %3606 = vmatprep.subr.mxu0 0.0
        %3607 = vmatpush1.msra.mxu0 0.0
        %3608 = vmatprep.subr.mxu0 0.0
        %3609 = vmatpush1.msra.mxu0 0.0
        %3610 = vmatprep.subr.mxu0 0.0
        %3611 = vmatpush1.msra.mxu0 0.0
        %3612 = vmatprep.subr.mxu0 0.0
        %3613 = vmatpush1.msra.mxu0 0.0
        %3614 = vmatprep.subr.mxu0 0.0
        %3615 = vmatpush1.msra.mxu0 0.0
        %3616 = vmatprep.subr.mxu0 0.0
        %3617 = vmatpush1.msra.mxu0 0.0
        %3618 = vmatprep.subr.mxu0 0.0
        %3619 = vmatpush1.msra.mxu0 0.0
        %3620 = vmatprep.mubr.f32.mxu0 0.0
        %3621 = vmatmul.mubr.f32.gmra.mrb[0].mxu0 %v3551
        %v3622 = vpop.f32.mrb[0].mxu0
        %v3623 = vadd.f32 0.0, %v3622
        %v3624 = vpop.f32.mrb[0].mxu0
        %3625 = vmatprep.mubr.f32.mxu0 0.0
        %3626 = vmatmul.mubr.f32.gmra.mrb[0].mxu0 %v3554
        %v3627 = vpop.f32.mrb[0].mxu0
        %v3628 = vadd.f32 0.0, %v3627
        %v3629 = vpop.f32.mrb[0].mxu0
        %3630 = vdwg.mxu0
        %v3631 = vadd.f32 %v3506, %v3623
        %v3632 = vadd.f32 %v3511, %v3628
        %3633 = vrot.lane.b32.xlu0 %v3281, 127
        %v3634 = vpop.permute.xlu0 %3633
        %v3636 = vmul.f32 %v3283, %v3634
        %v3637 = vmul.f32 %v3284, %v3634
        %v3638 = vmul.f32 %v3285, %v3634
        %v3639 = vmul.f32 %v3286, %v3634
        %v3640 = vmul.f32 %v3287, %v3634
        %v3641 = vmul.f32 %v3288, %v3634
        %v3642 = vld [vmem:[#allocation3 + $0x3c0] sm:$0xff]
        %v3643 = vld [vmem:[#allocation3 + $0x3d0] sm:$0xff]
        %3650 = vrot.lane.b32.xlu0 %v3636, 1
        %v3651 = vpop.permute.xlu0 %3650
        %3652 = vrot.lane.b32.xlu0 %v3637, 1
        %v3653 = vpop.permute.xlu0 %3652
        %3654 = vrot.lane.b32.xlu0 %v3638, 1
        %v3655 = vpop.permute.xlu0 %3654
        %3656 = vrot.lane.b32.xlu0 %v3639, 1
        %v3657 = vpop.permute.xlu0 %3656
        %3658 = vrot.lane.b32.xlu0 %v3640, 1
        %v3659 = vpop.permute.xlu0 %3658
        %3660 = vrot.lane.b32.xlu0 %v3641, 1
        %v3661 = vpop.permute.xlu0 %3660
        %v3662 = vsel %vm518, %v3651, %v3653
        %v3663 = vsel %vm518, %v3655, %v3657
        %v3664 = vsel %vm518, %v3659, %v3661
        %v3669 = vsel %vm3327, %v3642, 0
        %v3672 = vsel %vm3327, %v3643, 0
        %3674 = vmatprep.subr.mxu0 0.0
        %3675 = vmatpush1.msra.mxu0 %v3662
        %3676 = vmatprep.subr.mxu0 0.0
        %3677 = vmatpush1.msra.mxu0 %v3663
        %3678 = vmatprep.subr.mxu0 0.0
        %3679 = vmatpush1.msra.mxu0 %v3664
        %3680 = vmatprep.subr.mxu0 0.0
        %3681 = vmatpush1.msra.mxu0 0.0
        %3682 = vmatprep.subr.mxu0 0.0
        %3683 = vmatpush1.msra.mxu0 0.0
        %3684 = vmatprep.subr.mxu0 0.0
        %3685 = vmatpush1.msra.mxu0 0.0
        %3686 = vmatprep.subr.mxu0 0.0
        %3687 = vmatpush1.msra.mxu0 0.0
        %3688 = vmatprep.subr.mxu0 0.0
        %3689 = vmatpush1.msra.mxu0 0.0
        %3690 = vmatprep.subr.mxu0 0.0
        %3691 = vmatpush1.msra.mxu0 0.0
        %3692 = vmatprep.subr.mxu0 0.0
        %3693 = vmatpush1.msra.mxu0 0.0
        %3694 = vmatprep.subr.mxu0 0.0
        %3695 = vmatpush1.msra.mxu0 0.0
        %3696 = vmatprep.subr.mxu0 0.0
        %3697 = vmatpush1.msra.mxu0 0.0
        %3698 = vmatprep.subr.mxu0 0.0
        %3699 = vmatpush1.msra.mxu0 0.0
        %3700 = vmatprep.subr.mxu0 0.0
        %3701 = vmatpush1.msra.mxu0 0.0
        %3702 = vmatprep.subr.mxu0 0.0
        %3703 = vmatpush1.msra.mxu0 0.0
        %3704 = vmatprep.subr.mxu0 0.0
        %3705 = vmatpush1.msra.mxu0 0.0
        %3706 = vmatprep.subr.mxu0 0.0
        %3707 = vmatpush1.msra.mxu0 0.0
        %3708 = vmatprep.subr.mxu0 0.0
        %3709 = vmatpush1.msra.mxu0 0.0
        %3710 = vmatprep.subr.mxu0 0.0
        %3711 = vmatpush1.msra.mxu0 0.0
        %3712 = vmatprep.subr.mxu0 0.0
        %3713 = vmatpush1.msra.mxu0 0.0
        %3714 = vmatprep.subr.mxu0 0.0
        %3715 = vmatpush1.msra.mxu0 0.0
        %3716 = vmatprep.subr.mxu0 0.0
        %3717 = vmatpush1.msra.mxu0 0.0
        %3718 = vmatprep.subr.mxu0 0.0
        %3719 = vmatpush1.msra.mxu0 0.0
        %3720 = vmatprep.subr.mxu0 0.0
        %3721 = vmatpush1.msra.mxu0 0.0
        %3722 = vmatprep.subr.mxu0 0.0
        %3723 = vmatpush1.msra.mxu0 0.0
        %3724 = vmatprep.subr.mxu0 0.0
        %3725 = vmatpush1.msra.mxu0 0.0
        %3726 = vmatprep.subr.mxu0 0.0
        %3727 = vmatpush1.msra.mxu0 0.0
        %3728 = vmatprep.subr.mxu0 0.0
        %3729 = vmatpush1.msra.mxu0 0.0
        %3730 = vmatprep.subr.mxu0 0.0
        %3731 = vmatpush1.msra.mxu0 0.0
        %3732 = vmatprep.subr.mxu0 0.0
        %3733 = vmatpush1.msra.mxu0 0.0
        %3734 = vmatprep.subr.mxu0 0.0
        %3735 = vmatpush1.msra.mxu0 0.0
        %3736 = vmatprep.subr.mxu0 0.0
        %3737 = vmatpush1.msra.mxu0 0.0
        %3738 = vmatprep.mubr.f32.mxu0 0.0
        %3739 = vmatmul.mubr.f32.gmra.mrb[0].mxu0 %v3669
        %v3740 = vpop.f32.mrb[0].mxu0
        %v3741 = vadd.f32 0.0, %v3740
        %v3742 = vpop.f32.mrb[0].mxu0
        %3743 = vmatprep.mubr.f32.mxu0 0.0
        %3744 = vmatmul.mubr.f32.gmra.mrb[0].mxu0 %v3672
        %v3745 = vpop.f32.mrb[0].mxu0
        %v3746 = vadd.f32 0.0, %v3745
        %v3747 = vpop.f32.mrb[0].mxu0
        %3748 = vdwg.mxu0
        %v3749 = vadd.f32 %v3631, %v3741
        %v3750 = vadd.f32 %v3632, %v3746
        %v3751 = vld [vmem:[#allocation3 + $0x3e0] sm:$0xff]
        %v3752 = vld [vmem:[#allocation3 + $0x3f0] sm:$0xff]
        %v3754 = vsel %vm3327, %v3751, 0
        %v3757 = vsel %vm3327, %v3752, 0
        %3759 = vmatprep.subr.mxu0 0.0
        %3760 = vmatpush1.msra.mxu0 %v3284
        %3761 = vmatprep.subr.mxu0 0.0
        %3762 = vmatpush1.msra.mxu0 %v3286
        %3763 = vmatprep.subr.mxu0 0.0
        %3764 = vmatpush1.msra.mxu0 %v3288
        %3765 = vmatprep.subr.mxu0 0.0
        %3766 = vmatpush1.msra.mxu0 0.0
        %3767 = vmatprep.subr.mxu0 0.0
        %3768 = vmatpush1.msra.mxu0 0.0
        %3769 = vmatprep.subr.mxu0 0.0
        %3770 = vmatpush1.msra.mxu0 0.0
        %3771 = vmatprep.subr.mxu0 0.0
        %3772 = vmatpush1.msra.mxu0 0.0
        %3773 = vmatprep.subr.mxu0 0.0
        %3774 = vmatpush1.msra.mxu0 0.0
        %3775 = vmatprep.subr.mxu0 0.0
        %3776 = vmatpush1.msra.mxu0 0.0
        %3777 = vmatprep.subr.mxu0 0.0
        %3778 = vmatpush1.msra.mxu0 0.0
        %3779 = vmatprep.subr.mxu0 0.0
        %3780 = vmatpush1.msra.mxu0 0.0
        %3781 = vmatprep.subr.mxu0 0.0
        %3782 = vmatpush1.msra.mxu0 0.0
        %3783 = vmatprep.subr.mxu0 0.0
        %3784 = vmatpush1.msra.mxu0 0.0
        %3785 = vmatprep.subr.mxu0 0.0
        %3786 = vmatpush1.msra.mxu0 0.0
        %3787 = vmatprep.subr.mxu0 0.0
        %3788 = vmatpush1.msra.mxu0 0.0
        %3789 = vmatprep.subr.mxu0 0.0
        %3790 = vmatpush1.msra.mxu0 0.0
        %3791 = vmatprep.subr.mxu0 0.0
        %3792 = vmatpush1.msra.mxu0 0.0
        %3793 = vmatprep.subr.mxu0 0.0
        %3794 = vmatpush1.msra.mxu0 0.0
        %3795 = vmatprep.subr.mxu0 0.0
        %3796 = vmatpush1.msra.mxu0 0.0
        %3797 = vmatprep.subr.mxu0 0.0
        %3798 = vmatpush1.msra.mxu0 0.0
        %3799 = vmatprep.subr.mxu0 0.0
        %3800 = vmatpush1.msra.mxu0 0.0
        %3801 = vmatprep.subr.mxu0 0.0
        %3802 = vmatpush1.msra.mxu0 0.0
        %3803 = vmatprep.subr.mxu0 0.0
        %3804 = vmatpush1.msra.mxu0 0.0
        %3805 = vmatprep.subr.mxu0 0.0
        %3806 = vmatpush1.msra.mxu0 0.0
        %3807 = vmatprep.subr.mxu0 0.0
        %3808 = vmatpush1.msra.mxu0 0.0
        %3809 = vmatprep.subr.mxu0 0.0
        %3810 = vmatpush1.msra.mxu0 0.0
        %3811 = vmatprep.subr.mxu0 0.0
        %3812 = vmatpush1.msra.mxu0 0.0
        %3813 = vmatprep.subr.mxu0 0.0
        %3814 = vmatpush1.msra.mxu0 0.0
        %3815 = vmatprep.subr.mxu0 0.0
        %3816 = vmatpush1.msra.mxu0 0.0
        %3817 = vmatprep.subr.mxu0 0.0
        %3818 = vmatpush1.msra.mxu0 0.0
        %3819 = vmatprep.subr.mxu0 0.0
        %3820 = vmatpush1.msra.mxu0 0.0
        %3821 = vmatprep.subr.mxu0 0.0
        %3822 = vmatpush1.msra.mxu0 0.0
        %3823 = vmatprep.mubr.f32.mxu0 0.0
        %3824 = vmatmul.mubr.f32.gmra.mrb[0].mxu0 %v3754
        %v3825 = vpop.f32.mrb[0].mxu0
        %v3826 = vadd.f32 0.0, %v3825
        %v3827 = vpop.f32.mrb[0].mxu0
        %3828 = vmatprep.mubr.f32.mxu0 0.0
        %3829 = vmatmul.mubr.f32.gmra.mrb[0].mxu0 %v3757
        %v3830 = vpop.f32.mrb[0].mxu0
        %v3831 = vadd.f32 0.0, %v3830
        %v3832 = vpop.f32.mrb[0].mxu0
        %3833 = vdwg.mxu0
        %v3834 = vadd.f32 %v3749, %v3826
        %v3835 = vadd.f32 %v3750, %v3831
        %3836 = vrot.lane.b32.xlu0 %v3282, 1
        %v3837 = vpop.permute.xlu0 %3836
        %v3839 = vmul.f32 %v3284, %v3837
        %v3840 = vmul.f32 %v3286, %v3837
        %v3841 = vmul.f32 %v3288, %v3837
        %v3842 = vld [vmem:[#allocation3 + $0x400] sm:$0xff]
        %v3843 = vld [vmem:[#allocation3 + $0x410] sm:$0xff]
        %3847 = vrot.lane.b32.xlu0 %v3839, 127
        %v3848 = vpop.permute.xlu0 %3847
        %3849 = vrot.lane.b32.xlu0 %v3840, 127
        %v3850 = vpop.permute.xlu0 %3849
        %3851 = vrot.lane.b32.xlu0 %v3841, 127
        %v3852 = vpop.permute.xlu0 %3851
        %v3857 = vsel %vm3327, %v3842, 0
        %v3860 = vsel %vm3327, %v3843, 0
        %3862 = vmatprep.subr.mxu0 0.0
        %3863 = vmatpush1.msra.mxu0 %v3848
        %3864 = vmatprep.subr.mxu0 0.0
        %3865 = vmatpush1.msra.mxu0 %v3850
        %3866 = vmatprep.subr.mxu0 0.0
        %3867 = vmatpush1.msra.mxu0 %v3852
        %3868 = vmatprep.subr.mxu0 0.0
        %3869 = vmatpush1.msra.mxu0 0.0
        %3870 = vmatprep.subr.mxu0 0.0
        %3871 = vmatpush1.msra.mxu0 0.0
        %3872 = vmatprep.subr.mxu0 0.0
        %3873 = vmatpush1.msra.mxu0 0.0
        %3874 = vmatprep.subr.mxu0 0.0
        %3875 = vmatpush1.msra.mxu0 0.0
        %3876 = vmatprep.subr.mxu0 0.0
        %3877 = vmatpush1.msra.mxu0 0.0
        %3878 = vmatprep.subr.mxu0 0.0
        %3879 = vmatpush1.msra.mxu0 0.0
        %3880 = vmatprep.subr.mxu0 0.0
        %3881 = vmatpush1.msra.mxu0 0.0
        %3882 = vmatprep.subr.mxu0 0.0
        %3883 = vmatpush1.msra.mxu0 0.0
        %3884 = vmatprep.subr.mxu0 0.0
        %3885 = vmatpush1.msra.mxu0 0.0
        %3886 = vmatprep.subr.mxu0 0.0
        %3887 = vmatpush1.msra.mxu0 0.0
        %3888 = vmatprep.subr.mxu0 0.0
        %3889 = vmatpush1.msra.mxu0 0.0
        %3890 = vmatprep.subr.mxu0 0.0
        %3891 = vmatpush1.msra.mxu0 0.0
        %3892 = vmatprep.subr.mxu0 0.0
        %3893 = vmatpush1.msra.mxu0 0.0
        %3894 = vmatprep.subr.mxu0 0.0
        %3895 = vmatpush1.msra.mxu0 0.0
        %3896 = vmatprep.subr.mxu0 0.0
        %3897 = vmatpush1.msra.mxu0 0.0
        %3898 = vmatprep.subr.mxu0 0.0
        %3899 = vmatpush1.msra.mxu0 0.0
        %3900 = vmatprep.subr.mxu0 0.0
        %3901 = vmatpush1.msra.mxu0 0.0
        %3902 = vmatprep.subr.mxu0 0.0
        %3903 = vmatpush1.msra.mxu0 0.0
        %3904 = vmatprep.subr.mxu0 0.0
        %3905 = vmatpush1.msra.mxu0 0.0
        %3906 = vmatprep.subr.mxu0 0.0
        %3907 = vmatpush1.msra.mxu0 0.0
        %3908 = vmatprep.subr.mxu0 0.0
        %3909 = vmatpush1.msra.mxu0 0.0
        %3910 = vmatprep.subr.mxu0 0.0
        %3911 = vmatpush1.msra.mxu0 0.0
        %3912 = vmatprep.subr.mxu0 0.0
        %3913 = vmatpush1.msra.mxu0 0.0
        %3914 = vmatprep.subr.mxu0 0.0
        %3915 = vmatpush1.msra.mxu0 0.0
        %3916 = vmatprep.subr.mxu0 0.0
        %3917 = vmatpush1.msra.mxu0 0.0
        %3918 = vmatprep.subr.mxu0 0.0
        %3919 = vmatpush1.msra.mxu0 0.0
        %3920 = vmatprep.subr.mxu0 0.0
        %3921 = vmatpush1.msra.mxu0 0.0
        %3922 = vmatprep.subr.mxu0 0.0
        %3923 = vmatpush1.msra.mxu0 0.0
        %3924 = vmatprep.subr.mxu0 0.0
        %3925 = vmatpush1.msra.mxu0 0.0
        %3926 = vmatprep.mubr.f32.mxu0 0.0
        %3927 = vmatmul.mubr.f32.gmra.mrb[0].mxu0 %v3857
        %v3928 = vpop.f32.mrb[0].mxu0
        %v3929 = vadd.f32 0.0, %v3928
        %v3930 = vpop.f32.mrb[0].mxu0
        %3931 = vmatprep.mubr.f32.mxu0 0.0
        %3932 = vmatmul.mubr.f32.gmra.mrb[0].mxu0 %v3860
        %v3933 = vpop.f32.mrb[0].mxu0
        %v3934 = vadd.f32 0.0, %v3933
        %v3935 = vpop.f32.mrb[0].mxu0
        %3936 = vdwg.mxu0
        %v3937 = vadd.f32 %v3834, %v3929
        %v3938 = vadd.f32 %v3835, %v3934
        %3939 = vrot.lane.b32.xlu0 %v3281, 7
        %v3940 = vpop.permute.xlu0 %3939
        %v3942 = vmul.f32 %v3284, %v3940
        %v3943 = vmul.f32 %v3286, %v3940
        %v3944 = vmul.f32 %v3288, %v3940
        %v3945 = vld [vmem:[#allocation3 + $0x420] sm:$0xff]
        %v3946 = vld [vmem:[#allocation3 + $0x430] sm:$0xff]
        %3950 = vrot.lane.b32.xlu0 %v3942, 121
        %v3951 = vpop.permute.xlu0 %3950
        %3952 = vrot.lane.b32.xlu0 %v3943, 121
        %v3953 = vpop.permute.xlu0 %3952
        %3954 = vrot.lane.b32.xlu0 %v3944, 121
        %v3955 = vpop.permute.xlu0 %3954
        %v3960 = vsel %vm3327, %v3945, 0
        %v3963 = vsel %vm3327, %v3946, 0
        %3965 = vmatprep.subr.mxu0 0.0
        %3966 = vmatpush1.msra.mxu0 %v3951
        %3967 = vmatprep.subr.mxu0 0.0
        %3968 = vmatpush1.msra.mxu0 %v3953
        %3969 = vmatprep.subr.mxu0 0.0
        %3970 = vmatpush1.msra.mxu0 %v3955
        %3971 = vmatprep.subr.mxu0 0.0
        %3972 = vmatpush1.msra.mxu0 0.0
        %3973 = vmatprep.subr.mxu0 0.0
        %3974 = vmatpush1.msra.mxu0 0.0
        %3975 = vmatprep.subr.mxu0 0.0
        %3976 = vmatpush1.msra.mxu0 0.0
        %3977 = vmatprep.subr.mxu0 0.0
        %3978 = vmatpush1.msra.mxu0 0.0
        %3979 = vmatprep.subr.mxu0 0.0
        %3980 = vmatpush1.msra.mxu0 0.0
        %3981 = vmatprep.subr.mxu0 0.0
        %3982 = vmatpush1.msra.mxu0 0.0
        %3983 = vmatprep.subr.mxu0 0.0
        %3984 = vmatpush1.msra.mxu0 0.0
        %3985 = vmatprep.subr.mxu0 0.0
        %3986 = vmatpush1.msra.mxu0 0.0
        %3987 = vmatprep.subr.mxu0 0.0
        %3988 = vmatpush1.msra.mxu0 0.0
        %3989 = vmatprep.subr.mxu0 0.0
        %3990 = vmatpush1.msra.mxu0 0.0
        %3991 = vmatprep.subr.mxu0 0.0
        %3992 = vmatpush1.msra.mxu0 0.0
        %3993 = vmatprep.subr.mxu0 0.0
        %3994 = vmatpush1.msra.mxu0 0.0
        %3995 = vmatprep.subr.mxu0 0.0
        %3996 = vmatpush1.msra.mxu0 0.0
        %3997 = vmatprep.subr.mxu0 0.0
        %3998 = vmatpush1.msra.mxu0 0.0
        %3999 = vmatprep.subr.mxu0 0.0
        %4000 = vmatpush1.msra.mxu0 0.0
        %4001 = vmatprep.subr.mxu0 0.0
        %4002 = vmatpush1.msra.mxu0 0.0
        %4003 = vmatprep.subr.mxu0 0.0
        %4004 = vmatpush1.msra.mxu0 0.0
        %4005 = vmatprep.subr.mxu0 0.0
        %4006 = vmatpush1.msra.mxu0 0.0
        %4007 = vmatprep.subr.mxu0 0.0
        %4008 = vmatpush1.msra.mxu0 0.0
        %4009 = vmatprep.subr.mxu0 0.0
        %4010 = vmatpush1.msra.mxu0 0.0
        %4011 = vmatprep.subr.mxu0 0.0
        %4012 = vmatpush1.msra.mxu0 0.0
        %4013 = vmatprep.subr.mxu0 0.0
        %4014 = vmatpush1.msra.mxu0 0.0
        %4015 = vmatprep.subr.mxu0 0.0
        %4016 = vmatpush1.msra.mxu0 0.0
        %4017 = vmatprep.subr.mxu0 0.0
        %4018 = vmatpush1.msra.mxu0 0.0
        %4019 = vmatprep.subr.mxu0 0.0
        %4020 = vmatpush1.msra.mxu0 0.0
        %4021 = vmatprep.subr.mxu0 0.0
        %4022 = vmatpush1.msra.mxu0 0.0
        %4023 = vmatprep.subr.mxu0 0.0
        %4024 = vmatpush1.msra.mxu0 0.0
        %4025 = vmatprep.subr.mxu0 0.0
        %4026 = vmatpush1.msra.mxu0 0.0
        %4027 = vmatprep.subr.mxu0 0.0
        %4028 = vmatpush1.msra.mxu0 0.0
        %4029 = vmatprep.mubr.f32.mxu0 0.0
        %4030 = vmatmul.mubr.f32.gmra.mrb[0].mxu0 %v3960
        %v4031 = vpop.f32.mrb[0].mxu0
        %v4032 = vadd.f32 0.0, %v4031
        %v4033 = vpop.f32.mrb[0].mxu0
        %4034 = vmatprep.mubr.f32.mxu0 0.0
        %4035 = vmatmul.mubr.f32.gmra.mrb[0].mxu0 %v3963
        %v4036 = vpop.f32.mrb[0].mxu0
        %v4037 = vadd.f32 0.0, %v4036
        %v4038 = vpop.f32.mrb[0].mxu0
        %4039 = vdwg.mxu0
        %v4040 = vadd.f32 %v3937, %v4032
        %v4041 = vadd.f32 %v3938, %v4037
        %v4042 = vld [vmem:[#allocation3 + $0x440] sm:$0xff]
        %v4043 = vld [vmem:[#allocation3 + $0x450] sm:$0xff]
        %4044 = vrot.lane.b32.xlu0 %v3284, 120
        %v4045 = vpop.permute.xlu0 %4044
        %4046 = vrot.lane.b32.xlu0 %v3286, 120
        %v4047 = vpop.permute.xlu0 %4046
        %4048 = vrot.lane.b32.xlu0 %v3288, 120
        %v4049 = vpop.permute.xlu0 %4048
        %v4054 = vsel %vm3327, %v4042, 0
        %v4057 = vsel %vm3327, %v4043, 0
        %4059 = vmatprep.subr.mxu0 0.0
        %4060 = vmatpush1.msra.mxu0 %v4045
        %4061 = vmatprep.subr.mxu0 0.0
        %4062 = vmatpush1.msra.mxu0 %v4047
        %4063 = vmatprep.subr.mxu0 0.0
        %4064 = vmatpush1.msra.mxu0 %v4049
        %4065 = vmatprep.subr.mxu0 0.0
        %4066 = vmatpush1.msra.mxu0 0.0
        %4067 = vmatprep.subr.mxu0 0.0
        %4068 = vmatpush1.msra.mxu0 0.0
        %4069 = vmatprep.subr.mxu0 0.0
        %4070 = vmatpush1.msra.mxu0 0.0
        %4071 = vmatprep.subr.mxu0 0.0
        %4072 = vmatpush1.msra.mxu0 0.0
        %4073 = vmatprep.subr.mxu0 0.0
        %4074 = vmatpush1.msra.mxu0 0.0
        %4075 = vmatprep.subr.mxu0 0.0
        %4076 = vmatpush1.msra.mxu0 0.0
        %4077 = vmatprep.subr.mxu0 0.0
        %4078 = vmatpush1.msra.mxu0 0.0
        %4079 = vmatprep.subr.mxu0 0.0
        %4080 = vmatpush1.msra.mxu0 0.0
        %4081 = vmatprep.subr.mxu0 0.0
        %4082 = vmatpush1.msra.mxu0 0.0
        %4083 = vmatprep.subr.mxu0 0.0
        %4084 = vmatpush1.msra.mxu0 0.0
        %4085 = vmatprep.subr.mxu0 0.0
        %4086 = vmatpush1.msra.mxu0 0.0
        %4087 = vmatprep.subr.mxu0 0.0
        %4088 = vmatpush1.msra.mxu0 0.0
        %4089 = vmatprep.subr.mxu0 0.0
        %4090 = vmatpush1.msra.mxu0 0.0
        %4091 = vmatprep.subr.mxu0 0.0
        %4092 = vmatpush1.msra.mxu0 0.0
        %4093 = vmatprep.subr.mxu0 0.0
        %4094 = vmatpush1.msra.mxu0 0.0
        %4095 = vmatprep.subr.mxu0 0.0
        %4096 = vmatpush1.msra.mxu0 0.0
        %4097 = vmatprep.subr.mxu0 0.0
        %4098 = vmatpush1.msra.mxu0 0.0
        %4099 = vmatprep.subr.mxu0 0.0
        %4100 = vmatpush1.msra.mxu0 0.0
        %4101 = vmatprep.subr.mxu0 0.0
        %4102 = vmatpush1.msra.mxu0 0.0
        %4103 = vmatprep.subr.mxu0 0.0
        %4104 = vmatpush1.msra.mxu0 0.0
        %4105 = vmatprep.subr.mxu0 0.0
        %4106 = vmatpush1.msra.mxu0 0.0
        %4107 = vmatprep.subr.mxu0 0.0
        %4108 = vmatpush1.msra.mxu0 0.0
        %4109 = vmatprep.subr.mxu0 0.0
        %4110 = vmatpush1.msra.mxu0 0.0
        %4111 = vmatprep.subr.mxu0 0.0
        %4112 = vmatpush1.msra.mxu0 0.0
        %4113 = vmatprep.subr.mxu0 0.0
        %4114 = vmatpush1.msra.mxu0 0.0
        %4115 = vmatprep.subr.mxu0 0.0
        %4116 = vmatpush1.msra.mxu0 0.0
        %4117 = vmatprep.subr.mxu0 0.0
        %4118 = vmatpush1.msra.mxu0 0.0
        %4119 = vmatprep.subr.mxu0 0.0
        %4120 = vmatpush1.msra.mxu0 0.0
        %4121 = vmatprep.subr.mxu0 0.0
        %4122 = vmatpush1.msra.mxu0 0.0
        %4123 = vmatprep.mubr.f32.mxu0 0.0
        %4124 = vmatmul.mubr.f32.gmra.mrb[0].mxu0 %v4054
        %v4125 = vpop.f32.mrb[0].mxu0
        %v4126 = vadd.f32 0.0, %v4125
        %v4127 = vpop.f32.mrb[0].mxu0
        %4128 = vmatprep.mubr.f32.mxu0 0.0
        %4129 = vmatmul.mubr.f32.gmra.mrb[0].mxu0 %v4057
        %v4130 = vpop.f32.mrb[0].mxu0
        %v4131 = vadd.f32 0.0, %v4130
        %v4132 = vpop.f32.mrb[0].mxu0
        %4133 = vdwg.mxu0
        %v4134 = vadd.f32 %v4040, %v4126
        %v4135 = vadd.f32 %v4041, %v4131
        %4136 = vrot.lane.b32.xlu0 %v3282, 9
        %v4137 = vpop.permute.xlu0 %4136
        %v4139 = vmul.f32 %v3284, %v4137
        %v4140 = vmul.f32 %v3286, %v4137
        %v4141 = vmul.f32 %v3288, %v4137
        %v4142 = vld [vmem:[#allocation3 + $0x460] sm:$0xff]
        %v4143 = vld [vmem:[#allocation3 + $0x470] sm:$0xff]
        %4147 = vrot.lane.b32.xlu0 %v4139, 119
        %v4148 = vpop.permute.xlu0 %4147
        %4149 = vrot.lane.b32.xlu0 %v4140, 119
        %v4150 = vpop.permute.xlu0 %4149
        %4151 = vrot.lane.b32.xlu0 %v4141, 119
        %v4152 = vpop.permute.xlu0 %4151
        %v4157 = vsel %vm3327, %v4142, 0
        %v4160 = vsel %vm3327, %v4143, 0
        %4162 = vmatprep.subr.mxu0 0.0
        %4163 = vmatpush1.msra.mxu0 %v4148
        %4164 = vmatprep.subr.mxu0 0.0
        %4165 = vmatpush1.msra.mxu0 %v4150
        %4166 = vmatprep.subr.mxu0 0.0
        %4167 = vmatpush1.msra.mxu0 %v4152
        %4168 = vmatprep.subr.mxu0 0.0
        %4169 = vmatpush1.msra.mxu0 0.0
        %4170 = vmatprep.subr.mxu0 0.0
        %4171 = vmatpush1.msra.mxu0 0.0
        %4172 = vmatprep.subr.mxu0 0.0
        %4173 = vmatpush1.msra.mxu0 0.0
        %4174 = vmatprep.subr.mxu0 0.0
        %4175 = vmatpush1.msra.mxu0 0.0
        %4176 = vmatprep.subr.mxu0 0.0
        %4177 = vmatpush1.msra.mxu0 0.0
        %4178 = vmatprep.subr.mxu0 0.0
        %4179 = vmatpush1.msra.mxu0 0.0
        %4180 = vmatprep.subr.mxu0 0.0
        %4181 = vmatpush1.msra.mxu0 0.0
        %4182 = vmatprep.subr.mxu0 0.0
        %4183 = vmatpush1.msra.mxu0 0.0
        %4184 = vmatprep.subr.mxu0 0.0
        %4185 = vmatpush1.msra.mxu0 0.0
        %4186 = vmatprep.subr.mxu0 0.0
        %4187 = vmatpush1.msra.mxu0 0.0
        %4188 = vmatprep.subr.mxu0 0.0
        %4189 = vmatpush1.msra.mxu0 0.0
        %4190 = vmatprep.subr.mxu0 0.0
        %4191 = vmatpush1.msra.mxu0 0.0
        %4192 = vmatprep.subr.mxu0 0.0
        %4193 = vmatpush1.msra.mxu0 0.0
        %4194 = vmatprep.subr.mxu0 0.0
        %4195 = vmatpush1.msra.mxu0 0.0
        %4196 = vmatprep.subr.mxu0 0.0
        %4197 = vmatpush1.msra.mxu0 0.0
        %4198 = vmatprep.subr.mxu0 0.0
        %4199 = vmatpush1.msra.mxu0 0.0
        %4200 = vmatprep.subr.mxu0 0.0
        %4201 = vmatpush1.msra.mxu0 0.0
        %4202 = vmatprep.subr.mxu0 0.0
        %4203 = vmatpush1.msra.mxu0 0.0
        %4204 = vmatprep.subr.mxu0 0.0
        %4205 = vmatpush1.msra.mxu0 0.0
        %4206 = vmatprep.subr.mxu0 0.0
        %4207 = vmatpush1.msra.mxu0 0.0
        %4208 = vmatprep.subr.mxu0 0.0
        %4209 = vmatpush1.msra.mxu0 0.0
        %4210 = vmatprep.subr.mxu0 0.0
        %4211 = vmatpush1.msra.mxu0 0.0
        %4212 = vmatprep.subr.mxu0 0.0
        %4213 = vmatpush1.msra.mxu0 0.0
        %4214 = vmatprep.subr.mxu0 0.0
        %4215 = vmatpush1.msra.mxu0 0.0
        %4216 = vmatprep.subr.mxu0 0.0
        %4217 = vmatpush1.msra.mxu0 0.0
        %4218 = vmatprep.subr.mxu0 0.0
        %4219 = vmatpush1.msra.mxu0 0.0
        %4220 = vmatprep.subr.mxu0 0.0
        %4221 = vmatpush1.msra.mxu0 0.0
        %4222 = vmatprep.subr.mxu0 0.0
        %4223 = vmatpush1.msra.mxu0 0.0
        %4224 = vmatprep.subr.mxu0 0.0
        %4225 = vmatpush1.msra.mxu0 0.0
        %4226 = vmatprep.mubr.f32.mxu0 0.0
        %4227 = vmatmul.mubr.f32.gmra.mrb[0].mxu0 %v4157
        %v4228 = vpop.f32.mrb[0].mxu0
        %v4229 = vadd.f32 0.0, %v4228
        %v4230 = vpop.f32.mrb[0].mxu0
        %4231 = vmatprep.mubr.f32.mxu0 0.0
        %4232 = vmatmul.mubr.f32.gmra.mrb[0].mxu0 %v4160
        %v4233 = vpop.f32.mrb[0].mxu0
        %v4234 = vadd.f32 0.0, %v4233
        %v4235 = vpop.f32.mrb[0].mxu0
        %4236 = vdwg.mxu0
        %v4237 = vadd.f32 %v4134, %v4229
        %v4238 = vadd.f32 %v4135, %v4234
        %4239 = vset.pattern.permute.xlu0 24
        %4240 = vperm.xlu0 %4239, %v3299
        %v4241 = vpop.permute.xlu0 %4240
        %4243 = vset.pattern.permute.xlu0 24
        %4244 = vperm.xlu0 %4243, %v3300
        %v4245 = vpop.permute.xlu0 %4244
        %v4247 = vadd.f32 %v4237, %v4241
        %v4248 = vadd.f32 %v4238, %v4245
        %v4249 = vmul.f32 %v4247, 0.01
        %v4250 = vmul.f32 %v4248, 0.01
        %v4251 = vmax.f32 %v4247, %v4249
        %v4252 = vmax.f32 %v4248, %v4250
        %4253 = vst.msk [vmem:[#allocation2 + $0x8] sm:$0xff] %vm2027, %v4251
        %4254 = vst.msk [vmem:[#allocation2 + $0x28] sm:$0xff] %vm2027, %v4252
        %4255 = vst.msk [vmem:[#allocation2 + $0x48] sm:$0xff] %vm2027, %v2026
        %4256 = vst.msk [vmem:[#allocation2 + $0x68] sm:$0x7f] %vm1248, %v1245
        %4257 = vst.msk [vmem:[#allocation2 + $0x8] sm:$0xff] %vm2030, 0.0
        %4258 = vst.msk [vmem:[#allocation2 + $0x10] sm:$0xff] %vm2027, 0.0
        %4259 = vst.msk [vmem:[#allocation2 + $0x28] sm:$0xff] %vm2030, 0.0
        %4260 = vst.msk [vmem:[#allocation2 + $0x30] sm:$0xff] %vm2027, 0.0
        %4261 = vst.msk [vmem:[#allocation2 + $0x48] sm:$0xff] %vm2030, 0.0
        %4262 = vst.msk [vmem:[#allocation2 + $0x50] sm:$0xff] %vm2027, 0.0
        %4263 = vst.msk [vmem:[#allocation2 + $0x68] sm:$0x7f] %vm1250, 0.0
        %4264 = vst.msk [vmem:[#allocation2 + $0x70] sm:$0x7f] %vm1248, 0.0
        %v4265 = vld [vmem:[#allocation3 + $0x960] ss:$0 sm:$0xff]
        %v4266 = vld [vmem:[#allocation3 + $0x961] ss:$0 sm:$0xff]
        %v4267 = vld [vmem:[#allocation2] sm:$0xff]
        %v4268 = vld [vmem:[#allocation2 + $0x8] sm:$0xff]
        %v4269 = vld [vmem:[#allocation2 + $0x20] sm:$0xff]
        %v4270 = vld [vmem:[#allocation2 + $0x28] sm:$0xff]
        %v4271 = vld [vmem:[#allocation2 + $0x40] sm:$0xff]
        %v4272 = vld [vmem:[#allocation2 + $0x48] sm:$0xff]
        %v4273 = vld [vmem:[#allocation2 + $0x60] sm:$0x7f]
        %v4274 = vld [vmem:[#allocation2 + $0x68] sm:$0x7f]
        %4276 = vrot.lane.b32.xlu0 %v4265, 119
        %v4277 = vpop.permute.xlu0 %4276
        %v4279 = vmul.f32 %v4267, %v4277
        %v4280 = vmul.f32 %v4268, %v4277
        %v4281 = vmul.f32 %v4269, %v4277
        %v4282 = vmul.f32 %v4270, %v4277
        %v4283 = vmul.f32 %v4271, %v4277
        %v4284 = vmul.f32 %v4272, %v4277
        %v4285 = vmul.f32 %v4273, %v4277
        %v4286 = vmul.f32 %v4274, %v4277
        %v4287 = vld [vmem:[#allocation3 + $0x510] sm:$0xff]
        %v4288 = vld [vmem:[#allocation3 + $0x520] sm:$0xff]
        %v4289 = vld [vmem:[#allocation3 + $0x530] sm:$0xff]
        %v4290 = vld [vmem:[#allocation3 + $0x540] sm:$0xff]
        %4299 = vrot.lane.b32.xlu0 %v4267, 8
        %v4300 = vpop.permute.xlu0 %4299
        %4301 = vrot.lane.b32.xlu0 %v4268, 8
        %v4302 = vpop.permute.xlu0 %4301
        %4303 = vrot.lane.b32.xlu0 %v4269, 8
        %v4304 = vpop.permute.xlu0 %4303
        %4305 = vrot.lane.b32.xlu0 %v4270, 8
        %v4306 = vpop.permute.xlu0 %4305
        %4307 = vrot.lane.b32.xlu0 %v4271, 8
        %v4308 = vpop.permute.xlu0 %4307
        %4309 = vrot.lane.b32.xlu0 %v4272, 8
        %v4310 = vpop.permute.xlu0 %4309
        %4311 = vrot.lane.b32.xlu0 %v4273, 8
        %v4312 = vpop.permute.xlu0 %4311
        %4313 = vrot.lane.b32.xlu0 %v4274, 8
        %v4314 = vpop.permute.xlu0 %4313
        %v4315 = vsel %vm1271, %v4300, %v4302
        %v4316 = vsel %vm1271, %v4304, %v4306
        %v4317 = vsel %vm1271, %v4308, %v4310
        %v4318 = vsel %vm1271, %v4312, %v4314
        %vm4322 = vcmask 252928
        %v4324 = vsel %vm4322, %v4289, 0
        %v4327 = vsel %vm4322, %v4290, 0
        %v4329 = vsel %vm1277, %v4318, 0
        %4331 = vmatprep.subr.mxu0 0.0
        %4332 = vmatpush1.msra.mxu0 %v4315
        %4333 = vmatprep.subr.mxu0 0.0
        %4334 = vmatpush1.msra.mxu0 %v4316
        %4335 = vmatprep.subr.mxu0 0.0
        %4336 = vmatpush1.msra.mxu0 %v4317
        %4337 = vmatprep.subr.mxu0 0.0
        %4338 = vmatpush1.msra.mxu0 %v4329
        %4339 = vmatprep.subr.mxu0 0.0
        %4340 = vmatpush1.msra.mxu0 0.0
        %4341 = vmatprep.subr.mxu0 0.0
        %4342 = vmatpush1.msra.mxu0 0.0
        %4343 = vmatprep.subr.mxu0 0.0
        %4344 = vmatpush1.msra.mxu0 0.0
        %4345 = vmatprep.subr.mxu0 0.0
        %4346 = vmatpush1.msra.mxu0 0.0
        %4347 = vmatprep.subr.mxu0 0.0
        %4348 = vmatpush1.msra.mxu0 0.0
        %4349 = vmatprep.subr.mxu0 0.0
        %4350 = vmatpush1.msra.mxu0 0.0
        %4351 = vmatprep.subr.mxu0 0.0
        %4352 = vmatpush1.msra.mxu0 0.0
        %4353 = vmatprep.subr.mxu0 0.0
        %4354 = vmatpush1.msra.mxu0 0.0
        %4355 = vmatprep.subr.mxu0 0.0
        %4356 = vmatpush1.msra.mxu0 0.0
        %4357 = vmatprep.subr.mxu0 0.0
        %4358 = vmatpush1.msra.mxu0 0.0
        %4359 = vmatprep.subr.mxu0 0.0
        %4360 = vmatpush1.msra.mxu0 0.0
        %4361 = vmatprep.subr.mxu0 0.0
        %4362 = vmatpush1.msra.mxu0 0.0
        %4363 = vmatprep.subr.mxu0 0.0
        %4364 = vmatpush1.msra.mxu0 0.0
        %4365 = vmatprep.subr.mxu0 0.0
        %4366 = vmatpush1.msra.mxu0 0.0
        %4367 = vmatprep.subr.mxu0 0.0
        %4368 = vmatpush1.msra.mxu0 0.0
        %4369 = vmatprep.subr.mxu0 0.0
        %4370 = vmatpush1.msra.mxu0 0.0
        %4371 = vmatprep.subr.mxu0 0.0
        %4372 = vmatpush1.msra.mxu0 0.0
        %4373 = vmatprep.subr.mxu0 0.0
        %4374 = vmatpush1.msra.mxu0 0.0
        %4375 = vmatprep.subr.mxu0 0.0
        %4376 = vmatpush1.msra.mxu0 0.0
        %4377 = vmatprep.subr.mxu0 0.0
        %4378 = vmatpush1.msra.mxu0 0.0
        %4379 = vmatprep.subr.mxu0 0.0
        %4380 = vmatpush1.msra.mxu0 0.0
        %4381 = vmatprep.subr.mxu0 0.0
        %4382 = vmatpush1.msra.mxu0 0.0
        %4383 = vmatprep.subr.mxu0 0.0
        %4384 = vmatpush1.msra.mxu0 0.0
        %4385 = vmatprep.subr.mxu0 0.0
        %4386 = vmatpush1.msra.mxu0 0.0
        %4387 = vmatprep.subr.mxu0 0.0
        %4388 = vmatpush1.msra.mxu0 0.0
        %4389 = vmatprep.subr.mxu0 0.0
        %4390 = vmatpush1.msra.mxu0 0.0
        %4391 = vmatprep.subr.mxu0 0.0
        %4392 = vmatpush1.msra.mxu0 0.0
        %4393 = vmatprep.subr.mxu0 0.0
        %4394 = vmatpush1.msra.mxu0 0.0
        %4395 = vmatprep.mubr.f32.mxu0 0.0
        %4396 = vmatmul.mubr.f32.gmra.mrb[0].mxu0 %v4324
        %v4397 = vpop.f32.mrb[0].mxu0
        %v4398 = vadd.f32 0.0, %v4397
        %v4399 = vpop.f32.mrb[0].mxu0
        %4400 = vmatprep.mubr.f32.mxu0 0.0
        %4401 = vmatmul.mubr.f32.gmra.mrb[0].mxu0 %v4327
        %v4402 = vpop.f32.mrb[0].mxu0
        %v4403 = vadd.f32 0.0, %v4402
        %v4404 = vpop.f32.mrb[0].mxu0
        %4405 = vdwg.mxu0
        %4414 = vrot.lane.b32.xlu0 %v4279, 9
        %v4415 = vpop.permute.xlu0 %4414
        %4416 = vrot.lane.b32.xlu0 %v4280, 9
        %v4417 = vpop.permute.xlu0 %4416
        %4418 = vrot.lane.b32.xlu0 %v4281, 9
        %v4419 = vpop.permute.xlu0 %4418
        %4420 = vrot.lane.b32.xlu0 %v4282, 9
        %v4421 = vpop.permute.xlu0 %4420
        %4422 = vrot.lane.b32.xlu0 %v4283, 9
        %v4423 = vpop.permute.xlu0 %4422
        %4424 = vrot.lane.b32.xlu0 %v4284, 9
        %v4425 = vpop.permute.xlu0 %4424
        %4426 = vrot.lane.b32.xlu0 %v4285, 9
        %v4427 = vpop.permute.xlu0 %4426
        %4428 = vrot.lane.b32.xlu0 %v4286, 9
        %v4429 = vpop.permute.xlu0 %4428
        %v4430 = vsel %vm1356, %v4415, %v4417
        %v4431 = vsel %vm1356, %v4419, %v4421
        %v4432 = vsel %vm1356, %v4423, %v4425
        %v4433 = vsel %vm1356, %v4427, %v4429
        %v4438 = vsel %vm4322, %v4287, 0
        %v4441 = vsel %vm4322, %v4288, 0
        %v4443 = vsel %vm1277, %v4433, 0
        %4445 = vmatprep.subr.mxu0 0.0
        %4446 = vmatpush1.msra.mxu0 %v4430
        %4447 = vmatprep.subr.mxu0 0.0
        %4448 = vmatpush1.msra.mxu0 %v4431
        %4449 = vmatprep.subr.mxu0 0.0
        %4450 = vmatpush1.msra.mxu0 %v4432
        %4451 = vmatprep.subr.mxu0 0.0
        %4452 = vmatpush1.msra.mxu0 %v4443
        %4453 = vmatprep.subr.mxu0 0.0
        %4454 = vmatpush1.msra.mxu0 0.0
        %4455 = vmatprep.subr.mxu0 0.0
        %4456 = vmatpush1.msra.mxu0 0.0
        %4457 = vmatprep.subr.mxu0 0.0
        %4458 = vmatpush1.msra.mxu0 0.0
        %4459 = vmatprep.subr.mxu0 0.0
        %4460 = vmatpush1.msra.mxu0 0.0
        %4461 = vmatprep.subr.mxu0 0.0
        %4462 = vmatpush1.msra.mxu0 0.0
        %4463 = vmatprep.subr.mxu0 0.0
        %4464 = vmatpush1.msra.mxu0 0.0
        %4465 = vmatprep.subr.mxu0 0.0
        %4466 = vmatpush1.msra.mxu0 0.0
        %4467 = vmatprep.subr.mxu0 0.0
        %4468 = vmatpush1.msra.mxu0 0.0
        %4469 = vmatprep.subr.mxu0 0.0
        %4470 = vmatpush1.msra.mxu0 0.0
        %4471 = vmatprep.subr.mxu0 0.0
        %4472 = vmatpush1.msra.mxu0 0.0
        %4473 = vmatprep.subr.mxu0 0.0
        %4474 = vmatpush1.msra.mxu0 0.0
        %4475 = vmatprep.subr.mxu0 0.0
        %4476 = vmatpush1.msra.mxu0 0.0
        %4477 = vmatprep.subr.mxu0 0.0
        %4478 = vmatpush1.msra.mxu0 0.0
        %4479 = vmatprep.subr.mxu0 0.0
        %4480 = vmatpush1.msra.mxu0 0.0
        %4481 = vmatprep.subr.mxu0 0.0
        %4482 = vmatpush1.msra.mxu0 0.0
        %4483 = vmatprep.subr.mxu0 0.0
        %4484 = vmatpush1.msra.mxu0 0.0
        %4485 = vmatprep.subr.mxu0 0.0
        %4486 = vmatpush1.msra.mxu0 0.0
        %4487 = vmatprep.subr.mxu0 0.0
        %4488 = vmatpush1.msra.mxu0 0.0
        %4489 = vmatprep.subr.mxu0 0.0
        %4490 = vmatpush1.msra.mxu0 0.0
        %4491 = vmatprep.subr.mxu0 0.0
        %4492 = vmatpush1.msra.mxu0 0.0
        %4493 = vmatprep.subr.mxu0 0.0
        %4494 = vmatpush1.msra.mxu0 0.0
        %4495 = vmatprep.subr.mxu0 0.0
        %4496 = vmatpush1.msra.mxu0 0.0
        %4497 = vmatprep.subr.mxu0 0.0
        %4498 = vmatpush1.msra.mxu0 0.0
        %4499 = vmatprep.subr.mxu0 0.0
        %4500 = vmatpush1.msra.mxu0 0.0
        %4501 = vmatprep.subr.mxu0 0.0
        %4502 = vmatpush1.msra.mxu0 0.0
        %4503 = vmatprep.subr.mxu0 0.0
        %4504 = vmatpush1.msra.mxu0 0.0
        %4505 = vmatprep.subr.mxu0 0.0
        %4506 = vmatpush1.msra.mxu0 0.0
        %4507 = vmatprep.subr.mxu0 0.0
        %4508 = vmatpush1.msra.mxu0 0.0
        %4509 = vmatprep.mubr.f32.mxu0 0.0
        %4510 = vmatmul.mubr.f32.gmra.mrb[0].mxu0 %v4438
        %v4511 = vpop.f32.mrb[0].mxu0
        %v4512 = vadd.f32 %v4398, %v4511
        %v4513 = vpop.f32.mrb[0].mxu0
        %4514 = vmatprep.mubr.f32.mxu0 0.0
        %4515 = vmatmul.mubr.f32.gmra.mrb[0].mxu0 %v4441
        %v4516 = vpop.f32.mrb[0].mxu0
        %v4517 = vadd.f32 %v4403, %v4516
        %v4518 = vpop.f32.mrb[0].mxu0
        %4519 = vdwg.mxu0
        %4521 = vrot.lane.b32.xlu0 %v4266, 121
        %v4522 = vpop.permute.xlu0 %4521
        %v4524 = vmul.f32 %v4267, %v4522
        %v4525 = vmul.f32 %v4268, %v4522
        %v4526 = vmul.f32 %v4269, %v4522
        %v4527 = vmul.f32 %v4270, %v4522
        %v4528 = vmul.f32 %v4271, %v4522
        %v4529 = vmul.f32 %v4272, %v4522
        %v4530 = vmul.f32 %v4273, %v4522
        %v4531 = vmul.f32 %v4274, %v4522
        %v4532 = vld [vmem:[#allocation3 + $0x550] sm:$0xff]
        %v4533 = vld [vmem:[#allocation3 + $0x560] sm:$0xff]
        %4542 = vrot.lane.b32.xlu0 %v4524, 7
        %v4543 = vpop.permute.xlu0 %4542
        %4544 = vrot.lane.b32.xlu0 %v4525, 7
        %v4545 = vpop.permute.xlu0 %4544
        %4546 = vrot.lane.b32.xlu0 %v4526, 7
        %v4547 = vpop.permute.xlu0 %4546
        %4548 = vrot.lane.b32.xlu0 %v4527, 7
        %v4549 = vpop.permute.xlu0 %4548
        %4550 = vrot.lane.b32.xlu0 %v4528, 7
        %v4551 = vpop.permute.xlu0 %4550
        %4552 = vrot.lane.b32.xlu0 %v4529, 7
        %v4553 = vpop.permute.xlu0 %4552
        %4554 = vrot.lane.b32.xlu0 %v4530, 7
        %v4555 = vpop.permute.xlu0 %4554
        %4556 = vrot.lane.b32.xlu0 %v4531, 7
        %v4557 = vpop.permute.xlu0 %4556
        %v4558 = vsel %vm1273, %v4543, %v4545
        %v4559 = vsel %vm1273, %v4547, %v4549
        %v4560 = vsel %vm1273, %v4551, %v4553
        %v4561 = vsel %vm1273, %v4555, %v4557
        %v4566 = vsel %vm4322, %v4532, 0
        %v4569 = vsel %vm4322, %v4533, 0
        %v4571 = vsel %vm1277, %v4561, 0
        %4573 = vmatprep.subr.mxu0 0.0
        %4574 = vmatpush1.msra.mxu0 %v4558
        %4575 = vmatprep.subr.mxu0 0.0
        %4576 = vmatpush1.msra.mxu0 %v4559
        %4577 = vmatprep.subr.mxu0 0.0
        %4578 = vmatpush1.msra.mxu0 %v4560
        %4579 = vmatprep.subr.mxu0 0.0
        %4580 = vmatpush1.msra.mxu0 %v4571
        %4581 = vmatprep.subr.mxu0 0.0
        %4582 = vmatpush1.msra.mxu0 0.0
        %4583 = vmatprep.subr.mxu0 0.0
        %4584 = vmatpush1.msra.mxu0 0.0
        %4585 = vmatprep.subr.mxu0 0.0
        %4586 = vmatpush1.msra.mxu0 0.0
        %4587 = vmatprep.subr.mxu0 0.0
        %4588 = vmatpush1.msra.mxu0 0.0
        %4589 = vmatprep.subr.mxu0 0.0
        %4590 = vmatpush1.msra.mxu0 0.0
        %4591 = vmatprep.subr.mxu0 0.0
        %4592 = vmatpush1.msra.mxu0 0.0
        %4593 = vmatprep.subr.mxu0 0.0
        %4594 = vmatpush1.msra.mxu0 0.0
        %4595 = vmatprep.subr.mxu0 0.0
        %4596 = vmatpush1.msra.mxu0 0.0
        %4597 = vmatprep.subr.mxu0 0.0
        %4598 = vmatpush1.msra.mxu0 0.0
        %4599 = vmatprep.subr.mxu0 0.0
        %4600 = vmatpush1.msra.mxu0 0.0
        %4601 = vmatprep.subr.mxu0 0.0
        %4602 = vmatpush1.msra.mxu0 0.0
        %4603 = vmatprep.subr.mxu0 0.0
        %4604 = vmatpush1.msra.mxu0 0.0
        %4605 = vmatprep.subr.mxu0 0.0
        %4606 = vmatpush1.msra.mxu0 0.0
        %4607 = vmatprep.subr.mxu0 0.0
        %4608 = vmatpush1.msra.mxu0 0.0
        %4609 = vmatprep.subr.mxu0 0.0
        %4610 = vmatpush1.msra.mxu0 0.0
        %4611 = vmatprep.subr.mxu0 0.0
        %4612 = vmatpush1.msra.mxu0 0.0
        %4613 = vmatprep.subr.mxu0 0.0
        %4614 = vmatpush1.msra.mxu0 0.0
        %4615 = vmatprep.subr.mxu0 0.0
        %4616 = vmatpush1.msra.mxu0 0.0
        %4617 = vmatprep.subr.mxu0 0.0
        %4618 = vmatpush1.msra.mxu0 0.0
        %4619 = vmatprep.subr.mxu0 0.0
        %4620 = vmatpush1.msra.mxu0 0.0
        %4621 = vmatprep.subr.mxu0 0.0
        %4622 = vmatpush1.msra.mxu0 0.0
        %4623 = vmatprep.subr.mxu0 0.0
        %4624 = vmatpush1.msra.mxu0 0.0
        %4625 = vmatprep.subr.mxu0 0.0
        %4626 = vmatpush1.msra.mxu0 0.0
        %4627 = vmatprep.subr.mxu0 0.0
        %4628 = vmatpush1.msra.mxu0 0.0
        %4629 = vmatprep.subr.mxu0 0.0
        %4630 = vmatpush1.msra.mxu0 0.0
        %4631 = vmatprep.subr.mxu0 0.0
        %4632 = vmatpush1.msra.mxu0 0.0
        %4633 = vmatprep.subr.mxu0 0.0
        %4634 = vmatpush1.msra.mxu0 0.0
        %4635 = vmatprep.subr.mxu0 0.0
        %4636 = vmatpush1.msra.mxu0 0.0
        %4637 = vmatprep.mubr.f32.mxu0 0.0
        %4638 = vmatmul.mubr.f32.gmra.mrb[0].mxu0 %v4566
        %v4639 = vpop.f32.mrb[0].mxu0
        %v4640 = vadd.f32 0.0, %v4639
        %v4641 = vpop.f32.mrb[0].mxu0
        %4642 = vmatprep.mubr.f32.mxu0 0.0
        %4643 = vmatmul.mubr.f32.gmra.mrb[0].mxu0 %v4569
        %v4644 = vpop.f32.mrb[0].mxu0
        %v4645 = vadd.f32 0.0, %v4644
        %v4646 = vpop.f32.mrb[0].mxu0
        %4647 = vdwg.mxu0
        %v4648 = vadd.f32 %v4512, %v4640
        %v4649 = vadd.f32 %v4517, %v4645
        %4650 = vrot.lane.b32.xlu0 %v4265, 127
        %v4651 = vpop.permute.xlu0 %4650
        %v4653 = vmul.f32 %v4267, %v4651
        %v4654 = vmul.f32 %v4268, %v4651
        %v4655 = vmul.f32 %v4269, %v4651
        %v4656 = vmul.f32 %v4270, %v4651
        %v4657 = vmul.f32 %v4271, %v4651
        %v4658 = vmul.f32 %v4272, %v4651
        %v4659 = vmul.f32 %v4273, %v4651
        %v4660 = vmul.f32 %v4274, %v4651
        %v4661 = vld [vmem:[#allocation3 + $0x570] sm:$0xff]
        %v4662 = vld [vmem:[#allocation3 + $0x580] sm:$0xff]
        %4671 = vrot.lane.b32.xlu0 %v4653, 1
        %v4672 = vpop.permute.xlu0 %4671
        %4673 = vrot.lane.b32.xlu0 %v4654, 1
        %v4674 = vpop.permute.xlu0 %4673
        %4675 = vrot.lane.b32.xlu0 %v4655, 1
        %v4676 = vpop.permute.xlu0 %4675
        %4677 = vrot.lane.b32.xlu0 %v4656, 1
        %v4678 = vpop.permute.xlu0 %4677
        %4679 = vrot.lane.b32.xlu0 %v4657, 1
        %v4680 = vpop.permute.xlu0 %4679
        %4681 = vrot.lane.b32.xlu0 %v4658, 1
        %v4682 = vpop.permute.xlu0 %4681
        %4683 = vrot.lane.b32.xlu0 %v4659, 1
        %v4684 = vpop.permute.xlu0 %4683
        %4685 = vrot.lane.b32.xlu0 %v4660, 1
        %v4686 = vpop.permute.xlu0 %4685
        %v4687 = vsel %vm518, %v4672, %v4674
        %v4688 = vsel %vm518, %v4676, %v4678
        %v4689 = vsel %vm518, %v4680, %v4682
        %v4690 = vsel %vm518, %v4684, %v4686
        %v4695 = vsel %vm4322, %v4661, 0
        %v4698 = vsel %vm4322, %v4662, 0
        %v4700 = vsel %vm1277, %v4690, 0
        %4702 = vmatprep.subr.mxu0 0.0
        %4703 = vmatpush1.msra.mxu0 %v4687
        %4704 = vmatprep.subr.mxu0 0.0
        %4705 = vmatpush1.msra.mxu0 %v4688
        %4706 = vmatprep.subr.mxu0 0.0
        %4707 = vmatpush1.msra.mxu0 %v4689
        %4708 = vmatprep.subr.mxu0 0.0
        %4709 = vmatpush1.msra.mxu0 %v4700
        %4710 = vmatprep.subr.mxu0 0.0
        %4711 = vmatpush1.msra.mxu0 0.0
        %4712 = vmatprep.subr.mxu0 0.0
        %4713 = vmatpush1.msra.mxu0 0.0
        %4714 = vmatprep.subr.mxu0 0.0
        %4715 = vmatpush1.msra.mxu0 0.0
        %4716 = vmatprep.subr.mxu0 0.0
        %4717 = vmatpush1.msra.mxu0 0.0
        %4718 = vmatprep.subr.mxu0 0.0
        %4719 = vmatpush1.msra.mxu0 0.0
        %4720 = vmatprep.subr.mxu0 0.0
        %4721 = vmatpush1.msra.mxu0 0.0
        %4722 = vmatprep.subr.mxu0 0.0
        %4723 = vmatpush1.msra.mxu0 0.0
        %4724 = vmatprep.subr.mxu0 0.0
        %4725 = vmatpush1.msra.mxu0 0.0
        %4726 = vmatprep.subr.mxu0 0.0
        %4727 = vmatpush1.msra.mxu0 0.0
        %4728 = vmatprep.subr.mxu0 0.0
        %4729 = vmatpush1.msra.mxu0 0.0
        %4730 = vmatprep.subr.mxu0 0.0
        %4731 = vmatpush1.msra.mxu0 0.0
        %4732 = vmatprep.subr.mxu0 0.0
        %4733 = vmatpush1.msra.mxu0 0.0
        %4734 = vmatprep.subr.mxu0 0.0
        %4735 = vmatpush1.msra.mxu0 0.0
        %4736 = vmatprep.subr.mxu0 0.0
        %4737 = vmatpush1.msra.mxu0 0.0
        %4738 = vmatprep.subr.mxu0 0.0
        %4739 = vmatpush1.msra.mxu0 0.0
        %4740 = vmatprep.subr.mxu0 0.0
        %4741 = vmatpush1.msra.mxu0 0.0
        %4742 = vmatprep.subr.mxu0 0.0
        %4743 = vmatpush1.msra.mxu0 0.0
        %4744 = vmatprep.subr.mxu0 0.0
        %4745 = vmatpush1.msra.mxu0 0.0
        %4746 = vmatprep.subr.mxu0 0.0
        %4747 = vmatpush1.msra.mxu0 0.0
        %4748 = vmatprep.subr.mxu0 0.0
        %4749 = vmatpush1.msra.mxu0 0.0
        %4750 = vmatprep.subr.mxu0 0.0
        %4751 = vmatpush1.msra.mxu0 0.0
        %4752 = vmatprep.subr.mxu0 0.0
        %4753 = vmatpush1.msra.mxu0 0.0
        %4754 = vmatprep.subr.mxu0 0.0
        %4755 = vmatpush1.msra.mxu0 0.0
        %4756 = vmatprep.subr.mxu0 0.0
        %4757 = vmatpush1.msra.mxu0 0.0
        %4758 = vmatprep.subr.mxu0 0.0
        %4759 = vmatpush1.msra.mxu0 0.0
        %4760 = vmatprep.subr.mxu0 0.0
        %4761 = vmatpush1.msra.mxu0 0.0
        %4762 = vmatprep.subr.mxu0 0.0
        %4763 = vmatpush1.msra.mxu0 0.0
        %4764 = vmatprep.subr.mxu0 0.0
        %4765 = vmatpush1.msra.mxu0 0.0
        %4766 = vmatprep.mubr.f32.mxu0 0.0
        %4767 = vmatmul.mubr.f32.gmra.mrb[0].mxu0 %v4695
        %v4768 = vpop.f32.mrb[0].mxu0
        %v4769 = vadd.f32 0.0, %v4768
        %v4770 = vpop.f32.mrb[0].mxu0
        %4771 = vmatprep.mubr.f32.mxu0 0.0
        %4772 = vmatmul.mubr.f32.gmra.mrb[0].mxu0 %v4698
        %v4773 = vpop.f32.mrb[0].mxu0
        %v4774 = vadd.f32 0.0, %v4773
        %v4775 = vpop.f32.mrb[0].mxu0
        %4776 = vdwg.mxu0
        %v4777 = vadd.f32 %v4648, %v4769
        %v4778 = vadd.f32 %v4649, %v4774
        %v4779 = vld [vmem:[#allocation3 + $0x590] sm:$0xff]
        %v4780 = vld [vmem:[#allocation3 + $0x5a0] sm:$0xff]
        %v4782 = vsel %vm4322, %v4779, 0
        %v4785 = vsel %vm4322, %v4780, 0
        %v4787 = vsel %vm1277, %v4274, 0
        %4789 = vmatprep.subr.mxu0 0.0
        %4790 = vmatpush1.msra.mxu0 %v4268
        %4791 = vmatprep.subr.mxu0 0.0
        %4792 = vmatpush1.msra.mxu0 %v4270
        %4793 = vmatprep.subr.mxu0 0.0
        %4794 = vmatpush1.msra.mxu0 %v4272
        %4795 = vmatprep.subr.mxu0 0.0
        %4796 = vmatpush1.msra.mxu0 %v4787
        %4797 = vmatprep.subr.mxu0 0.0
        %4798 = vmatpush1.msra.mxu0 0.0
        %4799 = vmatprep.subr.mxu0 0.0
        %4800 = vmatpush1.msra.mxu0 0.0
        %4801 = vmatprep.subr.mxu0 0.0
        %4802 = vmatpush1.msra.mxu0 0.0
        %4803 = vmatprep.subr.mxu0 0.0
        %4804 = vmatpush1.msra.mxu0 0.0
        %4805 = vmatprep.subr.mxu0 0.0
        %4806 = vmatpush1.msra.mxu0 0.0
        %4807 = vmatprep.subr.mxu0 0.0
        %4808 = vmatpush1.msra.mxu0 0.0
        %4809 = vmatprep.subr.mxu0 0.0
        %4810 = vmatpush1.msra.mxu0 0.0
        %4811 = vmatprep.subr.mxu0 0.0
        %4812 = vmatpush1.msra.mxu0 0.0
        %4813 = vmatprep.subr.mxu0 0.0
        %4814 = vmatpush1.msra.mxu0 0.0
        %4815 = vmatprep.subr.mxu0 0.0
        %4816 = vmatpush1.msra.mxu0 0.0
        %4817 = vmatprep.subr.mxu0 0.0
        %4818 = vmatpush1.msra.mxu0 0.0
        %4819 = vmatprep.subr.mxu0 0.0
        %4820 = vmatpush1.msra.mxu0 0.0
        %4821 = vmatprep.subr.mxu0 0.0
        %4822 = vmatpush1.msra.mxu0 0.0
        %4823 = vmatprep.subr.mxu0 0.0
        %4824 = vmatpush1.msra.mxu0 0.0
        %4825 = vmatprep.subr.mxu0 0.0
        %4826 = vmatpush1.msra.mxu0 0.0
        %4827 = vmatprep.subr.mxu0 0.0
        %4828 = vmatpush1.msra.mxu0 0.0
        %4829 = vmatprep.subr.mxu0 0.0
        %4830 = vmatpush1.msra.mxu0 0.0
        %4831 = vmatprep.subr.mxu0 0.0
        %4832 = vmatpush1.msra.mxu0 0.0
        %4833 = vmatprep.subr.mxu0 0.0
        %4834 = vmatpush1.msra.mxu0 0.0
        %4835 = vmatprep.subr.mxu0 0.0
        %4836 = vmatpush1.msra.mxu0 0.0
        %4837 = vmatprep.subr.mxu0 0.0
        %4838 = vmatpush1.msra.mxu0 0.0
        %4839 = vmatprep.subr.mxu0 0.0
        %4840 = vmatpush1.msra.mxu0 0.0
        %4841 = vmatprep.subr.mxu0 0.0
        %4842 = vmatpush1.msra.mxu0 0.0
        %4843 = vmatprep.subr.mxu0 0.0
        %4844 = vmatpush1.msra.mxu0 0.0
        %4845 = vmatprep.subr.mxu0 0.0
        %4846 = vmatpush1.msra.mxu0 0.0
        %4847 = vmatprep.subr.mxu0 0.0
        %4848 = vmatpush1.msra.mxu0 0.0
        %4849 = vmatprep.subr.mxu0 0.0
        %4850 = vmatpush1.msra.mxu0 0.0
        %4851 = vmatprep.subr.mxu0 0.0
        %4852 = vmatpush1.msra.mxu0 0.0
        %4853 = vmatprep.mubr.f32.mxu0 0.0
        %4854 = vmatmul.mubr.f32.gmra.mrb[0].mxu0 %v4782
        %v4855 = vpop.f32.mrb[0].mxu0
        %v4856 = vadd.f32 0.0, %v4855
        %v4857 = vpop.f32.mrb[0].mxu0
        %4858 = vmatprep.mubr.f32.mxu0 0.0
        %4859 = vmatmul.mubr.f32.gmra.mrb[0].mxu0 %v4785
        %v4860 = vpop.f32.mrb[0].mxu0
        %v4861 = vadd.f32 0.0, %v4860
        %v4862 = vpop.f32.mrb[0].mxu0
        %4863 = vdwg.mxu0
        %v4864 = vadd.f32 %v4777, %v4856
        %v4865 = vadd.f32 %v4778, %v4861
        %4866 = vrot.lane.b32.xlu0 %v4266, 1
        %v4867 = vpop.permute.xlu0 %4866
        %v4869 = vmul.f32 %v4268, %v4867
        %v4870 = vmul.f32 %v4270, %v4867
        %v4871 = vmul.f32 %v4272, %v4867
        %v4872 = vmul.f32 %v4274, %v4867
        %v4873 = vld [vmem:[#allocation3 + $0x5b0] sm:$0xff]
        %v4874 = vld [vmem:[#allocation3 + $0x5c0] sm:$0xff]
        %4879 = vrot.lane.b32.xlu0 %v4869, 127
        %v4880 = vpop.permute.xlu0 %4879
        %4881 = vrot.lane.b32.xlu0 %v4870, 127
        %v4882 = vpop.permute.xlu0 %4881
        %4883 = vrot.lane.b32.xlu0 %v4871, 127
        %v4884 = vpop.permute.xlu0 %4883
        %4885 = vrot.lane.b32.xlu0 %v4872, 127
        %v4886 = vpop.permute.xlu0 %4885
        %v4891 = vsel %vm4322, %v4873, 0
        %v4894 = vsel %vm4322, %v4874, 0
        %v4896 = vsel %vm1277, %v4886, 0
        %4898 = vmatprep.subr.mxu0 0.0
        %4899 = vmatpush1.msra.mxu0 %v4880
        %4900 = vmatprep.subr.mxu0 0.0
        %4901 = vmatpush1.msra.mxu0 %v4882
        %4902 = vmatprep.subr.mxu0 0.0
        %4903 = vmatpush1.msra.mxu0 %v4884
        %4904 = vmatprep.subr.mxu0 0.0
        %4905 = vmatpush1.msra.mxu0 %v4896
        %4906 = vmatprep.subr.mxu0 0.0
        %4907 = vmatpush1.msra.mxu0 0.0
        %4908 = vmatprep.subr.mxu0 0.0
        %4909 = vmatpush1.msra.mxu0 0.0
        %4910 = vmatprep.subr.mxu0 0.0
        %4911 = vmatpush1.msra.mxu0 0.0
        %4912 = vmatprep.subr.mxu0 0.0
        %4913 = vmatpush1.msra.mxu0 0.0
        %4914 = vmatprep.subr.mxu0 0.0
        %4915 = vmatpush1.msra.mxu0 0.0
        %4916 = vmatprep.subr.mxu0 0.0
        %4917 = vmatpush1.msra.mxu0 0.0
        %4918 = vmatprep.subr.mxu0 0.0
        %4919 = vmatpush1.msra.mxu0 0.0
        %4920 = vmatprep.subr.mxu0 0.0
        %4921 = vmatpush1.msra.mxu0 0.0
        %4922 = vmatprep.subr.mxu0 0.0
        %4923 = vmatpush1.msra.mxu0 0.0
        %4924 = vmatprep.subr.mxu0 0.0
        %4925 = vmatpush1.msra.mxu0 0.0
        %4926 = vmatprep.subr.mxu0 0.0
        %4927 = vmatpush1.msra.mxu0 0.0
        %4928 = vmatprep.subr.mxu0 0.0
        %4929 = vmatpush1.msra.mxu0 0.0
        %4930 = vmatprep.subr.mxu0 0.0
        %4931 = vmatpush1.msra.mxu0 0.0
        %4932 = vmatprep.subr.mxu0 0.0
        %4933 = vmatpush1.msra.mxu0 0.0
        %4934 = vmatprep.subr.mxu0 0.0
        %4935 = vmatpush1.msra.mxu0 0.0
        %4936 = vmatprep.subr.mxu0 0.0
        %4937 = vmatpush1.msra.mxu0 0.0
        %4938 = vmatprep.subr.mxu0 0.0
        %4939 = vmatpush1.msra.mxu0 0.0
        %4940 = vmatprep.subr.mxu0 0.0
        %4941 = vmatpush1.msra.mxu0 0.0
        %4942 = vmatprep.subr.mxu0 0.0
        %4943 = vmatpush1.msra.mxu0 0.0
        %4944 = vmatprep.subr.mxu0 0.0
        %4945 = vmatpush1.msra.mxu0 0.0
        %4946 = vmatprep.subr.mxu0 0.0
        %4947 = vmatpush1.msra.mxu0 0.0
        %4948 = vmatprep.subr.mxu0 0.0
        %4949 = vmatpush1.msra.mxu0 0.0
        %4950 = vmatprep.subr.mxu0 0.0
        %4951 = vmatpush1.msra.mxu0 0.0
        %4952 = vmatprep.subr.mxu0 0.0
        %4953 = vmatpush1.msra.mxu0 0.0
        %4954 = vmatprep.subr.mxu0 0.0
        %4955 = vmatpush1.msra.mxu0 0.0
        %4956 = vmatprep.subr.mxu0 0.0
        %4957 = vmatpush1.msra.mxu0 0.0
        %4958 = vmatprep.subr.mxu0 0.0
        %4959 = vmatpush1.msra.mxu0 0.0
        %4960 = vmatprep.subr.mxu0 0.0
        %4961 = vmatpush1.msra.mxu0 0.0
        %4962 = vmatprep.mubr.f32.mxu0 0.0
        %4963 = vmatmul.mubr.f32.gmra.mrb[0].mxu0 %v4891
        %v4964 = vpop.f32.mrb[0].mxu0
        %v4965 = vadd.f32 0.0, %v4964
        %v4966 = vpop.f32.mrb[0].mxu0
        %4967 = vmatprep.mubr.f32.mxu0 0.0
        %4968 = vmatmul.mubr.f32.gmra.mrb[0].mxu0 %v4894
        %v4969 = vpop.f32.mrb[0].mxu0
        %v4970 = vadd.f32 0.0, %v4969
        %v4971 = vpop.f32.mrb[0].mxu0
        %4972 = vdwg.mxu0
        %v4973 = vadd.f32 %v4864, %v4965
        %v4974 = vadd.f32 %v4865, %v4970
        %4975 = vrot.lane.b32.xlu0 %v4265, 7
        %v4976 = vpop.permute.xlu0 %4975
        %v4978 = vmul.f32 %v4268, %v4976
        %v4979 = vmul.f32 %v4270, %v4976
        %v4980 = vmul.f32 %v4272, %v4976
        %v4981 = vmul.f32 %v4274, %v4976
        %v4982 = vld [vmem:[#allocation3 + $0x5d0] sm:$0xff]
        %v4983 = vld [vmem:[#allocation3 + $0x5e0] sm:$0xff]
        %4988 = vrot.lane.b32.xlu0 %v4978, 121
        %v4989 = vpop.permute.xlu0 %4988
        %4990 = vrot.lane.b32.xlu0 %v4979, 121
        %v4991 = vpop.permute.xlu0 %4990
        %4992 = vrot.lane.b32.xlu0 %v4980, 121
        %v4993 = vpop.permute.xlu0 %4992
        %4994 = vrot.lane.b32.xlu0 %v4981, 121
        %v4995 = vpop.permute.xlu0 %4994
        %v5000 = vsel %vm4322, %v4982, 0
        %v5003 = vsel %vm4322, %v4983, 0
        %v5005 = vsel %vm1277, %v4995, 0
        %5007 = vmatprep.subr.mxu0 0.0
        %5008 = vmatpush1.msra.mxu0 %v4989
        %5009 = vmatprep.subr.mxu0 0.0
        %5010 = vmatpush1.msra.mxu0 %v4991
        %5011 = vmatprep.subr.mxu0 0.0
        %5012 = vmatpush1.msra.mxu0 %v4993
        %5013 = vmatprep.subr.mxu0 0.0
        %5014 = vmatpush1.msra.mxu0 %v5005
        %5015 = vmatprep.subr.mxu0 0.0
        %5016 = vmatpush1.msra.mxu0 0.0
        %5017 = vmatprep.subr.mxu0 0.0
        %5018 = vmatpush1.msra.mxu0 0.0
        %5019 = vmatprep.subr.mxu0 0.0
        %5020 = vmatpush1.msra.mxu0 0.0
        %5021 = vmatprep.subr.mxu0 0.0
        %5022 = vmatpush1.msra.mxu0 0.0
        %5023 = vmatprep.subr.mxu0 0.0
        %5024 = vmatpush1.msra.mxu0 0.0
        %5025 = vmatprep.subr.mxu0 0.0
        %5026 = vmatpush1.msra.mxu0 0.0
        %5027 = vmatprep.subr.mxu0 0.0
        %5028 = vmatpush1.msra.mxu0 0.0
        %5029 = vmatprep.subr.mxu0 0.0
        %5030 = vmatpush1.msra.mxu0 0.0
        %5031 = vmatprep.subr.mxu0 0.0
        %5032 = vmatpush1.msra.mxu0 0.0
        %5033 = vmatprep.subr.mxu0 0.0
        %5034 = vmatpush1.msra.mxu0 0.0
        %5035 = vmatprep.subr.mxu0 0.0
        %5036 = vmatpush1.msra.mxu0 0.0
        %5037 = vmatprep.subr.mxu0 0.0
        %5038 = vmatpush1.msra.mxu0 0.0
        %5039 = vmatprep.subr.mxu0 0.0
        %5040 = vmatpush1.msra.mxu0 0.0
        %5041 = vmatprep.subr.mxu0 0.0
        %5042 = vmatpush1.msra.mxu0 0.0
        %5043 = vmatprep.subr.mxu0 0.0
        %5044 = vmatpush1.msra.mxu0 0.0
        %5045 = vmatprep.subr.mxu0 0.0
        %5046 = vmatpush1.msra.mxu0 0.0
        %5047 = vmatprep.subr.mxu0 0.0
        %5048 = vmatpush1.msra.mxu0 0.0
        %5049 = vmatprep.subr.mxu0 0.0
        %5050 = vmatpush1.msra.mxu0 0.0
        %5051 = vmatprep.subr.mxu0 0.0
        %5052 = vmatpush1.msra.mxu0 0.0
        %5053 = vmatprep.subr.mxu0 0.0
        %5054 = vmatpush1.msra.mxu0 0.0
        %5055 = vmatprep.subr.mxu0 0.0
        %5056 = vmatpush1.msra.mxu0 0.0
        %5057 = vmatprep.subr.mxu0 0.0
        %5058 = vmatpush1.msra.mxu0 0.0
        %5059 = vmatprep.subr.mxu0 0.0
        %5060 = vmatpush1.msra.mxu0 0.0
        %5061 = vmatprep.subr.mxu0 0.0
        %5062 = vmatpush1.msra.mxu0 0.0
        %5063 = vmatprep.subr.mxu0 0.0
        %5064 = vmatpush1.msra.mxu0 0.0
        %5065 = vmatprep.subr.mxu0 0.0
        %5066 = vmatpush1.msra.mxu0 0.0
        %5067 = vmatprep.subr.mxu0 0.0
        %5068 = vmatpush1.msra.mxu0 0.0
        %5069 = vmatprep.subr.mxu0 0.0
        %5070 = vmatpush1.msra.mxu0 0.0
        %5071 = vmatprep.mubr.f32.mxu0 0.0
        %5072 = vmatmul.mubr.f32.gmra.mrb[0].mxu0 %v5000
        %v5073 = vpop.f32.mrb[0].mxu0
        %v5074 = vadd.f32 0.0, %v5073
        %v5075 = vpop.f32.mrb[0].mxu0
        %5076 = vmatprep.mubr.f32.mxu0 0.0
        %5077 = vmatmul.mubr.f32.gmra.mrb[0].mxu0 %v5003
        %v5078 = vpop.f32.mrb[0].mxu0
        %v5079 = vadd.f32 0.0, %v5078
        %v5080 = vpop.f32.mrb[0].mxu0
        %5081 = vdwg.mxu0
        %v5082 = vadd.f32 %v4973, %v5074
        %v5083 = vadd.f32 %v4974, %v5079
        %v5084 = vld [vmem:[#allocation3 + $0x5f0] sm:$0xff]
        %v5085 = vld [vmem:[#allocation3 + $0x600] sm:$0xff]
        %5086 = vrot.lane.b32.xlu0 %v4268, 120
        %v5087 = vpop.permute.xlu0 %5086
        %5088 = vrot.lane.b32.xlu0 %v4270, 120
        %v5089 = vpop.permute.xlu0 %5088
        %5090 = vrot.lane.b32.xlu0 %v4272, 120
        %v5091 = vpop.permute.xlu0 %5090
        %5092 = vrot.lane.b32.xlu0 %v4274, 120
        %v5093 = vpop.permute.xlu0 %5092
        %v5098 = vsel %vm4322, %v5084, 0
        %v5101 = vsel %vm4322, %v5085, 0
        %v5103 = vsel %vm1277, %v5093, 0
        %5105 = vmatprep.subr.mxu0 0.0
        %5106 = vmatpush1.msra.mxu0 %v5087
        %5107 = vmatprep.subr.mxu0 0.0
        %5108 = vmatpush1.msra.mxu0 %v5089
        %5109 = vmatprep.subr.mxu0 0.0
        %5110 = vmatpush1.msra.mxu0 %v5091
        %5111 = vmatprep.subr.mxu0 0.0
        %5112 = vmatpush1.msra.mxu0 %v5103
        %5113 = vmatprep.subr.mxu0 0.0
        %5114 = vmatpush1.msra.mxu0 0.0
        %5115 = vmatprep.subr.mxu0 0.0
        %5116 = vmatpush1.msra.mxu0 0.0
        %5117 = vmatprep.subr.mxu0 0.0
        %5118 = vmatpush1.msra.mxu0 0.0
        %5119 = vmatprep.subr.mxu0 0.0
        %5120 = vmatpush1.msra.mxu0 0.0
        %5121 = vmatprep.subr.mxu0 0.0
        %5122 = vmatpush1.msra.mxu0 0.0
        %5123 = vmatprep.subr.mxu0 0.0
        %5124 = vmatpush1.msra.mxu0 0.0
        %5125 = vmatprep.subr.mxu0 0.0
        %5126 = vmatpush1.msra.mxu0 0.0
        %5127 = vmatprep.subr.mxu0 0.0
        %5128 = vmatpush1.msra.mxu0 0.0
        %5129 = vmatprep.subr.mxu0 0.0
        %5130 = vmatpush1.msra.mxu0 0.0
        %5131 = vmatprep.subr.mxu0 0.0
        %5132 = vmatpush1.msra.mxu0 0.0
        %5133 = vmatprep.subr.mxu0 0.0
        %5134 = vmatpush1.msra.mxu0 0.0
        %5135 = vmatprep.subr.mxu0 0.0
        %5136 = vmatpush1.msra.mxu0 0.0
        %5137 = vmatprep.subr.mxu0 0.0
        %5138 = vmatpush1.msra.mxu0 0.0
        %5139 = vmatprep.subr.mxu0 0.0
        %5140 = vmatpush1.msra.mxu0 0.0
        %5141 = vmatprep.subr.mxu0 0.0
        %5142 = vmatpush1.msra.mxu0 0.0
        %5143 = vmatprep.subr.mxu0 0.0
        %5144 = vmatpush1.msra.mxu0 0.0
        %5145 = vmatprep.subr.mxu0 0.0
        %5146 = vmatpush1.msra.mxu0 0.0
        %5147 = vmatprep.subr.mxu0 0.0
        %5148 = vmatpush1.msra.mxu0 0.0
        %5149 = vmatprep.subr.mxu0 0.0
        %5150 = vmatpush1.msra.mxu0 0.0
        %5151 = vmatprep.subr.mxu0 0.0
        %5152 = vmatpush1.msra.mxu0 0.0
        %5153 = vmatprep.subr.mxu0 0.0
        %5154 = vmatpush1.msra.mxu0 0.0
        %5155 = vmatprep.subr.mxu0 0.0
        %5156 = vmatpush1.msra.mxu0 0.0
        %5157 = vmatprep.subr.mxu0 0.0
        %5158 = vmatpush1.msra.mxu0 0.0
        %5159 = vmatprep.subr.mxu0 0.0
        %5160 = vmatpush1.msra.mxu0 0.0
        %5161 = vmatprep.subr.mxu0 0.0
        %5162 = vmatpush1.msra.mxu0 0.0
        %5163 = vmatprep.subr.mxu0 0.0
        %5164 = vmatpush1.msra.mxu0 0.0
        %5165 = vmatprep.subr.mxu0 0.0
        %5166 = vmatpush1.msra.mxu0 0.0
        %5167 = vmatprep.subr.mxu0 0.0
        %5168 = vmatpush1.msra.mxu0 0.0
        %5169 = vmatprep.mubr.f32.mxu0 0.0
        %5170 = vmatmul.mubr.f32.gmra.mrb[0].mxu0 %v5098
        %v5171 = vpop.f32.mrb[0].mxu0
        %v5172 = vadd.f32 0.0, %v5171
        %v5173 = vpop.f32.mrb[0].mxu0
        %5174 = vmatprep.mubr.f32.mxu0 0.0
        %5175 = vmatmul.mubr.f32.gmra.mrb[0].mxu0 %v5101
        %v5176 = vpop.f32.mrb[0].mxu0
        %v5177 = vadd.f32 0.0, %v5176
        %v5178 = vpop.f32.mrb[0].mxu0
        %5179 = vdwg.mxu0
        %v5180 = vadd.f32 %v5082, %v5172
        %v5181 = vadd.f32 %v5083, %v5177
        %5182 = vrot.lane.b32.xlu0 %v4266, 9
        %v5183 = vpop.permute.xlu0 %5182
        %v5185 = vmul.f32 %v4268, %v5183
        %v5186 = vmul.f32 %v4270, %v5183
        %v5187 = vmul.f32 %v4272, %v5183
        %v5188 = vmul.f32 %v4274, %v5183
        %v5189 = vld [vmem:[#allocation3 + $0x610] sm:$0xff]
        %v5190 = vld [vmem:[#allocation3 + $0x620] sm:$0xff]
        %5195 = vrot.lane.b32.xlu0 %v5185, 119
        %v5196 = vpop.permute.xlu0 %5195
        %5197 = vrot.lane.b32.xlu0 %v5186, 119
        %v5198 = vpop.permute.xlu0 %5197
        %5199 = vrot.lane.b32.xlu0 %v5187, 119
        %v5200 = vpop.permute.xlu0 %5199
        %5201 = vrot.lane.b32.xlu0 %v5188, 119
        %v5202 = vpop.permute.xlu0 %5201
        %v5207 = vsel %vm4322, %v5189, 0
        %v5210 = vsel %vm4322, %v5190, 0
        %v5212 = vsel %vm1277, %v5202, 0
        %5214 = vmatprep.subr.mxu0 0.0
        %5215 = vmatpush1.msra.mxu0 %v5196
        %5216 = vmatprep.subr.mxu0 0.0
        %5217 = vmatpush1.msra.mxu0 %v5198
        %5218 = vmatprep.subr.mxu0 0.0
        %5219 = vmatpush1.msra.mxu0 %v5200
        %5220 = vmatprep.subr.mxu0 0.0
        %5221 = vmatpush1.msra.mxu0 %v5212
        %5222 = vmatprep.subr.mxu0 0.0
        %5223 = vmatpush1.msra.mxu0 0.0
        %5224 = vmatprep.subr.mxu0 0.0
        %5225 = vmatpush1.msra.mxu0 0.0
        %5226 = vmatprep.subr.mxu0 0.0
        %5227 = vmatpush1.msra.mxu0 0.0
        %5228 = vmatprep.subr.mxu0 0.0
        %5229 = vmatpush1.msra.mxu0 0.0
        %5230 = vmatprep.subr.mxu0 0.0
        %5231 = vmatpush1.msra.mxu0 0.0
        %5232 = vmatprep.subr.mxu0 0.0
        %5233 = vmatpush1.msra.mxu0 0.0
        %5234 = vmatprep.subr.mxu0 0.0
        %5235 = vmatpush1.msra.mxu0 0.0
        %5236 = vmatprep.subr.mxu0 0.0
        %5237 = vmatpush1.msra.mxu0 0.0
        %5238 = vmatprep.subr.mxu0 0.0
        %5239 = vmatpush1.msra.mxu0 0.0
        %5240 = vmatprep.subr.mxu0 0.0
        %5241 = vmatpush1.msra.mxu0 0.0
        %5242 = vmatprep.subr.mxu0 0.0
        %5243 = vmatpush1.msra.mxu0 0.0
        %5244 = vmatprep.subr.mxu0 0.0
        %5245 = vmatpush1.msra.mxu0 0.0
        %5246 = vmatprep.subr.mxu0 0.0
        %5247 = vmatpush1.msra.mxu0 0.0
        %5248 = vmatprep.subr.mxu0 0.0
        %5249 = vmatpush1.msra.mxu0 0.0
        %5250 = vmatprep.subr.mxu0 0.0
        %5251 = vmatpush1.msra.mxu0 0.0
        %5252 = vmatprep.subr.mxu0 0.0
        %5253 = vmatpush1.msra.mxu0 0.0
        %5254 = vmatprep.subr.mxu0 0.0
        %5255 = vmatpush1.msra.mxu0 0.0
        %5256 = vmatprep.subr.mxu0 0.0
        %5257 = vmatpush1.msra.mxu0 0.0
        %5258 = vmatprep.subr.mxu0 0.0
        %5259 = vmatpush1.msra.mxu0 0.0
        %5260 = vmatprep.subr.mxu0 0.0
        %5261 = vmatpush1.msra.mxu0 0.0
        %5262 = vmatprep.subr.mxu0 0.0
        %5263 = vmatpush1.msra.mxu0 0.0
        %5264 = vmatprep.subr.mxu0 0.0
        %5265 = vmatpush1.msra.mxu0 0.0
        %5266 = vmatprep.subr.mxu0 0.0
        %5267 = vmatpush1.msra.mxu0 0.0
        %5268 = vmatprep.subr.mxu0 0.0
        %5269 = vmatpush1.msra.mxu0 0.0
        %5270 = vmatprep.subr.mxu0 0.0
        %5271 = vmatpush1.msra.mxu0 0.0
        %5272 = vmatprep.subr.mxu0 0.0
        %5273 = vmatpush1.msra.mxu0 0.0
        %5274 = vmatprep.subr.mxu0 0.0
        %5275 = vmatpush1.msra.mxu0 0.0
        %5276 = vmatprep.subr.mxu0 0.0
        %5277 = vmatpush1.msra.mxu0 0.0
        %5278 = vmatprep.mubr.f32.mxu0 0.0
        %5279 = vmatmul.mubr.f32.gmra.mrb[0].mxu0 %v5207
        %v5280 = vpop.f32.mrb[0].mxu0
        %v5281 = vadd.f32 0.0, %v5280
        %v5282 = vpop.f32.mrb[0].mxu0
        %5283 = vmatprep.mubr.f32.mxu0 0.0
        %5284 = vmatmul.mubr.f32.gmra.mrb[0].mxu0 %v5210
        %v5285 = vpop.f32.mrb[0].mxu0
        %v5286 = vadd.f32 0.0, %v5285
        %v5287 = vpop.f32.mrb[0].mxu0
        %5288 = vdwg.mxu0
        %v5289 = vadd.f32 %v5180, %v5281
        %v5290 = vadd.f32 %v5181, %v5286
        %5291 = vset.pattern.permute.xlu0 31
        %5292 = vperm.xlu0 %5291, %v4287
        %v5293 = vpop.permute.xlu0 %5292
        %5295 = vset.pattern.permute.xlu0 31
        %5296 = vperm.xlu0 %5295, %v4288
        %v5297 = vpop.permute.xlu0 %5296
        %v5299 = vadd.f32 %v5289, %v5293
        %v5300 = vadd.f32 %v5290, %v5297
        %v5301 = vmul.f32 %v5299, 0.01
        %v5302 = vmul.f32 %v5300, 0.01
        %v5303 = vmax.f32 %v5299, %v5301
        %v5304 = vmax.f32 %v5300, %v5302
        %v5305 = vld [vmem:[#allocation3 + $0x8b0] sm:$0xff]
        %v5306 = vld [vmem:[#allocation3 + $0x8b8] sm:$0xff]
        %v5307 = vld [vmem:[#allocation3 + $0x8c0] sm:$0xff]
        %v5308 = vld [vmem:[#allocation3 + $0x8c8] sm:$0xff]
        %v5309 = vld [vmem:[#allocation3 + $0x8d0] sm:$0xff]
        %v5310 = vld [vmem:[#allocation3 + $0x8d8] sm:$0xff]
        %v5311 = vld [vmem:[#allocation3 + $0x8e0] sm:$0xff]
        %v5312 = vld [vmem:[#allocation3 + $0x8e8] sm:$0xff]
        %v5313 = vld [vmem:[#allocation3 + $0x8f0] sm:$0xff]
        %v5314 = vld [vmem:[#allocation3 + $0x8f8] sm:$0xff]
        %v5315 = vld [vmem:[#allocation3 + $0x900] sm:$0xff]
        %v5316 = vld [vmem:[#allocation3 + $0x908] sm:$0xff]
        %v5317 = vld [vmem:[#allocation3 + $0x910] sm:$0xff]
        %v5318 = vld [vmem:[#allocation3 + $0x918] sm:$0xff]
        %v5319 = vld [vmem:[#allocation3 + $0x920] sm:$0xff]
        %v5320 = vld [vmem:[#allocation3 + $0x928] sm:$0xff]
        %v5322 = vsel %vm2027, %v5303, 0
        %v5325 = vsel %vm2027, %v5304, 0
        %5327 = vmatprep.subr.mxu0 %v5306
        %5328 = vmatpush1.msra.mxu0 %v5305
        %5329 = vmatprep.subr.mxu0 %v5308
        %5330 = vmatpush1.msra.mxu0 %v5307
        %5331 = vmatprep.subr.mxu0 %v5310
        %5332 = vmatpush1.msra.mxu0 %v5309
        %5333 = vmatprep.subr.mxu0 %v5312
        %5334 = vmatpush1.msra.mxu0 %v5311
        %5335 = vmatprep.subr.mxu0 %v5314
        %5336 = vmatpush1.msra.mxu0 %v5313
        %5337 = vmatprep.subr.mxu0 %v5316
        %5338 = vmatpush1.msra.mxu0 %v5315
        %5339 = vmatprep.subr.mxu0 %v5318
        %5340 = vmatpush1.msra.mxu0 %v5317
        %5341 = vmatprep.subr.mxu0 %v5320
        %5342 = vmatpush1.msra.mxu0 %v5319
        %5343 = vmatprep.subr.mxu0 0.0
        %5344 = vmatpush1.msra.mxu0 0.0
        %5345 = vmatprep.subr.mxu0 0.0
        %5346 = vmatpush1.msra.mxu0 0.0
        %5347 = vmatprep.subr.mxu0 0.0
        %5348 = vmatpush1.msra.mxu0 0.0
        %5349 = vmatprep.subr.mxu0 0.0
        %5350 = vmatpush1.msra.mxu0 0.0
        %5351 = vmatprep.subr.mxu0 0.0
        %5352 = vmatpush1.msra.mxu0 0.0
        %5353 = vmatprep.subr.mxu0 0.0
        %5354 = vmatpush1.msra.mxu0 0.0
        %5355 = vmatprep.subr.mxu0 0.0
        %5356 = vmatpush1.msra.mxu0 0.0
        %5357 = vmatprep.subr.mxu0 0.0
        %5358 = vmatpush1.msra.mxu0 0.0
        %5359 = vmatprep.subr.mxu0 0.0
        %5360 = vmatpush1.msra.mxu0 0.0
        %5361 = vmatprep.subr.mxu0 0.0
        %5362 = vmatpush1.msra.mxu0 0.0
        %5363 = vmatprep.subr.mxu0 0.0
        %5364 = vmatpush1.msra.mxu0 0.0
        %5365 = vmatprep.subr.mxu0 0.0
        %5366 = vmatpush1.msra.mxu0 0.0
        %5367 = vmatprep.subr.mxu0 0.0
        %5368 = vmatpush1.msra.mxu0 0.0
        %5369 = vmatprep.subr.mxu0 0.0
        %5370 = vmatpush1.msra.mxu0 0.0
        %5371 = vmatprep.subr.mxu0 0.0
        %5372 = vmatpush1.msra.mxu0 0.0
        %5373 = vmatprep.subr.mxu0 0.0
        %5374 = vmatpush1.msra.mxu0 0.0
        %5375 = vmatprep.subr.mxu0 0.0
        %5376 = vmatpush1.msra.mxu0 0.0
        %5377 = vmatprep.subr.mxu0 0.0
        %5378 = vmatpush1.msra.mxu0 0.0
        %5379 = vmatprep.subr.mxu0 0.0
        %5380 = vmatpush1.msra.mxu0 0.0
        %5381 = vmatprep.subr.mxu0 0.0
        %5382 = vmatpush1.msra.mxu0 0.0
        %5383 = vmatprep.subr.mxu0 0.0
        %5384 = vmatpush1.msra.mxu0 0.0
        %5385 = vmatprep.subr.mxu0 0.0
        %5386 = vmatpush1.msra.mxu0 0.0
        %5387 = vmatprep.subr.mxu0 0.0
        %5388 = vmatpush1.msra.mxu0 0.0
        %5389 = vmatprep.subr.mxu0 0.0
        %5390 = vmatpush1.msra.mxu0 0.0
        %5391 = vmatprep.mubr.f32.mxu0 0.0
        %5392 = vmatmul.mubr.f32.gmra.mrb[0].mxu0 %v5322
        %v5393 = vpop.f32.mrb[0].mxu0
        %v5394 = vadd.f32 0.0, %v5393
        %v5395 = vpop.f32.mrb[0].mxu0
        %v5396 = vadd.f32 0.0, %v5395
        %5397 = vmatprep.mubr.f32.mxu0 0.0
        %5398 = vmatmul.mubr.f32.gmra.mrb[0].mxu0 %v5325
        %v5399 = vpop.f32.mrb[0].mxu0
        %v5400 = vadd.f32 0.0, %v5399
        %v5401 = vpop.f32.mrb[0].mxu0
        %v5402 = vadd.f32 0.0, %v5401
        %5403 = vdwg.mxu0
        %5404 = vst [vmem:[#allocation2 + $0x8] sm:$0xff] %v5394
        %5405 = vst [vmem:[#allocation2 + $0x10] sm:$0xff] %v5396
        %5406 = vst [vmem:[#allocation2 + $0x28] sm:$0xff] %v5400
        %5407 = vst [vmem:[#allocation2 + $0x30] sm:$0xff] %v5402
        %5408 = vst [vmem:[#allocation2 + $0x18] sm:$0xff] 0.0
        %5409 = vst [vmem:[#allocation2 + $0x38] sm:$0xff] 0.0
        %v5410 = vld [vmem:[%s170] ss:$8 sm:$0x3]
        %v5411 = vld [vmem:[%s172] ss:$8 sm:$0x3]
        %v5412 = vld [vmem:[#allocation2] sm:$0xff]
        %v5413 = vld [vmem:[#allocation2 + $0x8] sm:$0xff]
        %v5414 = vld [vmem:[#allocation2 + $0x10] sm:$0xff]
        %v5415 = vld [vmem:[#allocation2 + $0x20] sm:$0xff]
        %v5416 = vld [vmem:[#allocation2 + $0x28] sm:$0xff]
        %v5417 = vld [vmem:[#allocation2 + $0x30] sm:$0xff]
        %v5419 = vlaneseq
        %v5420 = vshrl.u32 %v5419, 7
        %v5421 = vsub.s32 0, %v5420
        %v5422 = vrot.slane %v5410, %v5421
        %v5423 = vlaneseq
        %v5424 = vshrl.u32 %v5423, 7
        %v5425 = vsub.s32 1, %v5424
        %v5426 = vrot.slane %v5410, %v5425
        %5427 = vrot.lane.b32.xlu0 %v5422, 111
        %v5428 = vpop.permute.xlu0 %5427
        %5429 = vrot.lane.b32.xlu0 %v5426, 111
        %v5430 = vpop.permute.xlu0 %5429
        %v5431 = vsel %vm190, %v5428, %v5430
        %v5435 = vmul.f32 %v5412, %v5428
        %v5436 = vmul.f32 %v5413, %v5431
        %v5437 = vmul.f32 %v5414, %v5430
        %v5438 = vmul.f32 %v5415, %v5428
        %v5439 = vmul.f32 %v5416, %v5431
        %v5440 = vmul.f32 %v5417, %v5430
        %v5441 = vld [vmem:[#allocation3 + $0x2d0] sm:$0xff]
        %v5442 = vld [vmem:[#allocation3 + $0x2e0] sm:$0xff]
        %5449 = vrot.lane.b32.xlu0 %v5412, 16
        %v5450 = vpop.permute.xlu0 %5449
        %5451 = vrot.lane.b32.xlu0 %v5413, 16
        %v5452 = vpop.permute.xlu0 %5451
        %5453 = vrot.lane.b32.xlu0 %v5414, 16
        %v5454 = vpop.permute.xlu0 %5453
        %5455 = vrot.lane.b32.xlu0 %v5415, 16
        %v5456 = vpop.permute.xlu0 %5455
        %5457 = vrot.lane.b32.xlu0 %v5416, 16
        %v5458 = vpop.permute.xlu0 %5457
        %5459 = vrot.lane.b32.xlu0 %v5417, 16
        %v5460 = vpop.permute.xlu0 %5459
        %v5461 = vsel %vm209, %v5450, %v5452
        %v5462 = vsel %vm209, %v5452, %v5454
        %v5463 = vsel %vm209, %v5456, %v5458
        %v5464 = vsel %vm209, %v5458, %v5460
        %v5470 = vsel %vm209, %v5442, 0
        %5472 = vmatprep.subr.mxu0 %v5462
        %5473 = vmatpush1.msra.mxu0 %v5461
        %5474 = vmatprep.subr.mxu0 %v5464
        %5475 = vmatpush1.msra.mxu0 %v5463
        %5476 = vmatprep.subr.mxu0 0.0
        %5477 = vmatpush1.msra.mxu0 0.0
        %5478 = vmatprep.subr.mxu0 0.0
        %5479 = vmatpush1.msra.mxu0 0.0
        %5480 = vmatprep.subr.mxu0 0.0
        %5481 = vmatpush1.msra.mxu0 0.0
        %5482 = vmatprep.subr.mxu0 0.0
        %5483 = vmatpush1.msra.mxu0 0.0
        %5484 = vmatprep.subr.mxu0 0.0
        %5485 = vmatpush1.msra.mxu0 0.0
        %5486 = vmatprep.subr.mxu0 0.0
        %5487 = vmatpush1.msra.mxu0 0.0
        %5488 = vmatprep.subr.mxu0 0.0
        %5489 = vmatpush1.msra.mxu0 0.0
        %5490 = vmatprep.subr.mxu0 0.0
        %5491 = vmatpush1.msra.mxu0 0.0
        %5492 = vmatprep.subr.mxu0 0.0
        %5493 = vmatpush1.msra.mxu0 0.0
        %5494 = vmatprep.subr.mxu0 0.0
        %5495 = vmatpush1.msra.mxu0 0.0
        %5496 = vmatprep.subr.mxu0 0.0
        %5497 = vmatpush1.msra.mxu0 0.0
        %5498 = vmatprep.subr.mxu0 0.0
        %5499 = vmatpush1.msra.mxu0 0.0
        %5500 = vmatprep.subr.mxu0 0.0
        %5501 = vmatpush1.msra.mxu0 0.0
        %5502 = vmatprep.subr.mxu0 0.0
        %5503 = vmatpush1.msra.mxu0 0.0
        %5504 = vmatprep.subr.mxu0 0.0
        %5505 = vmatpush1.msra.mxu0 0.0
        %5506 = vmatprep.subr.mxu0 0.0
        %5507 = vmatpush1.msra.mxu0 0.0
        %5508 = vmatprep.subr.mxu0 0.0
        %5509 = vmatpush1.msra.mxu0 0.0
        %5510 = vmatprep.subr.mxu0 0.0
        %5511 = vmatpush1.msra.mxu0 0.0
        %5512 = vmatprep.subr.mxu0 0.0
        %5513 = vmatpush1.msra.mxu0 0.0
        %5514 = vmatprep.subr.mxu0 0.0
        %5515 = vmatpush1.msra.mxu0 0.0
        %5516 = vmatprep.subr.mxu0 0.0
        %5517 = vmatpush1.msra.mxu0 0.0
        %5518 = vmatprep.subr.mxu0 0.0
        %5519 = vmatpush1.msra.mxu0 0.0
        %5520 = vmatprep.subr.mxu0 0.0
        %5521 = vmatpush1.msra.mxu0 0.0
        %5522 = vmatprep.subr.mxu0 0.0
        %5523 = vmatpush1.msra.mxu0 0.0
        %5524 = vmatprep.subr.mxu0 0.0
        %5525 = vmatpush1.msra.mxu0 0.0
        %5526 = vmatprep.subr.mxu0 0.0
        %5527 = vmatpush1.msra.mxu0 0.0
        %5528 = vmatprep.subr.mxu0 0.0
        %5529 = vmatpush1.msra.mxu0 0.0
        %5530 = vmatprep.subr.mxu0 0.0
        %5531 = vmatpush1.msra.mxu0 0.0
        %5532 = vmatprep.subr.mxu0 0.0
        %5533 = vmatpush1.msra.mxu0 0.0
        %5534 = vmatprep.subr.mxu0 0.0
        %5535 = vmatpush1.msra.mxu0 0.0
        %5536 = vmatprep.mubr.f32.mxu0 0.0
        %5537 = vmatmul.mubr.f32.gmra.mrb[0].mxu0 %v5470
        %v5538 = vpop.f32.mrb[0].mxu0
        %v5539 = vadd.f32 0.0, %v5538
        %v5540 = vpop.f32.mrb[0].mxu0
        %v5541 = vadd.f32 0.0, %v5540
        %5542 = vdwg.mxu0
        %5549 = vrot.lane.b32.xlu0 %v5435, 17
        %v5550 = vpop.permute.xlu0 %5549
        %5551 = vrot.lane.b32.xlu0 %v5436, 17
        %v5552 = vpop.permute.xlu0 %5551
        %5553 = vrot.lane.b32.xlu0 %v5437, 17
        %v5554 = vpop.permute.xlu0 %5553
        %5555 = vrot.lane.b32.xlu0 %v5438, 17
        %v5556 = vpop.permute.xlu0 %5555
        %5557 = vrot.lane.b32.xlu0 %v5439, 17
        %v5558 = vpop.permute.xlu0 %5557
        %5559 = vrot.lane.b32.xlu0 %v5440, 17
        %v5560 = vpop.permute.xlu0 %5559
        %v5561 = vsel %vm301, %v5550, %v5552
        %v5562 = vsel %vm301, %v5552, %v5554
        %v5563 = vsel %vm301, %v5556, %v5558
        %v5564 = vsel %vm301, %v5558, %v5560
        %v5570 = vsel %vm209, %v5441, 0
        %5572 = vmatprep.subr.mxu0 %v5562
        %5573 = vmatpush1.msra.mxu0 %v5561
        %5574 = vmatprep.subr.mxu0 %v5564
        %5575 = vmatpush1.msra.mxu0 %v5563
        %5576 = vmatprep.subr.mxu0 0.0
        %5577 = vmatpush1.msra.mxu0 0.0
        %5578 = vmatprep.subr.mxu0 0.0
        %5579 = vmatpush1.msra.mxu0 0.0
        %5580 = vmatprep.subr.mxu0 0.0
        %5581 = vmatpush1.msra.mxu0 0.0
        %5582 = vmatprep.subr.mxu0 0.0
        %5583 = vmatpush1.msra.mxu0 0.0
        %5584 = vmatprep.subr.mxu0 0.0
        %5585 = vmatpush1.msra.mxu0 0.0
        %5586 = vmatprep.subr.mxu0 0.0
        %5587 = vmatpush1.msra.mxu0 0.0
        %5588 = vmatprep.subr.mxu0 0.0
        %5589 = vmatpush1.msra.mxu0 0.0
        %5590 = vmatprep.subr.mxu0 0.0
        %5591 = vmatpush1.msra.mxu0 0.0
        %5592 = vmatprep.subr.mxu0 0.0
        %5593 = vmatpush1.msra.mxu0 0.0
        %5594 = vmatprep.subr.mxu0 0.0
        %5595 = vmatpush1.msra.mxu0 0.0
        %5596 = vmatprep.subr.mxu0 0.0
        %5597 = vmatpush1.msra.mxu0 0.0
        %5598 = vmatprep.subr.mxu0 0.0
        %5599 = vmatpush1.msra.mxu0 0.0
        %5600 = vmatprep.subr.mxu0 0.0
        %5601 = vmatpush1.msra.mxu0 0.0
        %5602 = vmatprep.subr.mxu0 0.0
        %5603 = vmatpush1.msra.mxu0 0.0
        %5604 = vmatprep.subr.mxu0 0.0
        %5605 = vmatpush1.msra.mxu0 0.0
        %5606 = vmatprep.subr.mxu0 0.0
        %5607 = vmatpush1.msra.mxu0 0.0
        %5608 = vmatprep.subr.mxu0 0.0
        %5609 = vmatpush1.msra.mxu0 0.0
        %5610 = vmatprep.subr.mxu0 0.0
        %5611 = vmatpush1.msra.mxu0 0.0
        %5612 = vmatprep.subr.mxu0 0.0
        %5613 = vmatpush1.msra.mxu0 0.0
        %5614 = vmatprep.subr.mxu0 0.0
        %5615 = vmatpush1.msra.mxu0 0.0
        %5616 = vmatprep.subr.mxu0 0.0
        %5617 = vmatpush1.msra.mxu0 0.0
        %5618 = vmatprep.subr.mxu0 0.0
        %5619 = vmatpush1.msra.mxu0 0.0
        %5620 = vmatprep.subr.mxu0 0.0
        %5621 = vmatpush1.msra.mxu0 0.0
        %5622 = vmatprep.subr.mxu0 0.0
        %5623 = vmatpush1.msra.mxu0 0.0
        %5624 = vmatprep.subr.mxu0 0.0
        %5625 = vmatpush1.msra.mxu0 0.0
        %5626 = vmatprep.subr.mxu0 0.0
        %5627 = vmatpush1.msra.mxu0 0.0
        %5628 = vmatprep.subr.mxu0 0.0
        %5629 = vmatpush1.msra.mxu0 0.0
        %5630 = vmatprep.subr.mxu0 0.0
        %5631 = vmatpush1.msra.mxu0 0.0
        %5632 = vmatprep.subr.mxu0 0.0
        %5633 = vmatpush1.msra.mxu0 0.0
        %5634 = vmatprep.subr.mxu0 0.0
        %5635 = vmatpush1.msra.mxu0 0.0
        %5636 = vmatprep.mubr.f32.mxu0 0.0
        %5637 = vmatmul.mubr.f32.gmra.mrb[0].mxu0 %v5570
        %v5638 = vpop.f32.mrb[0].mxu0
        %v5639 = vadd.f32 %v5539, %v5638
        %v5640 = vpop.f32.mrb[0].mxu0
        %v5641 = vadd.f32 %v5541, %v5640
        %5642 = vdwg.mxu0
        %v5644 = vlaneseq
        %v5645 = vshrl.u32 %v5644, 7
        %v5646 = vsub.s32 0, %v5645
        %v5647 = vrot.slane %v5411, %v5646
        %v5648 = vlaneseq
        %v5649 = vshrl.u32 %v5648, 7
        %v5650 = vsub.s32 1, %v5649
        %v5651 = vrot.slane %v5411, %v5650
        %5652 = vrot.lane.b32.xlu0 %v5647, 113
        %v5653 = vpop.permute.xlu0 %5652
        %5654 = vrot.lane.b32.xlu0 %v5651, 113
        %v5655 = vpop.permute.xlu0 %5654
        %v5656 = vsel %vm395, %v5653, %v5655
        %v5660 = vmul.f32 %v5412, %v5653
        %v5661 = vmul.f32 %v5413, %v5656
        %v5662 = vmul.f32 %v5414, %v5655
        %v5663 = vmul.f32 %v5415, %v5653
        %v5664 = vmul.f32 %v5416, %v5656
        %v5665 = vmul.f32 %v5417, %v5655
        %v5666 = vld [vmem:[#allocation3 + $0x2f0] sm:$0xff]
        %5673 = vrot.lane.b32.xlu0 %v5660, 15
        %v5674 = vpop.permute.xlu0 %5673
        %5675 = vrot.lane.b32.xlu0 %v5661, 15
        %v5676 = vpop.permute.xlu0 %5675
        %5677 = vrot.lane.b32.xlu0 %v5662, 15
        %v5678 = vpop.permute.xlu0 %5677
        %5679 = vrot.lane.b32.xlu0 %v5663, 15
        %v5680 = vpop.permute.xlu0 %5679
        %5681 = vrot.lane.b32.xlu0 %v5664, 15
        %v5682 = vpop.permute.xlu0 %5681
        %5683 = vrot.lane.b32.xlu0 %v5665, 15
        %v5684 = vpop.permute.xlu0 %5683
        %v5685 = vsel %vm413, %v5674, %v5676
        %v5686 = vsel %vm413, %v5676, %v5678
        %v5687 = vsel %vm413, %v5680, %v5682
        %v5688 = vsel %vm413, %v5682, %v5684
        %v5694 = vsel %vm209, %v5666, 0
        %5696 = vmatprep.subr.mxu0 %v5686
        %5697 = vmatpush1.msra.mxu0 %v5685
        %5698 = vmatprep.subr.mxu0 %v5688
        %5699 = vmatpush1.msra.mxu0 %v5687
        %5700 = vmatprep.subr.mxu0 0.0
        %5701 = vmatpush1.msra.mxu0 0.0
        %5702 = vmatprep.subr.mxu0 0.0
        %5703 = vmatpush1.msra.mxu0 0.0
        %5704 = vmatprep.subr.mxu0 0.0
        %5705 = vmatpush1.msra.mxu0 0.0
        %5706 = vmatprep.subr.mxu0 0.0
        %5707 = vmatpush1.msra.mxu0 0.0
        %5708 = vmatprep.subr.mxu0 0.0
        %5709 = vmatpush1.msra.mxu0 0.0
        %5710 = vmatprep.subr.mxu0 0.0
        %5711 = vmatpush1.msra.mxu0 0.0
        %5712 = vmatprep.subr.mxu0 0.0
        %5713 = vmatpush1.msra.mxu0 0.0
        %5714 = vmatprep.subr.mxu0 0.0
        %5715 = vmatpush1.msra.mxu0 0.0
        %5716 = vmatprep.subr.mxu0 0.0
        %5717 = vmatpush1.msra.mxu0 0.0
        %5718 = vmatprep.subr.mxu0 0.0
        %5719 = vmatpush1.msra.mxu0 0.0
        %5720 = vmatprep.subr.mxu0 0.0
        %5721 = vmatpush1.msra.mxu0 0.0
        %5722 = vmatprep.subr.mxu0 0.0
        %5723 = vmatpush1.msra.mxu0 0.0
        %5724 = vmatprep.subr.mxu0 0.0
        %5725 = vmatpush1.msra.mxu0 0.0
        %5726 = vmatprep.subr.mxu0 0.0
        %5727 = vmatpush1.msra.mxu0 0.0
        %5728 = vmatprep.subr.mxu0 0.0
        %5729 = vmatpush1.msra.mxu0 0.0
        %5730 = vmatprep.subr.mxu0 0.0
        %5731 = vmatpush1.msra.mxu0 0.0
        %5732 = vmatprep.subr.mxu0 0.0
        %5733 = vmatpush1.msra.mxu0 0.0
        %5734 = vmatprep.subr.mxu0 0.0
        %5735 = vmatpush1.msra.mxu0 0.0
        %5736 = vmatprep.subr.mxu0 0.0
        %5737 = vmatpush1.msra.mxu0 0.0
        %5738 = vmatprep.subr.mxu0 0.0
        %5739 = vmatpush1.msra.mxu0 0.0
        %5740 = vmatprep.subr.mxu0 0.0
        %5741 = vmatpush1.msra.mxu0 0.0
        %5742 = vmatprep.subr.mxu0 0.0
        %5743 = vmatpush1.msra.mxu0 0.0
        %5744 = vmatprep.subr.mxu0 0.0
        %5745 = vmatpush1.msra.mxu0 0.0
        %5746 = vmatprep.subr.mxu0 0.0
        %5747 = vmatpush1.msra.mxu0 0.0
        %5748 = vmatprep.subr.mxu0 0.0
        %5749 = vmatpush1.msra.mxu0 0.0
        %5750 = vmatprep.subr.mxu0 0.0
        %5751 = vmatpush1.msra.mxu0 0.0
        %5752 = vmatprep.subr.mxu0 0.0
        %5753 = vmatpush1.msra.mxu0 0.0
        %5754 = vmatprep.subr.mxu0 0.0
        %5755 = vmatpush1.msra.mxu0 0.0
        %5756 = vmatprep.subr.mxu0 0.0
        %5757 = vmatpush1.msra.mxu0 0.0
        %5758 = vmatprep.subr.mxu0 0.0
        %5759 = vmatpush1.msra.mxu0 0.0
        %5760 = vmatprep.mubr.f32.mxu0 0.0
        %5761 = vmatmul.mubr.f32.gmra.mrb[0].mxu0 %v5694
        %v5762 = vpop.f32.mrb[0].mxu0
        %v5763 = vadd.f32 0.0, %v5762
        %v5764 = vpop.f32.mrb[0].mxu0
        %v5765 = vadd.f32 0.0, %v5764
        %5766 = vdwg.mxu0
        %v5767 = vadd.f32 %v5639, %v5763
        %v5768 = vadd.f32 %v5641, %v5765
        %5769 = vrot.lane.b32.xlu0 %v5422, 127
        %v5770 = vpop.permute.xlu0 %5769
        %5771 = vrot.lane.b32.xlu0 %v5426, 127
        %v5772 = vpop.permute.xlu0 %5771
        %v5773 = vsel %vm500, %v5770, %v5772
        %v5777 = vmul.f32 %v5412, %v5770
        %v5778 = vmul.f32 %v5413, %v5773
        %v5779 = vmul.f32 %v5414, %v5772
        %v5780 = vmul.f32 %v5415, %v5770
        %v5781 = vmul.f32 %v5416, %v5773
        %v5782 = vmul.f32 %v5417, %v5772
        %v5783 = vld [vmem:[#allocation3 + $0x300] sm:$0xff]
        %5790 = vrot.lane.b32.xlu0 %v5777, 1
        %v5791 = vpop.permute.xlu0 %5790
        %5792 = vrot.lane.b32.xlu0 %v5778, 1
        %v5793 = vpop.permute.xlu0 %5792
        %5794 = vrot.lane.b32.xlu0 %v5779, 1
        %v5795 = vpop.permute.xlu0 %5794
        %5796 = vrot.lane.b32.xlu0 %v5780, 1
        %v5797 = vpop.permute.xlu0 %5796
        %5798 = vrot.lane.b32.xlu0 %v5781, 1
        %v5799 = vpop.permute.xlu0 %5798
        %5800 = vrot.lane.b32.xlu0 %v5782, 1
        %v5801 = vpop.permute.xlu0 %5800
        %v5802 = vsel %vm518, %v5791, %v5793
        %v5803 = vsel %vm518, %v5793, %v5795
        %v5804 = vsel %vm518, %v5797, %v5799
        %v5805 = vsel %vm518, %v5799, %v5801
        %v5811 = vsel %vm209, %v5783, 0
        %5813 = vmatprep.subr.mxu0 %v5803
        %5814 = vmatpush1.msra.mxu0 %v5802
        %5815 = vmatprep.subr.mxu0 %v5805
        %5816 = vmatpush1.msra.mxu0 %v5804
        %5817 = vmatprep.subr.mxu0 0.0
        %5818 = vmatpush1.msra.mxu0 0.0
        %5819 = vmatprep.subr.mxu0 0.0
        %5820 = vmatpush1.msra.mxu0 0.0
        %5821 = vmatprep.subr.mxu0 0.0
        %5822 = vmatpush1.msra.mxu0 0.0
        %5823 = vmatprep.subr.mxu0 0.0
        %5824 = vmatpush1.msra.mxu0 0.0
        %5825 = vmatprep.subr.mxu0 0.0
        %5826 = vmatpush1.msra.mxu0 0.0
        %5827 = vmatprep.subr.mxu0 0.0
        %5828 = vmatpush1.msra.mxu0 0.0
        %5829 = vmatprep.subr.mxu0 0.0
        %5830 = vmatpush1.msra.mxu0 0.0
        %5831 = vmatprep.subr.mxu0 0.0
        %5832 = vmatpush1.msra.mxu0 0.0
        %5833 = vmatprep.subr.mxu0 0.0
        %5834 = vmatpush1.msra.mxu0 0.0
        %5835 = vmatprep.subr.mxu0 0.0
        %5836 = vmatpush1.msra.mxu0 0.0
        %5837 = vmatprep.subr.mxu0 0.0
        %5838 = vmatpush1.msra.mxu0 0.0
        %5839 = vmatprep.subr.mxu0 0.0
        %5840 = vmatpush1.msra.mxu0 0.0
        %5841 = vmatprep.subr.mxu0 0.0
        %5842 = vmatpush1.msra.mxu0 0.0
        %5843 = vmatprep.subr.mxu0 0.0
        %5844 = vmatpush1.msra.mxu0 0.0
        %5845 = vmatprep.subr.mxu0 0.0
        %5846 = vmatpush1.msra.mxu0 0.0
        %5847 = vmatprep.subr.mxu0 0.0
        %5848 = vmatpush1.msra.mxu0 0.0
        %5849 = vmatprep.subr.mxu0 0.0
        %5850 = vmatpush1.msra.mxu0 0.0
        %5851 = vmatprep.subr.mxu0 0.0
        %5852 = vmatpush1.msra.mxu0 0.0
        %5853 = vmatprep.subr.mxu0 0.0
        %5854 = vmatpush1.msra.mxu0 0.0
        %5855 = vmatprep.subr.mxu0 0.0
        %5856 = vmatpush1.msra.mxu0 0.0
        %5857 = vmatprep.subr.mxu0 0.0
        %5858 = vmatpush1.msra.mxu0 0.0
        %5859 = vmatprep.subr.mxu0 0.0
        %5860 = vmatpush1.msra.mxu0 0.0
        %5861 = vmatprep.subr.mxu0 0.0
        %5862 = vmatpush1.msra.mxu0 0.0
        %5863 = vmatprep.subr.mxu0 0.0
        %5864 = vmatpush1.msra.mxu0 0.0
        %5865 = vmatprep.subr.mxu0 0.0
        %5866 = vmatpush1.msra.mxu0 0.0
        %5867 = vmatprep.subr.mxu0 0.0
        %5868 = vmatpush1.msra.mxu0 0.0
        %5869 = vmatprep.subr.mxu0 0.0
        %5870 = vmatpush1.msra.mxu0 0.0
        %5871 = vmatprep.subr.mxu0 0.0
        %5872 = vmatpush1.msra.mxu0 0.0
        %5873 = vmatprep.subr.mxu0 0.0
        %5874 = vmatpush1.msra.mxu0 0.0
        %5875 = vmatprep.subr.mxu0 0.0
        %5876 = vmatpush1.msra.mxu0 0.0
        %5877 = vmatprep.mubr.f32.mxu0 0.0
        %5878 = vmatmul.mubr.f32.gmra.mrb[0].mxu0 %v5811
        %v5879 = vpop.f32.mrb[0].mxu0
        %v5880 = vadd.f32 0.0, %v5879
        %v5881 = vpop.f32.mrb[0].mxu0
        %v5882 = vadd.f32 0.0, %v5881
        %5883 = vdwg.mxu0
        %v5884 = vadd.f32 %v5767, %v5880
        %v5885 = vadd.f32 %v5768, %v5882
        %v5886 = vld [vmem:[#allocation3 + $0x310] sm:$0xff]
        %v5888 = vsel %vm209, %v5886, 0
        %5890 = vmatprep.subr.mxu0 %v5414
        %5891 = vmatpush1.msra.mxu0 %v5413
        %5892 = vmatprep.subr.mxu0 %v5417
        %5893 = vmatpush1.msra.mxu0 %v5416
        %5894 = vmatprep.subr.mxu0 0.0
        %5895 = vmatpush1.msra.mxu0 0.0
        %5896 = vmatprep.subr.mxu0 0.0
        %5897 = vmatpush1.msra.mxu0 0.0
        %5898 = vmatprep.subr.mxu0 0.0
        %5899 = vmatpush1.msra.mxu0 0.0
        %5900 = vmatprep.subr.mxu0 0.0
        %5901 = vmatpush1.msra.mxu0 0.0
        %5902 = vmatprep.subr.mxu0 0.0
        %5903 = vmatpush1.msra.mxu0 0.0
        %5904 = vmatprep.subr.mxu0 0.0
        %5905 = vmatpush1.msra.mxu0 0.0
        %5906 = vmatprep.subr.mxu0 0.0
        %5907 = vmatpush1.msra.mxu0 0.0
        %5908 = vmatprep.subr.mxu0 0.0
        %5909 = vmatpush1.msra.mxu0 0.0
        %5910 = vmatprep.subr.mxu0 0.0
        %5911 = vmatpush1.msra.mxu0 0.0
        %5912 = vmatprep.subr.mxu0 0.0
        %5913 = vmatpush1.msra.mxu0 0.0
        %5914 = vmatprep.subr.mxu0 0.0
        %5915 = vmatpush1.msra.mxu0 0.0
        %5916 = vmatprep.subr.mxu0 0.0
        %5917 = vmatpush1.msra.mxu0 0.0
        %5918 = vmatprep.subr.mxu0 0.0
        %5919 = vmatpush1.msra.mxu0 0.0
        %5920 = vmatprep.subr.mxu0 0.0
        %5921 = vmatpush1.msra.mxu0 0.0
        %5922 = vmatprep.subr.mxu0 0.0
        %5923 = vmatpush1.msra.mxu0 0.0
        %5924 = vmatprep.subr.mxu0 0.0
        %5925 = vmatpush1.msra.mxu0 0.0
        %5926 = vmatprep.subr.mxu0 0.0
        %5927 = vmatpush1.msra.mxu0 0.0
        %5928 = vmatprep.subr.mxu0 0.0
        %5929 = vmatpush1.msra.mxu0 0.0
        %5930 = vmatprep.subr.mxu0 0.0
        %5931 = vmatpush1.msra.mxu0 0.0
        %5932 = vmatprep.subr.mxu0 0.0
        %5933 = vmatpush1.msra.mxu0 0.0
        %5934 = vmatprep.subr.mxu0 0.0
        %5935 = vmatpush1.msra.mxu0 0.0
        %5936 = vmatprep.subr.mxu0 0.0
        %5937 = vmatpush1.msra.mxu0 0.0
        %5938 = vmatprep.subr.mxu0 0.0
        %5939 = vmatpush1.msra.mxu0 0.0
        %5940 = vmatprep.subr.mxu0 0.0
        %5941 = vmatpush1.msra.mxu0 0.0
        %5942 = vmatprep.subr.mxu0 0.0
        %5943 = vmatpush1.msra.mxu0 0.0
        %5944 = vmatprep.subr.mxu0 0.0
        %5945 = vmatpush1.msra.mxu0 0.0
        %5946 = vmatprep.subr.mxu0 0.0
        %5947 = vmatpush1.msra.mxu0 0.0
        %5948 = vmatprep.subr.mxu0 0.0
        %5949 = vmatpush1.msra.mxu0 0.0
        %5950 = vmatprep.subr.mxu0 0.0
        %5951 = vmatpush1.msra.mxu0 0.0
        %5952 = vmatprep.subr.mxu0 0.0
        %5953 = vmatpush1.msra.mxu0 0.0
        %5954 = vmatprep.mubr.f32.mxu0 0.0
        %5955 = vmatmul.mubr.f32.gmra.mrb[0].mxu0 %v5888
        %v5956 = vpop.f32.mrb[0].mxu0
        %v5957 = vadd.f32 0.0, %v5956
        %v5958 = vpop.f32.mrb[0].mxu0
        %v5959 = vadd.f32 0.0, %v5958
        %5960 = vdwg.mxu0
        %v5961 = vadd.f32 %v5884, %v5957
        %v5962 = vadd.f32 %v5885, %v5959
        %v5963 = vld [vmem:[#allocation2 + $0x8] sm:$0xff]
        %v5964 = vld [vmem:[#allocation2 + $0x10] sm:$0xff]
        %v5965 = vld [vmem:[#allocation2 + $0x18] sm:$0xff]
        %v5966 = vld [vmem:[#allocation2 + $0x28] sm:$0xff]
        %v5967 = vld [vmem:[#allocation2 + $0x30] sm:$0xff]
        %v5968 = vld [vmem:[#allocation2 + $0x38] sm:$0xff]
        %5969 = vrot.lane.b32.xlu0 %v5647, 1
        %v5970 = vpop.permute.xlu0 %5969
        %5971 = vrot.lane.b32.xlu0 %v5651, 1
        %v5972 = vpop.permute.xlu0 %5971
        %v5973 = vsel %vm518, %v5970, %v5972
        %v5977 = vmul.f32 %v5963, %v5970
        %v5978 = vmul.f32 %v5964, %v5973
        %v5979 = vmul.f32 %v5965, %v5972
        %v5980 = vmul.f32 %v5966, %v5970
        %v5981 = vmul.f32 %v5967, %v5973
        %v5982 = vmul.f32 %v5968, %v5972
        %v5983 = vld [vmem:[#allocation3 + $0x320] sm:$0xff]
        %5990 = vrot.lane.b32.xlu0 %v5977, 127
        %v5991 = vpop.permute.xlu0 %5990
        %5992 = vrot.lane.b32.xlu0 %v5978, 127
        %v5993 = vpop.permute.xlu0 %5992
        %5994 = vrot.lane.b32.xlu0 %v5979, 127
        %v5995 = vpop.permute.xlu0 %5994
        %5996 = vrot.lane.b32.xlu0 %v5980, 127
        %v5997 = vpop.permute.xlu0 %5996
        %5998 = vrot.lane.b32.xlu0 %v5981, 127
        %v5999 = vpop.permute.xlu0 %5998
        %6000 = vrot.lane.b32.xlu0 %v5982, 127
        %v6001 = vpop.permute.xlu0 %6000
        %v6002 = vsel %vm500, %v5991, %v5993
        %v6003 = vsel %vm500, %v5993, %v5995
        %v6004 = vsel %vm500, %v5997, %v5999
        %v6005 = vsel %vm500, %v5999, %v6001
        %v6011 = vsel %vm209, %v5983, 0
        %6013 = vmatprep.subr.mxu0 %v6003
        %6014 = vmatpush1.msra.mxu0 %v6002
        %6015 = vmatprep.subr.mxu0 %v6005
        %6016 = vmatpush1.msra.mxu0 %v6004
        %6017 = vmatprep.subr.mxu0 0.0
        %6018 = vmatpush1.msra.mxu0 0.0
        %6019 = vmatprep.subr.mxu0 0.0
        %6020 = vmatpush1.msra.mxu0 0.0
        %6021 = vmatprep.subr.mxu0 0.0
        %6022 = vmatpush1.msra.mxu0 0.0
        %6023 = vmatprep.subr.mxu0 0.0
        %6024 = vmatpush1.msra.mxu0 0.0
        %6025 = vmatprep.subr.mxu0 0.0
        %6026 = vmatpush1.msra.mxu0 0.0
        %6027 = vmatprep.subr.mxu0 0.0
        %6028 = vmatpush1.msra.mxu0 0.0
        %6029 = vmatprep.subr.mxu0 0.0
        %6030 = vmatpush1.msra.mxu0 0.0
        %6031 = vmatprep.subr.mxu0 0.0
        %6032 = vmatpush1.msra.mxu0 0.0
        %6033 = vmatprep.subr.mxu0 0.0
        %6034 = vmatpush1.msra.mxu0 0.0
        %6035 = vmatprep.subr.mxu0 0.0
        %6036 = vmatpush1.msra.mxu0 0.0
        %6037 = vmatprep.subr.mxu0 0.0
        %6038 = vmatpush1.msra.mxu0 0.0
        %6039 = vmatprep.subr.mxu0 0.0
        %6040 = vmatpush1.msra.mxu0 0.0
        %6041 = vmatprep.subr.mxu0 0.0
        %6042 = vmatpush1.msra.mxu0 0.0
        %6043 = vmatprep.subr.mxu0 0.0
        %6044 = vmatpush1.msra.mxu0 0.0
        %6045 = vmatprep.subr.mxu0 0.0
        %6046 = vmatpush1.msra.mxu0 0.0
        %6047 = vmatprep.subr.mxu0 0.0
        %6048 = vmatpush1.msra.mxu0 0.0
        %6049 = vmatprep.subr.mxu0 0.0
        %6050 = vmatpush1.msra.mxu0 0.0
        %6051 = vmatprep.subr.mxu0 0.0
        %6052 = vmatpush1.msra.mxu0 0.0
        %6053 = vmatprep.subr.mxu0 0.0
        %6054 = vmatpush1.msra.mxu0 0.0
        %6055 = vmatprep.subr.mxu0 0.0
        %6056 = vmatpush1.msra.mxu0 0.0
        %6057 = vmatprep.subr.mxu0 0.0
        %6058 = vmatpush1.msra.mxu0 0.0
        %6059 = vmatprep.subr.mxu0 0.0
        %6060 = vmatpush1.msra.mxu0 0.0
        %6061 = vmatprep.subr.mxu0 0.0
        %6062 = vmatpush1.msra.mxu0 0.0
        %6063 = vmatprep.subr.mxu0 0.0
        %6064 = vmatpush1.msra.mxu0 0.0
        %6065 = vmatprep.subr.mxu0 0.0
        %6066 = vmatpush1.msra.mxu0 0.0
        %6067 = vmatprep.subr.mxu0 0.0
        %6068 = vmatpush1.msra.mxu0 0.0
        %6069 = vmatprep.subr.mxu0 0.0
        %6070 = vmatpush1.msra.mxu0 0.0
        %6071 = vmatprep.subr.mxu0 0.0
        %6072 = vmatpush1.msra.mxu0 0.0
        %6073 = vmatprep.subr.mxu0 0.0
        %6074 = vmatpush1.msra.mxu0 0.0
        %6075 = vmatprep.subr.mxu0 0.0
        %6076 = vmatpush1.msra.mxu0 0.0
        %6077 = vmatprep.mubr.f32.mxu0 0.0
        %6078 = vmatmul.mubr.f32.gmra.mrb[0].mxu0 %v6011
        %v6079 = vpop.f32.mrb[0].mxu0
        %v6080 = vadd.f32 0.0, %v6079
        %v6081 = vpop.f32.mrb[0].mxu0
        %v6082 = vadd.f32 0.0, %v6081
        %6083 = vdwg.mxu0
        %v6084 = vadd.f32 %v5961, %v6080
        %v6085 = vadd.f32 %v5962, %v6082
        %6086 = vrot.lane.b32.xlu0 %v5422, 15
        %v6087 = vpop.permute.xlu0 %6086
        %6088 = vrot.lane.b32.xlu0 %v5426, 15
        %v6089 = vpop.permute.xlu0 %6088
        %v6090 = vsel %vm413, %v6087, %v6089
        %v6094 = vmul.f32 %v5963, %v6087
        %v6095 = vmul.f32 %v5964, %v6090
        %v6096 = vmul.f32 %v5965, %v6089
        %v6097 = vmul.f32 %v5966, %v6087
        %v6098 = vmul.f32 %v5967, %v6090
        %v6099 = vmul.f32 %v5968, %v6089
        %v6100 = vld [vmem:[#allocation3 + $0x330] sm:$0xff]
        %6107 = vrot.lane.b32.xlu0 %v6094, 113
        %v6108 = vpop.permute.xlu0 %6107
        %6109 = vrot.lane.b32.xlu0 %v6095, 113
        %v6110 = vpop.permute.xlu0 %6109
        %6111 = vrot.lane.b32.xlu0 %v6096, 113
        %v6112 = vpop.permute.xlu0 %6111
        %6113 = vrot.lane.b32.xlu0 %v6097, 113
        %v6114 = vpop.permute.xlu0 %6113
        %6115 = vrot.lane.b32.xlu0 %v6098, 113
        %v6116 = vpop.permute.xlu0 %6115
        %6117 = vrot.lane.b32.xlu0 %v6099, 113
        %v6118 = vpop.permute.xlu0 %6117
        %v6119 = vsel %vm395, %v6108, %v6110
        %v6120 = vsel %vm395, %v6110, %v6112
        %v6121 = vsel %vm395, %v6114, %v6116
        %v6122 = vsel %vm395, %v6116, %v6118
        %v6128 = vsel %vm209, %v6100, 0
        %6130 = vmatprep.subr.mxu0 %v6120
        %6131 = vmatpush1.msra.mxu0 %v6119
        %6132 = vmatprep.subr.mxu0 %v6122
        %6133 = vmatpush1.msra.mxu0 %v6121
        %6134 = vmatprep.subr.mxu0 0.0
        %6135 = vmatpush1.msra.mxu0 0.0
        %6136 = vmatprep.subr.mxu0 0.0
        %6137 = vmatpush1.msra.mxu0 0.0
        %6138 = vmatprep.subr.mxu0 0.0
        %6139 = vmatpush1.msra.mxu0 0.0
        %6140 = vmatprep.subr.mxu0 0.0
        %6141 = vmatpush1.msra.mxu0 0.0
        %6142 = vmatprep.subr.mxu0 0.0
        %6143 = vmatpush1.msra.mxu0 0.0
        %6144 = vmatprep.subr.mxu0 0.0
        %6145 = vmatpush1.msra.mxu0 0.0
        %6146 = vmatprep.subr.mxu0 0.0
        %6147 = vmatpush1.msra.mxu0 0.0
        %6148 = vmatprep.subr.mxu0 0.0
        %6149 = vmatpush1.msra.mxu0 0.0
        %6150 = vmatprep.subr.mxu0 0.0
        %6151 = vmatpush1.msra.mxu0 0.0
        %6152 = vmatprep.subr.mxu0 0.0
        %6153 = vmatpush1.msra.mxu0 0.0
        %6154 = vmatprep.subr.mxu0 0.0
        %6155 = vmatpush1.msra.mxu0 0.0
        %6156 = vmatprep.subr.mxu0 0.0
        %6157 = vmatpush1.msra.mxu0 0.0
        %6158 = vmatprep.subr.mxu0 0.0
        %6159 = vmatpush1.msra.mxu0 0.0
        %6160 = vmatprep.subr.mxu0 0.0
        %6161 = vmatpush1.msra.mxu0 0.0
        %6162 = vmatprep.subr.mxu0 0.0
        %6163 = vmatpush1.msra.mxu0 0.0
        %6164 = vmatprep.subr.mxu0 0.0
        %6165 = vmatpush1.msra.mxu0 0.0
        %6166 = vmatprep.subr.mxu0 0.0
        %6167 = vmatpush1.msra.mxu0 0.0
        %6168 = vmatprep.subr.mxu0 0.0
        %6169 = vmatpush1.msra.mxu0 0.0
        %6170 = vmatprep.subr.mxu0 0.0
        %6171 = vmatpush1.msra.mxu0 0.0
        %6172 = vmatprep.subr.mxu0 0.0
        %6173 = vmatpush1.msra.mxu0 0.0
        %6174 = vmatprep.subr.mxu0 0.0
        %6175 = vmatpush1.msra.mxu0 0.0
        %6176 = vmatprep.subr.mxu0 0.0
        %6177 = vmatpush1.msra.mxu0 0.0
        %6178 = vmatprep.subr.mxu0 0.0
        %6179 = vmatpush1.msra.mxu0 0.0
        %6180 = vmatprep.subr.mxu0 0.0
        %6181 = vmatpush1.msra.mxu0 0.0
        %6182 = vmatprep.subr.mxu0 0.0
        %6183 = vmatpush1.msra.mxu0 0.0
        %6184 = vmatprep.subr.mxu0 0.0
        %6185 = vmatpush1.msra.mxu0 0.0
        %6186 = vmatprep.subr.mxu0 0.0
        %6187 = vmatpush1.msra.mxu0 0.0
        %6188 = vmatprep.subr.mxu0 0.0
        %6189 = vmatpush1.msra.mxu0 0.0
        %6190 = vmatprep.subr.mxu0 0.0
        %6191 = vmatpush1.msra.mxu0 0.0
        %6192 = vmatprep.subr.mxu0 0.0
        %6193 = vmatpush1.msra.mxu0 0.0
        %6194 = vmatprep.mubr.f32.mxu0 0.0
        %6195 = vmatmul.mubr.f32.gmra.mrb[0].mxu0 %v6128
        %v6196 = vpop.f32.mrb[0].mxu0
        %v6197 = vadd.f32 0.0, %v6196
        %v6198 = vpop.f32.mrb[0].mxu0
        %v6199 = vadd.f32 0.0, %v6198
        %6200 = vdwg.mxu0
        %v6201 = vadd.f32 %v6084, %v6197
        %v6202 = vadd.f32 %v6085, %v6199
        %v6203 = vld [vmem:[#allocation3 + $0x340] sm:$0xff]
        %6210 = vrot.lane.b32.xlu0 %v5963, 112
        %v6211 = vpop.permute.xlu0 %6210
        %6212 = vrot.lane.b32.xlu0 %v5964, 112
        %v6213 = vpop.permute.xlu0 %6212
        %6214 = vrot.lane.b32.xlu0 %v5965, 112
        %v6215 = vpop.permute.xlu0 %6214
        %6216 = vrot.lane.b32.xlu0 %v5966, 112
        %v6217 = vpop.permute.xlu0 %6216
        %6218 = vrot.lane.b32.xlu0 %v5967, 112
        %v6219 = vpop.permute.xlu0 %6218
        %6220 = vrot.lane.b32.xlu0 %v5968, 112
        %v6221 = vpop.permute.xlu0 %6220
        %v6222 = vsel %vm901, %v6211, %v6213
        %v6223 = vsel %vm901, %v6213, %v6215
        %v6224 = vsel %vm901, %v6217, %v6219
        %v6225 = vsel %vm901, %v6219, %v6221
        %v6231 = vsel %vm209, %v6203, 0
        %6233 = vmatprep.subr.mxu0 %v6223
        %6234 = vmatpush1.msra.mxu0 %v6222
        %6235 = vmatprep.subr.mxu0 %v6225
        %6236 = vmatpush1.msra.mxu0 %v6224
        %6237 = vmatprep.subr.mxu0 0.0
        %6238 = vmatpush1.msra.mxu0 0.0
        %6239 = vmatprep.subr.mxu0 0.0
        %6240 = vmatpush1.msra.mxu0 0.0
        %6241 = vmatprep.subr.mxu0 0.0
        %6242 = vmatpush1.msra.mxu0 0.0
        %6243 = vmatprep.subr.mxu0 0.0
        %6244 = vmatpush1.msra.mxu0 0.0
        %6245 = vmatprep.subr.mxu0 0.0
        %6246 = vmatpush1.msra.mxu0 0.0
        %6247 = vmatprep.subr.mxu0 0.0
        %6248 = vmatpush1.msra.mxu0 0.0
        %6249 = vmatprep.subr.mxu0 0.0
        %6250 = vmatpush1.msra.mxu0 0.0
        %6251 = vmatprep.subr.mxu0 0.0
        %6252 = vmatpush1.msra.mxu0 0.0
        %6253 = vmatprep.subr.mxu0 0.0
        %6254 = vmatpush1.msra.mxu0 0.0
        %6255 = vmatprep.subr.mxu0 0.0
        %6256 = vmatpush1.msra.mxu0 0.0
        %6257 = vmatprep.subr.mxu0 0.0
        %6258 = vmatpush1.msra.mxu0 0.0
        %6259 = vmatprep.subr.mxu0 0.0
        %6260 = vmatpush1.msra.mxu0 0.0
        %6261 = vmatprep.subr.mxu0 0.0
        %6262 = vmatpush1.msra.mxu0 0.0
        %6263 = vmatprep.subr.mxu0 0.0
        %6264 = vmatpush1.msra.mxu0 0.0
        %6265 = vmatprep.subr.mxu0 0.0
        %6266 = vmatpush1.msra.mxu0 0.0
        %6267 = vmatprep.subr.mxu0 0.0
        %6268 = vmatpush1.msra.mxu0 0.0
        %6269 = vmatprep.subr.mxu0 0.0
        %6270 = vmatpush1.msra.mxu0 0.0
        %6271 = vmatprep.subr.mxu0 0.0
        %6272 = vmatpush1.msra.mxu0 0.0
        %6273 = vmatprep.subr.mxu0 0.0
        %6274 = vmatpush1.msra.mxu0 0.0
        %6275 = vmatprep.subr.mxu0 0.0
        %6276 = vmatpush1.msra.mxu0 0.0
        %6277 = vmatprep.subr.mxu0 0.0
        %6278 = vmatpush1.msra.mxu0 0.0
        %6279 = vmatprep.subr.mxu0 0.0
        %6280 = vmatpush1.msra.mxu0 0.0
        %6281 = vmatprep.subr.mxu0 0.0
        %6282 = vmatpush1.msra.mxu0 0.0
        %6283 = vmatprep.subr.mxu0 0.0
        %6284 = vmatpush1.msra.mxu0 0.0
        %6285 = vmatprep.subr.mxu0 0.0
        %6286 = vmatpush1.msra.mxu0 0.0
        %6287 = vmatprep.subr.mxu0 0.0
        %6288 = vmatpush1.msra.mxu0 0.0
        %6289 = vmatprep.subr.mxu0 0.0
        %6290 = vmatpush1.msra.mxu0 0.0
        %6291 = vmatprep.subr.mxu0 0.0
        %6292 = vmatpush1.msra.mxu0 0.0
        %6293 = vmatprep.subr.mxu0 0.0
        %6294 = vmatpush1.msra.mxu0 0.0
        %6295 = vmatprep.subr.mxu0 0.0
        %6296 = vmatpush1.msra.mxu0 0.0
        %6297 = vmatprep.mubr.f32.mxu0 0.0
        %6298 = vmatmul.mubr.f32.gmra.mrb[0].mxu0 %v6231
        %v6299 = vpop.f32.mrb[0].mxu0
        %v6300 = vadd.f32 0.0, %v6299
        %v6301 = vpop.f32.mrb[0].mxu0
        %v6302 = vadd.f32 0.0, %v6301
        %6303 = vdwg.mxu0
        %v6304 = vadd.f32 %v6201, %v6300
        %v6305 = vadd.f32 %v6202, %v6302
        %6306 = vrot.lane.b32.xlu0 %v5647, 17
        %v6307 = vpop.permute.xlu0 %6306
        %6308 = vrot.lane.b32.xlu0 %v5651, 17
        %v6309 = vpop.permute.xlu0 %6308
        %v6310 = vsel %vm301, %v6307, %v6309
        %v6314 = vmul.f32 %v5963, %v6307
        %v6315 = vmul.f32 %v5964, %v6310
        %v6316 = vmul.f32 %v5965, %v6309
        %v6317 = vmul.f32 %v5966, %v6307
        %v6318 = vmul.f32 %v5967, %v6310
        %v6319 = vmul.f32 %v5968, %v6309
        %v6320 = vld [vmem:[#allocation3 + $0x350] sm:$0xff]
        %6327 = vrot.lane.b32.xlu0 %v6314, 111
        %v6328 = vpop.permute.xlu0 %6327
        %6329 = vrot.lane.b32.xlu0 %v6315, 111
        %v6330 = vpop.permute.xlu0 %6329
        %6331 = vrot.lane.b32.xlu0 %v6316, 111
        %v6332 = vpop.permute.xlu0 %6331
        %6333 = vrot.lane.b32.xlu0 %v6317, 111
        %v6334 = vpop.permute.xlu0 %6333
        %6335 = vrot.lane.b32.xlu0 %v6318, 111
        %v6336 = vpop.permute.xlu0 %6335
        %6337 = vrot.lane.b32.xlu0 %v6319, 111
        %v6338 = vpop.permute.xlu0 %6337
        %v6339 = vsel %vm190, %v6328, %v6330
        %v6340 = vsel %vm190, %v6330, %v6332
        %v6341 = vsel %vm190, %v6334, %v6336
        %v6342 = vsel %vm190, %v6336, %v6338
        %v6348 = vsel %vm209, %v6320, 0
        %6350 = vmatprep.subr.mxu0 %v6340
        %6351 = vmatpush1.msra.mxu0 %v6339
        %6352 = vmatprep.subr.mxu0 %v6342
        %6353 = vmatpush1.msra.mxu0 %v6341
        %6354 = vmatprep.subr.mxu0 0.0
        %6355 = vmatpush1.msra.mxu0 0.0
        %6356 = vmatprep.subr.mxu0 0.0
        %6357 = vmatpush1.msra.mxu0 0.0
        %6358 = vmatprep.subr.mxu0 0.0
        %6359 = vmatpush1.msra.mxu0 0.0
        %6360 = vmatprep.subr.mxu0 0.0
        %6361 = vmatpush1.msra.mxu0 0.0
        %6362 = vmatprep.subr.mxu0 0.0
        %6363 = vmatpush1.msra.mxu0 0.0
        %6364 = vmatprep.subr.mxu0 0.0
        %6365 = vmatpush1.msra.mxu0 0.0
        %6366 = vmatprep.subr.mxu0 0.0
        %6367 = vmatpush1.msra.mxu0 0.0
        %6368 = vmatprep.subr.mxu0 0.0
        %6369 = vmatpush1.msra.mxu0 0.0
        %6370 = vmatprep.subr.mxu0 0.0
        %6371 = vmatpush1.msra.mxu0 0.0
        %6372 = vmatprep.subr.mxu0 0.0
        %6373 = vmatpush1.msra.mxu0 0.0
        %6374 = vmatprep.subr.mxu0 0.0
        %6375 = vmatpush1.msra.mxu0 0.0
        %6376 = vmatprep.subr.mxu0 0.0
        %6377 = vmatpush1.msra.mxu0 0.0
        %6378 = vmatprep.subr.mxu0 0.0
        %6379 = vmatpush1.msra.mxu0 0.0
        %6380 = vmatprep.subr.mxu0 0.0
        %6381 = vmatpush1.msra.mxu0 0.0
        %6382 = vmatprep.subr.mxu0 0.0
        %6383 = vmatpush1.msra.mxu0 0.0
        %6384 = vmatprep.subr.mxu0 0.0
        %6385 = vmatpush1.msra.mxu0 0.0
        %6386 = vmatprep.subr.mxu0 0.0
        %6387 = vmatpush1.msra.mxu0 0.0
        %6388 = vmatprep.subr.mxu0 0.0
        %6389 = vmatpush1.msra.mxu0 0.0
        %6390 = vmatprep.subr.mxu0 0.0
        %6391 = vmatpush1.msra.mxu0 0.0
        %6392 = vmatprep.subr.mxu0 0.0
        %6393 = vmatpush1.msra.mxu0 0.0
        %6394 = vmatprep.subr.mxu0 0.0
        %6395 = vmatpush1.msra.mxu0 0.0
        %6396 = vmatprep.subr.mxu0 0.0
        %6397 = vmatpush1.msra.mxu0 0.0
        %6398 = vmatprep.subr.mxu0 0.0
        %6399 = vmatpush1.msra.mxu0 0.0
        %6400 = vmatprep.subr.mxu0 0.0
        %6401 = vmatpush1.msra.mxu0 0.0
        %6402 = vmatprep.subr.mxu0 0.0
        %6403 = vmatpush1.msra.mxu0 0.0
        %6404 = vmatprep.subr.mxu0 0.0
        %6405 = vmatpush1.msra.mxu0 0.0
        %6406 = vmatprep.subr.mxu0 0.0
        %6407 = vmatpush1.msra.mxu0 0.0
        %6408 = vmatprep.subr.mxu0 0.0
        %6409 = vmatpush1.msra.mxu0 0.0
        %6410 = vmatprep.subr.mxu0 0.0
        %6411 = vmatpush1.msra.mxu0 0.0
        %6412 = vmatprep.subr.mxu0 0.0
        %6413 = vmatpush1.msra.mxu0 0.0
        %6414 = vmatprep.mubr.f32.mxu0 0.0
        %6415 = vmatmul.mubr.f32.gmra.mrb[0].mxu0 %v6348
        %v6416 = vpop.f32.mrb[0].mxu0
        %v6417 = vadd.f32 0.0, %v6416
        %v6418 = vpop.f32.mrb[0].mxu0
        %v6419 = vadd.f32 0.0, %v6418
        %6420 = vdwg.mxu0
        %v6421 = vadd.f32 %v6304, %v6417
        %v6422 = vadd.f32 %v6305, %v6419
        %6423 = vset.pattern.permute.xlu0 16
        %6424 = vperm.xlu0 %6423, %v5441
        %v6425 = vpop.permute.xlu0 %6424
        %v6427 = vadd.f32 %v6421, %v6425
        %v6428 = vadd.f32 %v6422, %v6425
        %v6429 = vmul.f32 %v6427, 0.01
        %v6430 = vmul.f32 %v6428, 0.01
        %v6431 = vmax.f32 %v6427, %v6429
        %v6432 = vmax.f32 %v6428, %v6430
        %6433 = vst [vmem:[#allocation2 + $0x8] sm:$0xff] %v6431
        %6434 = vst [vmem:[#allocation2 + $0x10] sm:$0xff] %v6432
        %6435 = vst [vmem:[#allocation2 + $0x28] sm:$0xf] %v1095
        %6436 = vst [vmem:[#allocation2 + $0x30] sm:$0xf] %v1096
        %6437 = vst [vmem:[#allocation2 + $0x28] sm:$0x70] %v1099
        %6438 = vst [vmem:[#allocation2 + $0x30] sm:$0x70] %v163
        %6439 = vst [vmem:[#allocation2 + $0x18] sm:$0xff] 0.0
        %6440 = vst [vmem:[#allocation2 + $0x38] sm:$0x7f] 0.0
        %v6441 = vld [vmem:[%s170] ss:$8 sm:$0x3]
        %v6442 = vld [vmem:[%s172] ss:$8 sm:$0x3]
        %v6443 = vld [vmem:[#allocation2] sm:$0xff]
        %v6444 = vld [vmem:[#allocation2 + $0x8] sm:$0xff]
        %v6445 = vld [vmem:[#allocation2 + $0x10] sm:$0xff]
        %v6446 = vld [vmem:[#allocation2 + $0x20] sm:$0x7f]
        %v6447 = vld [vmem:[#allocation2 + $0x28] sm:$0x7f]
        %v6448 = vld [vmem:[#allocation2 + $0x30] sm:$0x7f]
        %v6450 = vlaneseq
        %v6451 = vshrl.u32 %v6450, 7
        %v6452 = vsub.s32 0, %v6451
        %v6453 = vrot.slane %v6441, %v6452
        %v6454 = vlaneseq
        %v6455 = vshrl.u32 %v6454, 7
        %v6456 = vsub.s32 1, %v6455
        %v6457 = vrot.slane %v6441, %v6456
        %6458 = vrot.lane.b32.xlu0 %v6453, 111
        %v6459 = vpop.permute.xlu0 %6458
        %6460 = vrot.lane.b32.xlu0 %v6457, 111
        %v6461 = vpop.permute.xlu0 %6460
        %v6462 = vsel %vm190, %v6459, %v6461
        %v6466 = vmul.f32 %v6443, %v6459
        %v6467 = vmul.f32 %v6444, %v6462
        %v6468 = vmul.f32 %v6445, %v6461
        %v6469 = vmul.f32 %v6446, %v6459
        %v6470 = vmul.f32 %v6447, %v6462
        %v6471 = vmul.f32 %v6448, %v6461
        %v6472 = vld [vmem:[#allocation3 + $0x480] sm:$0xff]
        %v6473 = vld [vmem:[#allocation3 + $0x490] sm:$0xff]
        %6480 = vrot.lane.b32.xlu0 %v6443, 16
        %v6481 = vpop.permute.xlu0 %6480
        %6482 = vrot.lane.b32.xlu0 %v6444, 16
        %v6483 = vpop.permute.xlu0 %6482
        %6484 = vrot.lane.b32.xlu0 %v6445, 16
        %v6485 = vpop.permute.xlu0 %6484
        %6486 = vrot.lane.b32.xlu0 %v6446, 16
        %v6487 = vpop.permute.xlu0 %6486
        %6488 = vrot.lane.b32.xlu0 %v6447, 16
        %v6489 = vpop.permute.xlu0 %6488
        %6490 = vrot.lane.b32.xlu0 %v6448, 16
        %v6491 = vpop.permute.xlu0 %6490
        %v6492 = vsel %vm209, %v6481, %v6483
        %v6493 = vsel %vm209, %v6483, %v6485
        %v6494 = vsel %vm209, %v6487, %v6489
        %v6495 = vsel %vm209, %v6489, %v6491
        %v6499 = vsel %vm413, %v6473, 0
        %v6501 = vsel %vm1277, %v6494, 0
        %v6503 = vsel %vm1277, %v6495, 0
        %6505 = vmatprep.subr.mxu0 %v6493
        %6506 = vmatpush1.msra.mxu0 %v6492
        %6507 = vmatprep.subr.mxu0 %v6503
        %6508 = vmatpush1.msra.mxu0 %v6501
        %6509 = vmatprep.subr.mxu0 0.0
        %6510 = vmatpush1.msra.mxu0 0.0
        %6511 = vmatprep.subr.mxu0 0.0
        %6512 = vmatpush1.msra.mxu0 0.0
        %6513 = vmatprep.subr.mxu0 0.0
        %6514 = vmatpush1.msra.mxu0 0.0
        %6515 = vmatprep.subr.mxu0 0.0
        %6516 = vmatpush1.msra.mxu0 0.0
        %6517 = vmatprep.subr.mxu0 0.0
        %6518 = vmatpush1.msra.mxu0 0.0
        %6519 = vmatprep.subr.mxu0 0.0
        %6520 = vmatpush1.msra.mxu0 0.0
        %6521 = vmatprep.subr.mxu0 0.0
        %6522 = vmatpush1.msra.mxu0 0.0
        %6523 = vmatprep.subr.mxu0 0.0
        %6524 = vmatpush1.msra.mxu0 0.0
        %6525 = vmatprep.subr.mxu0 0.0
        %6526 = vmatpush1.msra.mxu0 0.0
        %6527 = vmatprep.subr.mxu0 0.0
        %6528 = vmatpush1.msra.mxu0 0.0
        %6529 = vmatprep.subr.mxu0 0.0
        %6530 = vmatpush1.msra.mxu0 0.0
        %6531 = vmatprep.subr.mxu0 0.0
        %6532 = vmatpush1.msra.mxu0 0.0
        %6533 = vmatprep.subr.mxu0 0.0
        %6534 = vmatpush1.msra.mxu0 0.0
        %6535 = vmatprep.subr.mxu0 0.0
        %6536 = vmatpush1.msra.mxu0 0.0
        %6537 = vmatprep.subr.mxu0 0.0
        %6538 = vmatpush1.msra.mxu0 0.0
        %6539 = vmatprep.subr.mxu0 0.0
        %6540 = vmatpush1.msra.mxu0 0.0
        %6541 = vmatprep.subr.mxu0 0.0
        %6542 = vmatpush1.msra.mxu0 0.0
        %6543 = vmatprep.subr.mxu0 0.0
        %6544 = vmatpush1.msra.mxu0 0.0
        %6545 = vmatprep.subr.mxu0 0.0
        %6546 = vmatpush1.msra.mxu0 0.0
        %6547 = vmatprep.subr.mxu0 0.0
        %6548 = vmatpush1.msra.mxu0 0.0
        %6549 = vmatprep.subr.mxu0 0.0
        %6550 = vmatpush1.msra.mxu0 0.0
        %6551 = vmatprep.subr.mxu0 0.0
        %6552 = vmatpush1.msra.mxu0 0.0
        %6553 = vmatprep.subr.mxu0 0.0
        %6554 = vmatpush1.msra.mxu0 0.0
        %6555 = vmatprep.subr.mxu0 0.0
        %6556 = vmatpush1.msra.mxu0 0.0
        %6557 = vmatprep.subr.mxu0 0.0
        %6558 = vmatpush1.msra.mxu0 0.0
        %6559 = vmatprep.subr.mxu0 0.0
        %6560 = vmatpush1.msra.mxu0 0.0
        %6561 = vmatprep.subr.mxu0 0.0
        %6562 = vmatpush1.msra.mxu0 0.0
        %6563 = vmatprep.subr.mxu0 0.0
        %6564 = vmatpush1.msra.mxu0 0.0
        %6565 = vmatprep.subr.mxu0 0.0
        %6566 = vmatpush1.msra.mxu0 0.0
        %6567 = vmatprep.subr.mxu0 0.0
        %6568 = vmatpush1.msra.mxu0 0.0
        %6569 = vmatprep.mubr.f32.mxu0 0.0
        %6570 = vmatmul.mubr.f32.gmra.mrb[0].mxu0 %v6499
        %v6571 = vpop.f32.mrb[0].mxu0
        %v6572 = vadd.f32 0.0, %v6571
        %v6573 = vpop.f32.mrb[0].mxu0
        %v6574 = vadd.f32 0.0, %v6573
        %6575 = vdwg.mxu0
        %6582 = vrot.lane.b32.xlu0 %v6466, 17
        %v6583 = vpop.permute.xlu0 %6582
        %6584 = vrot.lane.b32.xlu0 %v6467, 17
        %v6585 = vpop.permute.xlu0 %6584
        %6586 = vrot.lane.b32.xlu0 %v6468, 17
        %v6587 = vpop.permute.xlu0 %6586
        %6588 = vrot.lane.b32.xlu0 %v6469, 17
        %v6589 = vpop.permute.xlu0 %6588
        %6590 = vrot.lane.b32.xlu0 %v6470, 17
        %v6591 = vpop.permute.xlu0 %6590
        %6592 = vrot.lane.b32.xlu0 %v6471, 17
        %v6593 = vpop.permute.xlu0 %6592
        %v6594 = vsel %vm301, %v6583, %v6585
        %v6595 = vsel %vm301, %v6585, %v6587
        %v6596 = vsel %vm301, %v6589, %v6591
        %v6597 = vsel %vm301, %v6591, %v6593
        %v6601 = vsel %vm413, %v6472, 0
        %v6603 = vsel %vm1277, %v6596, 0
        %v6605 = vsel %vm1277, %v6597, 0
        %6607 = vmatprep.subr.mxu0 %v6595
        %6608 = vmatpush1.msra.mxu0 %v6594
        %6609 = vmatprep.subr.mxu0 %v6605
        %6610 = vmatpush1.msra.mxu0 %v6603
        %6611 = vmatprep.subr.mxu0 0.0
        %6612 = vmatpush1.msra.mxu0 0.0
        %6613 = vmatprep.subr.mxu0 0.0
        %6614 = vmatpush1.msra.mxu0 0.0
        %6615 = vmatprep.subr.mxu0 0.0
        %6616 = vmatpush1.msra.mxu0 0.0
        %6617 = vmatprep.subr.mxu0 0.0
        %6618 = vmatpush1.msra.mxu0 0.0
        %6619 = vmatprep.subr.mxu0 0.0
        %6620 = vmatpush1.msra.mxu0 0.0
        %6621 = vmatprep.subr.mxu0 0.0
        %6622 = vmatpush1.msra.mxu0 0.0
        %6623 = vmatprep.subr.mxu0 0.0
        %6624 = vmatpush1.msra.mxu0 0.0
        %6625 = vmatprep.subr.mxu0 0.0
        %6626 = vmatpush1.msra.mxu0 0.0
        %6627 = vmatprep.subr.mxu0 0.0
        %6628 = vmatpush1.msra.mxu0 0.0
        %6629 = vmatprep.subr.mxu0 0.0
        %6630 = vmatpush1.msra.mxu0 0.0
        %6631 = vmatprep.subr.mxu0 0.0
        %6632 = vmatpush1.msra.mxu0 0.0
        %6633 = vmatprep.subr.mxu0 0.0
        %6634 = vmatpush1.msra.mxu0 0.0
        %6635 = vmatprep.subr.mxu0 0.0
        %6636 = vmatpush1.msra.mxu0 0.0
        %6637 = vmatprep.subr.mxu0 0.0
        %6638 = vmatpush1.msra.mxu0 0.0
        %6639 = vmatprep.subr.mxu0 0.0
        %6640 = vmatpush1.msra.mxu0 0.0
        %6641 = vmatprep.subr.mxu0 0.0
        %6642 = vmatpush1.msra.mxu0 0.0
        %6643 = vmatprep.subr.mxu0 0.0
        %6644 = vmatpush1.msra.mxu0 0.0
        %6645 = vmatprep.subr.mxu0 0.0
        %6646 = vmatpush1.msra.mxu0 0.0
        %6647 = vmatprep.subr.mxu0 0.0
        %6648 = vmatpush1.msra.mxu0 0.0
        %6649 = vmatprep.subr.mxu0 0.0
        %6650 = vmatpush1.msra.mxu0 0.0
        %6651 = vmatprep.subr.mxu0 0.0
        %6652 = vmatpush1.msra.mxu0 0.0
        %6653 = vmatprep.subr.mxu0 0.0
        %6654 = vmatpush1.msra.mxu0 0.0
        %6655 = vmatprep.subr.mxu0 0.0
        %6656 = vmatpush1.msra.mxu0 0.0
        %6657 = vmatprep.subr.mxu0 0.0
        %6658 = vmatpush1.msra.mxu0 0.0
        %6659 = vmatprep.subr.mxu0 0.0
        %6660 = vmatpush1.msra.mxu0 0.0
        %6661 = vmatprep.subr.mxu0 0.0
        %6662 = vmatpush1.msra.mxu0 0.0
        %6663 = vmatprep.subr.mxu0 0.0
        %6664 = vmatpush1.msra.mxu0 0.0
        %6665 = vmatprep.subr.mxu0 0.0
        %6666 = vmatpush1.msra.mxu0 0.0
        %6667 = vmatprep.subr.mxu0 0.0
        %6668 = vmatpush1.msra.mxu0 0.0
        %6669 = vmatprep.subr.mxu0 0.0
        %6670 = vmatpush1.msra.mxu0 0.0
        %6671 = vmatprep.mubr.f32.mxu0 0.0
        %6672 = vmatmul.mubr.f32.gmra.mrb[0].mxu0 %v6601
        %v6673 = vpop.f32.mrb[0].mxu0
        %v6674 = vadd.f32 %v6572, %v6673
        %v6675 = vpop.f32.mrb[0].mxu0
        %v6676 = vadd.f32 %v6574, %v6675
        %6677 = vdwg.mxu0
        %v6679 = vlaneseq
        %v6680 = vshrl.u32 %v6679, 7
        %v6681 = vsub.s32 0, %v6680
        %v6682 = vrot.slane %v6442, %v6681
        %v6683 = vlaneseq
        %v6684 = vshrl.u32 %v6683, 7
        %v6685 = vsub.s32 1, %v6684
        %v6686 = vrot.slane %v6442, %v6685
        %6687 = vrot.lane.b32.xlu0 %v6682, 113
        %v6688 = vpop.permute.xlu0 %6687
        %6689 = vrot.lane.b32.xlu0 %v6686, 113
        %v6690 = vpop.permute.xlu0 %6689
        %v6691 = vsel %vm395, %v6688, %v6690
        %v6695 = vmul.f32 %v6443, %v6688
        %v6696 = vmul.f32 %v6444, %v6691
        %v6697 = vmul.f32 %v6445, %v6690
        %v6698 = vmul.f32 %v6446, %v6688
        %v6699 = vmul.f32 %v6447, %v6691
        %v6700 = vmul.f32 %v6448, %v6690
        %v6701 = vld [vmem:[#allocation3 + $0x4a0] sm:$0xff]
        %6708 = vrot.lane.b32.xlu0 %v6695, 15
        %v6709 = vpop.permute.xlu0 %6708
        %6710 = vrot.lane.b32.xlu0 %v6696, 15
        %v6711 = vpop.permute.xlu0 %6710
        %6712 = vrot.lane.b32.xlu0 %v6697, 15
        %v6713 = vpop.permute.xlu0 %6712
        %6714 = vrot.lane.b32.xlu0 %v6698, 15
        %v6715 = vpop.permute.xlu0 %6714
        %6716 = vrot.lane.b32.xlu0 %v6699, 15
        %v6717 = vpop.permute.xlu0 %6716
        %6718 = vrot.lane.b32.xlu0 %v6700, 15
        %v6719 = vpop.permute.xlu0 %6718
        %v6720 = vsel %vm413, %v6709, %v6711
        %v6721 = vsel %vm413, %v6711, %v6713
        %v6722 = vsel %vm413, %v6715, %v6717
        %v6723 = vsel %vm413, %v6717, %v6719
        %v6727 = vsel %vm413, %v6701, 0
        %v6729 = vsel %vm1277, %v6722, 0
        %v6731 = vsel %vm1277, %v6723, 0
        %6733 = vmatprep.subr.mxu0 %v6721
        %6734 = vmatpush1.msra.mxu0 %v6720
        %6735 = vmatprep.subr.mxu0 %v6731
        %6736 = vmatpush1.msra.mxu0 %v6729
        %6737 = vmatprep.subr.mxu0 0.0
        %6738 = vmatpush1.msra.mxu0 0.0
        %6739 = vmatprep.subr.mxu0 0.0
        %6740 = vmatpush1.msra.mxu0 0.0
        %6741 = vmatprep.subr.mxu0 0.0
        %6742 = vmatpush1.msra.mxu0 0.0
        %6743 = vmatprep.subr.mxu0 0.0
        %6744 = vmatpush1.msra.mxu0 0.0
        %6745 = vmatprep.subr.mxu0 0.0
        %6746 = vmatpush1.msra.mxu0 0.0
        %6747 = vmatprep.subr.mxu0 0.0
        %6748 = vmatpush1.msra.mxu0 0.0
        %6749 = vmatprep.subr.mxu0 0.0
        %6750 = vmatpush1.msra.mxu0 0.0
        %6751 = vmatprep.subr.mxu0 0.0
        %6752 = vmatpush1.msra.mxu0 0.0
        %6753 = vmatprep.subr.mxu0 0.0
        %6754 = vmatpush1.msra.mxu0 0.0
        %6755 = vmatprep.subr.mxu0 0.0
        %6756 = vmatpush1.msra.mxu0 0.0
        %6757 = vmatprep.subr.mxu0 0.0
        %6758 = vmatpush1.msra.mxu0 0.0
        %6759 = vmatprep.subr.mxu0 0.0
        %6760 = vmatpush1.msra.mxu0 0.0
        %6761 = vmatprep.subr.mxu0 0.0
        %6762 = vmatpush1.msra.mxu0 0.0
        %6763 = vmatprep.subr.mxu0 0.0
        %6764 = vmatpush1.msra.mxu0 0.0
        %6765 = vmatprep.subr.mxu0 0.0
        %6766 = vmatpush1.msra.mxu0 0.0
        %6767 = vmatprep.subr.mxu0 0.0
        %6768 = vmatpush1.msra.mxu0 0.0
        %6769 = vmatprep.subr.mxu0 0.0
        %6770 = vmatpush1.msra.mxu0 0.0
        %6771 = vmatprep.subr.mxu0 0.0
        %6772 = vmatpush1.msra.mxu0 0.0
        %6773 = vmatprep.subr.mxu0 0.0
        %6774 = vmatpush1.msra.mxu0 0.0
        %6775 = vmatprep.subr.mxu0 0.0
        %6776 = vmatpush1.msra.mxu0 0.0
        %6777 = vmatprep.subr.mxu0 0.0
        %6778 = vmatpush1.msra.mxu0 0.0
        %6779 = vmatprep.subr.mxu0 0.0
        %6780 = vmatpush1.msra.mxu0 0.0
        %6781 = vmatprep.subr.mxu0 0.0
        %6782 = vmatpush1.msra.mxu0 0.0
        %6783 = vmatprep.subr.mxu0 0.0
        %6784 = vmatpush1.msra.mxu0 0.0
        %6785 = vmatprep.subr.mxu0 0.0
        %6786 = vmatpush1.msra.mxu0 0.0
        %6787 = vmatprep.subr.mxu0 0.0
        %6788 = vmatpush1.msra.mxu0 0.0
        %6789 = vmatprep.subr.mxu0 0.0
        %6790 = vmatpush1.msra.mxu0 0.0
        %6791 = vmatprep.subr.mxu0 0.0
        %6792 = vmatpush1.msra.mxu0 0.0
        %6793 = vmatprep.subr.mxu0 0.0
        %6794 = vmatpush1.msra.mxu0 0.0
        %6795 = vmatprep.subr.mxu0 0.0
        %6796 = vmatpush1.msra.mxu0 0.0
        %6797 = vmatprep.mubr.f32.mxu0 0.0
        %6798 = vmatmul.mubr.f32.gmra.mrb[0].mxu0 %v6727
        %v6799 = vpop.f32.mrb[0].mxu0
        %v6800 = vadd.f32 0.0, %v6799
        %v6801 = vpop.f32.mrb[0].mxu0
        %v6802 = vadd.f32 0.0, %v6801
        %6803 = vdwg.mxu0
        %v6804 = vadd.f32 %v6674, %v6800
        %v6805 = vadd.f32 %v6676, %v6802
        %6806 = vrot.lane.b32.xlu0 %v6453, 127
        %v6807 = vpop.permute.xlu0 %6806
        %6808 = vrot.lane.b32.xlu0 %v6457, 127
        %v6809 = vpop.permute.xlu0 %6808
        %v6810 = vsel %vm500, %v6807, %v6809
        %v6814 = vmul.f32 %v6443, %v6807
        %v6815 = vmul.f32 %v6444, %v6810
        %v6816 = vmul.f32 %v6445, %v6809
        %v6817 = vmul.f32 %v6446, %v6807
        %v6818 = vmul.f32 %v6447, %v6810
        %v6819 = vmul.f32 %v6448, %v6809
        %v6820 = vld [vmem:[#allocation3 + $0x4b0] sm:$0xff]
        %6827 = vrot.lane.b32.xlu0 %v6814, 1
        %v6828 = vpop.permute.xlu0 %6827
        %6829 = vrot.lane.b32.xlu0 %v6815, 1
        %v6830 = vpop.permute.xlu0 %6829
        %6831 = vrot.lane.b32.xlu0 %v6816, 1
        %v6832 = vpop.permute.xlu0 %6831
        %6833 = vrot.lane.b32.xlu0 %v6817, 1
        %v6834 = vpop.permute.xlu0 %6833
        %6835 = vrot.lane.b32.xlu0 %v6818, 1
        %v6836 = vpop.permute.xlu0 %6835
        %6837 = vrot.lane.b32.xlu0 %v6819, 1
        %v6838 = vpop.permute.xlu0 %6837
        %v6839 = vsel %vm518, %v6828, %v6830
        %v6840 = vsel %vm518, %v6830, %v6832
        %v6841 = vsel %vm518, %v6834, %v6836
        %v6842 = vsel %vm518, %v6836, %v6838
        %v6846 = vsel %vm413, %v6820, 0
        %v6848 = vsel %vm1277, %v6841, 0
        %v6850 = vsel %vm1277, %v6842, 0
        %6852 = vmatprep.subr.mxu0 %v6840
        %6853 = vmatpush1.msra.mxu0 %v6839
        %6854 = vmatprep.subr.mxu0 %v6850
        %6855 = vmatpush1.msra.mxu0 %v6848
        %6856 = vmatprep.subr.mxu0 0.0
        %6857 = vmatpush1.msra.mxu0 0.0
        %6858 = vmatprep.subr.mxu0 0.0
        %6859 = vmatpush1.msra.mxu0 0.0
        %6860 = vmatprep.subr.mxu0 0.0
        %6861 = vmatpush1.msra.mxu0 0.0
        %6862 = vmatprep.subr.mxu0 0.0
        %6863 = vmatpush1.msra.mxu0 0.0
        %6864 = vmatprep.subr.mxu0 0.0
        %6865 = vmatpush1.msra.mxu0 0.0
        %6866 = vmatprep.subr.mxu0 0.0
        %6867 = vmatpush1.msra.mxu0 0.0
        %6868 = vmatprep.subr.mxu0 0.0
        %6869 = vmatpush1.msra.mxu0 0.0
        %6870 = vmatprep.subr.mxu0 0.0
        %6871 = vmatpush1.msra.mxu0 0.0
        %6872 = vmatprep.subr.mxu0 0.0
        %6873 = vmatpush1.msra.mxu0 0.0
        %6874 = vmatprep.subr.mxu0 0.0
        %6875 = vmatpush1.msra.mxu0 0.0
        %6876 = vmatprep.subr.mxu0 0.0
        %6877 = vmatpush1.msra.mxu0 0.0
        %6878 = vmatprep.subr.mxu0 0.0
        %6879 = vmatpush1.msra.mxu0 0.0
        %6880 = vmatprep.subr.mxu0 0.0
        %6881 = vmatpush1.msra.mxu0 0.0
        %6882 = vmatprep.subr.mxu0 0.0
        %6883 = vmatpush1.msra.mxu0 0.0
        %6884 = vmatprep.subr.mxu0 0.0
        %6885 = vmatpush1.msra.mxu0 0.0
        %6886 = vmatprep.subr.mxu0 0.0
        %6887 = vmatpush1.msra.mxu0 0.0
        %6888 = vmatprep.subr.mxu0 0.0
        %6889 = vmatpush1.msra.mxu0 0.0
        %6890 = vmatprep.subr.mxu0 0.0
        %6891 = vmatpush1.msra.mxu0 0.0
        %6892 = vmatprep.subr.mxu0 0.0
        %6893 = vmatpush1.msra.mxu0 0.0
        %6894 = vmatprep.subr.mxu0 0.0
        %6895 = vmatpush1.msra.mxu0 0.0
        %6896 = vmatprep.subr.mxu0 0.0
        %6897 = vmatpush1.msra.mxu0 0.0
        %6898 = vmatprep.subr.mxu0 0.0
        %6899 = vmatpush1.msra.mxu0 0.0
        %6900 = vmatprep.subr.mxu0 0.0
        %6901 = vmatpush1.msra.mxu0 0.0
        %6902 = vmatprep.subr.mxu0 0.0
        %6903 = vmatpush1.msra.mxu0 0.0
        %6904 = vmatprep.subr.mxu0 0.0
        %6905 = vmatpush1.msra.mxu0 0.0
        %6906 = vmatprep.subr.mxu0 0.0
        %6907 = vmatpush1.msra.mxu0 0.0
        %6908 = vmatprep.subr.mxu0 0.0
        %6909 = vmatpush1.msra.mxu0 0.0
        %6910 = vmatprep.subr.mxu0 0.0
        %6911 = vmatpush1.msra.mxu0 0.0
        %6912 = vmatprep.subr.mxu0 0.0
        %6913 = vmatpush1.msra.mxu0 0.0
        %6914 = vmatprep.subr.mxu0 0.0
        %6915 = vmatpush1.msra.mxu0 0.0
        %6916 = vmatprep.mubr.f32.mxu0 0.0
        %6917 = vmatmul.mubr.f32.gmra.mrb[0].mxu0 %v6846
        %v6918 = vpop.f32.mrb[0].mxu0
        %v6919 = vadd.f32 0.0, %v6918
        %v6920 = vpop.f32.mrb[0].mxu0
        %v6921 = vadd.f32 0.0, %v6920
        %6922 = vdwg.mxu0
        %v6923 = vadd.f32 %v6804, %v6919
        %v6924 = vadd.f32 %v6805, %v6921
        %v6925 = vld [vmem:[#allocation3 + $0x4c0] sm:$0xff]
        %v6927 = vsel %vm413, %v6925, 0
        %v6929 = vsel %vm1277, %v6447, 0
        %v6931 = vsel %vm1277, %v6448, 0
        %6933 = vmatprep.subr.mxu0 %v6445
        %6934 = vmatpush1.msra.mxu0 %v6444
        %6935 = vmatprep.subr.mxu0 %v6931
        %6936 = vmatpush1.msra.mxu0 %v6929
        %6937 = vmatprep.subr.mxu0 0.0
        %6938 = vmatpush1.msra.mxu0 0.0
        %6939 = vmatprep.subr.mxu0 0.0
        %6940 = vmatpush1.msra.mxu0 0.0
        %6941 = vmatprep.subr.mxu0 0.0
        %6942 = vmatpush1.msra.mxu0 0.0
        %6943 = vmatprep.subr.mxu0 0.0
        %6944 = vmatpush1.msra.mxu0 0.0
        %6945 = vmatprep.subr.mxu0 0.0
        %6946 = vmatpush1.msra.mxu0 0.0
        %6947 = vmatprep.subr.mxu0 0.0
        %6948 = vmatpush1.msra.mxu0 0.0
        %6949 = vmatprep.subr.mxu0 0.0
        %6950 = vmatpush1.msra.mxu0 0.0
        %6951 = vmatprep.subr.mxu0 0.0
        %6952 = vmatpush1.msra.mxu0 0.0
        %6953 = vmatprep.subr.mxu0 0.0
        %6954 = vmatpush1.msra.mxu0 0.0
        %6955 = vmatprep.subr.mxu0 0.0
        %6956 = vmatpush1.msra.mxu0 0.0
        %6957 = vmatprep.subr.mxu0 0.0
        %6958 = vmatpush1.msra.mxu0 0.0
        %6959 = vmatprep.subr.mxu0 0.0
        %6960 = vmatpush1.msra.mxu0 0.0
        %6961 = vmatprep.subr.mxu0 0.0
        %6962 = vmatpush1.msra.mxu0 0.0
        %6963 = vmatprep.subr.mxu0 0.0
        %6964 = vmatpush1.msra.mxu0 0.0
        %6965 = vmatprep.subr.mxu0 0.0
        %6966 = vmatpush1.msra.mxu0 0.0
        %6967 = vmatprep.subr.mxu0 0.0
        %6968 = vmatpush1.msra.mxu0 0.0
        %6969 = vmatprep.subr.mxu0 0.0
        %6970 = vmatpush1.msra.mxu0 0.0
        %6971 = vmatprep.subr.mxu0 0.0
        %6972 = vmatpush1.msra.mxu0 0.0
        %6973 = vmatprep.subr.mxu0 0.0
        %6974 = vmatpush1.msra.mxu0 0.0
        %6975 = vmatprep.subr.mxu0 0.0
        %6976 = vmatpush1.msra.mxu0 0.0
        %6977 = vmatprep.subr.mxu0 0.0
        %6978 = vmatpush1.msra.mxu0 0.0
        %6979 = vmatprep.subr.mxu0 0.0
        %6980 = vmatpush1.msra.mxu0 0.0
        %6981 = vmatprep.subr.mxu0 0.0
        %6982 = vmatpush1.msra.mxu0 0.0
        %6983 = vmatprep.subr.mxu0 0.0
        %6984 = vmatpush1.msra.mxu0 0.0
        %6985 = vmatprep.subr.mxu0 0.0
        %6986 = vmatpush1.msra.mxu0 0.0
        %6987 = vmatprep.subr.mxu0 0.0
        %6988 = vmatpush1.msra.mxu0 0.0
        %6989 = vmatprep.subr.mxu0 0.0
        %6990 = vmatpush1.msra.mxu0 0.0
        %6991 = vmatprep.subr.mxu0 0.0
        %6992 = vmatpush1.msra.mxu0 0.0
        %6993 = vmatprep.subr.mxu0 0.0
        %6994 = vmatpush1.msra.mxu0 0.0
        %6995 = vmatprep.subr.mxu0 0.0
        %6996 = vmatpush1.msra.mxu0 0.0
        %6997 = vmatprep.mubr.f32.mxu0 0.0
        %6998 = vmatmul.mubr.f32.gmra.mrb[0].mxu0 %v6927
        %v6999 = vpop.f32.mrb[0].mxu0
        %v7000 = vadd.f32 0.0, %v6999
        %v7001 = vpop.f32.mrb[0].mxu0
        %v7002 = vadd.f32 0.0, %v7001
        %7003 = vdwg.mxu0
        %v7004 = vadd.f32 %v6923, %v7000
        %v7005 = vadd.f32 %v6924, %v7002
        %v7006 = vld [vmem:[#allocation2 + $0x8] sm:$0xff]
        %v7007 = vld [vmem:[#allocation2 + $0x10] sm:$0xff]
        %v7008 = vld [vmem:[#allocation2 + $0x18] sm:$0xff]
        %v7009 = vld [vmem:[#allocation2 + $0x28] sm:$0x7f]
        %v7010 = vld [vmem:[#allocation2 + $0x30] sm:$0x7f]
        %v7011 = vld [vmem:[#allocation2 + $0x38] sm:$0x7f]
        %7012 = vrot.lane.b32.xlu0 %v6682, 1
        %v7013 = vpop.permute.xlu0 %7012
        %7014 = vrot.lane.b32.xlu0 %v6686, 1
        %v7015 = vpop.permute.xlu0 %7014
        %v7016 = vsel %vm518, %v7013, %v7015
        %v7020 = vmul.f32 %v7006, %v7013
        %v7021 = vmul.f32 %v7007, %v7016
        %v7022 = vmul.f32 %v7008, %v7015
        %v7023 = vmul.f32 %v7009, %v7013
        %v7024 = vmul.f32 %v7010, %v7016
        %v7025 = vmul.f32 %v7011, %v7015
        %v7026 = vld [vmem:[#allocation3 + $0x4d0] sm:$0xff]
        %7033 = vrot.lane.b32.xlu0 %v7020, 127
        %v7034 = vpop.permute.xlu0 %7033
        %7035 = vrot.lane.b32.xlu0 %v7021, 127
        %v7036 = vpop.permute.xlu0 %7035
        %7037 = vrot.lane.b32.xlu0 %v7022, 127
        %v7038 = vpop.permute.xlu0 %7037
        %7039 = vrot.lane.b32.xlu0 %v7023, 127
        %v7040 = vpop.permute.xlu0 %7039
        %7041 = vrot.lane.b32.xlu0 %v7024, 127
        %v7042 = vpop.permute.xlu0 %7041
        %7043 = vrot.lane.b32.xlu0 %v7025, 127
        %v7044 = vpop.permute.xlu0 %7043
        %v7045 = vsel %vm500, %v7034, %v7036
        %v7046 = vsel %vm500, %v7036, %v7038
        %v7047 = vsel %vm500, %v7040, %v7042
        %v7048 = vsel %vm500, %v7042, %v7044
        %v7052 = vsel %vm413, %v7026, 0
        %v7054 = vsel %vm1277, %v7047, 0
        %v7056 = vsel %vm1277, %v7048, 0
        %7058 = vmatprep.subr.mxu0 %v7046
        %7059 = vmatpush1.msra.mxu0 %v7045
        %7060 = vmatprep.subr.mxu0 %v7056
        %7061 = vmatpush1.msra.mxu0 %v7054
        %7062 = vmatprep.subr.mxu0 0.0
        %7063 = vmatpush1.msra.mxu0 0.0
        %7064 = vmatprep.subr.mxu0 0.0
        %7065 = vmatpush1.msra.mxu0 0.0
        %7066 = vmatprep.subr.mxu0 0.0
        %7067 = vmatpush1.msra.mxu0 0.0
        %7068 = vmatprep.subr.mxu0 0.0
        %7069 = vmatpush1.msra.mxu0 0.0
        %7070 = vmatprep.subr.mxu0 0.0
        %7071 = vmatpush1.msra.mxu0 0.0
        %7072 = vmatprep.subr.mxu0 0.0
        %7073 = vmatpush1.msra.mxu0 0.0
        %7074 = vmatprep.subr.mxu0 0.0
        %7075 = vmatpush1.msra.mxu0 0.0
        %7076 = vmatprep.subr.mxu0 0.0
        %7077 = vmatpush1.msra.mxu0 0.0
        %7078 = vmatprep.subr.mxu0 0.0
        %7079 = vmatpush1.msra.mxu0 0.0
        %7080 = vmatprep.subr.mxu0 0.0
        %7081 = vmatpush1.msra.mxu0 0.0
        %7082 = vmatprep.subr.mxu0 0.0
        %7083 = vmatpush1.msra.mxu0 0.0
        %7084 = vmatprep.subr.mxu0 0.0
        %7085 = vmatpush1.msra.mxu0 0.0
        %7086 = vmatprep.subr.mxu0 0.0
        %7087 = vmatpush1.msra.mxu0 0.0
        %7088 = vmatprep.subr.mxu0 0.0
        %7089 = vmatpush1.msra.mxu0 0.0
        %7090 = vmatprep.subr.mxu0 0.0
        %7091 = vmatpush1.msra.mxu0 0.0
        %7092 = vmatprep.subr.mxu0 0.0
        %7093 = vmatpush1.msra.mxu0 0.0
        %7094 = vmatprep.subr.mxu0 0.0
        %7095 = vmatpush1.msra.mxu0 0.0
        %7096 = vmatprep.subr.mxu0 0.0
        %7097 = vmatpush1.msra.mxu0 0.0
        %7098 = vmatprep.subr.mxu0 0.0
        %7099 = vmatpush1.msra.mxu0 0.0
        %7100 = vmatprep.subr.mxu0 0.0
        %7101 = vmatpush1.msra.mxu0 0.0
        %7102 = vmatprep.subr.mxu0 0.0
        %7103 = vmatpush1.msra.mxu0 0.0
        %7104 = vmatprep.subr.mxu0 0.0
        %7105 = vmatpush1.msra.mxu0 0.0
        %7106 = vmatprep.subr.mxu0 0.0
        %7107 = vmatpush1.msra.mxu0 0.0
        %7108 = vmatprep.subr.mxu0 0.0
        %7109 = vmatpush1.msra.mxu0 0.0
        %7110 = vmatprep.subr.mxu0 0.0
        %7111 = vmatpush1.msra.mxu0 0.0
        %7112 = vmatprep.subr.mxu0 0.0
        %7113 = vmatpush1.msra.mxu0 0.0
        %7114 = vmatprep.subr.mxu0 0.0
        %7115 = vmatpush1.msra.mxu0 0.0
        %7116 = vmatprep.subr.mxu0 0.0
        %7117 = vmatpush1.msra.mxu0 0.0
        %7118 = vmatprep.subr.mxu0 0.0
        %7119 = vmatpush1.msra.mxu0 0.0
        %7120 = vmatprep.subr.mxu0 0.0
        %7121 = vmatpush1.msra.mxu0 0.0
        %7122 = vmatprep.mubr.f32.mxu0 0.0
        %7123 = vmatmul.mubr.f32.gmra.mrb[0].mxu0 %v7052
        %v7124 = vpop.f32.mrb[0].mxu0
        %v7125 = vadd.f32 0.0, %v7124
        %v7126 = vpop.f32.mrb[0].mxu0
        %v7127 = vadd.f32 0.0, %v7126
        %7128 = vdwg.mxu0
        %v7129 = vadd.f32 %v7004, %v7125
        %v7130 = vadd.f32 %v7005, %v7127
        %7131 = vrot.lane.b32.xlu0 %v6453, 15
        %v7132 = vpop.permute.xlu0 %7131
        %7133 = vrot.lane.b32.xlu0 %v6457, 15
        %v7134 = vpop.permute.xlu0 %7133
        %v7135 = vsel %vm413, %v7132, %v7134
        %v7139 = vmul.f32 %v7006, %v7132
        %v7140 = vmul.f32 %v7007, %v7135
        %v7141 = vmul.f32 %v7008, %v7134
        %v7142 = vmul.f32 %v7009, %v7132
        %v7143 = vmul.f32 %v7010, %v7135
        %v7144 = vmul.f32 %v7011, %v7134
        %v7145 = vld [vmem:[#allocation3 + $0x4e0] sm:$0xff]
        %7152 = vrot.lane.b32.xlu0 %v7139, 113
        %v7153 = vpop.permute.xlu0 %7152
        %7154 = vrot.lane.b32.xlu0 %v7140, 113
        %v7155 = vpop.permute.xlu0 %7154
        %7156 = vrot.lane.b32.xlu0 %v7141, 113
        %v7157 = vpop.permute.xlu0 %7156
        %7158 = vrot.lane.b32.xlu0 %v7142, 113
        %v7159 = vpop.permute.xlu0 %7158
        %7160 = vrot.lane.b32.xlu0 %v7143, 113
        %v7161 = vpop.permute.xlu0 %7160
        %7162 = vrot.lane.b32.xlu0 %v7144, 113
        %v7163 = vpop.permute.xlu0 %7162
        %v7164 = vsel %vm395, %v7153, %v7155
        %v7165 = vsel %vm395, %v7155, %v7157
        %v7166 = vsel %vm395, %v7159, %v7161
        %v7167 = vsel %vm395, %v7161, %v7163
        %v7171 = vsel %vm413, %v7145, 0
        %v7173 = vsel %vm1277, %v7166, 0
        %v7175 = vsel %vm1277, %v7167, 0
        %7177 = vmatprep.subr.mxu0 %v7165
        %7178 = vmatpush1.msra.mxu0 %v7164
        %7179 = vmatprep.subr.mxu0 %v7175
        %7180 = vmatpush1.msra.mxu0 %v7173
        %7181 = vmatprep.subr.mxu0 0.0
        %7182 = vmatpush1.msra.mxu0 0.0
        %7183 = vmatprep.subr.mxu0 0.0
        %7184 = vmatpush1.msra.mxu0 0.0
        %7185 = vmatprep.subr.mxu0 0.0
        %7186 = vmatpush1.msra.mxu0 0.0
        %7187 = vmatprep.subr.mxu0 0.0
        %7188 = vmatpush1.msra.mxu0 0.0
        %7189 = vmatprep.subr.mxu0 0.0
        %7190 = vmatpush1.msra.mxu0 0.0
        %7191 = vmatprep.subr.mxu0 0.0
        %7192 = vmatpush1.msra.mxu0 0.0
        %7193 = vmatprep.subr.mxu0 0.0
        %7194 = vmatpush1.msra.mxu0 0.0
        %7195 = vmatprep.subr.mxu0 0.0
        %7196 = vmatpush1.msra.mxu0 0.0
        %7197 = vmatprep.subr.mxu0 0.0
        %7198 = vmatpush1.msra.mxu0 0.0
        %7199 = vmatprep.subr.mxu0 0.0
        %7200 = vmatpush1.msra.mxu0 0.0
        %7201 = vmatprep.subr.mxu0 0.0
        %7202 = vmatpush1.msra.mxu0 0.0
        %7203 = vmatprep.subr.mxu0 0.0
        %7204 = vmatpush1.msra.mxu0 0.0
        %7205 = vmatprep.subr.mxu0 0.0
        %7206 = vmatpush1.msra.mxu0 0.0
        %7207 = vmatprep.subr.mxu0 0.0
        %7208 = vmatpush1.msra.mxu0 0.0
        %7209 = vmatprep.subr.mxu0 0.0
        %7210 = vmatpush1.msra.mxu0 0.0
        %7211 = vmatprep.subr.mxu0 0.0
        %7212 = vmatpush1.msra.mxu0 0.0
        %7213 = vmatprep.subr.mxu0 0.0
        %7214 = vmatpush1.msra.mxu0 0.0
        %7215 = vmatprep.subr.mxu0 0.0
        %7216 = vmatpush1.msra.mxu0 0.0
        %7217 = vmatprep.subr.mxu0 0.0
        %7218 = vmatpush1.msra.mxu0 0.0
        %7219 = vmatprep.subr.mxu0 0.0
        %7220 = vmatpush1.msra.mxu0 0.0
        %7221 = vmatprep.subr.mxu0 0.0
        %7222 = vmatpush1.msra.mxu0 0.0
        %7223 = vmatprep.subr.mxu0 0.0
        %7224 = vmatpush1.msra.mxu0 0.0
        %7225 = vmatprep.subr.mxu0 0.0
        %7226 = vmatpush1.msra.mxu0 0.0
        %7227 = vmatprep.subr.mxu0 0.0
        %7228 = vmatpush1.msra.mxu0 0.0
        %7229 = vmatprep.subr.mxu0 0.0
        %7230 = vmatpush1.msra.mxu0 0.0
        %7231 = vmatprep.subr.mxu0 0.0
        %7232 = vmatpush1.msra.mxu0 0.0
        %7233 = vmatprep.subr.mxu0 0.0
        %7234 = vmatpush1.msra.mxu0 0.0
        %7235 = vmatprep.subr.mxu0 0.0
        %7236 = vmatpush1.msra.mxu0 0.0
        %7237 = vmatprep.subr.mxu0 0.0
        %7238 = vmatpush1.msra.mxu0 0.0
        %7239 = vmatprep.subr.mxu0 0.0
        %7240 = vmatpush1.msra.mxu0 0.0
        %7241 = vmatprep.mubr.f32.mxu0 0.0
        %7242 = vmatmul.mubr.f32.gmra.mrb[0].mxu0 %v7171
        %v7243 = vpop.f32.mrb[0].mxu0
        %v7244 = vadd.f32 0.0, %v7243
        %v7245 = vpop.f32.mrb[0].mxu0
        %v7246 = vadd.f32 0.0, %v7245
        %7247 = vdwg.mxu0
        %v7248 = vadd.f32 %v7129, %v7244
        %v7249 = vadd.f32 %v7130, %v7246
        %v7250 = vld [vmem:[#allocation3 + $0x4f0] sm:$0xff]
        %7257 = vrot.lane.b32.xlu0 %v7006, 112
        %v7258 = vpop.permute.xlu0 %7257
        %7259 = vrot.lane.b32.xlu0 %v7007, 112
        %v7260 = vpop.permute.xlu0 %7259
        %7261 = vrot.lane.b32.xlu0 %v7008, 112
        %v7262 = vpop.permute.xlu0 %7261
        %7263 = vrot.lane.b32.xlu0 %v7009, 112
        %v7264 = vpop.permute.xlu0 %7263
        %7265 = vrot.lane.b32.xlu0 %v7010, 112
        %v7266 = vpop.permute.xlu0 %7265
        %7267 = vrot.lane.b32.xlu0 %v7011, 112
        %v7268 = vpop.permute.xlu0 %7267
        %v7269 = vsel %vm901, %v7258, %v7260
        %v7270 = vsel %vm901, %v7260, %v7262
        %v7271 = vsel %vm901, %v7264, %v7266
        %v7272 = vsel %vm901, %v7266, %v7268
        %v7276 = vsel %vm413, %v7250, 0
        %v7278 = vsel %vm1277, %v7271, 0
        %v7280 = vsel %vm1277, %v7272, 0
        %7282 = vmatprep.subr.mxu0 %v7270
        %7283 = vmatpush1.msra.mxu0 %v7269
        %7284 = vmatprep.subr.mxu0 %v7280
        %7285 = vmatpush1.msra.mxu0 %v7278
        %7286 = vmatprep.subr.mxu0 0.0
        %7287 = vmatpush1.msra.mxu0 0.0
        %7288 = vmatprep.subr.mxu0 0.0
        %7289 = vmatpush1.msra.mxu0 0.0
        %7290 = vmatprep.subr.mxu0 0.0
        %7291 = vmatpush1.msra.mxu0 0.0
        %7292 = vmatprep.subr.mxu0 0.0
        %7293 = vmatpush1.msra.mxu0 0.0
        %7294 = vmatprep.subr.mxu0 0.0
        %7295 = vmatpush1.msra.mxu0 0.0
        %7296 = vmatprep.subr.mxu0 0.0
        %7297 = vmatpush1.msra.mxu0 0.0
        %7298 = vmatprep.subr.mxu0 0.0
        %7299 = vmatpush1.msra.mxu0 0.0
        %7300 = vmatprep.subr.mxu0 0.0
        %7301 = vmatpush1.msra.mxu0 0.0
        %7302 = vmatprep.subr.mxu0 0.0
        %7303 = vmatpush1.msra.mxu0 0.0
        %7304 = vmatprep.subr.mxu0 0.0
        %7305 = vmatpush1.msra.mxu0 0.0
        %7306 = vmatprep.subr.mxu0 0.0
        %7307 = vmatpush1.msra.mxu0 0.0
        %7308 = vmatprep.subr.mxu0 0.0
        %7309 = vmatpush1.msra.mxu0 0.0
        %7310 = vmatprep.subr.mxu0 0.0
        %7311 = vmatpush1.msra.mxu0 0.0
        %7312 = vmatprep.subr.mxu0 0.0
        %7313 = vmatpush1.msra.mxu0 0.0
        %7314 = vmatprep.subr.mxu0 0.0
        %7315 = vmatpush1.msra.mxu0 0.0
        %7316 = vmatprep.subr.mxu0 0.0
        %7317 = vmatpush1.msra.mxu0 0.0
        %7318 = vmatprep.subr.mxu0 0.0
        %7319 = vmatpush1.msra.mxu0 0.0
        %7320 = vmatprep.subr.mxu0 0.0
        %7321 = vmatpush1.msra.mxu0 0.0
        %7322 = vmatprep.subr.mxu0 0.0
        %7323 = vmatpush1.msra.mxu0 0.0
        %7324 = vmatprep.subr.mxu0 0.0
        %7325 = vmatpush1.msra.mxu0 0.0
        %7326 = vmatprep.subr.mxu0 0.0
        %7327 = vmatpush1.msra.mxu0 0.0
        %7328 = vmatprep.subr.mxu0 0.0
        %7329 = vmatpush1.msra.mxu0 0.0
        %7330 = vmatprep.subr.mxu0 0.0
        %7331 = vmatpush1.msra.mxu0 0.0
        %7332 = vmatprep.subr.mxu0 0.0
        %7333 = vmatpush1.msra.mxu0 0.0
        %7334 = vmatprep.subr.mxu0 0.0
        %7335 = vmatpush1.msra.mxu0 0.0
        %7336 = vmatprep.subr.mxu0 0.0
        %7337 = vmatpush1.msra.mxu0 0.0
        %7338 = vmatprep.subr.mxu0 0.0
        %7339 = vmatpush1.msra.mxu0 0.0
        %7340 = vmatprep.subr.mxu0 0.0
        %7341 = vmatpush1.msra.mxu0 0.0
        %7342 = vmatprep.subr.mxu0 0.0
        %7343 = vmatpush1.msra.mxu0 0.0
        %7344 = vmatprep.subr.mxu0 0.0
        %7345 = vmatpush1.msra.mxu0 0.0
        %7346 = vmatprep.mubr.f32.mxu0 0.0
        %7347 = vmatmul.mubr.f32.gmra.mrb[0].mxu0 %v7276
        %v7348 = vpop.f32.mrb[0].mxu0
        %v7349 = vadd.f32 0.0, %v7348
        %v7350 = vpop.f32.mrb[0].mxu0
        %v7351 = vadd.f32 0.0, %v7350
        %7352 = vdwg.mxu0
        %v7353 = vadd.f32 %v7248, %v7349
        %v7354 = vadd.f32 %v7249, %v7351
        %7355 = vrot.lane.b32.xlu0 %v6682, 17
        %v7356 = vpop.permute.xlu0 %7355
        %7357 = vrot.lane.b32.xlu0 %v6686, 17
        %v7358 = vpop.permute.xlu0 %7357
        %v7359 = vsel %vm301, %v7356, %v7358
        %v7363 = vmul.f32 %v7006, %v7356
        %v7364 = vmul.f32 %v7007, %v7359
        %v7365 = vmul.f32 %v7008, %v7358
        %v7366 = vmul.f32 %v7009, %v7356
        %v7367 = vmul.f32 %v7010, %v7359
        %v7368 = vmul.f32 %v7011, %v7358
        %v7369 = vld [vmem:[#allocation3 + $0x500] sm:$0xff]
        %7376 = vrot.lane.b32.xlu0 %v7363, 111
        %v7377 = vpop.permute.xlu0 %7376
        %7378 = vrot.lane.b32.xlu0 %v7364, 111
        %v7379 = vpop.permute.xlu0 %7378
        %7380 = vrot.lane.b32.xlu0 %v7365, 111
        %v7381 = vpop.permute.xlu0 %7380
        %7382 = vrot.lane.b32.xlu0 %v7366, 111
        %v7383 = vpop.permute.xlu0 %7382
        %7384 = vrot.lane.b32.xlu0 %v7367, 111
        %v7385 = vpop.permute.xlu0 %7384
        %7386 = vrot.lane.b32.xlu0 %v7368, 111
        %v7387 = vpop.permute.xlu0 %7386
        %v7388 = vsel %vm190, %v7377, %v7379
        %v7389 = vsel %vm190, %v7379, %v7381
        %v7390 = vsel %vm190, %v7383, %v7385
        %v7391 = vsel %vm190, %v7385, %v7387
        %v7395 = vsel %vm413, %v7369, 0
        %v7397 = vsel %vm1277, %v7390, 0
        %v7399 = vsel %vm1277, %v7391, 0
        %7401 = vmatprep.subr.mxu0 %v7389
        %7402 = vmatpush1.msra.mxu0 %v7388
        %7403 = vmatprep.subr.mxu0 %v7399
        %7404 = vmatpush1.msra.mxu0 %v7397
        %7405 = vmatprep.subr.mxu0 0.0
        %7406 = vmatpush1.msra.mxu0 0.0
        %7407 = vmatprep.subr.mxu0 0.0
        %7408 = vmatpush1.msra.mxu0 0.0
        %7409 = vmatprep.subr.mxu0 0.0
        %7410 = vmatpush1.msra.mxu0 0.0
        %7411 = vmatprep.subr.mxu0 0.0
        %7412 = vmatpush1.msra.mxu0 0.0
        %7413 = vmatprep.subr.mxu0 0.0
        %7414 = vmatpush1.msra.mxu0 0.0
        %7415 = vmatprep.subr.mxu0 0.0
        %7416 = vmatpush1.msra.mxu0 0.0
        %7417 = vmatprep.subr.mxu0 0.0
        %7418 = vmatpush1.msra.mxu0 0.0
        %7419 = vmatprep.subr.mxu0 0.0
        %7420 = vmatpush1.msra.mxu0 0.0
        %7421 = vmatprep.subr.mxu0 0.0
        %7422 = vmatpush1.msra.mxu0 0.0
        %7423 = vmatprep.subr.mxu0 0.0
        %7424 = vmatpush1.msra.mxu0 0.0
        %7425 = vmatprep.subr.mxu0 0.0
        %7426 = vmatpush1.msra.mxu0 0.0
        %7427 = vmatprep.subr.mxu0 0.0
        %7428 = vmatpush1.msra.mxu0 0.0
        %7429 = vmatprep.subr.mxu0 0.0
        %7430 = vmatpush1.msra.mxu0 0.0
        %7431 = vmatprep.subr.mxu0 0.0
        %7432 = vmatpush1.msra.mxu0 0.0
        %7433 = vmatprep.subr.mxu0 0.0
        %7434 = vmatpush1.msra.mxu0 0.0
        %7435 = vmatprep.subr.mxu0 0.0
        %7436 = vmatpush1.msra.mxu0 0.0
        %7437 = vmatprep.subr.mxu0 0.0
        %7438 = vmatpush1.msra.mxu0 0.0
        %7439 = vmatprep.subr.mxu0 0.0
        %7440 = vmatpush1.msra.mxu0 0.0
        %7441 = vmatprep.subr.mxu0 0.0
        %7442 = vmatpush1.msra.mxu0 0.0
        %7443 = vmatprep.subr.mxu0 0.0
        %7444 = vmatpush1.msra.mxu0 0.0
        %7445 = vmatprep.subr.mxu0 0.0
        %7446 = vmatpush1.msra.mxu0 0.0
        %7447 = vmatprep.subr.mxu0 0.0
        %7448 = vmatpush1.msra.mxu0 0.0
        %7449 = vmatprep.subr.mxu0 0.0
        %7450 = vmatpush1.msra.mxu0 0.0
        %7451 = vmatprep.subr.mxu0 0.0
        %7452 = vmatpush1.msra.mxu0 0.0
        %7453 = vmatprep.subr.mxu0 0.0
        %7454 = vmatpush1.msra.mxu0 0.0
        %7455 = vmatprep.subr.mxu0 0.0
        %7456 = vmatpush1.msra.mxu0 0.0
        %7457 = vmatprep.subr.mxu0 0.0
        %7458 = vmatpush1.msra.mxu0 0.0
        %7459 = vmatprep.subr.mxu0 0.0
        %7460 = vmatpush1.msra.mxu0 0.0
        %7461 = vmatprep.subr.mxu0 0.0
        %7462 = vmatpush1.msra.mxu0 0.0
        %7463 = vmatprep.subr.mxu0 0.0
        %7464 = vmatpush1.msra.mxu0 0.0
        %7465 = vmatprep.mubr.f32.mxu0 0.0
        %7466 = vmatmul.mubr.f32.gmra.mrb[0].mxu0 %v7395
        %v7467 = vpop.f32.mrb[0].mxu0
        %v7468 = vadd.f32 0.0, %v7467
        %v7469 = vpop.f32.mrb[0].mxu0
        %v7470 = vadd.f32 0.0, %v7469
        %7471 = vdwg.mxu0
        %v7472 = vadd.f32 %v7353, %v7468
        %v7473 = vadd.f32 %v7354, %v7470
        %7474 = vset.pattern.permute.xlu0 15
        %7475 = vperm.xlu0 %7474, %v6472
        %v7476 = vpop.permute.xlu0 %7475
        %v7478 = vadd.f32 %v7472, %v7476
        %v7479 = vadd.f32 %v7473, %v7476
        %v7480 = vmul.f32 %v7478, 0.01
        %v7481 = vmul.f32 %v7479, 0.01
        %v7482 = vmax.f32 %v7478, %v7480
        %v7483 = vmax.f32 %v7479, %v7481
        %7484 = vst [vmem:[%s158] sm:$0xff] %v7482
        %7485 = vst [vmem:[%s158 + $0x8] sm:$0xff] %v7483
        %p7486 = scmp.lt.s32.totalorder %s14, 1
        %s7487 = scalar_select %p7486, %s14, 1
        %s7488 = smul.addr %s7487, 2
        %s7489 = smul.addr %s7488, 8
        %s7490 = scalar_lea.vmem %s2, %s7489
        // Predicated region
        $region33: #{fwd.1} parent=27 // pred_check
          %p7491 = pneg %p79
        $region34: #{fwd.1} parent=27 // pred_check_branch
          %7493 = sbr.rel (%p7491) target = $region36
        $region35: #{fwd.1} parent=27 // pred_region
          _
        $region36: #{fwd.1} parent=27 // pred_fallthru
          _
      $region28: #{fwd.1} parent=5 // pred_fallthru
        _
      %p7494 = scmp.le.s32.totalorder 2, %s9
      // Predicated region
      $region37: #{fwd.1} parent=5 // pred_check
        %p7495 = pneg %p7494
      $region38: #{fwd.1} parent=5 // pred_check_branch
        %7497 = sbr.rel (%p7495) target = $region40
      $region39: #{fwd.1} parent=5 // pred_region
        %s7498 = ssub.s32 %s9, 2
        // Predicated region
        $region41: #{fwd.1} parent=39 // pred_check
          %p7499 = pneg %p85
        $region42: #{fwd.1} parent=39 // pred_check_branch
          %7501 = sbr.rel (%p7499) target = $region44
        $region43: #{fwd.1} parent=39 // pred_region
          %p7502 = scmp.lt.s32.totalorder %s15, 1
          %s7503 = scalar_select %p7502, %s15, 1
          %s7504 = smul.addr %s7503, 2
          %s7505 = smul.addr %s7504, 8
          %s7506 = scalar_lea.vmem %s2, %s7505
        $region44: #{fwd.1} parent=39 // pred_fallthru
          _
      $region40: #{fwd.1} parent=5 // pred_fallthru
        _
    $region6: #{fwd.1} parent=1 // loop_footer
      %s13 = sadd.s32 1, %s9
    $region7: #{fwd.1} parent=1 // loop_footer_branch
      %8 = sbr.rel target = $region3
    $region8: #{fwd.1} parent=1 // loop_exit
      _
    %7507 = vsyncpa [#allocation4], 1
    %s7508 = scalar_lea.sflag [#allocation4], 1
    %7509 = vsyncpa %s7508, 1

</llo_original>
